<compile_context>
chip_gen: v6e
topology: v6e:2x2x1
jax: 0.10.0
libtpu: 0.0.40
codegen_flags: <defaults>
</compile_context>

<pallas_src>
import functools

import numpy as np
import jax
import jax.numpy as jnp
from jax import lax
from jax.experimental import pallas as pl
from jax.experimental.pallas import tpu as pltpu

INPUT = 3
HIDDEN = 64
SEQ = 10          # fixed by the model: x.unsqueeze(1).repeat(1, 10, 1)
OUT = 3

PARAM_ORDER = ("we1", "be1", "we2", "be2",
               "wih0", "whh0", "b0",
               "w1cat", "b1",
               "wd1", "bd1", "wd2p", "bd2p")


def _round_up(n, m):
    return ((n + m - 1) // m) * m


def mouse_traj_kernel(x_ref,
                      we1_ref, be1_ref, we2_ref, be2_ref,
                      wih0_ref, whh0_ref, b0_ref,
                      w1cat_ref, b1_ref,
                      wd1_ref, bd1_ref, wd2p_ref, bd2p_ref,
                      out_ref, xproj_ref, hist_ref,
                      *, unroll):
    f32 = jnp.float32
    cdt = we1_ref.dtype                  # matmul operand dtype (bf16 or f32)
    hdt = hist_ref.dtype                 # h1-history dtype (== cdt)
    TB = x_ref.shape[0]
    H = HIDDEN

    # --- encoder: Linear + ReLU + Linear + ReLU ---
    x = x_ref[...].astype(cdt)                                            # (TB, 3)
    e = jnp.maximum(
        jnp.dot(x, we1_ref[...], preferred_element_type=f32) + be1_ref[...], 0.0)
    e = jnp.maximum(
        jnp.dot(e.astype(cdt), we2_ref[...],
                preferred_element_type=f32) + be2_ref[...], 0.0)          # (TB, 64)

    # Layer-0 LSTM input is identical at every timestep: hoist its input
    # projection (incl. b_ih + b_hh) and park it in VMEM scratch so it is not a
    # loop-invariant vreg value held across the whole recurrence.
    xproj_ref[...] = jnp.dot(e.astype(cdt), wih0_ref[...],
                             preferred_element_type=f32) + b0_ref[...]    # (TB, 4H)

    def cell(z, c):
        # Gate axis permuted at param-prep time to (i, f, o, g): one sigmoid over
        # a contiguous 192-lane slice, one tanh over the last 64 lanes. Kept f32
        # (safe on v5e which has no bf16 VPU/EUP).
        s = jax.nn.sigmoid(z[:, :3 * H])
        g = jnp.tanh(z[:, 3 * H:])
        i = s[:, 0 * H:1 * H]
        f = s[:, 1 * H:2 * H]
        o = s[:, 2 * H:3 * H]
        c_new = f * c + i * g
        h_new = o * jnp.tanh(c_new)
        return h_new, c_new

    def step(t, carry):
        h0, c0, h1, c1 = carry
        # layer 0: only the recurrent matmul is on the serial chain
        z0 = xproj_ref[...] + jnp.dot(h0.astype(cdt), whh0_ref[...],
                                      preferred_element_type=f32)
        h0, c0 = cell(z0, c0)
        # layer 1: fused input+recurrent matmul via concatenated weights;
        # b1 (1, 4H) is broadcast-added at the use site (not materialized).
        hcat = jnp.concatenate([h0, h1], axis=-1).astype(cdt)             # (TB, 2H)
        z1 = jnp.dot(hcat, w1cat_ref[...],
                     preferred_element_type=f32) + b1_ref[...]
        h1, c1 = cell(z1, c1)
        hist_ref[t] = h1.astype(hdt)
        return h0, c0, h1, c1

    zeros = jnp.zeros((TB, H), f32)
    carry = (zeros, zeros, zeros, zeros)
    if unroll:
        for t in range(SEQ):                              # static unroll (small TB)
            carry = step(t, carry)
    else:
        carry = lax.fori_loop(0, SEQ, step, carry)        # bounded live ranges (TB>=256)

    # --- decoder, off the recurrent chain. The second layer uses a block-diagonal
    # packed weight (SEQ*H, SEQ*OUT), so the result accumulates directly into a
    # lane-dense, batch-major (TB, SEQ*OUT) tile: no 3-lane masked stores, no
    # in-kernel transpose, and the wrapper only reshapes.
    acc = jnp.zeros((TB, SEQ * OUT), f32)
    for t in range(SEQ):
        d_t = jnp.maximum(
            jnp.dot(hist_ref[t], wd1_ref[...],
                    preferred_element_type=f32) + bd1_ref[...], 0.0)      # (TB, H)
        acc = acc + jnp.dot(d_t.astype(cdt), wd2p_ref[pl.ds(t * H, H), :],
                            preferred_element_type=f32)                   # (TB, SEQ*OUT)
    out_ref[...] = acc + bd2p_ref[...]


def _reorder_gates(w):
    """Permute the trailing 4H axis from PyTorch (i, f, g, o) to (i, f, o, g)."""
    H = HIDDEN
    return jnp.concatenate([w[..., :2 * H], w[..., 3 * H:], w[..., 2 * H:3 * H]],
                           axis=-1)


def prepare_params(p, matmul_dtype=jnp.bfloat16):
    """Wrapper-side param prep: gate reorder, layer-1 weight concat, block-diagonal
    packed decoder output weight, dtype cast.

    Matmul weights are cast to `matmul_dtype` (bf16 for MXU peak on v6e/v7x, or
    f32 for exact checking); biases stay f32 since they add into f32 accumulators.
    """
    H, O = HIDDEN, OUT
    wih1 = _reorder_gates(p["wih1"])
    whh1 = _reorder_gates(p["whh1"])
    # Block-diagonal packed decoder output weight: out[:, t*3:(t+1)*3] only sees
    # timestep t's hidden state, so the lane-dense (TB, 30) output is produced by
    # plain matmul-accumulate inside the kernel.
    wd2p = jnp.zeros((SEQ * H, SEQ * O), jnp.float32)
    for t in range(SEQ):
        wd2p = wd2p.at[t * H:(t + 1) * H, t * O:(t + 1) * O].set(p["wd2"])
    return {
        "we1": p["we1"].astype(matmul_dtype),
        "be1": p["be1"].astype(jnp.float32),
        "we2": p["we2"].astype(matmul_dtype),
        "be2": p["be2"].astype(jnp.float32),
        "wih0": _reorder_gates(p["wih0"]).astype(matmul_dtype),
        "whh0": _reorder_gates(p["whh0"]).astype(matmul_dtype),
        "b0": _reorder_gates(p["b0"]).astype(jnp.float32),
        "w1cat": jnp.concatenate([wih1, whh1], axis=0).astype(matmul_dtype),
        "b1": _reorder_gates(p["b1"]).astype(jnp.float32),
        "wd1": p["wd1"].astype(matmul_dtype),
        "bd1": p["bd1"].astype(jnp.float32),
        "wd2p": wd2p.astype(matmul_dtype),
        "bd2p": jnp.tile(p["bd2"], (1, SEQ)).astype(jnp.float32),
    }


def _resident_spec(arr):
    """Full-array block whose index_map always returns block 0 (weights stay in VMEM)."""
    return pl.BlockSpec(arr.shape, lambda i: (0, 0))


def mouse_trajectory_forward(x, prepared, *, block_b=256):
    """Run the Pallas kernel. `prepared` comes from prepare_params().

    block_b: batch tile. 256 is a good default for v6e/v7x; use 128 on v5e (its
    4x128x128 MXU is already filled at M=128). The tile is additionally capped so
    the batch grid has >= 2 blocks whenever B >= 16, which lets the 'parallel'
    grid axis shard the batch across v7x's two TensorCores.
    """
    B = x.shape[0]
    cdt = prepared["we1"].dtype

    Bp8 = _round_up(max(B, 8), 8)
    TB = min(_round_up(block_b, 8), Bp8)
    if Bp8 >= 16:                       # guarantee >= 2 grid blocks (v7x megacore)
        TB = min(TB, max(8, (Bp8 // 2) // 8 * 8))
    B_pad = _round_up(B, TB)
    if B_pad != B:
        x = jnp.pad(x, ((0, B_pad - B), (0, 0)))

    unroll = TB < 256                   # static unroll small tiles, fori_loop big ones

    args = (x,) + tuple(prepared[k] for k in PARAM_ORDER)
    in_specs = [pl.BlockSpec((TB, INPUT), lambda i: (i, 0))] + \
               [_resident_spec(prepared[k]) for k in PARAM_ORDER]

    H = HIDDEN
    flops = 2 * B_pad * (INPUT * H + H * H                      # encoder
                         + H * 4 * H                            # hoisted xproj0
                         + SEQ * 3 * H * 4 * H                  # recurrence
                         + SEQ * (H * H + H * SEQ * OUT))       # decoder
    transcendentals = B_pad * SEQ * 2 * 5 * H                   # sigmoid/tanh elems
    bytes_accessed = int(x.size * x.dtype.itemsize
                         + sum(int(np.prod(prepared[k].shape)) * prepared[k].dtype.itemsize
                               for k in PARAM_ORDER)
                         + B_pad * SEQ * OUT * 4)

    out = pl.pallas_call(
        functools.partial(mouse_traj_kernel, unroll=unroll),
        out_shape=jax.ShapeDtypeStruct((B_pad, SEQ * OUT), jnp.float32),
        grid=(B_pad // TB,),
        in_specs=in_specs,
        out_specs=pl.BlockSpec((TB, SEQ * OUT), lambda i: (i, 0)),
        scratch_shapes=[pltpu.VMEM((TB, 4 * HIDDEN), jnp.float32),   # xproj0
                        pltpu.VMEM((SEQ, TB, HIDDEN), cdt)],         # h1 history
        compiler_params=pltpu.CompilerParams(
            dimension_semantics=("parallel",)),       # shards batch across TCs on v7x
        cost_estimate=pl.CostEstimate(flops=int(flops),
                                      transcendentals=int(transcendentals),
                                      bytes_accessed=bytes_accessed),
    )(*args)

    # Kernel emits a lane-dense batch-major (B_pad, SEQ*3) slab: reshape only.
    return out[:B].reshape(B, SEQ, OUT)


def init_params(key):
    """Deterministic synthetic parameters in PyTorch gate order (i,f,g,o),
    stored in matmul-friendly (in_features, out_features) layout."""
    ks = jax.random.split(key, 16)
    n = lambda k, shape: (0.1 * jax.random.normal(k, shape)).astype(jnp.float32)
    H = HIDDEN
    p = {}
    # encoder
    p["we1"] = n(ks[0], (INPUT, H))          # Linear(3,64).weight.T
    p["be1"] = n(ks[1], (1, H))
    p["we2"] = n(ks[2], (H, H))
    p["be2"] = n(ks[3], (1, H))
    # LSTM layer 0  (PyTorch weight_ih_l0 is (4H, H); we hold its transpose)
    p["wih0"] = n(ks[4], (H, 4 * H))
    p["whh0"] = n(ks[5], (H, 4 * H))
    p["b0"] = n(ks[6], (1, 4 * H)) + n(ks[7], (1, 4 * H))   # b_ih + b_hh
    # LSTM layer 1
    p["wih1"] = n(ks[8], (H, 4 * H))
    p["whh1"] = n(ks[9], (H, 4 * H))
    p["b1"] = n(ks[10], (1, 4 * H)) + n(ks[11], (1, 4 * H))
    # decoder
    p["wd1"] = n(ks[12], (H, H))
    p["bd1"] = n(ks[13], (1, H))
    p["wd2"] = n(ks[14], (H, OUT))
    p["bd2"] = n(ks[15], (1, OUT))
    return p


def reference_forward(x, p):
    """Plain-JAX reference mirroring PyTorch nn.LSTM / Sequential semantics
    (original PyTorch gate order, un-fused weights)."""
    H = HIDDEN
    e = jax.nn.relu(x @ p["we1"] + p["be1"])
    e = jax.nn.relu(e @ p["we2"] + p["be2"])
    B = x.shape[0]
    h = [jnp.zeros((B, H)), jnp.zeros((B, H))]
    c = [jnp.zeros((B, H)), jnp.zeros((B, H))]
    layers = [(p["wih0"], p["whh0"], p["b0"]), (p["wih1"], p["whh1"], p["b1"])]
    outs = []
    for _ in range(SEQ):
        inp = e
        for l, (wih, whh, b) in enumerate(layers):
            z = inp @ wih + b + h[l] @ whh
            i = jax.nn.sigmoid(z[:, :H])
            f = jax.nn.sigmoid(z[:, H:2 * H])
            g = jnp.tanh(z[:, 2 * H:3 * H])
            o = jax.nn.sigmoid(z[:, 3 * H:])
            c[l] = f * c[l] + i * g
            h[l] = o * jnp.tanh(c[l])
            inp = h[l]
        d = jax.nn.relu(inp @ p["wd1"] + p["bd1"])
        outs.append(d @ p["wd2"] + p["bd2"])
    return jnp.stack(outs, axis=1)


if __name__ == "__main__":
    key = jax.random.PRNGKey(0)
    k_x, k_x2, k_p = jax.random.split(key, 3)
    params = init_params(k_p)

    # --- small batch ---
    B = 16
    x = jax.random.normal(k_x, (B, INPUT), dtype=jnp.float32)
    ref = reference_forward(x, params)

    # 1) Exact-math check (f32 matmuls, static-unroll path, grid=(2,)) — verifies
    #    gate reorder / layer-1 fusion / packed block-diagonal decoder output.
    out_f32 = mouse_trajectory_forward(x, prepare_params(params, jnp.float32),
                                       block_b=8)
    out_f32 = jax.block_until_ready(out_f32)
    assert out_f32.shape == (B, SEQ, OUT), out_f32.shape
    np.testing.assert_allclose(np.asarray(out_f32), np.asarray(ref),
                               atol=5e-4, rtol=5e-4)

    # 2) Performance config: bf16 matmuls / bf16 history, f32 accumulation & gates.
    prepared_bf16 = prepare_params(params, jnp.bfloat16)
    out_bf16 = mouse_trajectory_forward(x, prepared_bf16)
    out_bf16 = jax.block_until_ready(out_bf16)
    assert out_bf16.shape == (B, SEQ, OUT), out_bf16.shape
    np.testing.assert_allclose(np.asarray(out_bf16), np.asarray(ref),
                               atol=2e-2, rtol=2e-2)

    # 3) Larger batch: TB=256 -> fori_loop recurrence path, grid=(2,) 'parallel'.
    B2 = 512
    x2 = jax.random.normal(k_x2, (B2, INPUT), dtype=jnp.float32)
    ref2 = reference_forward(x2, params)
    out2 = mouse_trajectory_forward(x2, prepared_bf16, block_b=256)
    out2 = jax.block_until_ready(out2)
    assert out2.shape == (B2, SEQ, OUT), out2.shape
    np.testing.assert_allclose(np.asarray(out2), np.asarray(ref2),
                               atol=3e-2, rtol=3e-2)

    print("KERNEL_OK")
</pallas_src>

<mosaic_0001>
module attributes {stable_mosaic.version = 11 : i64} {
  func.func @mouse_traj_kernel(%arg0: i32, %arg1: memref<8x3xf32, #tpu.memory_space<vmem>>, %arg2: memref<3x64xf32, #tpu.memory_space<vmem>>, %arg3: memref<1x64xf32, #tpu.memory_space<vmem>>, %arg4: memref<64x64xf32, #tpu.memory_space<vmem>>, %arg5: memref<1x64xf32, #tpu.memory_space<vmem>>, %arg6: memref<64x256xf32, #tpu.memory_space<vmem>>, %arg7: memref<64x256xf32, #tpu.memory_space<vmem>>, %arg8: memref<1x256xf32, #tpu.memory_space<vmem>>, %arg9: memref<128x256xf32, #tpu.memory_space<vmem>>, %arg10: memref<1x256xf32, #tpu.memory_space<vmem>>, %arg11: memref<64x64xf32, #tpu.memory_space<vmem>>, %arg12: memref<1x64xf32, #tpu.memory_space<vmem>>, %arg13: memref<640x30xf32, #tpu.memory_space<vmem>>, %arg14: memref<1x30xf32, #tpu.memory_space<vmem>>, %arg15: memref<8x30xf32, #tpu.memory_space<vmem>>, %arg16: memref<8x256xf32, #tpu.memory_space<vmem>>, %arg17: memref<10x8x64xf32, #tpu.memory_space<vmem>>) attributes {dimension_semantics = [#tpu.dimension_semantics<parallel>], iteration_bounds = array<i64: 2>, scalar_prefetch = 0 : i64, scratch_operands = 2 : i64, tpu.core_type = #tpu.core_type<tc>, window_params = [{transform_indices = @transform_0, window_bounds = array<i64: 8, 3>}, {pipeline_mode = #tpu.pipeline_mode<synchronous>, transform_indices = @transform_1, window_bounds = array<i64: 3, 64>}, {pipeline_mode = #tpu.pipeline_mode<synchronous>, transform_indices = @transform_2, window_bounds = array<i64: 1, 64>}, {pipeline_mode = #tpu.pipeline_mode<synchronous>, transform_indices = @transform_3, window_bounds = array<i64: 64, 64>}, {pipeline_mode = #tpu.pipeline_mode<synchronous>, transform_indices = @transform_4, window_bounds = array<i64: 1, 64>}, {pipeline_mode = #tpu.pipeline_mode<synchronous>, transform_indices = @transform_5, window_bounds = array<i64: 64, 256>}, {pipeline_mode = #tpu.pipeline_mode<synchronous>, transform_indices = @transform_6, window_bounds = array<i64: 64, 256>}, {pipeline_mode = #tpu.pipeline_mode<synchronous>, transform_indices = @transform_7, window_bounds = array<i64: 1, 256>}, {pipeline_mode = #tpu.pipeline_mode<synchronous>, transform_indices = @transform_8, window_bounds = array<i64: 128, 256>}, {pipeline_mode = #tpu.pipeline_mode<synchronous>, transform_indices = @transform_9, window_bounds = array<i64: 1, 256>}, {pipeline_mode = #tpu.pipeline_mode<synchronous>, transform_indices = @transform_10, window_bounds = array<i64: 64, 64>}, {pipeline_mode = #tpu.pipeline_mode<synchronous>, transform_indices = @transform_11, window_bounds = array<i64: 1, 64>}, {pipeline_mode = #tpu.pipeline_mode<synchronous>, transform_indices = @transform_12, window_bounds = array<i64: 640, 30>}, {pipeline_mode = #tpu.pipeline_mode<synchronous>, transform_indices = @transform_13, window_bounds = array<i64: 1, 30>}, {transform_indices = @transform_14, window_bounds = array<i64: 8, 30>}]} {
    %c0 = arith.constant 0 : index
    %c0_0 = arith.constant 0 : index
    %0 = vector.load %arg1[%c0, %c0_0] : memref<8x3xf32, #tpu.memory_space<vmem>>, vector<8x3xf32>
    %c0_1 = arith.constant 0 : index
    %c0_2 = arith.constant 0 : index
    %1 = vector.load %arg2[%c0_1, %c0_2] : memref<3x64xf32, #tpu.memory_space<vmem>>, vector<3x64xf32>
    %cst = arith.constant dense<0.000000e+00> : vector<8x64xf32>
    %2 = tpu.matmul %0, %1, %cst {dimension_numbers = #tpu.dot_dimension_numbers<[1], [0], [0], [1], [0, 0, 1, 1], [], []>} : vector<8x3xf32>, vector<3x64xf32>, vector<8x64xf32> -> vector<8x64xf32>
    %c0_3 = arith.constant 0 : index
    %c0_4 = arith.constant 0 : index
    %3 = vector.load %arg3[%c0_3, %c0_4] : memref<1x64xf32, #tpu.memory_space<vmem>>, vector<1x64xf32>
    %4 = vector.broadcast %3 : vector<1x64xf32> to vector<8x64xf32>
    %5 = arith.addf %2, %4 : vector<8x64xf32>
    %cst_5 = arith.constant 0.000000e+00 : f32
    %6 = vector.broadcast %cst_5 : f32 to vector<8x64xf32>
    %7 = arith.maximumf %5, %6 : vector<8x64xf32>
    %c0_6 = arith.constant 0 : index
    %c0_7 = arith.constant 0 : index
    %8 = vector.load %arg4[%c0_6, %c0_7] : memref<64x64xf32, #tpu.memory_space<vmem>>, vector<64x64xf32>
    %cst_8 = arith.constant dense<0.000000e+00> : vector<8x64xf32>
    %9 = tpu.matmul %7, %8, %cst_8 {dimension_numbers = #tpu.dot_dimension_numbers<[1], [0], [0], [1], [0, 0, 1, 1], [], []>} : vector<8x64xf32>, vector<64x64xf32>, vector<8x64xf32> -> vector<8x64xf32>
    %c0_9 = arith.constant 0 : index
    %c0_10 = arith.constant 0 : index
    %10 = vector.load %arg5[%c0_9, %c0_10] : memref<1x64xf32, #tpu.memory_space<vmem>>, vector<1x64xf32>
    %11 = vector.broadcast %10 : vector<1x64xf32> to vector<8x64xf32>
    %12 = arith.addf %9, %11 : vector<8x64xf32>
    %cst_11 = arith.constant 0.000000e+00 : f32
    %13 = vector.broadcast %cst_11 : f32 to vector<8x64xf32>
    %14 = arith.maximumf %12, %13 : vector<8x64xf32>
    %c0_12 = arith.constant 0 : index
    %c0_13 = arith.constant 0 : index
    %15 = vector.load %arg6[%c0_12, %c0_13] : memref<64x256xf32, #tpu.memory_space<vmem>>, vector<64x256xf32>
    %cst_14 = arith.constant dense<0.000000e+00> : vector<8x256xf32>
    %16 = tpu.matmul %14, %15, %cst_14 {dimension_numbers = #tpu.dot_dimension_numbers<[1], [0], [0], [1], [0, 0, 1, 1], [], []>} : vector<8x64xf32>, vector<64x256xf32>, vector<8x256xf32> -> vector<8x256xf32>
    %c0_15 = arith.constant 0 : index
    %c0_16 = arith.constant 0 : index
    %17 = vector.load %arg8[%c0_15, %c0_16] : memref<1x256xf32, #tpu.memory_space<vmem>>, vector<1x256xf32>
    %18 = vector.broadcast %17 : vector<1x256xf32> to vector<8x256xf32>
    %19 = arith.addf %16, %18 : vector<8x256xf32>
    %c0_17 = arith.constant 0 : index
    %c0_18 = arith.constant 0 : index
    %20 = vector.load %arg16[%c0_17, %c0_18] : memref<8x256xf32, #tpu.memory_space<vmem>>, vector<8x256xf32>
    tpu.vector_store %arg16[%c0_17, %c0_18], %19 {strides = array<i32>} : memref<8x256xf32, #tpu.memory_space<vmem>>, vector<8x256xf32>,
    %cst_19 = arith.constant 0.000000e+00 : f32
    %21 = vector.broadcast %cst_19 : f32 to vector<8x64xf32>
    %c0_20 = arith.constant 0 : index
    %c0_21 = arith.constant 0 : index
    %22 = vector.load %arg16[%c0_20, %c0_21] : memref<8x256xf32, #tpu.memory_space<vmem>>, vector<8x256xf32>
    %c0_22 = arith.constant 0 : index
    %c0_23 = arith.constant 0 : index
    %23 = vector.load %arg7[%c0_22, %c0_23] : memref<64x256xf32, #tpu.memory_space<vmem>>, vector<64x256xf32>
    %cst_24 = arith.constant dense<0.000000e+00> : vector<8x256xf32>
    %24 = tpu.matmul %21, %23, %cst_24 {dimension_numbers = #tpu.dot_dimension_numbers<[1], [0], [0], [1], [0, 0, 1, 1], [], []>} : vector<8x64xf32>, vector<64x256xf32>, vector<8x256xf32> -> vector<8x256xf32>
    %25 = arith.addf %22, %24 : vector<8x256xf32>
    %26 = vector.extract_strided_slice %25 {offsets = [0, 0], sizes = [8, 192], strides = [1, 1]} : vector<8x256xf32> to vector<8x192xf32>
    %27 = arith.negf %26 : vector<8x192xf32>
    %28 = math.exp %27 : vector<8x192xf32>
    %cst_25 = arith.constant 1.000000e+00 : f32
    %29 = vector.broadcast %cst_25 : f32 to vector<8x192xf32>
    %30 = arith.addf %29, %28 : vector<8x192xf32>
    %31 = arith.divf %29, %30 : vector<8x192xf32>
    %32 = vector.extract_strided_slice %25 {offsets = [0, 192], sizes = [8, 64], strides = [1, 1]} : vector<8x256xf32> to vector<8x64xf32>
    %33 = math.tanh %32 : vector<8x64xf32>
    %34 = vector.extract_strided_slice %31 {offsets = [0, 0], sizes = [8, 64], strides = [1, 1]} : vector<8x192xf32> to vector<8x64xf32>
    %35 = vector.extract_strided_slice %31 {offsets = [0, 64], sizes = [8, 64], strides = [1, 1]} : vector<8x192xf32> to vector<8x64xf32>
    %36 = vector.extract_strided_slice %31 {offsets = [0, 128], sizes = [8, 64], strides = [1, 1]} : vector<8x192xf32> to vector<8x64xf32>
    %37 = arith.mulf %35, %21 : vector<8x64xf32>
    %38 = arith.mulf %34, %33 : vector<8x64xf32>
    %39 = arith.addf %37, %38 : vector<8x64xf32>
    %40 = math.tanh %39 : vector<8x64xf32>
    %41 = arith.mulf %36, %40 : vector<8x64xf32>
    %42 = tpu.concatenate %41, %21 in 1 : vector<8x64xf32>, vector<8x64xf32> -> vector<8x128xf32>
    %c0_26 = arith.constant 0 : index
    %c0_27 = arith.constant 0 : index
    %43 = vector.load %arg9[%c0_26, %c0_27] : memref<128x256xf32, #tpu.memory_space<vmem>>, vector<128x256xf32>
    %cst_28 = arith.constant dense<0.000000e+00> : vector<8x256xf32>
    %44 = tpu.matmul %42, %43, %cst_28 {dimension_numbers = #tpu.dot_dimension_numbers<[1], [0], [0], [1], [0, 0, 1, 1], [], []>} : vector<8x128xf32>, vector<128x256xf32>, vector<8x256xf32> -> vector<8x256xf32>
    %c0_29 = arith.constant 0 : index
    %c0_30 = arith.constant 0 : index
    %45 = vector.load %arg10[%c0_29, %c0_30] : memref<1x256xf32, #tpu.memory_space<vmem>>, vector<1x256xf32>
    %46 = vector.broadcast %45 : vector<1x256xf32> to vector<8x256xf32>
    %47 = arith.addf %44, %46 : vector<8x256xf32>
    %48 = vector.extract_strided_slice %47 {offsets = [0, 0], sizes = [8, 192], strides = [1, 1]} : vector<8x256xf32> to vector<8x192xf32>
    %49 = arith.negf %48 : vector<8x192xf32>
    %50 = math.exp %49 : vector<8x192xf32>
    %cst_31 = arith.constant 1.000000e+00 : f32
    %51 = vector.broadcast %cst_31 : f32 to vector<8x192xf32>
    %52 = arith.addf %51, %50 : vector<8x192xf32>
    %53 = arith.divf %51, %52 : vector<8x192xf32>
    %54 = vector.extract_strided_slice %47 {offsets = [0, 192], sizes = [8, 64], strides = [1, 1]} : vector<8x256xf32> to vector<8x64xf32>
    %55 = math.tanh %54 : vector<8x64xf32>
    %56 = vector.extract_strided_slice %53 {offsets = [0, 0], sizes = [8, 64], strides = [1, 1]} : vector<8x192xf32> to vector<8x64xf32>
    %57 = vector.extract_strided_slice %53 {offsets = [0, 64], sizes = [8, 64], strides = [1, 1]} : vector<8x192xf32> to vector<8x64xf32>
    %58 = vector.extract_strided_slice %53 {offsets = [0, 128], sizes = [8, 64], strides = [1, 1]} : vector<8x192xf32> to vector<8x64xf32>
    %59 = arith.mulf %57, %21 : vector<8x64xf32>
    %60 = arith.mulf %56, %55 : vector<8x64xf32>
    %61 = arith.addf %59, %60 : vector<8x64xf32>
    %62 = math.tanh %61 : vector<8x64xf32>
    %63 = arith.mulf %58, %62 : vector<8x64xf32>
    %c0_32 = arith.constant 0 : index
    %c0_33 = arith.constant 0 : index
    %c0_34 = arith.constant 0 : index
    %64 = vector.load %arg17[%c0_32, %c0_33, %c0_34] : memref<10x8x64xf32, #tpu.memory_space<vmem>>, vector<1x8x64xf32>
    %65 = vector.shape_cast %64 : vector<1x8x64xf32> to vector<8x64xf32>
    %66 = vector.shape_cast %63 : vector<8x64xf32> to vector<1x8x64xf32>
    tpu.vector_store %arg17[%c0_32, %c0_33, %c0_34], %66 {strides = array<i32>} : memref<10x8x64xf32, #tpu.memory_space<vmem>>, vector<1x8x64xf32>,
    %c0_35 = arith.constant 0 : index
    %c0_36 = arith.constant 0 : index
    %67 = vector.load %arg16[%c0_35, %c0_36] : memref<8x256xf32, #tpu.memory_space<vmem>>, vector<8x256xf32>
    %c0_37 = arith.constant 0 : index
    %c0_38 = arith.constant 0 : index
    %68 = vector.load %arg7[%c0_37, %c0_38] : memref<64x256xf32, #tpu.memory_space<vmem>>, vector<64x256xf32>
    %cst_39 = arith.constant dense<0.000000e+00> : vector<8x256xf32>
    %69 = tpu.matmul %41, %68, %cst_39 {dimension_numbers = #tpu.dot_dimension_numbers<[1], [0], [0], [1], [0, 0, 1, 1], [], []>} : vector<8x64xf32>, vector<64x256xf32>, vector<8x256xf32> -> vector<8x256xf32>
    %70 = arith.addf %67, %69 : vector<8x256xf32>
    %71 = vector.extract_strided_slice %70 {offsets = [0, 0], sizes = [8, 192], strides = [1, 1]} : vector<8x256xf32> to vector<8x192xf32>
    %72 = arith.negf %71 : vector<8x192xf32>
    %73 = math.exp %72 : vector<8x192xf32>
    %cst_40 = arith.constant 1.000000e+00 : f32
    %74 = vector.broadcast %cst_40 : f32 to vector<8x192xf32>
    %75 = arith.addf %74, %73 : vector<8x192xf32>
    %76 = arith.divf %74, %75 : vector<8x192xf32>
    %77 = vector.extract_strided_slice %70 {offsets = [0, 192], sizes = [8, 64], strides = [1, 1]} : vector<8x256xf32> to vector<8x64xf32>
    %78 = math.tanh %77 : vector<8x64xf32>
    %79 = vector.extract_strided_slice %76 {offsets = [0, 0], sizes = [8, 64], strides = [1, 1]} : vector<8x192xf32> to vector<8x64xf32>
    %80 = vector.extract_strided_slice %76 {offsets = [0, 64], sizes = [8, 64], strides = [1, 1]} : vector<8x192xf32> to vector<8x64xf32>
    %81 = vector.extract_strided_slice %76 {offsets = [0, 128], sizes = [8, 64], strides = [1, 1]} : vector<8x192xf32> to vector<8x64xf32>
    %82 = arith.mulf %80, %39 : vector<8x64xf32>
    %83 = arith.mulf %79, %78 : vector<8x64xf32>
    %84 = arith.addf %82, %83 : vector<8x64xf32>
    %85 = math.tanh %84 : vector<8x64xf32>
    %86 = arith.mulf %81, %85 : vector<8x64xf32>
    %87 = tpu.concatenate %86, %63 in 1 : vector<8x64xf32>, vector<8x64xf32> -> vector<8x128xf32>
    %c0_41 = arith.constant 0 : index
    %c0_42 = arith.constant 0 : index
    %88 = vector.load %arg9[%c0_41, %c0_42] : memref<128x256xf32, #tpu.memory_space<vmem>>, vector<128x256xf32>
    %cst_43 = arith.constant dense<0.000000e+00> : vector<8x256xf32>
    %89 = tpu.matmul %87, %88, %cst_43 {dimension_numbers = #tpu.dot_dimension_numbers<[1], [0], [0], [1], [0, 0, 1, 1], [], []>} : vector<8x128xf32>, vector<128x256xf32>, vector<8x256xf32> -> vector<8x256xf32>
    %c0_44 = arith.constant 0 : index
    %c0_45 = arith.constant 0 : index
    %90 = vector.load %arg10[%c0_44, %c0_45] : memref<1x256xf32, #tpu.memory_space<vmem>>, vector<1x256xf32>
    %91 = vector.broadcast %90 : vector<1x256xf32> to vector<8x256xf32>
    %92 = arith.addf %89, %91 : vector<8x256xf32>
    %93 = vector.extract_strided_slice %92 {offsets = [0, 0], sizes = [8, 192], strides = [1, 1]} : vector<8x256xf32> to vector<8x192xf32>
    %94 = arith.negf %93 : vector<8x192xf32>
    %95 = math.exp %94 : vector<8x192xf32>
    %cst_46 = arith.constant 1.000000e+00 : f32
    %96 = vector.broadcast %cst_46 : f32 to vector<8x192xf32>
    %97 = arith.addf %96, %95 : vector<8x192xf32>
    %98 = arith.divf %96, %97 : vector<8x192xf32>
    %99 = vector.extract_strided_slice %92 {offsets = [0, 192], sizes = [8, 64], strides = [1, 1]} : vector<8x256xf32> to vector<8x64xf32>
    %100 = math.tanh %99 : vector<8x64xf32>
    %101 = vector.extract_strided_slice %98 {offsets = [0, 0], sizes = [8, 64], strides = [1, 1]} : vector<8x192xf32> to vector<8x64xf32>
    %102 = vector.extract_strided_slice %98 {offsets = [0, 64], sizes = [8, 64], strides = [1, 1]} : vector<8x192xf32> to vector<8x64xf32>
    %103 = vector.extract_strided_slice %98 {offsets = [0, 128], sizes = [8, 64], strides = [1, 1]} : vector<8x192xf32> to vector<8x64xf32>
    %104 = arith.mulf %102, %61 : vector<8x64xf32>
    %105 = arith.mulf %101, %100 : vector<8x64xf32>
    %106 = arith.addf %104, %105 : vector<8x64xf32>
    %107 = math.tanh %106 : vector<8x64xf32>
    %108 = arith.mulf %103, %107 : vector<8x64xf32>
    %c1 = arith.constant 1 : index
    %c0_47 = arith.constant 0 : index
    %c0_48 = arith.constant 0 : index
    %109 = vector.load %arg17[%c1, %c0_47, %c0_48] : memref<10x8x64xf32, #tpu.memory_space<vmem>>, vector<1x8x64xf32>
    %110 = vector.shape_cast %109 : vector<1x8x64xf32> to vector<8x64xf32>
    %111 = vector.shape_cast %108 : vector<8x64xf32> to vector<1x8x64xf32>
    tpu.vector_store %arg17[%c1, %c0_47, %c0_48], %111 {strides = array<i32>} : memref<10x8x64xf32, #tpu.memory_space<vmem>>, vector<1x8x64xf32>,
    %c0_49 = arith.constant 0 : index
    %c0_50 = arith.constant 0 : index
    %112 = vector.load %arg16[%c0_49, %c0_50] : memref<8x256xf32, #tpu.memory_space<vmem>>, vector<8x256xf32>
    %c0_51 = arith.constant 0 : index
    %c0_52 = arith.constant 0 : index
    %113 = vector.load %arg7[%c0_51, %c0_52] : memref<64x256xf32, #tpu.memory_space<vmem>>, vector<64x256xf32>
    %cst_53 = arith.constant dense<0.000000e+00> : vector<8x256xf32>
    %114 = tpu.matmul %86, %113, %cst_53 {dimension_numbers = #tpu.dot_dimension_numbers<[1], [0], [0], [1], [0, 0, 1, 1], [], []>} : vector<8x64xf32>, vector<64x256xf32>, vector<8x256xf32> -> vector<8x256xf32>
    %115 = arith.addf %112, %114 : vector<8x256xf32>
    %116 = vector.extract_strided_slice %115 {offsets = [0, 0], sizes = [8, 192], strides = [1, 1]} : vector<8x256xf32> to vector<8x192xf32>
    %117 = arith.negf %116 : vector<8x192xf32>
    %118 = math.exp %117 : vector<8x192xf32>
    %cst_54 = arith.constant 1.000000e+00 : f32
    %119 = vector.broadcast %cst_54 : f32 to vector<8x192xf32>
    %120 = arith.addf %119, %118 : vector<8x192xf32>
    %121 = arith.divf %119, %120 : vector<8x192xf32>
    %122 = vector.extract_strided_slice %115 {offsets = [0, 192], sizes = [8, 64], strides = [1, 1]} : vector<8x256xf32> to vector<8x64xf32>
    %123 = math.tanh %122 : vector<8x64xf32>
    %124 = vector.extract_strided_slice %121 {offsets = [0, 0], sizes = [8, 64], strides = [1, 1]} : vector<8x192xf32> to vector<8x64xf32>
    %125 = vector.extract_strided_slice %121 {offsets = [0, 64], sizes = [8, 64], strides = [1, 1]} : vector<8x192xf32> to vector<8x64xf32>
    %126 = vector.extract_strided_slice %121 {offsets = [0, 128], sizes = [8, 64], strides = [1, 1]} : vector<8x192xf32> to vector<8x64xf32>
    %127 = arith.mulf %125, %84 : vector<8x64xf32>
    %128 = arith.mulf %124, %123 : vector<8x64xf32>
    %129 = arith.addf %127, %128 : vector<8x64xf32>
    %130 = math.tanh %129 : vector<8x64xf32>
    %131 = arith.mulf %126, %130 : vector<8x64xf32>
    %132 = tpu.concatenate %131, %108 in 1 : vector<8x64xf32>, vector<8x64xf32> -> vector<8x128xf32>
    %c0_55 = arith.constant 0 : index
    %c0_56 = arith.constant 0 : index
    %133 = vector.load %arg9[%c0_55, %c0_56] : memref<128x256xf32, #tpu.memory_space<vmem>>, vector<128x256xf32>
    %cst_57 = arith.constant dense<0.000000e+00> : vector<8x256xf32>
    %134 = tpu.matmul %132, %133, %cst_57 {dimension_numbers = #tpu.dot_dimension_numbers<[1], [0], [0], [1], [0, 0, 1, 1], [], []>} : vector<8x128xf32>, vector<128x256xf32>, vector<8x256xf32> -> vector<8x256xf32>
    %c0_58 = arith.constant 0 : index
    %c0_59 = arith.constant 0 : index
    %135 = vector.load %arg10[%c0_58, %c0_59] : memref<1x256xf32, #tpu.memory_space<vmem>>, vector<1x256xf32>
    %136 = vector.broadcast %135 : vector<1x256xf32> to vector<8x256xf32>
    %137 = arith.addf %134, %136 : vector<8x256xf32>
    %138 = vector.extract_strided_slice %137 {offsets = [0, 0], sizes = [8, 192], strides = [1, 1]} : vector<8x256xf32> to vector<8x192xf32>
    %139 = arith.negf %138 : vector<8x192xf32>
    %140 = math.exp %139 : vector<8x192xf32>
    %cst_60 = arith.constant 1.000000e+00 : f32
    %141 = vector.broadcast %cst_60 : f32 to vector<8x192xf32>
    %142 = arith.addf %141, %140 : vector<8x192xf32>
    %143 = arith.divf %141, %142 : vector<8x192xf32>
    %144 = vector.extract_strided_slice %137 {offsets = [0, 192], sizes = [8, 64], strides = [1, 1]} : vector<8x256xf32> to vector<8x64xf32>
    %145 = math.tanh %144 : vector<8x64xf32>
    %146 = vector.extract_strided_slice %143 {offsets = [0, 0], sizes = [8, 64], strides = [1, 1]} : vector<8x192xf32> to vector<8x64xf32>
    %147 = vector.extract_strided_slice %143 {offsets = [0, 64], sizes = [8, 64], strides = [1, 1]} : vector<8x192xf32> to vector<8x64xf32>
    %148 = vector.extract_strided_slice %143 {offsets = [0, 128], sizes = [8, 64], strides = [1, 1]} : vector<8x192xf32> to vector<8x64xf32>
    %149 = arith.mulf %147, %106 : vector<8x64xf32>
    %150 = arith.mulf %146, %145 : vector<8x64xf32>
    %151 = arith.addf %149, %150 : vector<8x64xf32>
    %152 = math.tanh %151 : vector<8x64xf32>
    %153 = arith.mulf %148, %152 : vector<8x64xf32>
    %c2 = arith.constant 2 : index
    %c0_61 = arith.constant 0 : index
    %c0_62 = arith.constant 0 : index
    %154 = vector.load %arg17[%c2, %c0_61, %c0_62] : memref<10x8x64xf32, #tpu.memory_space<vmem>>, vector<1x8x64xf32>
    %155 = vector.shape_cast %154 : vector<1x8x64xf32> to vector<8x64xf32>
    %156 = vector.shape_cast %153 : vector<8x64xf32> to vector<1x8x64xf32>
    tpu.vector_store %arg17[%c2, %c0_61, %c0_62], %156 {strides = array<i32>} : memref<10x8x64xf32, #tpu.memory_space<vmem>>, vector<1x8x64xf32>,
    %c0_63 = arith.constant 0 : index
    %c0_64 = arith.constant 0 : index
    %157 = vector.load %arg16[%c0_63, %c0_64] : memref<8x256xf32, #tpu.memory_space<vmem>>, vector<8x256xf32>
    %c0_65 = arith.constant 0 : index
    %c0_66 = arith.constant 0 : index
    %158 = vector.load %arg7[%c0_65, %c0_66] : memref<64x256xf32, #tpu.memory_space<vmem>>, vector<64x256xf32>
    %cst_67 = arith.constant dense<0.000000e+00> : vector<8x256xf32>
    %159 = tpu.matmul %131, %158, %cst_67 {dimension_numbers = #tpu.dot_dimension_numbers<[1], [0], [0], [1], [0, 0, 1, 1], [], []>} : vector<8x64xf32>, vector<64x256xf32>, vector<8x256xf32> -> vector<8x256xf32>
    %160 = arith.addf %157, %159 : vector<8x256xf32>
    %161 = vector.extract_strided_slice %160 {offsets = [0, 0], sizes = [8, 192], strides = [1, 1]} : vector<8x256xf32> to vector<8x192xf32>
    %162 = arith.negf %161 : vector<8x192xf32>
    %163 = math.exp %162 : vector<8x192xf32>
    %cst_68 = arith.constant 1.000000e+00 : f32
    %164 = vector.broadcast %cst_68 : f32 to vector<8x192xf32>
    %165 = arith.addf %164, %163 : vector<8x192xf32>
    %166 = arith.divf %164, %165 : vector<8x192xf32>
    %167 = vector.extract_strided_slice %160 {offsets = [0, 192], sizes = [8, 64], strides = [1, 1]} : vector<8x256xf32> to vector<8x64xf32>
    %168 = math.tanh %167 : vector<8x64xf32>
    %169 = vector.extract_strided_slice %166 {offsets = [0, 0], sizes = [8, 64], strides = [1, 1]} : vector<8x192xf32> to vector<8x64xf32>
    %170 = vector.extract_strided_slice %166 {offsets = [0, 64], sizes = [8, 64], strides = [1, 1]} : vector<8x192xf32> to vector<8x64xf32>
    %171 = vector.extract_strided_slice %166 {offsets = [0, 128], sizes = [8, 64], strides = [1, 1]} : vector<8x192xf32> to vector<8x64xf32>
    %172 = arith.mulf %170, %129 : vector<8x64xf32>
    %173 = arith.mulf %169, %168 : vector<8x64xf32>
    %174 = arith.addf %172, %173 : vector<8x64xf32>
    %175 = math.tanh %174 : vector<8x64xf32>
    %176 = arith.mulf %171, %175 : vector<8x64xf32>
    %177 = tpu.concatenate %176, %153 in 1 : vector<8x64xf32>, vector<8x64xf32> -> vector<8x128xf32>
    %c0_69 = arith.constant 0 : index
    %c0_70 = arith.constant 0 : index
    %178 = vector.load %arg9[%c0_69, %c0_70] : memref<128x256xf32, #tpu.memory_space<vmem>>, vector<128x256xf32>
    %cst_71 = arith.constant dense<0.000000e+00> : vector<8x256xf32>
    %179 = tpu.matmul %177, %178, %cst_71 {dimension_numbers = #tpu.dot_dimension_numbers<[1], [0], [0], [1], [0, 0, 1, 1], [], []>} : vector<8x128xf32>, vector<128x256xf32>, vector<8x256xf32> -> vector<8x256xf32>
    %c0_72 = arith.constant 0 : index
    %c0_73 = arith.constant 0 : index
    %180 = vector.load %arg10[%c0_72, %c0_73] : memref<1x256xf32, #tpu.memory_space<vmem>>, vector<1x256xf32>
    %181 = vector.broadcast %180 : vector<1x256xf32> to vector<8x256xf32>
    %182 = arith.addf %179, %181 : vector<8x256xf32>
    %183 = vector.extract_strided_slice %182 {offsets = [0, 0], sizes = [8, 192], strides = [1, 1]} : vector<8x256xf32> to vector<8x192xf32>
    %184 = arith.negf %183 : vector<8x192xf32>
    %185 = math.exp %184 : vector<8x192xf32>
    %cst_74 = arith.constant 1.000000e+00 : f32
    %186 = vector.broadcast %cst_74 : f32 to vector<8x192xf32>
    %187 = arith.addf %186, %185 : vector<8x192xf32>
    %188 = arith.divf %186, %187 : vector<8x192xf32>
    %189 = vector.extract_strided_slice %182 {offsets = [0, 192], sizes = [8, 64], strides = [1, 1]} : vector<8x256xf32> to vector<8x64xf32>
    %190 = math.tanh %189 : vector<8x64xf32>
    %191 = vector.extract_strided_slice %188 {offsets = [0, 0], sizes = [8, 64], strides = [1, 1]} : vector<8x192xf32> to vector<8x64xf32>
    %192 = vector.extract_strided_slice %188 {offsets = [0, 64], sizes = [8, 64], strides = [1, 1]} : vector<8x192xf32> to vector<8x64xf32>
    %193 = vector.extract_strided_slice %188 {offsets = [0, 128], sizes = [8, 64], strides = [1, 1]} : vector<8x192xf32> to vector<8x64xf32>
    %194 = arith.mulf %192, %151 : vector<8x64xf32>
    %195 = arith.mulf %191, %190 : vector<8x64xf32>
    %196 = arith.addf %194, %195 : vector<8x64xf32>
    %197 = math.tanh %196 : vector<8x64xf32>
    %198 = arith.mulf %193, %197 : vector<8x64xf32>
    %c3 = arith.constant 3 : index
    %c0_75 = arith.constant 0 : index
    %c0_76 = arith.constant 0 : index
    %199 = vector.load %arg17[%c3, %c0_75, %c0_76] : memref<10x8x64xf32, #tpu.memory_space<vmem>>, vector<1x8x64xf32>
    %200 = vector.shape_cast %199 : vector<1x8x64xf32> to vector<8x64xf32>
    %201 = vector.shape_cast %198 : vector<8x64xf32> to vector<1x8x64xf32>
    tpu.vector_store %arg17[%c3, %c0_75, %c0_76], %201 {strides = array<i32>} : memref<10x8x64xf32, #tpu.memory_space<vmem>>, vector<1x8x64xf32>,
    %c0_77 = arith.constant 0 : index
    %c0_78 = arith.constant 0 : index
    %202 = vector.load %arg16[%c0_77, %c0_78] : memref<8x256xf32, #tpu.memory_space<vmem>>, vector<8x256xf32>
    %c0_79 = arith.constant 0 : index
    %c0_80 = arith.constant 0 : index
    %203 = vector.load %arg7[%c0_79, %c0_80] : memref<64x256xf32, #tpu.memory_space<vmem>>, vector<64x256xf32>
    %cst_81 = arith.constant dense<0.000000e+00> : vector<8x256xf32>
    %204 = tpu.matmul %176, %203, %cst_81 {dimension_numbers = #tpu.dot_dimension_numbers<[1], [0], [0], [1], [0, 0, 1, 1], [], []>} : vector<8x64xf32>, vector<64x256xf32>, vector<8x256xf32> -> vector<8x256xf32>
    %205 = arith.addf %202, %204 : vector<8x256xf32>
    %206 = vector.extract_strided_slice %205 {offsets = [0, 0], sizes = [8, 192], strides = [1, 1]} : vector<8x256xf32> to vector<8x192xf32>
    %207 = arith.negf %206 : vector<8x192xf32>
    %208 = math.exp %207 : vector<8x192xf32>
    %cst_82 = arith.constant 1.000000e+00 : f32
    %209 = vector.broadcast %cst_82 : f32 to vector<8x192xf32>
    %210 = arith.addf %209, %208 : vector<8x192xf32>
    %211 = arith.divf %209, %210 : vector<8x192xf32>
    %212 = vector.extract_strided_slice %205 {offsets = [0, 192], sizes = [8, 64], strides = [1, 1]} : vector<8x256xf32> to vector<8x64xf32>
    %213 = math.tanh %212 : vector<8x64xf32>
    %214 = vector.extract_strided_slice %211 {offsets = [0, 0], sizes = [8, 64], strides = [1, 1]} : vector<8x192xf32> to vector<8x64xf32>
    %215 = vector.extract_strided_slice %211 {offsets = [0, 64], sizes = [8, 64], strides = [1, 1]} : vector<8x192xf32> to vector<8x64xf32>
    %216 = vector.extract_strided_slice %211 {offsets = [0, 128], sizes = [8, 64], strides = [1, 1]} : vector<8x192xf32> to vector<8x64xf32>
    %217 = arith.mulf %215, %174 : vector<8x64xf32>
    %218 = arith.mulf %214, %213 : vector<8x64xf32>
    %219 = arith.addf %217, %218 : vector<8x64xf32>
    %220 = math.tanh %219 : vector<8x64xf32>
    %221 = arith.mulf %216, %220 : vector<8x64xf32>
    %222 = tpu.concatenate %221, %198 in 1 : vector<8x64xf32>, vector<8x64xf32> -> vector<8x128xf32>
    %c0_83 = arith.constant 0 : index
    %c0_84 = arith.constant 0 : index
    %223 = vector.load %arg9[%c0_83, %c0_84] : memref<128x256xf32, #tpu.memory_space<vmem>>, vector<128x256xf32>
    %cst_85 = arith.constant dense<0.000000e+00> : vector<8x256xf32>
    %224 = tpu.matmul %222, %223, %cst_85 {dimension_numbers = #tpu.dot_dimension_numbers<[1], [0], [0], [1], [0, 0, 1, 1], [], []>} : vector<8x128xf32>, vector<128x256xf32>, vector<8x256xf32> -> vector<8x256xf32>
    %c0_86 = arith.constant 0 : index
    %c0_87 = arith.constant 0 : index
    %225 = vector.load %arg10[%c0_86, %c0_87] : memref<1x256xf32, #tpu.memory_space<vmem>>, vector<1x256xf32>
    %226 = vector.broadcast %225 : vector<1x256xf32> to vector<8x256xf32>
    %227 = arith.addf %224, %226 : vector<8x256xf32>
    %228 = vector.extract_strided_slice %227 {offsets = [0, 0], sizes = [8, 192], strides = [1, 1]} : vector<8x256xf32> to vector<8x192xf32>
    %229 = arith.negf %228 : vector<8x192xf32>
    %230 = math.exp %229 : vector<8x192xf32>
    %cst_88 = arith.constant 1.000000e+00 : f32
    %231 = vector.broadcast %cst_88 : f32 to vector<8x192xf32>
    %232 = arith.addf %231, %230 : vector<8x192xf32>
    %233 = arith.divf %231, %232 : vector<8x192xf32>
    %234 = vector.extract_strided_slice %227 {offsets = [0, 192], sizes = [8, 64], strides = [1, 1]} : vector<8x256xf32> to vector<8x64xf32>
    %235 = math.tanh %234 : vector<8x64xf32>
    %236 = vector.extract_strided_slice %233 {offsets = [0, 0], sizes = [8, 64], strides = [1, 1]} : vector<8x192xf32> to vector<8x64xf32>
    %237 = vector.extract_strided_slice %233 {offsets = [0, 64], sizes = [8, 64], strides = [1, 1]} : vector<8x192xf32> to vector<8x64xf32>
    %238 = vector.extract_strided_slice %233 {offsets = [0, 128], sizes = [8, 64], strides = [1, 1]} : vector<8x192xf32> to vector<8x64xf32>
    %239 = arith.mulf %237, %196 : vector<8x64xf32>
    %240 = arith.mulf %236, %235 : vector<8x64xf32>
    %241 = arith.addf %239, %240 : vector<8x64xf32>
    %242 = math.tanh %241 : vector<8x64xf32>
    %243 = arith.mulf %238, %242 : vector<8x64xf32>
    %c4 = arith.constant 4 : index
    %c0_89 = arith.constant 0 : index
    %c0_90 = arith.constant 0 : index
    %244 = vector.load %arg17[%c4, %c0_89, %c0_90] : memref<10x8x64xf32, #tpu.memory_space<vmem>>, vector<1x8x64xf32>
    %245 = vector.shape_cast %244 : vector<1x8x64xf32> to vector<8x64xf32>
    %246 = vector.shape_cast %243 : vector<8x64xf32> to vector<1x8x64xf32>
    tpu.vector_store %arg17[%c4, %c0_89, %c0_90], %246 {strides = array<i32>} : memref<10x8x64xf32, #tpu.memory_space<vmem>>, vector<1x8x64xf32>,
    %c0_91 = arith.constant 0 : index
    %c0_92 = arith.constant 0 : index
    %247 = vector.load %arg16[%c0_91, %c0_92] : memref<8x256xf32, #tpu.memory_space<vmem>>, vector<8x256xf32>
    %c0_93 = arith.constant 0 : index
    %c0_94 = arith.constant 0 : index
    %248 = vector.load %arg7[%c0_93, %c0_94] : memref<64x256xf32, #tpu.memory_space<vmem>>, vector<64x256xf32>
    %cst_95 = arith.constant dense<0.000000e+00> : vector<8x256xf32>
    %249 = tpu.matmul %221, %248, %cst_95 {dimension_numbers = #tpu.dot_dimension_numbers<[1], [0], [0], [1], [0, 0, 1, 1], [], []>} : vector<8x64xf32>, vector<64x256xf32>, vector<8x256xf32> -> vector<8x256xf32>
    %250 = arith.addf %247, %249 : vector<8x256xf32>
    %251 = vector.extract_strided_slice %250 {offsets = [0, 0], sizes = [8, 192], strides = [1, 1]} : vector<8x256xf32> to vector<8x192xf32>
    %252 = arith.negf %251 : vector<8x192xf32>
    %253 = math.exp %252 : vector<8x192xf32>
    %cst_96 = arith.constant 1.000000e+00 : f32
    %254 = vector.broadcast %cst_96 : f32 to vector<8x192xf32>
    %255 = arith.addf %254, %253 : vector<8x192xf32>
    %256 = arith.divf %254, %255 : vector<8x192xf32>
    %257 = vector.extract_strided_slice %250 {offsets = [0, 192], sizes = [8, 64], strides = [1, 1]} : vector<8x256xf32> to vector<8x64xf32>
    %258 = math.tanh %257 : vector<8x64xf32>
    %259 = vector.extract_strided_slice %256 {offsets = [0, 0], sizes = [8, 64], strides = [1, 1]} : vector<8x192xf32> to vector<8x64xf32>
    %260 = vector.extract_strided_slice %256 {offsets = [0, 64], sizes = [8, 64], strides = [1, 1]} : vector<8x192xf32> to vector<8x64xf32>
    %261 = vector.extract_strided_slice %256 {offsets = [0, 128], sizes = [8, 64], strides = [1, 1]} : vector<8x192xf32> to vector<8x64xf32>
    %262 = arith.mulf %260, %219 : vector<8x64xf32>
    %263 = arith.mulf %259, %258 : vector<8x64xf32>
    %264 = arith.addf %262, %263 : vector<8x64xf32>
    %265 = math.tanh %264 : vector<8x64xf32>
    %266 = arith.mulf %261, %265 : vector<8x64xf32>
    %267 = tpu.concatenate %266, %243 in 1 : vector<8x64xf32>, vector<8x64xf32> -> vector<8x128xf32>
    %c0_97 = arith.constant 0 : index
    %c0_98 = arith.constant 0 : index
    %268 = vector.load %arg9[%c0_97, %c0_98] : memref<128x256xf32, #tpu.memory_space<vmem>>, vector<128x256xf32>
    %cst_99 = arith.constant dense<0.000000e+00> : vector<8x256xf32>
    %269 = tpu.matmul %267, %268, %cst_99 {dimension_numbers = #tpu.dot_dimension_numbers<[1], [0], [0], [1], [0, 0, 1, 1], [], []>} : vector<8x128xf32>, vector<128x256xf32>, vector<8x256xf32> -> vector<8x256xf32>
    %c0_100 = arith.constant 0 : index
    %c0_101 = arith.constant 0 : index
    %270 = vector.load %arg10[%c0_100, %c0_101] : memref<1x256xf32, #tpu.memory_space<vmem>>, vector<1x256xf32>
    %271 = vector.broadcast %270 : vector<1x256xf32> to vector<8x256xf32>
    %272 = arith.addf %269, %271 : vector<8x256xf32>
    %273 = vector.extract_strided_slice %272 {offsets = [0, 0], sizes = [8, 192], strides = [1, 1]} : vector<8x256xf32> to vector<8x192xf32>
    %274 = arith.negf %273 : vector<8x192xf32>
    %275 = math.exp %274 : vector<8x192xf32>
    %cst_102 = arith.constant 1.000000e+00 : f32
    %276 = vector.broadcast %cst_102 : f32 to vector<8x192xf32>
    %277 = arith.addf %276, %275 : vector<8x192xf32>
    %278 = arith.divf %276, %277 : vector<8x192xf32>
    %279 = vector.extract_strided_slice %272 {offsets = [0, 192], sizes = [8, 64], strides = [1, 1]} : vector<8x256xf32> to vector<8x64xf32>
    %280 = math.tanh %279 : vector<8x64xf32>
    %281 = vector.extract_strided_slice %278 {offsets = [0, 0], sizes = [8, 64], strides = [1, 1]} : vector<8x192xf32> to vector<8x64xf32>
    %282 = vector.extract_strided_slice %278 {offsets = [0, 64], sizes = [8, 64], strides = [1, 1]} : vector<8x192xf32> to vector<8x64xf32>
    %283 = vector.extract_strided_slice %278 {offsets = [0, 128], sizes = [8, 64], strides = [1, 1]} : vector<8x192xf32> to vector<8x64xf32>
    %284 = arith.mulf %282, %241 : vector<8x64xf32>
    %285 = arith.mulf %281, %280 : vector<8x64xf32>
    %286 = arith.addf %284, %285 : vector<8x64xf32>
    %287 = math.tanh %286 : vector<8x64xf32>
    %288 = arith.mulf %283, %287 : vector<8x64xf32>
    %c5 = arith.constant 5 : index
    %c0_103 = arith.constant 0 : index
    %c0_104 = arith.constant 0 : index
    %289 = vector.load %arg17[%c5, %c0_103, %c0_104] : memref<10x8x64xf32, #tpu.memory_space<vmem>>, vector<1x8x64xf32>
    %290 = vector.shape_cast %289 : vector<1x8x64xf32> to vector<8x64xf32>
    %291 = vector.shape_cast %288 : vector<8x64xf32> to vector<1x8x64xf32>
    tpu.vector_store %arg17[%c5, %c0_103, %c0_104], %291 {strides = array<i32>} : memref<10x8x64xf32, #tpu.memory_space<vmem>>, vector<1x8x64xf32>,
    %c0_105 = arith.constant 0 : index
    %c0_106 = arith.constant 0 : index
    %292 = vector.load %arg16[%c0_105, %c0_106] : memref<8x256xf32, #tpu.memory_space<vmem>>, vector<8x256xf32>
    %c0_107 = arith.constant 0 : index
    %c0_108 = arith.constant 0 : index
    %293 = vector.load %arg7[%c0_107, %c0_108] : memref<64x256xf32, #tpu.memory_space<vmem>>, vector<64x256xf32>
    %cst_109 = arith.constant dense<0.000000e+00> : vector<8x256xf32>
    %294 = tpu.matmul %266, %293, %cst_109 {dimension_numbers = #tpu.dot_dimension_numbers<[1], [0], [0], [1], [0, 0, 1, 1], [], []>} : vector<8x64xf32>, vector<64x256xf32>, vector<8x256xf32> -> vector<8x256xf32>
    %295 = arith.addf %292, %294 : vector<8x256xf32>
    %296 = vector.extract_strided_slice %295 {offsets = [0, 0], sizes = [8, 192], strides = [1, 1]} : vector<8x256xf32> to vector<8x192xf32>
    %297 = arith.negf %296 : vector<8x192xf32>
    %298 = math.exp %297 : vector<8x192xf32>
    %cst_110 = arith.constant 1.000000e+00 : f32
    %299 = vector.broadcast %cst_110 : f32 to vector<8x192xf32>
    %300 = arith.addf %299, %298 : vector<8x192xf32>
    %301 = arith.divf %299, %300 : vector<8x192xf32>
    %302 = vector.extract_strided_slice %295 {offsets = [0, 192], sizes = [8, 64], strides = [1, 1]} : vector<8x256xf32> to vector<8x64xf32>
    %303 = math.tanh %302 : vector<8x64xf32>
    %304 = vector.extract_strided_slice %301 {offsets = [0, 0], sizes = [8, 64], strides = [1, 1]} : vector<8x192xf32> to vector<8x64xf32>
    %305 = vector.extract_strided_slice %301 {offsets = [0, 64], sizes = [8, 64], strides = [1, 1]} : vector<8x192xf32> to vector<8x64xf32>
    %306 = vector.extract_strided_slice %301 {offsets = [0, 128], sizes = [8, 64], strides = [1, 1]} : vector<8x192xf32> to vector<8x64xf32>
    %307 = arith.mulf %305, %264 : vector<8x64xf32>
    %308 = arith.mulf %304, %303 : vector<8x64xf32>
    %309 = arith.addf %307, %308 : vector<8x64xf32>
    %310 = math.tanh %309 : vector<8x64xf32>
    %311 = arith.mulf %306, %310 : vector<8x64xf32>
    %312 = tpu.concatenate %311, %288 in 1 : vector<8x64xf32>, vector<8x64xf32> -> vector<8x128xf32>
    %c0_111 = arith.constant 0 : index
    %c0_112 = arith.constant 0 : index
    %313 = vector.load %arg9[%c0_111, %c0_112] : memref<128x256xf32, #tpu.memory_space<vmem>>, vector<128x256xf32>
    %cst_113 = arith.constant dense<0.000000e+00> : vector<8x256xf32>
    %314 = tpu.matmul %312, %313, %cst_113 {dimension_numbers = #tpu.dot_dimension_numbers<[1], [0], [0], [1], [0, 0, 1, 1], [], []>} : vector<8x128xf32>, vector<128x256xf32>, vector<8x256xf32> -> vector<8x256xf32>
    %c0_114 = arith.constant 0 : index
    %c0_115 = arith.constant 0 : index
    %315 = vector.load %arg10[%c0_114, %c0_115] : memref<1x256xf32, #tpu.memory_space<vmem>>, vector<1x256xf32>
    %316 = vector.broadcast %315 : vector<1x256xf32> to vector<8x256xf32>
    %317 = arith.addf %314, %316 : vector<8x256xf32>
    %318 = vector.extract_strided_slice %317 {offsets = [0, 0], sizes = [8, 192], strides = [1, 1]} : vector<8x256xf32> to vector<8x192xf32>
    %319 = arith.negf %318 : vector<8x192xf32>
    %320 = math.exp %319 : vector<8x192xf32>
    %cst_116 = arith.constant 1.000000e+00 : f32
    %321 = vector.broadcast %cst_116 : f32 to vector<8x192xf32>
    %322 = arith.addf %321, %320 : vector<8x192xf32>
    %323 = arith.divf %321, %322 : vector<8x192xf32>
    %324 = vector.extract_strided_slice %317 {offsets = [0, 192], sizes = [8, 64], strides = [1, 1]} : vector<8x256xf32> to vector<8x64xf32>
    %325 = math.tanh %324 : vector<8x64xf32>
    %326 = vector.extract_strided_slice %323 {offsets = [0, 0], sizes = [8, 64], strides = [1, 1]} : vector<8x192xf32> to vector<8x64xf32>
    %327 = vector.extract_strided_slice %323 {offsets = [0, 64], sizes = [8, 64], strides = [1, 1]} : vector<8x192xf32> to vector<8x64xf32>
    %328 = vector.extract_strided_slice %323 {offsets = [0, 128], sizes = [8, 64], strides = [1, 1]} : vector<8x192xf32> to vector<8x64xf32>
    %329 = arith.mulf %327, %286 : vector<8x64xf32>
    %330 = arith.mulf %326, %325 : vector<8x64xf32>
    %331 = arith.addf %329, %330 : vector<8x64xf32>
    %332 = math.tanh %331 : vector<8x64xf32>
    %333 = arith.mulf %328, %332 : vector<8x64xf32>
    %c6 = arith.constant 6 : index
    %c0_117 = arith.constant 0 : index
    %c0_118 = arith.constant 0 : index
    %334 = vector.load %arg17[%c6, %c0_117, %c0_118] : memref<10x8x64xf32, #tpu.memory_space<vmem>>, vector<1x8x64xf32>
    %335 = vector.shape_cast %334 : vector<1x8x64xf32> to vector<8x64xf32>
    %336 = vector.shape_cast %333 : vector<8x64xf32> to vector<1x8x64xf32>
    tpu.vector_store %arg17[%c6, %c0_117, %c0_118], %336 {strides = array<i32>} : memref<10x8x64xf32, #tpu.memory_space<vmem>>, vector<1x8x64xf32>,
    %c0_119 = arith.constant 0 : index
    %c0_120 = arith.constant 0 : index
    %337 = vector.load %arg16[%c0_119, %c0_120] : memref<8x256xf32, #tpu.memory_space<vmem>>, vector<8x256xf32>
    %c0_121 = arith.constant 0 : index
    %c0_122 = arith.constant 0 : index
    %338 = vector.load %arg7[%c0_121, %c0_122] : memref<64x256xf32, #tpu.memory_space<vmem>>, vector<64x256xf32>
    %cst_123 = arith.constant dense<0.000000e+00> : vector<8x256xf32>
    %339 = tpu.matmul %311, %338, %cst_123 {dimension_numbers = #tpu.dot_dimension_numbers<[1], [0], [0], [1], [0, 0, 1, 1], [], []>} : vector<8x64xf32>, vector<64x256xf32>, vector<8x256xf32> -> vector<8x256xf32>
    %340 = arith.addf %337, %339 : vector<8x256xf32>
    %341 = vector.extract_strided_slice %340 {offsets = [0, 0], sizes = [8, 192], strides = [1, 1]} : vector<8x256xf32> to vector<8x192xf32>
    %342 = arith.negf %341 : vector<8x192xf32>
    %343 = math.exp %342 : vector<8x192xf32>
    %cst_124 = arith.constant 1.000000e+00 : f32
    %344 = vector.broadcast %cst_124 : f32 to vector<8x192xf32>
    %345 = arith.addf %344, %343 : vector<8x192xf32>
    %346 = arith.divf %344, %345 : vector<8x192xf32>
    %347 = vector.extract_strided_slice %340 {offsets = [0, 192], sizes = [8, 64], strides = [1, 1]} : vector<8x256xf32> to vector<8x64xf32>
    %348 = math.tanh %347 : vector<8x64xf32>
    %349 = vector.extract_strided_slice %346 {offsets = [0, 0], sizes = [8, 64], strides = [1, 1]} : vector<8x192xf32> to vector<8x64xf32>
    %350 = vector.extract_strided_slice %346 {offsets = [0, 64], sizes = [8, 64], strides = [1, 1]} : vector<8x192xf32> to vector<8x64xf32>
    %351 = vector.extract_strided_slice %346 {offsets = [0, 128], sizes = [8, 64], strides = [1, 1]} : vector<8x192xf32> to vector<8x64xf32>
    %352 = arith.mulf %350, %309 : vector<8x64xf32>
    %353 = arith.mulf %349, %348 : vector<8x64xf32>
    %354 = arith.addf %352, %353 : vector<8x64xf32>
    %355 = math.tanh %354 : vector<8x64xf32>
    %356 = arith.mulf %351, %355 : vector<8x64xf32>
    %357 = tpu.concatenate %356, %333 in 1 : vector<8x64xf32>, vector<8x64xf32> -> vector<8x128xf32>
    %c0_125 = arith.constant 0 : index
    %c0_126 = arith.constant 0 : index
    %358 = vector.load %arg9[%c0_125, %c0_126] : memref<128x256xf32, #tpu.memory_space<vmem>>, vector<128x256xf32>
    %cst_127 = arith.constant dense<0.000000e+00> : vector<8x256xf32>
    %359 = tpu.matmul %357, %358, %cst_127 {dimension_numbers = #tpu.dot_dimension_numbers<[1], [0], [0], [1], [0, 0, 1, 1], [], []>} : vector<8x128xf32>, vector<128x256xf32>, vector<8x256xf32> -> vector<8x256xf32>
    %c0_128 = arith.constant 0 : index
    %c0_129 = arith.constant 0 : index
    %360 = vector.load %arg10[%c0_128, %c0_129] : memref<1x256xf32, #tpu.memory_space<vmem>>, vector<1x256xf32>
    %361 = vector.broadcast %360 : vector<1x256xf32> to vector<8x256xf32>
    %362 = arith.addf %359, %361 : vector<8x256xf32>
    %363 = vector.extract_strided_slice %362 {offsets = [0, 0], sizes = [8, 192], strides = [1, 1]} : vector<8x256xf32> to vector<8x192xf32>
    %364 = arith.negf %363 : vector<8x192xf32>
    %365 = math.exp %364 : vector<8x192xf32>
    %cst_130 = arith.constant 1.000000e+00 : f32
    %366 = vector.broadcast %cst_130 : f32 to vector<8x192xf32>
    %367 = arith.addf %366, %365 : vector<8x192xf32>
    %368 = arith.divf %366, %367 : vector<8x192xf32>
    %369 = vector.extract_strided_slice %362 {offsets = [0, 192], sizes = [8, 64], strides = [1, 1]} : vector<8x256xf32> to vector<8x64xf32>
    %370 = math.tanh %369 : vector<8x64xf32>
    %371 = vector.extract_strided_slice %368 {offsets = [0, 0], sizes = [8, 64], strides = [1, 1]} : vector<8x192xf32> to vector<8x64xf32>
    %372 = vector.extract_strided_slice %368 {offsets = [0, 64], sizes = [8, 64], strides = [1, 1]} : vector<8x192xf32> to vector<8x64xf32>
    %373 = vector.extract_strided_slice %368 {offsets = [0, 128], sizes = [8, 64], strides = [1, 1]} : vector<8x192xf32> to vector<8x64xf32>
    %374 = arith.mulf %372, %331 : vector<8x64xf32>
    %375 = arith.mulf %371, %370 : vector<8x64xf32>
    %376 = arith.addf %374, %375 : vector<8x64xf32>
    %377 = math.tanh %376 : vector<8x64xf32>
    %378 = arith.mulf %373, %377 : vector<8x64xf32>
    %c7 = arith.constant 7 : index
    %c0_131 = arith.constant 0 : index
    %c0_132 = arith.constant 0 : index
    %379 = vector.load %arg17[%c7, %c0_131, %c0_132] : memref<10x8x64xf32, #tpu.memory_space<vmem>>, vector<1x8x64xf32>
    %380 = vector.shape_cast %379 : vector<1x8x64xf32> to vector<8x64xf32>
    %381 = vector.shape_cast %378 : vector<8x64xf32> to vector<1x8x64xf32>
    tpu.vector_store %arg17[%c7, %c0_131, %c0_132], %381 {strides = array<i32>} : memref<10x8x64xf32, #tpu.memory_space<vmem>>, vector<1x8x64xf32>,
    %c0_133 = arith.constant 0 : index
    %c0_134 = arith.constant 0 : index
    %382 = vector.load %arg16[%c0_133, %c0_134] : memref<8x256xf32, #tpu.memory_space<vmem>>, vector<8x256xf32>
    %c0_135 = arith.constant 0 : index
    %c0_136 = arith.constant 0 : index
    %383 = vector.load %arg7[%c0_135, %c0_136] : memref<64x256xf32, #tpu.memory_space<vmem>>, vector<64x256xf32>
    %cst_137 = arith.constant dense<0.000000e+00> : vector<8x256xf32>
    %384 = tpu.matmul %356, %383, %cst_137 {dimension_numbers = #tpu.dot_dimension_numbers<[1], [0], [0], [1], [0, 0, 1, 1], [], []>} : vector<8x64xf32>, vector<64x256xf32>, vector<8x256xf32> -> vector<8x256xf32>
    %385 = arith.addf %382, %384 : vector<8x256xf32>
    %386 = vector.extract_strided_slice %385 {offsets = [0, 0], sizes = [8, 192], strides = [1, 1]} : vector<8x256xf32> to vector<8x192xf32>
    %387 = arith.negf %386 : vector<8x192xf32>
    %388 = math.exp %387 : vector<8x192xf32>
    %cst_138 = arith.constant 1.000000e+00 : f32
    %389 = vector.broadcast %cst_138 : f32 to vector<8x192xf32>
    %390 = arith.addf %389, %388 : vector<8x192xf32>
    %391 = arith.divf %389, %390 : vector<8x192xf32>
    %392 = vector.extract_strided_slice %385 {offsets = [0, 192], sizes = [8, 64], strides = [1, 1]} : vector<8x256xf32> to vector<8x64xf32>
    %393 = math.tanh %392 : vector<8x64xf32>
    %394 = vector.extract_strided_slice %391 {offsets = [0, 0], sizes = [8, 64], strides = [1, 1]} : vector<8x192xf32> to vector<8x64xf32>
    %395 = vector.extract_strided_slice %391 {offsets = [0, 64], sizes = [8, 64], strides = [1, 1]} : vector<8x192xf32> to vector<8x64xf32>
    %396 = vector.extract_strided_slice %391 {offsets = [0, 128], sizes = [8, 64], strides = [1, 1]} : vector<8x192xf32> to vector<8x64xf32>
    %397 = arith.mulf %395, %354 : vector<8x64xf32>
    %398 = arith.mulf %394, %393 : vector<8x64xf32>
    %399 = arith.addf %397, %398 : vector<8x64xf32>
    %400 = math.tanh %399 : vector<8x64xf32>
    %401 = arith.mulf %396, %400 : vector<8x64xf32>
    %402 = tpu.concatenate %401, %378 in 1 : vector<8x64xf32>, vector<8x64xf32> -> vector<8x128xf32>
    %c0_139 = arith.constant 0 : index
    %c0_140 = arith.constant 0 : index
    %403 = vector.load %arg9[%c0_139, %c0_140] : memref<128x256xf32, #tpu.memory_space<vmem>>, vector<128x256xf32>
    %cst_141 = arith.constant dense<0.000000e+00> : vector<8x256xf32>
    %404 = tpu.matmul %402, %403, %cst_141 {dimension_numbers = #tpu.dot_dimension_numbers<[1], [0], [0], [1], [0, 0, 1, 1], [], []>} : vector<8x128xf32>, vector<128x256xf32>, vector<8x256xf32> -> vector<8x256xf32>
    %c0_142 = arith.constant 0 : index
    %c0_143 = arith.constant 0 : index
    %405 = vector.load %arg10[%c0_142, %c0_143] : memref<1x256xf32, #tpu.memory_space<vmem>>, vector<1x256xf32>
    %406 = vector.broadcast %405 : vector<1x256xf32> to vector<8x256xf32>
    %407 = arith.addf %404, %406 : vector<8x256xf32>
    %408 = vector.extract_strided_slice %407 {offsets = [0, 0], sizes = [8, 192], strides = [1, 1]} : vector<8x256xf32> to vector<8x192xf32>
    %409 = arith.negf %408 : vector<8x192xf32>
    %410 = math.exp %409 : vector<8x192xf32>
    %cst_144 = arith.constant 1.000000e+00 : f32
    %411 = vector.broadcast %cst_144 : f32 to vector<8x192xf32>
    %412 = arith.addf %411, %410 : vector<8x192xf32>
    %413 = arith.divf %411, %412 : vector<8x192xf32>
    %414 = vector.extract_strided_slice %407 {offsets = [0, 192], sizes = [8, 64], strides = [1, 1]} : vector<8x256xf32> to vector<8x64xf32>
    %415 = math.tanh %414 : vector<8x64xf32>
    %416 = vector.extract_strided_slice %413 {offsets = [0, 0], sizes = [8, 64], strides = [1, 1]} : vector<8x192xf32> to vector<8x64xf32>
    %417 = vector.extract_strided_slice %413 {offsets = [0, 64], sizes = [8, 64], strides = [1, 1]} : vector<8x192xf32> to vector<8x64xf32>
    %418 = vector.extract_strided_slice %413 {offsets = [0, 128], sizes = [8, 64], strides = [1, 1]} : vector<8x192xf32> to vector<8x64xf32>
    %419 = arith.mulf %417, %376 : vector<8x64xf32>
    %420 = arith.mulf %416, %415 : vector<8x64xf32>
    %421 = arith.addf %419, %420 : vector<8x64xf32>
    %422 = math.tanh %421 : vector<8x64xf32>
    %423 = arith.mulf %418, %422 : vector<8x64xf32>
    %c8 = arith.constant 8 : index
    %c0_145 = arith.constant 0 : index
    %c0_146 = arith.constant 0 : index
    %424 = vector.load %arg17[%c8, %c0_145, %c0_146] : memref<10x8x64xf32, #tpu.memory_space<vmem>>, vector<1x8x64xf32>
    %425 = vector.shape_cast %424 : vector<1x8x64xf32> to vector<8x64xf32>
    %426 = vector.shape_cast %423 : vector<8x64xf32> to vector<1x8x64xf32>
    tpu.vector_store %arg17[%c8, %c0_145, %c0_146], %426 {strides = array<i32>} : memref<10x8x64xf32, #tpu.memory_space<vmem>>, vector<1x8x64xf32>,
    %c0_147 = arith.constant 0 : index
    %c0_148 = arith.constant 0 : index
    %427 = vector.load %arg16[%c0_147, %c0_148] : memref<8x256xf32, #tpu.memory_space<vmem>>, vector<8x256xf32>
    %c0_149 = arith.constant 0 : index
    %c0_150 = arith.constant 0 : index
    %428 = vector.load %arg7[%c0_149, %c0_150] : memref<64x256xf32, #tpu.memory_space<vmem>>, vector<64x256xf32>
    %cst_151 = arith.constant dense<0.000000e+00> : vector<8x256xf32>
    %429 = tpu.matmul %401, %428, %cst_151 {dimension_numbers = #tpu.dot_dimension_numbers<[1], [0], [0], [1], [0, 0, 1, 1], [], []>} : vector<8x64xf32>, vector<64x256xf32>, vector<8x256xf32> -> vector<8x256xf32>
    %430 = arith.addf %427, %429 : vector<8x256xf32>
    %431 = vector.extract_strided_slice %430 {offsets = [0, 0], sizes = [8, 192], strides = [1, 1]} : vector<8x256xf32> to vector<8x192xf32>
    %432 = arith.negf %431 : vector<8x192xf32>
    %433 = math.exp %432 : vector<8x192xf32>
    %cst_152 = arith.constant 1.000000e+00 : f32
    %434 = vector.broadcast %cst_152 : f32 to vector<8x192xf32>
    %435 = arith.addf %434, %433 : vector<8x192xf32>
    %436 = arith.divf %434, %435 : vector<8x192xf32>
    %437 = vector.extract_strided_slice %430 {offsets = [0, 192], sizes = [8, 64], strides = [1, 1]} : vector<8x256xf32> to vector<8x64xf32>
    %438 = math.tanh %437 : vector<8x64xf32>
    %439 = vector.extract_strided_slice %436 {offsets = [0, 0], sizes = [8, 64], strides = [1, 1]} : vector<8x192xf32> to vector<8x64xf32>
    %440 = vector.extract_strided_slice %436 {offsets = [0, 64], sizes = [8, 64], strides = [1, 1]} : vector<8x192xf32> to vector<8x64xf32>
    %441 = vector.extract_strided_slice %436 {offsets = [0, 128], sizes = [8, 64], strides = [1, 1]} : vector<8x192xf32> to vector<8x64xf32>
    %442 = arith.mulf %440, %399 : vector<8x64xf32>
    %443 = arith.mulf %439, %438 : vector<8x64xf32>
    %444 = arith.addf %442, %443 : vector<8x64xf32>
    %445 = math.tanh %444 : vector<8x64xf32>
    %446 = arith.mulf %441, %445 : vector<8x64xf32>
    %447 = tpu.concatenate %446, %423 in 1 : vector<8x64xf32>, vector<8x64xf32> -> vector<8x128xf32>
    %c0_153 = arith.constant 0 : index
    %c0_154 = arith.constant 0 : index
    %448 = vector.load %arg9[%c0_153, %c0_154] : memref<128x256xf32, #tpu.memory_space<vmem>>, vector<128x256xf32>
    %cst_155 = arith.constant dense<0.000000e+00> : vector<8x256xf32>
    %449 = tpu.matmul %447, %448, %cst_155 {dimension_numbers = #tpu.dot_dimension_numbers<[1], [0], [0], [1], [0, 0, 1, 1], [], []>} : vector<8x128xf32>, vector<128x256xf32>, vector<8x256xf32> -> vector<8x256xf32>
    %c0_156 = arith.constant 0 : index
    %c0_157 = arith.constant 0 : index
    %450 = vector.load %arg10[%c0_156, %c0_157] : memref<1x256xf32, #tpu.memory_space<vmem>>, vector<1x256xf32>
    %451 = vector.broadcast %450 : vector<1x256xf32> to vector<8x256xf32>
    %452 = arith.addf %449, %451 : vector<8x256xf32>
    %453 = vector.extract_strided_slice %452 {offsets = [0, 0], sizes = [8, 192], strides = [1, 1]} : vector<8x256xf32> to vector<8x192xf32>
    %454 = arith.negf %453 : vector<8x192xf32>
    %455 = math.exp %454 : vector<8x192xf32>
    %cst_158 = arith.constant 1.000000e+00 : f32
    %456 = vector.broadcast %cst_158 : f32 to vector<8x192xf32>
    %457 = arith.addf %456, %455 : vector<8x192xf32>
    %458 = arith.divf %456, %457 : vector<8x192xf32>
    %459 = vector.extract_strided_slice %452 {offsets = [0, 192], sizes = [8, 64], strides = [1, 1]} : vector<8x256xf32> to vector<8x64xf32>
    %460 = math.tanh %459 : vector<8x64xf32>
    %461 = vector.extract_strided_slice %458 {offsets = [0, 0], sizes = [8, 64], strides = [1, 1]} : vector<8x192xf32> to vector<8x64xf32>
    %462 = vector.extract_strided_slice %458 {offsets = [0, 64], sizes = [8, 64], strides = [1, 1]} : vector<8x192xf32> to vector<8x64xf32>
    %463 = vector.extract_strided_slice %458 {offsets = [0, 128], sizes = [8, 64], strides = [1, 1]} : vector<8x192xf32> to vector<8x64xf32>
    %464 = arith.mulf %462, %421 : vector<8x64xf32>
    %465 = arith.mulf %461, %460 : vector<8x64xf32>
    %466 = arith.addf %464, %465 : vector<8x64xf32>
    %467 = math.tanh %466 : vector<8x64xf32>
    %468 = arith.mulf %463, %467 : vector<8x64xf32>
    %c9 = arith.constant 9 : index
    %c0_159 = arith.constant 0 : index
    %c0_160 = arith.constant 0 : index
    %469 = vector.load %arg17[%c9, %c0_159, %c0_160] : memref<10x8x64xf32, #tpu.memory_space<vmem>>, vector<1x8x64xf32>
    %470 = vector.shape_cast %469 : vector<1x8x64xf32> to vector<8x64xf32>
    %471 = vector.shape_cast %468 : vector<8x64xf32> to vector<1x8x64xf32>
    tpu.vector_store %arg17[%c9, %c0_159, %c0_160], %471 {strides = array<i32>} : memref<10x8x64xf32, #tpu.memory_space<vmem>>, vector<1x8x64xf32>,
    %cst_161 = arith.constant 0.000000e+00 : f32
    %472 = vector.broadcast %cst_161 : f32 to vector<8x30xf32>
    %c0_162 = arith.constant 0 : index
    %c0_163 = arith.constant 0 : index
    %c0_164 = arith.constant 0 : index
    %473 = vector.load %arg17[%c0_162, %c0_163, %c0_164] : memref<10x8x64xf32, #tpu.memory_space<vmem>>, vector<1x8x64xf32>
    %474 = vector.shape_cast %473 : vector<1x8x64xf32> to vector<8x64xf32>
    %c0_165 = arith.constant 0 : index
    %c0_166 = arith.constant 0 : index
    %475 = vector.load %arg11[%c0_165, %c0_166] : memref<64x64xf32, #tpu.memory_space<vmem>>, vector<64x64xf32>
    %cst_167 = arith.constant dense<0.000000e+00> : vector<8x64xf32>
    %476 = tpu.matmul %474, %475, %cst_167 {dimension_numbers = #tpu.dot_dimension_numbers<[1], [0], [0], [1], [0, 0, 1, 1], [], []>} : vector<8x64xf32>, vector<64x64xf32>, vector<8x64xf32> -> vector<8x64xf32>
    %c0_168 = arith.constant 0 : index
    %c0_169 = arith.constant 0 : index
    %477 = vector.load %arg12[%c0_168, %c0_169] : memref<1x64xf32, #tpu.memory_space<vmem>>, vector<1x64xf32>
    %478 = vector.broadcast %477 : vector<1x64xf32> to vector<8x64xf32>
    %479 = arith.addf %476, %478 : vector<8x64xf32>
    %cst_170 = arith.constant 0.000000e+00 : f32
    %480 = vector.broadcast %cst_170 : f32 to vector<8x64xf32>
    %481 = arith.maximumf %479, %480 : vector<8x64xf32>
    %c0_171 = arith.constant 0 : index
    %c0_172 = arith.constant 0 : index
    %482 = vector.load %arg13[%c0_171, %c0_172] : memref<640x30xf32, #tpu.memory_space<vmem>>, vector<64x30xf32>
    %cst_173 = arith.constant dense<0.000000e+00> : vector<8x30xf32>
    %483 = tpu.matmul %481, %482, %cst_173 {dimension_numbers = #tpu.dot_dimension_numbers<[1], [0], [0], [1], [0, 0, 1, 1], [], []>} : vector<8x64xf32>, vector<64x30xf32>, vector<8x30xf32> -> vector<8x30xf32>
    %484 = arith.addf %472, %483 : vector<8x30xf32>
    %c1_174 = arith.constant 1 : index
    %c0_175 = arith.constant 0 : index
    %c0_176 = arith.constant 0 : index
    %485 = vector.load %arg17[%c1_174, %c0_175, %c0_176] : memref<10x8x64xf32, #tpu.memory_space<vmem>>, vector<1x8x64xf32>
    %486 = vector.shape_cast %485 : vector<1x8x64xf32> to vector<8x64xf32>
    %c0_177 = arith.constant 0 : index
    %c0_178 = arith.constant 0 : index
    %487 = vector.load %arg11[%c0_177, %c0_178] : memref<64x64xf32, #tpu.memory_space<vmem>>, vector<64x64xf32>
    %cst_179 = arith.constant dense<0.000000e+00> : vector<8x64xf32>
    %488 = tpu.matmul %486, %487, %cst_179 {dimension_numbers = #tpu.dot_dimension_numbers<[1], [0], [0], [1], [0, 0, 1, 1], [], []>} : vector<8x64xf32>, vector<64x64xf32>, vector<8x64xf32> -> vector<8x64xf32>
    %c0_180 = arith.constant 0 : index
    %c0_181 = arith.constant 0 : index
    %489 = vector.load %arg12[%c0_180, %c0_181] : memref<1x64xf32, #tpu.memory_space<vmem>>, vector<1x64xf32>
    %490 = vector.broadcast %489 : vector<1x64xf32> to vector<8x64xf32>
    %491 = arith.addf %488, %490 : vector<8x64xf32>
    %cst_182 = arith.constant 0.000000e+00 : f32
    %492 = vector.broadcast %cst_182 : f32 to vector<8x64xf32>
    %493 = arith.maximumf %491, %492 : vector<8x64xf32>
    %c64 = arith.constant 64 : index
    %c0_183 = arith.constant 0 : index
    %494 = vector.load %arg13[%c64, %c0_183] : memref<640x30xf32, #tpu.memory_space<vmem>>, vector<64x30xf32>
    %cst_184 = arith.constant dense<0.000000e+00> : vector<8x30xf32>
    %495 = tpu.matmul %493, %494, %cst_184 {dimension_numbers = #tpu.dot_dimension_numbers<[1], [0], [0], [1], [0, 0, 1, 1], [], []>} : vector<8x64xf32>, vector<64x30xf32>, vector<8x30xf32> -> vector<8x30xf32>
    %496 = arith.addf %484, %495 : vector<8x30xf32>
    %c2_185 = arith.constant 2 : index
    %c0_186 = arith.constant 0 : index
    %c0_187 = arith.constant 0 : index
    %497 = vector.load %arg17[%c2_185, %c0_186, %c0_187] : memref<10x8x64xf32, #tpu.memory_space<vmem>>, vector<1x8x64xf32>
    %498 = vector.shape_cast %497 : vector<1x8x64xf32> to vector<8x64xf32>
    %c0_188 = arith.constant 0 : index
    %c0_189 = arith.constant 0 : index
    %499 = vector.load %arg11[%c0_188, %c0_189] : memref<64x64xf32, #tpu.memory_space<vmem>>, vector<64x64xf32>
    %cst_190 = arith.constant dense<0.000000e+00> : vector<8x64xf32>
    %500 = tpu.matmul %498, %499, %cst_190 {dimension_numbers = #tpu.dot_dimension_numbers<[1], [0], [0], [1], [0, 0, 1, 1], [], []>} : vector<8x64xf32>, vector<64x64xf32>, vector<8x64xf32> -> vector<8x64xf32>
    %c0_191 = arith.constant 0 : index
    %c0_192 = arith.constant 0 : index
    %501 = vector.load %arg12[%c0_191, %c0_192] : memref<1x64xf32, #tpu.memory_space<vmem>>, vector<1x64xf32>
    %502 = vector.broadcast %501 : vector<1x64xf32> to vector<8x64xf32>
    %503 = arith.addf %500, %502 : vector<8x64xf32>
    %cst_193 = arith.constant 0.000000e+00 : f32
    %504 = vector.broadcast %cst_193 : f32 to vector<8x64xf32>
    %505 = arith.maximumf %503, %504 : vector<8x64xf32>
    %c128 = arith.constant 128 : index
    %c0_194 = arith.constant 0 : index
    %506 = vector.load %arg13[%c128, %c0_194] : memref<640x30xf32, #tpu.memory_space<vmem>>, vector<64x30xf32>
    %cst_195 = arith.constant dense<0.000000e+00> : vector<8x30xf32>
    %507 = tpu.matmul %505, %506, %cst_195 {dimension_numbers = #tpu.dot_dimension_numbers<[1], [0], [0], [1], [0, 0, 1, 1], [], []>} : vector<8x64xf32>, vector<64x30xf32>, vector<8x30xf32> -> vector<8x30xf32>
    %508 = arith.addf %496, %507 : vector<8x30xf32>
    %c3_196 = arith.constant 3 : index
    %c0_197 = arith.constant 0 : index
    %c0_198 = arith.constant 0 : index
    %509 = vector.load %arg17[%c3_196, %c0_197, %c0_198] : memref<10x8x64xf32, #tpu.memory_space<vmem>>, vector<1x8x64xf32>
    %510 = vector.shape_cast %509 : vector<1x8x64xf32> to vector<8x64xf32>
    %c0_199 = arith.constant 0 : index
    %c0_200 = arith.constant 0 : index
    %511 = vector.load %arg11[%c0_199, %c0_200] : memref<64x64xf32, #tpu.memory_space<vmem>>, vector<64x64xf32>
    %cst_201 = arith.constant dense<0.000000e+00> : vector<8x64xf32>
    %512 = tpu.matmul %510, %511, %cst_201 {dimension_numbers = #tpu.dot_dimension_numbers<[1], [0], [0], [1], [0, 0, 1, 1], [], []>} : vector<8x64xf32>, vector<64x64xf32>, vector<8x64xf32> -> vector<8x64xf32>
    %c0_202 = arith.constant 0 : index
    %c0_203 = arith.constant 0 : index
    %513 = vector.load %arg12[%c0_202, %c0_203] : memref<1x64xf32, #tpu.memory_space<vmem>>, vector<1x64xf32>
    %514 = vector.broadcast %513 : vector<1x64xf32> to vector<8x64xf32>
    %515 = arith.addf %512, %514 : vector<8x64xf32>
    %cst_204 = arith.constant 0.000000e+00 : f32
    %516 = vector.broadcast %cst_204 : f32 to vector<8x64xf32>
    %517 = arith.maximumf %515, %516 : vector<8x64xf32>
    %c192 = arith.constant 192 : index
    %c0_205 = arith.constant 0 : index
    %518 = vector.load %arg13[%c192, %c0_205] : memref<640x30xf32, #tpu.memory_space<vmem>>, vector<64x30xf32>
    %cst_206 = arith.constant dense<0.000000e+00> : vector<8x30xf32>
    %519 = tpu.matmul %517, %518, %cst_206 {dimension_numbers = #tpu.dot_dimension_numbers<[1], [0], [0], [1], [0, 0, 1, 1], [], []>} : vector<8x64xf32>, vector<64x30xf32>, vector<8x30xf32> -> vector<8x30xf32>
    %520 = arith.addf %508, %519 : vector<8x30xf32>
    %c4_207 = arith.constant 4 : index
    %c0_208 = arith.constant 0 : index
    %c0_209 = arith.constant 0 : index
    %521 = vector.load %arg17[%c4_207, %c0_208, %c0_209] : memref<10x8x64xf32, #tpu.memory_space<vmem>>, vector<1x8x64xf32>
    %522 = vector.shape_cast %521 : vector<1x8x64xf32> to vector<8x64xf32>
    %c0_210 = arith.constant 0 : index
    %c0_211 = arith.constant 0 : index
    %523 = vector.load %arg11[%c0_210, %c0_211] : memref<64x64xf32, #tpu.memory_space<vmem>>, vector<64x64xf32>
    %cst_212 = arith.constant dense<0.000000e+00> : vector<8x64xf32>
    %524 = tpu.matmul %522, %523, %cst_212 {dimension_numbers = #tpu.dot_dimension_numbers<[1], [0], [0], [1], [0, 0, 1, 1], [], []>} : vector<8x64xf32>, vector<64x64xf32>, vector<8x64xf32> -> vector<8x64xf32>
    %c0_213 = arith.constant 0 : index
    %c0_214 = arith.constant 0 : index
    %525 = vector.load %arg12[%c0_213, %c0_214] : memref<1x64xf32, #tpu.memory_space<vmem>>, vector<1x64xf32>
    %526 = vector.broadcast %525 : vector<1x64xf32> to vector<8x64xf32>
    %527 = arith.addf %524, %526 : vector<8x64xf32>
    %cst_215 = arith.constant 0.000000e+00 : f32
    %528 = vector.broadcast %cst_215 : f32 to vector<8x64xf32>
    %529 = arith.maximumf %527, %528 : vector<8x64xf32>
    %c256 = arith.constant 256 : index
    %c0_216 = arith.constant 0 : index
    %530 = vector.load %arg13[%c256, %c0_216] : memref<640x30xf32, #tpu.memory_space<vmem>>, vector<64x30xf32>
    %cst_217 = arith.constant dense<0.000000e+00> : vector<8x30xf32>
    %531 = tpu.matmul %529, %530, %cst_217 {dimension_numbers = #tpu.dot_dimension_numbers<[1], [0], [0], [1], [0, 0, 1, 1], [], []>} : vector<8x64xf32>, vector<64x30xf32>, vector<8x30xf32> -> vector<8x30xf32>
    %532 = arith.addf %520, %531 : vector<8x30xf32>
    %c5_218 = arith.constant 5 : index
    %c0_219 = arith.constant 0 : index
    %c0_220 = arith.constant 0 : index
    %533 = vector.load %arg17[%c5_218, %c0_219, %c0_220] : memref<10x8x64xf32, #tpu.memory_space<vmem>>, vector<1x8x64xf32>
    %534 = vector.shape_cast %533 : vector<1x8x64xf32> to vector<8x64xf32>
    %c0_221 = arith.constant 0 : index
    %c0_222 = arith.constant 0 : index
    %535 = vector.load %arg11[%c0_221, %c0_222] : memref<64x64xf32, #tpu.memory_space<vmem>>, vector<64x64xf32>
    %cst_223 = arith.constant dense<0.000000e+00> : vector<8x64xf32>
    %536 = tpu.matmul %534, %535, %cst_223 {dimension_numbers = #tpu.dot_dimension_numbers<[1], [0], [0], [1], [0, 0, 1, 1], [], []>} : vector<8x64xf32>, vector<64x64xf32>, vector<8x64xf32> -> vector<8x64xf32>
    %c0_224 = arith.constant 0 : index
    %c0_225 = arith.constant 0 : index
    %537 = vector.load %arg12[%c0_224, %c0_225] : memref<1x64xf32, #tpu.memory_space<vmem>>, vector<1x64xf32>
    %538 = vector.broadcast %537 : vector<1x64xf32> to vector<8x64xf32>
    %539 = arith.addf %536, %538 : vector<8x64xf32>
    %cst_226 = arith.constant 0.000000e+00 : f32
    %540 = vector.broadcast %cst_226 : f32 to vector<8x64xf32>
    %541 = arith.maximumf %539, %540 : vector<8x64xf32>
    %c320 = arith.constant 320 : index
    %c0_227 = arith.constant 0 : index
    %542 = vector.load %arg13[%c320, %c0_227] : memref<640x30xf32, #tpu.memory_space<vmem>>, vector<64x30xf32>
    %cst_228 = arith.constant dense<0.000000e+00> : vector<8x30xf32>
    %543 = tpu.matmul %541, %542, %cst_228 {dimension_numbers = #tpu.dot_dimension_numbers<[1], [0], [0], [1], [0, 0, 1, 1], [], []>} : vector<8x64xf32>, vector<64x30xf32>, vector<8x30xf32> -> vector<8x30xf32>
    %544 = arith.addf %532, %543 : vector<8x30xf32>
    %c6_229 = arith.constant 6 : index
    %c0_230 = arith.constant 0 : index
    %c0_231 = arith.constant 0 : index
    %545 = vector.load %arg17[%c6_229, %c0_230, %c0_231] : memref<10x8x64xf32, #tpu.memory_space<vmem>>, vector<1x8x64xf32>
    %546 = vector.shape_cast %545 : vector<1x8x64xf32> to vector<8x64xf32>
    %c0_232 = arith.constant 0 : index
    %c0_233 = arith.constant 0 : index
    %547 = vector.load %arg11[%c0_232, %c0_233] : memref<64x64xf32, #tpu.memory_space<vmem>>, vector<64x64xf32>
    %cst_234 = arith.constant dense<0.000000e+00> : vector<8x64xf32>
    %548 = tpu.matmul %546, %547, %cst_234 {dimension_numbers = #tpu.dot_dimension_numbers<[1], [0], [0], [1], [0, 0, 1, 1], [], []>} : vector<8x64xf32>, vector<64x64xf32>, vector<8x64xf32> -> vector<8x64xf32>
    %c0_235 = arith.constant 0 : index
    %c0_236 = arith.constant 0 : index
    %549 = vector.load %arg12[%c0_235, %c0_236] : memref<1x64xf32, #tpu.memory_space<vmem>>, vector<1x64xf32>
    %550 = vector.broadcast %549 : vector<1x64xf32> to vector<8x64xf32>
    %551 = arith.addf %548, %550 : vector<8x64xf32>
    %cst_237 = arith.constant 0.000000e+00 : f32
    %552 = vector.broadcast %cst_237 : f32 to vector<8x64xf32>
    %553 = arith.maximumf %551, %552 : vector<8x64xf32>
    %c384 = arith.constant 384 : index
    %c0_238 = arith.constant 0 : index
    %554 = vector.load %arg13[%c384, %c0_238] : memref<640x30xf32, #tpu.memory_space<vmem>>, vector<64x30xf32>
    %cst_239 = arith.constant dense<0.000000e+00> : vector<8x30xf32>
    %555 = tpu.matmul %553, %554, %cst_239 {dimension_numbers = #tpu.dot_dimension_numbers<[1], [0], [0], [1], [0, 0, 1, 1], [], []>} : vector<8x64xf32>, vector<64x30xf32>, vector<8x30xf32> -> vector<8x30xf32>
    %556 = arith.addf %544, %555 : vector<8x30xf32>
    %c7_240 = arith.constant 7 : index
    %c0_241 = arith.constant 0 : index
    %c0_242 = arith.constant 0 : index
    %557 = vector.load %arg17[%c7_240, %c0_241, %c0_242] : memref<10x8x64xf32, #tpu.memory_space<vmem>>, vector<1x8x64xf32>
    %558 = vector.shape_cast %557 : vector<1x8x64xf32> to vector<8x64xf32>
    %c0_243 = arith.constant 0 : index
    %c0_244 = arith.constant 0 : index
    %559 = vector.load %arg11[%c0_243, %c0_244] : memref<64x64xf32, #tpu.memory_space<vmem>>, vector<64x64xf32>
    %cst_245 = arith.constant dense<0.000000e+00> : vector<8x64xf32>
    %560 = tpu.matmul %558, %559, %cst_245 {dimension_numbers = #tpu.dot_dimension_numbers<[1], [0], [0], [1], [0, 0, 1, 1], [], []>} : vector<8x64xf32>, vector<64x64xf32>, vector<8x64xf32> -> vector<8x64xf32>
    %c0_246 = arith.constant 0 : index
    %c0_247 = arith.constant 0 : index
    %561 = vector.load %arg12[%c0_246, %c0_247] : memref<1x64xf32, #tpu.memory_space<vmem>>, vector<1x64xf32>
    %562 = vector.broadcast %561 : vector<1x64xf32> to vector<8x64xf32>
    %563 = arith.addf %560, %562 : vector<8x64xf32>
    %cst_248 = arith.constant 0.000000e+00 : f32
    %564 = vector.broadcast %cst_248 : f32 to vector<8x64xf32>
    %565 = arith.maximumf %563, %564 : vector<8x64xf32>
    %c448 = arith.constant 448 : index
    %c0_249 = arith.constant 0 : index
    %566 = vector.load %arg13[%c448, %c0_249] : memref<640x30xf32, #tpu.memory_space<vmem>>, vector<64x30xf32>
    %cst_250 = arith.constant dense<0.000000e+00> : vector<8x30xf32>
    %567 = tpu.matmul %565, %566, %cst_250 {dimension_numbers = #tpu.dot_dimension_numbers<[1], [0], [0], [1], [0, 0, 1, 1], [], []>} : vector<8x64xf32>, vector<64x30xf32>, vector<8x30xf32> -> vector<8x30xf32>
    %568 = arith.addf %556, %567 : vector<8x30xf32>
    %c8_251 = arith.constant 8 : index
    %c0_252 = arith.constant 0 : index
    %c0_253 = arith.constant 0 : index
    %569 = vector.load %arg17[%c8_251, %c0_252, %c0_253] : memref<10x8x64xf32, #tpu.memory_space<vmem>>, vector<1x8x64xf32>
    %570 = vector.shape_cast %569 : vector<1x8x64xf32> to vector<8x64xf32>
    %c0_254 = arith.constant 0 : index
    %c0_255 = arith.constant 0 : index
    %571 = vector.load %arg11[%c0_254, %c0_255] : memref<64x64xf32, #tpu.memory_space<vmem>>, vector<64x64xf32>
    %cst_256 = arith.constant dense<0.000000e+00> : vector<8x64xf32>
    %572 = tpu.matmul %570, %571, %cst_256 {dimension_numbers = #tpu.dot_dimension_numbers<[1], [0], [0], [1], [0, 0, 1, 1], [], []>} : vector<8x64xf32>, vector<64x64xf32>, vector<8x64xf32> -> vector<8x64xf32>
    %c0_257 = arith.constant 0 : index
    %c0_258 = arith.constant 0 : index
    %573 = vector.load %arg12[%c0_257, %c0_258] : memref<1x64xf32, #tpu.memory_space<vmem>>, vector<1x64xf32>
    %574 = vector.broadcast %573 : vector<1x64xf32> to vector<8x64xf32>
    %575 = arith.addf %572, %574 : vector<8x64xf32>
    %cst_259 = arith.constant 0.000000e+00 : f32
    %576 = vector.broadcast %cst_259 : f32 to vector<8x64xf32>
    %577 = arith.maximumf %575, %576 : vector<8x64xf32>
    %c512 = arith.constant 512 : index
    %c0_260 = arith.constant 0 : index
    %578 = vector.load %arg13[%c512, %c0_260] : memref<640x30xf32, #tpu.memory_space<vmem>>, vector<64x30xf32>
    %cst_261 = arith.constant dense<0.000000e+00> : vector<8x30xf32>
    %579 = tpu.matmul %577, %578, %cst_261 {dimension_numbers = #tpu.dot_dimension_numbers<[1], [0], [0], [1], [0, 0, 1, 1], [], []>} : vector<8x64xf32>, vector<64x30xf32>, vector<8x30xf32> -> vector<8x30xf32>
    %580 = arith.addf %568, %579 : vector<8x30xf32>
    %c9_262 = arith.constant 9 : index
    %c0_263 = arith.constant 0 : index
    %c0_264 = arith.constant 0 : index
    %581 = vector.load %arg17[%c9_262, %c0_263, %c0_264] : memref<10x8x64xf32, #tpu.memory_space<vmem>>, vector<1x8x64xf32>
    %582 = vector.shape_cast %581 : vector<1x8x64xf32> to vector<8x64xf32>
    %c0_265 = arith.constant 0 : index
    %c0_266 = arith.constant 0 : index
    %583 = vector.load %arg11[%c0_265, %c0_266] : memref<64x64xf32, #tpu.memory_space<vmem>>, vector<64x64xf32>
    %cst_267 = arith.constant dense<0.000000e+00> : vector<8x64xf32>
    %584 = tpu.matmul %582, %583, %cst_267 {dimension_numbers = #tpu.dot_dimension_numbers<[1], [0], [0], [1], [0, 0, 1, 1], [], []>} : vector<8x64xf32>, vector<64x64xf32>, vector<8x64xf32> -> vector<8x64xf32>
    %c0_268 = arith.constant 0 : index
    %c0_269 = arith.constant 0 : index
    %585 = vector.load %arg12[%c0_268, %c0_269] : memref<1x64xf32, #tpu.memory_space<vmem>>, vector<1x64xf32>
    %586 = vector.broadcast %585 : vector<1x64xf32> to vector<8x64xf32>
    %587 = arith.addf %584, %586 : vector<8x64xf32>
    %cst_270 = arith.constant 0.000000e+00 : f32
    %588 = vector.broadcast %cst_270 : f32 to vector<8x64xf32>
    %589 = arith.maximumf %587, %588 : vector<8x64xf32>
    %c576 = arith.constant 576 : index
    %c0_271 = arith.constant 0 : index
    %590 = vector.load %arg13[%c576, %c0_271] : memref<640x30xf32, #tpu.memory_space<vmem>>, vector<64x30xf32>
    %cst_272 = arith.constant dense<0.000000e+00> : vector<8x30xf32>
    %591 = tpu.matmul %589, %590, %cst_272 {dimension_numbers = #tpu.dot_dimension_numbers<[1], [0], [0], [1], [0, 0, 1, 1], [], []>} : vector<8x64xf32>, vector<64x30xf32>, vector<8x30xf32> -> vector<8x30xf32>
    %592 = arith.addf %580, %591 : vector<8x30xf32>
    %c0_273 = arith.constant 0 : index
    %c0_274 = arith.constant 0 : index
    %593 = vector.load %arg14[%c0_273, %c0_274] : memref<1x30xf32, #tpu.memory_space<vmem>>, vector<1x30xf32>
    %594 = vector.broadcast %593 : vector<1x30xf32> to vector<8x30xf32>
    %595 = arith.addf %592, %594 : vector<8x30xf32>
    %c0_275 = arith.constant 0 : index
    %c0_276 = arith.constant 0 : index
    %596 = vector.load %arg15[%c0_275, %c0_276] : memref<8x30xf32, #tpu.memory_space<vmem>>, vector<8x30xf32>
    tpu.vector_store %arg15[%c0_275, %c0_276], %595 {strides = array<i32>} : memref<8x30xf32, #tpu.memory_space<vmem>>, vector<8x30xf32>,
    return
  }
  func.func @transform_0(%arg0: i32) -> (i32, i32) {
    %c0_i32 = arith.constant 0 : i32
    %c0_i32_0 = arith.constant 0 : i32
    return %arg0, %c0_i32 : i32, i32
  }
  func.func @transform_1(%arg0: i32) -> (i32, i32) {
    %c0_i32 = arith.constant 0 : i32
    %c0_i32_0 = arith.constant 0 : i32
    %c0_i32_1 = arith.constant 0 : i32
    return %c0_i32, %c0_i32_0 : i32, i32
  }
  func.func @transform_2(%arg0: i32) -> (i32, i32) {
    %c0_i32 = arith.constant 0 : i32
    %c0_i32_0 = arith.constant 0 : i32
    %c0_i32_1 = arith.constant 0 : i32
    return %c0_i32, %c0_i32_0 : i32, i32
  }
  func.func @transform_3(%arg0: i32) -> (i32, i32) {
    %c0_i32 = arith.constant 0 : i32
    %c0_i32_0 = arith.constant 0 : i32
    %c0_i32_1 = arith.constant 0 : i32
    return %c0_i32, %c0_i32_0 : i32, i32
  }
  func.func @transform_4(%arg0: i32) -> (i32, i32) {
    %c0_i32 = arith.constant 0 : i32
    %c0_i32_0 = arith.constant 0 : i32
    %c0_i32_1 = arith.constant 0 : i32
    return %c0_i32, %c0_i32_0 : i32, i32
  }
  func.func @transform_5(%arg0: i32) -> (i32, i32) {
    %c0_i32 = arith.constant 0 : i32
    %c0_i32_0 = arith.constant 0 : i32
    %c0_i32_1 = arith.constant 0 : i32
    return %c0_i32, %c0_i32_0 : i32, i32
  }
  func.func @transform_6(%arg0: i32) -> (i32, i32) {
    %c0_i32 = arith.constant 0 : i32
    %c0_i32_0 = arith.constant 0 : i32
    %c0_i32_1 = arith.constant 0 : i32
    return %c0_i32, %c0_i32_0 : i32, i32
  }
  func.func @transform_7(%arg0: i32) -> (i32, i32) {
    %c0_i32 = arith.constant 0 : i32
    %c0_i32_0 = arith.constant 0 : i32
    %c0_i32_1 = arith.constant 0 : i32
    return %c0_i32, %c0_i32_0 : i32, i32
  }
  func.func @transform_8(%arg0: i32) -> (i32, i32) {
    %c0_i32 = arith.constant 0 : i32
    %c0_i32_0 = arith.constant 0 : i32
    %c0_i32_1 = arith.constant 0 : i32
    return %c0_i32, %c0_i32_0 : i32, i32
  }
  func.func @transform_9(%arg0: i32) -> (i32, i32) {
    %c0_i32 = arith.constant 0 : i32
    %c0_i32_0 = arith.constant 0 : i32
    %c0_i32_1 = arith.constant 0 : i32
    return %c0_i32, %c0_i32_0 : i32, i32
  }
  func.func @transform_10(%arg0: i32) -> (i32, i32) {
    %c0_i32 = arith.constant 0 : i32
    %c0_i32_0 = arith.constant 0 : i32
    %c0_i32_1 = arith.constant 0 : i32
    return %c0_i32, %c0_i32_0 : i32, i32
  }
  func.func @transform_11(%arg0: i32) -> (i32, i32) {
    %c0_i32 = arith.constant 0 : i32
    %c0_i32_0 = arith.constant 0 : i32
    %c0_i32_1 = arith.constant 0 : i32
    return %c0_i32, %c0_i32_0 : i32, i32
  }
  func.func @transform_12(%arg0: i32) -> (i32, i32) {
    %c0_i32 = arith.constant 0 : i32
    %c0_i32_0 = arith.constant 0 : i32
    %c0_i32_1 = arith.constant 0 : i32
    return %c0_i32, %c0_i32_0 : i32, i32
  }
  func.func @transform_13(%arg0: i32) -> (i32, i32) {
    %c0_i32 = arith.constant 0 : i32
    %c0_i32_0 = arith.constant 0 : i32
    %c0_i32_1 = arith.constant 0 : i32
    return %c0_i32, %c0_i32_0 : i32, i32
  }
  func.func @transform_14(%arg0: i32) -> (i32, i32) {
    %c0_i32 = arith.constant 0 : i32
    %c0_i32_0 = arith.constant 0 : i32
    return %arg0, %c0_i32 : i32, i32
  }
}

</mosaic_0001>

<llo_original>
// kernel: tpu_custom_call.1
$region0: #{tpu_custom_call.1}
  #allocation0 [shape = 'u32[]', space=smem, size = 0x4, offset = 0x4, fixed_abs, tag = 'smem constant byte address 0x4 - core index']
  #allocation1 [shape = 'u32[144,128]{1,0:T(1,128)}', space=vmem, size = 0x12000, scoped, tag = 'internal scratch']
  #allocation2 [shape = 'f32[8,256]{1,0:T(8,128)}', space=vmem, size = 0x2000, scoped, tag = 'scratch operand']
  #allocation3 [shape = 'f32[10,8,64]{2,1,0:T(8,128)}', space=vmem, size = 0xa000, scoped, tag = 'scratch operand']
  %s0 = inlined_call_operand.vmem [shape: f32[16,3], index: 0, kind: input, shape index: {}]
  %s1 = inlined_call_operand.vmem [shape: f32[3,64], index: 1, kind: input, shape index: {}]
  %s2 = inlined_call_operand.vmem [shape: f32[1,64], index: 2, kind: input, shape index: {}]
  %s3 = inlined_call_operand.vmem [shape: f32[64,64], index: 3, kind: input, shape index: {}]
  %s4 = inlined_call_operand.vmem [shape: f32[1,64], index: 4, kind: input, shape index: {}]
  %s5 = inlined_call_operand.vmem [shape: f32[64,256], index: 5, kind: input, shape index: {}]
  %s6 = inlined_call_operand.vmem [shape: f32[64,256], index: 6, kind: input, shape index: {}]
  %s7 = inlined_call_operand.vmem [shape: f32[1,256], index: 7, kind: input, shape index: {}]
  %s8 = inlined_call_operand.vmem [shape: f32[128,256], index: 8, kind: input, shape index: {}]
  %s9 = inlined_call_operand.vmem [shape: f32[1,256], index: 9, kind: input, shape index: {}]
  %s10 = inlined_call_operand.vmem [shape: f32[64,64], index: 10, kind: input, shape index: {}]
  %s11 = inlined_call_operand.vmem [shape: f32[1,64], index: 11, kind: input, shape index: {}]
  %s12 = inlined_call_operand.vmem [shape: f32[640,30], index: 12, kind: input, shape index: {}]
  %s13 = inlined_call_operand.vmem [shape: f32[1,30], index: 13, kind: input, shape index: {}]
  %s14 = inlined_call_operand.hbm [shape: f32[16,30], index: 14, kind: output, shape index: {}]
  %s15 = sld [smem:[#allocation0]]
  $region89: #{tpu_custom_call.1} parent=0
    _
  %s17 = ssub.s32 1, %s15
  %s18 = scalar_select 0, %s17, %s15
  $region1: #{tpu_custom_call.1} parent=0
    #allocation4 [shape = 'u8[8192]{0}', space=vmem, size = 0x2000, scoped, tag = 'output window, operand 0']
    #allocation5 [shape = 's32[2]{0}', space=sflag, size = 0x8, scoped, tag = 'scoped memory for tpu_custom_call.1']
    %19 = vsyncpa [#allocation5], 0
    %s20 = scalar_lea.sflag [#allocation5], 1
    %21 = vsyncpa %s20, 0
    loop: start=0, step=1, limit=4
    $region2: #{tpu_custom_call.1} parent=1 // loop_pre_header
      _
    $region3: #{tpu_custom_call.1} parent=1 // loop_header
      %s23 = sphi 0, %s27
      %p24 = scmp.ge.s32.totalorder %s23, 4
      %s33 = sphi 0, %s35
      %s36 = sphi 0, %s33
      %s37 = sphi 0, %s36
      %s53 = sphi 0, %s37
      %s57 = sphi 0, %s57
      %s59 = sphi 0, %s57
      %s60 = sphi 0, %s59
      %s74 = sphi 0, %s60
      %s78 = sphi 0, %s78
      %s80 = sphi 0, %s78
      %s81 = sphi 0, %s80
      %s95 = sphi 0, %s81
      %s99 = sphi 0, %s99
      %s101 = sphi 0, %s99
      %s102 = sphi 0, %s101
      %s116 = sphi 0, %s102
      %s120 = sphi 0, %s120
      %s122 = sphi 0, %s120
      %s123 = sphi 0, %s122
      %s137 = sphi 0, %s123
      %s141 = sphi 0, %s141
      %s143 = sphi 0, %s141
      %s144 = sphi 0, %s143
      %s158 = sphi 0, %s144
      %s162 = sphi 0, %s162
      %s164 = sphi 0, %s162
      %s165 = sphi 0, %s164
      %s179 = sphi 0, %s165
      %s183 = sphi 0, %s183
      %s185 = sphi 0, %s183
      %s186 = sphi 0, %s185
      %s200 = sphi 0, %s186
      %s204 = sphi 0, %s204
      %s206 = sphi 0, %s204
      %s207 = sphi 0, %s206
      %s221 = sphi 0, %s207
      %s225 = sphi 0, %s225
      %s227 = sphi 0, %s225
      %s228 = sphi 0, %s227
      %s242 = sphi 0, %s228
      %s246 = sphi 0, %s246
      %s248 = sphi 0, %s246
      %s249 = sphi 0, %s248
      %s263 = sphi 0, %s249
      %s267 = sphi 0, %s267
      %s269 = sphi 0, %s267
      %s270 = sphi 0, %s269
      %s284 = sphi 0, %s270
      %s288 = sphi 0, %s288
      %s290 = sphi 0, %s288
      %s291 = sphi 0, %s290
      %s305 = sphi 0, %s291
      %s309 = sphi 0, %s309
      %s311 = sphi 0, %s309
      %s312 = sphi 0, %s311
      %s326 = sphi 0, %s312
      %s332 = sphi 0, %s334
      %s335 = sphi 0, %s332
      %s336 = sphi 0, %s335
      %s352 = sphi 0, %s336
    $region4: #{tpu_custom_call.1} parent=1 // loop_header_branch
      %26 = sbr.rel (%p24) target = $region8
    $region5: #{tpu_custom_call.1} parent=1 // loop_body
      %s28 = ssub.s32 %s23, 1
      %s29 = ssub.s32 %s23, 2
      %s30 = sadd.s32 %s23, 1
      %s31 = ssub.s32 %s23, %s30
      %p32 = scmp.eq.s32.totalorder %s31, 0
      %s34 = sadd.s32 %s33, 1
      %s35 = scalar_select %p32, %s33, %s34
      %p38 = pneg %p32
      %p39 = scmp.eq.s32.totalorder %s23, 1
      %p40 = por %p38, %p39
      %p41 = scmp.ne.s32.totalorder %s33, %s36
      %p42 = scmp.eq.s32.totalorder %s23, 0
      %p43 = por %p41, %p42
      %p44 = scmp.ne.s32.totalorder %s33, %s36
      %p45 = scmp.eq.s32.totalorder %s28, 1
      %p46 = por %p44, %p45
      %p47 = scmp.ne.s32.totalorder %s36, %s37
      %p48 = scmp.eq.s32.totalorder %s28, 0
      %p49 = por %p47, %p48
      %p50 = scmp.ne.s32.totalorder %s36, %s37
      %p51 = scmp.eq.s32.totalorder %s29, 1
      %p52 = por %p50, %p51
      %p54 = scmp.ne.s32.totalorder %s37, %s53
      %p55 = scmp.eq.s32.totalorder %s29, 0
      %p56 = por %p54, %p55
      %s58 = sadd.s32 %s57, 1
      %p61 = scmp.eq.s32.totalorder %s23, 1
      %p62 = scmp.ne.s32.totalorder %s57, %s59
      %p63 = scmp.eq.s32.totalorder %s23, 0
      %p64 = por %p62, %p63
      %p65 = scmp.ne.s32.totalorder %s57, %s59
      %p66 = scmp.eq.s32.totalorder %s28, 1
      %p67 = por %p65, %p66
      %p68 = scmp.ne.s32.totalorder %s59, %s60
      %p69 = scmp.eq.s32.totalorder %s28, 0
      %p70 = por %p68, %p69
      %p71 = scmp.ne.s32.totalorder %s59, %s60
      %p72 = scmp.eq.s32.totalorder %s29, 1
      %p73 = por %p71, %p72
      %p75 = scmp.ne.s32.totalorder %s60, %s74
      %p76 = scmp.eq.s32.totalorder %s29, 0
      %p77 = por %p75, %p76
      %s79 = sadd.s32 %s78, 1
      %p82 = scmp.eq.s32.totalorder %s23, 1
      %p83 = scmp.ne.s32.totalorder %s78, %s80
      %p84 = scmp.eq.s32.totalorder %s23, 0
      %p85 = por %p83, %p84
      %p86 = scmp.ne.s32.totalorder %s78, %s80
      %p87 = scmp.eq.s32.totalorder %s28, 1
      %p88 = por %p86, %p87
      %p89 = scmp.ne.s32.totalorder %s80, %s81
      %p90 = scmp.eq.s32.totalorder %s28, 0
      %p91 = por %p89, %p90
      %p92 = scmp.ne.s32.totalorder %s80, %s81
      %p93 = scmp.eq.s32.totalorder %s29, 1
      %p94 = por %p92, %p93
      %p96 = scmp.ne.s32.totalorder %s81, %s95
      %p97 = scmp.eq.s32.totalorder %s29, 0
      %p98 = por %p96, %p97
      %s100 = sadd.s32 %s99, 1
      %p103 = scmp.eq.s32.totalorder %s23, 1
      %p104 = scmp.ne.s32.totalorder %s99, %s101
      %p105 = scmp.eq.s32.totalorder %s23, 0
      %p106 = por %p104, %p105
      %p107 = scmp.ne.s32.totalorder %s99, %s101
      %p108 = scmp.eq.s32.totalorder %s28, 1
      %p109 = por %p107, %p108
      %p110 = scmp.ne.s32.totalorder %s101, %s102
      %p111 = scmp.eq.s32.totalorder %s28, 0
      %p112 = por %p110, %p111
      %p113 = scmp.ne.s32.totalorder %s101, %s102
      %p114 = scmp.eq.s32.totalorder %s29, 1
      %p115 = por %p113, %p114
      %p117 = scmp.ne.s32.totalorder %s102, %s116
      %p118 = scmp.eq.s32.totalorder %s29, 0
      %p119 = por %p117, %p118
      %s121 = sadd.s32 %s120, 1
      %p124 = scmp.eq.s32.totalorder %s23, 1
      %p125 = scmp.ne.s32.totalorder %s120, %s122
      %p126 = scmp.eq.s32.totalorder %s23, 0
      %p127 = por %p125, %p126
      %p128 = scmp.ne.s32.totalorder %s120, %s122
      %p129 = scmp.eq.s32.totalorder %s28, 1
      %p130 = por %p128, %p129
      %p131 = scmp.ne.s32.totalorder %s122, %s123
      %p132 = scmp.eq.s32.totalorder %s28, 0
      %p133 = por %p131, %p132
      %p134 = scmp.ne.s32.totalorder %s122, %s123
      %p135 = scmp.eq.s32.totalorder %s29, 1
      %p136 = por %p134, %p135
      %p138 = scmp.ne.s32.totalorder %s123, %s137
      %p139 = scmp.eq.s32.totalorder %s29, 0
      %p140 = por %p138, %p139
      %s142 = sadd.s32 %s141, 1
      %p145 = scmp.eq.s32.totalorder %s23, 1
      %p146 = scmp.ne.s32.totalorder %s141, %s143
      %p147 = scmp.eq.s32.totalorder %s23, 0
      %p148 = por %p146, %p147
      %p149 = scmp.ne.s32.totalorder %s141, %s143
      %p150 = scmp.eq.s32.totalorder %s28, 1
      %p151 = por %p149, %p150
      %p152 = scmp.ne.s32.totalorder %s143, %s144
      %p153 = scmp.eq.s32.totalorder %s28, 0
      %p154 = por %p152, %p153
      %p155 = scmp.ne.s32.totalorder %s143, %s144
      %p156 = scmp.eq.s32.totalorder %s29, 1
      %p157 = por %p155, %p156
      %p159 = scmp.ne.s32.totalorder %s144, %s158
      %p160 = scmp.eq.s32.totalorder %s29, 0
      %p161 = por %p159, %p160
      %s163 = sadd.s32 %s162, 1
      %p166 = scmp.eq.s32.totalorder %s23, 1
      %p167 = scmp.ne.s32.totalorder %s162, %s164
      %p168 = scmp.eq.s32.totalorder %s23, 0
      %p169 = por %p167, %p168
      %p170 = scmp.ne.s32.totalorder %s162, %s164
      %p171 = scmp.eq.s32.totalorder %s28, 1
      %p172 = por %p170, %p171
      %p173 = scmp.ne.s32.totalorder %s164, %s165
      %p174 = scmp.eq.s32.totalorder %s28, 0
      %p175 = por %p173, %p174
      %p176 = scmp.ne.s32.totalorder %s164, %s165
      %p177 = scmp.eq.s32.totalorder %s29, 1
      %p178 = por %p176, %p177
      %p180 = scmp.ne.s32.totalorder %s165, %s179
      %p181 = scmp.eq.s32.totalorder %s29, 0
      %p182 = por %p180, %p181
      %s184 = sadd.s32 %s183, 1
      %p187 = scmp.eq.s32.totalorder %s23, 1
      %p188 = scmp.ne.s32.totalorder %s183, %s185
      %p189 = scmp.eq.s32.totalorder %s23, 0
      %p190 = por %p188, %p189
      %p191 = scmp.ne.s32.totalorder %s183, %s185
      %p192 = scmp.eq.s32.totalorder %s28, 1
      %p193 = por %p191, %p192
      %p194 = scmp.ne.s32.totalorder %s185, %s186
      %p195 = scmp.eq.s32.totalorder %s28, 0
      %p196 = por %p194, %p195
      %p197 = scmp.ne.s32.totalorder %s185, %s186
      %p198 = scmp.eq.s32.totalorder %s29, 1
      %p199 = por %p197, %p198
      %p201 = scmp.ne.s32.totalorder %s186, %s200
      %p202 = scmp.eq.s32.totalorder %s29, 0
      %p203 = por %p201, %p202
      %s205 = sadd.s32 %s204, 1
      %p208 = scmp.eq.s32.totalorder %s23, 1
      %p209 = scmp.ne.s32.totalorder %s204, %s206
      %p210 = scmp.eq.s32.totalorder %s23, 0
      %p211 = por %p209, %p210
      %p212 = scmp.ne.s32.totalorder %s204, %s206
      %p213 = scmp.eq.s32.totalorder %s28, 1
      %p214 = por %p212, %p213
      %p215 = scmp.ne.s32.totalorder %s206, %s207
      %p216 = scmp.eq.s32.totalorder %s28, 0
      %p217 = por %p215, %p216
      %p218 = scmp.ne.s32.totalorder %s206, %s207
      %p219 = scmp.eq.s32.totalorder %s29, 1
      %p220 = por %p218, %p219
      %p222 = scmp.ne.s32.totalorder %s207, %s221
      %p223 = scmp.eq.s32.totalorder %s29, 0
      %p224 = por %p222, %p223
      %s226 = sadd.s32 %s225, 1
      %p229 = scmp.eq.s32.totalorder %s23, 1
      %p230 = scmp.ne.s32.totalorder %s225, %s227
      %p231 = scmp.eq.s32.totalorder %s23, 0
      %p232 = por %p230, %p231
      %p233 = scmp.ne.s32.totalorder %s225, %s227
      %p234 = scmp.eq.s32.totalorder %s28, 1
      %p235 = por %p233, %p234
      %p236 = scmp.ne.s32.totalorder %s227, %s228
      %p237 = scmp.eq.s32.totalorder %s28, 0
      %p238 = por %p236, %p237
      %p239 = scmp.ne.s32.totalorder %s227, %s228
      %p240 = scmp.eq.s32.totalorder %s29, 1
      %p241 = por %p239, %p240
      %p243 = scmp.ne.s32.totalorder %s228, %s242
      %p244 = scmp.eq.s32.totalorder %s29, 0
      %p245 = por %p243, %p244
      %s247 = sadd.s32 %s246, 1
      %p250 = scmp.eq.s32.totalorder %s23, 1
      %p251 = scmp.ne.s32.totalorder %s246, %s248
      %p252 = scmp.eq.s32.totalorder %s23, 0
      %p253 = por %p251, %p252
      %p254 = scmp.ne.s32.totalorder %s246, %s248
      %p255 = scmp.eq.s32.totalorder %s28, 1
      %p256 = por %p254, %p255
      %p257 = scmp.ne.s32.totalorder %s248, %s249
      %p258 = scmp.eq.s32.totalorder %s28, 0
      %p259 = por %p257, %p258
      %p260 = scmp.ne.s32.totalorder %s248, %s249
      %p261 = scmp.eq.s32.totalorder %s29, 1
      %p262 = por %p260, %p261
      %p264 = scmp.ne.s32.totalorder %s249, %s263
      %p265 = scmp.eq.s32.totalorder %s29, 0
      %p266 = por %p264, %p265
      %s268 = sadd.s32 %s267, 1
      %p271 = scmp.eq.s32.totalorder %s23, 1
      %p272 = scmp.ne.s32.totalorder %s267, %s269
      %p273 = scmp.eq.s32.totalorder %s23, 0
      %p274 = por %p272, %p273
      %p275 = scmp.ne.s32.totalorder %s267, %s269
      %p276 = scmp.eq.s32.totalorder %s28, 1
      %p277 = por %p275, %p276
      %p278 = scmp.ne.s32.totalorder %s269, %s270
      %p279 = scmp.eq.s32.totalorder %s28, 0
      %p280 = por %p278, %p279
      %p281 = scmp.ne.s32.totalorder %s269, %s270
      %p282 = scmp.eq.s32.totalorder %s29, 1
      %p283 = por %p281, %p282
      %p285 = scmp.ne.s32.totalorder %s270, %s284
      %p286 = scmp.eq.s32.totalorder %s29, 0
      %p287 = por %p285, %p286
      %s289 = sadd.s32 %s288, 1
      %p292 = scmp.eq.s32.totalorder %s23, 1
      %p293 = scmp.ne.s32.totalorder %s288, %s290
      %p294 = scmp.eq.s32.totalorder %s23, 0
      %p295 = por %p293, %p294
      %p296 = scmp.ne.s32.totalorder %s288, %s290
      %p297 = scmp.eq.s32.totalorder %s28, 1
      %p298 = por %p296, %p297
      %p299 = scmp.ne.s32.totalorder %s290, %s291
      %p300 = scmp.eq.s32.totalorder %s28, 0
      %p301 = por %p299, %p300
      %p302 = scmp.ne.s32.totalorder %s290, %s291
      %p303 = scmp.eq.s32.totalorder %s29, 1
      %p304 = por %p302, %p303
      %p306 = scmp.ne.s32.totalorder %s291, %s305
      %p307 = scmp.eq.s32.totalorder %s29, 0
      %p308 = por %p306, %p307
      %s310 = sadd.s32 %s309, 1
      %p313 = scmp.eq.s32.totalorder %s23, 1
      %p314 = scmp.ne.s32.totalorder %s309, %s311
      %p315 = scmp.eq.s32.totalorder %s23, 0
      %p316 = por %p314, %p315
      %p317 = scmp.ne.s32.totalorder %s309, %s311
      %p318 = scmp.eq.s32.totalorder %s28, 1
      %p319 = por %p317, %p318
      %p320 = scmp.ne.s32.totalorder %s311, %s312
      %p321 = scmp.eq.s32.totalorder %s28, 0
      %p322 = por %p320, %p321
      %p323 = scmp.ne.s32.totalorder %s311, %s312
      %p324 = scmp.eq.s32.totalorder %s29, 1
      %p325 = por %p323, %p324
      %p327 = scmp.ne.s32.totalorder %s312, %s326
      %p328 = scmp.eq.s32.totalorder %s29, 0
      %p329 = por %p327, %p328
      %s330 = ssub.s32 %s23, %s30
      %p331 = scmp.eq.s32.totalorder %s330, 0
      %s333 = sadd.s32 %s332, 1
      %s334 = scalar_select %p331, %s332, %s333
      %p337 = pneg %p331
      %p338 = scmp.eq.s32.totalorder %s23, 1
      %p339 = por %p337, %p338
      %p340 = scmp.ne.s32.totalorder %s332, %s335
      %p341 = scmp.eq.s32.totalorder %s23, 0
      %p342 = por %p340, %p341
      %p343 = scmp.ne.s32.totalorder %s332, %s335
      %p344 = scmp.eq.s32.totalorder %s28, 1
      %p345 = por %p343, %p344
      %p346 = scmp.ne.s32.totalorder %s335, %s336
      %p347 = scmp.eq.s32.totalorder %s28, 0
      %p348 = por %p346, %p347
      %p349 = scmp.ne.s32.totalorder %s335, %s336
      %p350 = scmp.eq.s32.totalorder %s29, 1
      %p351 = por %p349, %p350
      %p353 = scmp.ne.s32.totalorder %s336, %s352
      %p354 = scmp.eq.s32.totalorder %s29, 0
      %p355 = por %p353, %p354
      %p356 = scmp.le.s32.totalorder 1, %s23
      %p357 = scmp.lt.s32.totalorder %s23, 3
      %p358 = pnand %p356, %p357
      %p359 = pneg %p358
      // Predicated region
      $region9: #{tpu_custom_call.1} parent=5 // pred_check
        _
      $region10: #{tpu_custom_call.1} parent=5 // pred_check_branch
        %361 = sbr.rel (%p358) target = $region12
      $region11: #{tpu_custom_call.1} parent=5 // pred_region
        %s362 = ssub.s32 %s23, 1
        // Predicated region
        $region13: #{tpu_custom_call.1} parent=11 // pred_check
          %p363 = pneg %p70
        $region14: #{tpu_custom_call.1} parent=11 // pred_check_branch
          %365 = sbr.rel (%p363) target = $region16
        $region15: #{tpu_custom_call.1} parent=11 // pred_region
          _
        $region16: #{tpu_custom_call.1} parent=11 // pred_fallthru
          _
        // Predicated region
        $region17: #{tpu_custom_call.1} parent=11 // pred_check
          %p366 = pneg %p91
        $region18: #{tpu_custom_call.1} parent=11 // pred_check_branch
          %368 = sbr.rel (%p366) target = $region20
        $region19: #{tpu_custom_call.1} parent=11 // pred_region
          _
        $region20: #{tpu_custom_call.1} parent=11 // pred_fallthru
          _
        // Predicated region
        $region21: #{tpu_custom_call.1} parent=11 // pred_check
          %p369 = pneg %p112
        $region22: #{tpu_custom_call.1} parent=11 // pred_check_branch
          %371 = sbr.rel (%p369) target = $region24
        $region23: #{tpu_custom_call.1} parent=11 // pred_region
          _
        $region24: #{tpu_custom_call.1} parent=11 // pred_fallthru
          _
        // Predicated region
        $region25: #{tpu_custom_call.1} parent=11 // pred_check
          %p372 = pneg %p133
        $region26: #{tpu_custom_call.1} parent=11 // pred_check_branch
          %374 = sbr.rel (%p372) target = $region28
        $region27: #{tpu_custom_call.1} parent=11 // pred_region
          _
        $region28: #{tpu_custom_call.1} parent=11 // pred_fallthru
          _
        // Predicated region
        $region29: #{tpu_custom_call.1} parent=11 // pred_check
          %p375 = pneg %p154
        $region30: #{tpu_custom_call.1} parent=11 // pred_check_branch
          %377 = sbr.rel (%p375) target = $region32
        $region31: #{tpu_custom_call.1} parent=11 // pred_region
          _
        $region32: #{tpu_custom_call.1} parent=11 // pred_fallthru
          _
        // Predicated region
        $region33: #{tpu_custom_call.1} parent=11 // pred_check
          %p378 = pneg %p175
        $region34: #{tpu_custom_call.1} parent=11 // pred_check_branch
          %380 = sbr.rel (%p378) target = $region36
        $region35: #{tpu_custom_call.1} parent=11 // pred_region
          _
        $region36: #{tpu_custom_call.1} parent=11 // pred_fallthru
          _
        // Predicated region
        $region37: #{tpu_custom_call.1} parent=11 // pred_check
          %p381 = pneg %p196
        $region38: #{tpu_custom_call.1} parent=11 // pred_check_branch
          %383 = sbr.rel (%p381) target = $region40
        $region39: #{tpu_custom_call.1} parent=11 // pred_region
          _
        $region40: #{tpu_custom_call.1} parent=11 // pred_fallthru
          _
        // Predicated region
        $region41: #{tpu_custom_call.1} parent=11 // pred_check
          %p384 = pneg %p217
        $region42: #{tpu_custom_call.1} parent=11 // pred_check_branch
          %386 = sbr.rel (%p384) target = $region44
        $region43: #{tpu_custom_call.1} parent=11 // pred_region
          _
        $region44: #{tpu_custom_call.1} parent=11 // pred_fallthru
          _
        // Predicated region
        $region45: #{tpu_custom_call.1} parent=11 // pred_check
          %p387 = pneg %p238
        $region46: #{tpu_custom_call.1} parent=11 // pred_check_branch
          %389 = sbr.rel (%p387) target = $region48
        $region47: #{tpu_custom_call.1} parent=11 // pred_region
          _
        $region48: #{tpu_custom_call.1} parent=11 // pred_fallthru
          _
        // Predicated region
        $region49: #{tpu_custom_call.1} parent=11 // pred_check
          %p390 = pneg %p259
        $region50: #{tpu_custom_call.1} parent=11 // pred_check_branch
          %392 = sbr.rel (%p390) target = $region52
        $region51: #{tpu_custom_call.1} parent=11 // pred_region
          _
        $region52: #{tpu_custom_call.1} parent=11 // pred_fallthru
          _
        // Predicated region
        $region53: #{tpu_custom_call.1} parent=11 // pred_check
          %p393 = pneg %p280
        $region54: #{tpu_custom_call.1} parent=11 // pred_check_branch
          %395 = sbr.rel (%p393) target = $region56
        $region55: #{tpu_custom_call.1} parent=11 // pred_region
          _
        $region56: #{tpu_custom_call.1} parent=11 // pred_fallthru
          _
        // Predicated region
        $region57: #{tpu_custom_call.1} parent=11 // pred_check
          %p396 = pneg %p301
        $region58: #{tpu_custom_call.1} parent=11 // pred_check_branch
          %398 = sbr.rel (%p396) target = $region60
        $region59: #{tpu_custom_call.1} parent=11 // pred_region
          _
        $region60: #{tpu_custom_call.1} parent=11 // pred_fallthru
          _
        // Predicated region
        $region61: #{tpu_custom_call.1} parent=11 // pred_check
          %p399 = pneg %p322
        $region62: #{tpu_custom_call.1} parent=11 // pred_check_branch
          %401 = sbr.rel (%p399) target = $region64
        $region63: #{tpu_custom_call.1} parent=11 // pred_region
          _
        $region64: #{tpu_custom_call.1} parent=11 // pred_fallthru
          _
      $region12: #{tpu_custom_call.1} parent=5 // pred_fallthru
        _
      %p402 = scmp.lt.s32.totalorder %s23, 2
      // Predicated region
      $region65: #{tpu_custom_call.1} parent=5 // pred_check
        %p403 = pneg %p402
      $region66: #{tpu_custom_call.1} parent=5 // pred_check_branch
        %405 = sbr.rel (%p403) target = $region68
      $region67: #{tpu_custom_call.1} parent=5 // pred_region
        // Predicated region
        $region69: #{tpu_custom_call.1} parent=67 // pred_check
          %p406 = pneg %p43
        $region70: #{tpu_custom_call.1} parent=67 // pred_check_branch
          %408 = sbr.rel (%p406) target = $region72
        $region71: #{tpu_custom_call.1} parent=67 // pred_region
          %p409 = scmp.lt.s32.totalorder %s23, 1
          %s410 = scalar_select %p409, %s23, 1
          %s411 = smul.addr %s410, 8
          %s412 = scalar_lea.vmem %s0, %s411
        $region72: #{tpu_custom_call.1} parent=67 // pred_fallthru
          _
      $region68: #{tpu_custom_call.1} parent=5 // pred_fallthru
        _
      %p413 = scmp.le.s32.totalorder 1, %s23
      %p414 = scmp.lt.s32.totalorder %s23, 3
      %p415 = pnand %p413, %p414
      %p416 = pneg %p415
      // Predicated region
      $region73: #{tpu_custom_call.1} parent=5 // pred_check
        _
      $region74: #{tpu_custom_call.1} parent=5 // pred_check_branch
        %418 = sbr.rel (%p415) target = $region76
      $region75: #{tpu_custom_call.1} parent=5 // pred_region
        %s419 = ssub.s32 %s23, 1
        %p420 = scmp.lt.s32.totalorder %s28, 1
        %s421 = scalar_select %p420, %s28, 1
        %s422 = smul.addr %s421, 8
        %s423 = scalar_lea.vmem %s0, %s422
        %p424 = pneg %p49
        %p425 = pneg %p46
        %p426 = pneg %p70
        %p427 = pneg %p67
        %p428 = pneg %p91
        %p429 = pneg %p88
        %p430 = pneg %p112
        %p431 = pneg %p109
        %p432 = pneg %p133
        %p433 = pneg %p130
        %p434 = pneg %p154
        %p435 = pneg %p151
        %p436 = pneg %p175
        %p437 = pneg %p172
        %p438 = pneg %p196
        %p439 = pneg %p193
        %p440 = pneg %p217
        %p441 = pneg %p214
        %p442 = pneg %p238
        %p443 = pneg %p235
        %p444 = pneg %p259
        %p445 = pneg %p256
        %p446 = pneg %p280
        %p447 = pneg %p277
        %p448 = pneg %p301
        %p449 = pneg %p298
        %p450 = pneg %p322
        %p451 = pneg %p319
        %p452 = pneg %p348
        %p453 = pneg %p345
        %s454 = sand.u32 %s335, 1
        %s455 = scalar_lea.sflag [#allocation5], %s454
        %s456 = sand.u32 %s335, 1
        %s457 = smul.addr %s456, 8
        %s458 = scalar_lea.vmem [#allocation4], %s457
        %p459 = scmp.lt.s32.totalorder %s28, 1
        %s460 = scalar_select %p459, %s28, 1
        %s461 = smul.addr %s460, 8
        %s462 = scalar_lea.vmem %s0, %s461
        %v463 = vld [vmem:[%s462] sm:$0xff]
        %v464 = vld [vmem:[%s1] sm:$0x7]
        %v465 = vld [vmem:[%s2] sm:$0x1]
        %v467 = vlaneseq
        %v468 = vshrl.u32 %v467, 7
        %v469 = vsub.s32 0, %v468
        %v470 = vrot.slane %v465, %v469
        %vm472 = vcmask 23552
        %v474 = vsel %vm472, %v463, 0
        %vm476 = vcmask 1042432
        %v478 = vsel %vm476, %v464, 0
        %480 = vmatprep.subr.mxu0 0.0
        %481 = vmatpush1.msra.mxu0 0.0
        %482 = vmatprep.subr.mxu0 0.0
        %483 = vmatpush1.msra.mxu0 0.0
        %484 = vmatprep.subr.mxu0 0.0
        %485 = vmatpush1.msra.mxu0 0.0
        %486 = vmatprep.subr.mxu0 0.0
        %487 = vmatpush1.msra.mxu0 0.0
        %488 = vmatprep.subr.mxu0 0.0
        %489 = vmatpush1.msra.mxu0 0.0
        %490 = vmatprep.subr.mxu0 0.0
        %491 = vmatpush1.msra.mxu0 0.0
        %492 = vmatprep.subr.mxu0 0.0
        %493 = vmatpush1.msra.mxu0 0.0
        %494 = vmatprep.subr.mxu0 0.0
        %495 = vmatpush1.msra.mxu0 0.0
        %496 = vmatprep.subr.mxu0 0.0
        %497 = vmatpush1.msra.mxu0 0.0
        %498 = vmatprep.subr.mxu0 0.0
        %499 = vmatpush1.msra.mxu0 0.0
        %500 = vmatprep.subr.mxu0 0.0
        %501 = vmatpush1.msra.mxu0 0.0
        %502 = vmatprep.subr.mxu0 0.0
        %503 = vmatpush1.msra.mxu0 0.0
        %504 = vmatprep.subr.mxu0 0.0
        %505 = vmatpush1.msra.mxu0 0.0
        %506 = vmatprep.subr.mxu0 0.0
        %507 = vmatpush1.msra.mxu0 0.0
        %508 = vmatprep.subr.mxu0 0.0
        %509 = vmatpush1.msra.mxu0 0.0
        %510 = vmatprep.subr.mxu0 0.0
        %511 = vmatpush1.msra.mxu0 %v478
        %512 = vmatprep.subr.mxu0 0.0
        %513 = vmatpush2.msra.mxu0 0.0
        %514 = vmatprep.subr.mxu0 0.0
        %515 = vmatpush2.msra.mxu0 0.0
        %516 = vmatprep.subr.mxu0 0.0
        %517 = vmatpush2.msra.mxu0 0.0
        %518 = vmatprep.subr.mxu0 0.0
        %519 = vmatpush2.msra.mxu0 0.0
        %520 = vmatprep.subr.mxu0 0.0
        %521 = vmatpush2.msra.mxu0 0.0
        %522 = vmatprep.subr.mxu0 0.0
        %523 = vmatpush2.msra.mxu0 0.0
        %524 = vmatprep.subr.mxu0 0.0
        %525 = vmatpush2.msra.mxu0 0.0
        %526 = vmatprep.subr.mxu0 0.0
        %527 = vmatpush2.msra.mxu0 0.0
        %528 = vmatprep.subr.mxu0 0.0
        %529 = vmatpush2.msra.mxu0 0.0
        %530 = vmatprep.subr.mxu0 0.0
        %531 = vmatpush2.msra.mxu0 0.0
        %532 = vmatprep.subr.mxu0 0.0
        %533 = vmatpush2.msra.mxu0 0.0
        %534 = vmatprep.subr.mxu0 0.0
        %535 = vmatpush2.msra.mxu0 0.0
        %536 = vmatprep.subr.mxu0 0.0
        %537 = vmatpush2.msra.mxu0 0.0
        %538 = vmatprep.subr.mxu0 0.0
        %539 = vmatpush2.msra.mxu0 0.0
        %540 = vmatprep.subr.mxu0 0.0
        %541 = vmatpush2.msra.mxu0 0.0
        %542 = vmatprep.subr.mxu0 0.0
        %543 = vmatpush2.msra.mxu0 0.0
        %544 = vmatprep.mubr.f32.mxu0 0.0
        %545 = vmatmul.mubr.f32.gmra.mxu0 %v474
        %v546 = vpop.f32.mrf.mxu0
        %v547 = vadd.f32 %v470, %v546
        %v548 = vpop.f32.mrf.mxu0
        %549 = vdwg.mxu0
        %v550 = vmax.f32 %v547, 0.0
        %v551 = vld [vmem:[%s3] sm:$0xff]
        %v552 = vld [vmem:[%s3 + $0x8] sm:$0xff]
        %v553 = vld [vmem:[%s3 + $0x10] sm:$0xff]
        %v554 = vld [vmem:[%s3 + $0x18] sm:$0xff]
        %v555 = vld [vmem:[%s3 + $0x20] sm:$0xff]
        %v556 = vld [vmem:[%s3 + $0x28] sm:$0xff]
        %v557 = vld [vmem:[%s3 + $0x30] sm:$0xff]
        %v558 = vld [vmem:[%s3 + $0x38] sm:$0xff]
        %v559 = vld [vmem:[%s4] sm:$0x1]
        %v561 = vlaneseq
        %v562 = vshrl.u32 %v561, 7
        %v563 = vsub.s32 0, %v562
        %v564 = vrot.slane %v559, %v563
        %vm566 = vcmask 523264
        %v568 = vsel %vm566, %v550, 0
        %570 = vmatprep.subr.mxu0 0.0
        %571 = vmatpush1.msra.mxu0 0.0
        %572 = vmatprep.subr.mxu0 0.0
        %573 = vmatpush1.msra.mxu0 0.0
        %574 = vmatprep.subr.mxu0 0.0
        %575 = vmatpush1.msra.mxu0 0.0
        %576 = vmatprep.subr.mxu0 0.0
        %577 = vmatpush1.msra.mxu0 0.0
        %578 = vmatprep.subr.mxu0 0.0
        %579 = vmatpush1.msra.mxu0 0.0
        %580 = vmatprep.subr.mxu0 0.0
        %581 = vmatpush1.msra.mxu0 0.0
        %582 = vmatprep.subr.mxu0 0.0
        %583 = vmatpush1.msra.mxu0 0.0
        %584 = vmatprep.subr.mxu0 0.0
        %585 = vmatpush1.msra.mxu0 0.0
        %586 = vmatprep.subr.mxu0 0.0
        %587 = vmatpush1.msra.mxu0 %v558
        %588 = vmatprep.subr.mxu0 0.0
        %589 = vmatpush1.msra.mxu0 %v557
        %590 = vmatprep.subr.mxu0 0.0
        %591 = vmatpush1.msra.mxu0 %v556
        %592 = vmatprep.subr.mxu0 0.0
        %593 = vmatpush1.msra.mxu0 %v555
        %594 = vmatprep.subr.mxu0 0.0
        %595 = vmatpush1.msra.mxu0 %v554
        %596 = vmatprep.subr.mxu0 0.0
        %597 = vmatpush1.msra.mxu0 %v553
        %598 = vmatprep.subr.mxu0 0.0
        %599 = vmatpush1.msra.mxu0 %v552
        %600 = vmatprep.subr.mxu0 0.0
        %601 = vmatpush1.msra.mxu0 %v551
        %602 = vmatprep.subr.mxu0 0.0
        %603 = vmatpush2.msra.mxu0 0.0
        %604 = vmatprep.subr.mxu0 0.0
        %605 = vmatpush2.msra.mxu0 0.0
        %606 = vmatprep.subr.mxu0 0.0
        %607 = vmatpush2.msra.mxu0 0.0
        %608 = vmatprep.subr.mxu0 0.0
        %609 = vmatpush2.msra.mxu0 0.0
        %610 = vmatprep.subr.mxu0 0.0
        %611 = vmatpush2.msra.mxu0 0.0
        %612 = vmatprep.subr.mxu0 0.0
        %613 = vmatpush2.msra.mxu0 0.0
        %614 = vmatprep.subr.mxu0 0.0
        %615 = vmatpush2.msra.mxu0 0.0
        %616 = vmatprep.subr.mxu0 0.0
        %617 = vmatpush2.msra.mxu0 0.0
        %618 = vmatprep.subr.mxu0 0.0
        %619 = vmatpush2.msra.mxu0 0.0
        %620 = vmatprep.subr.mxu0 0.0
        %621 = vmatpush2.msra.mxu0 0.0
        %622 = vmatprep.subr.mxu0 0.0
        %623 = vmatpush2.msra.mxu0 0.0
        %624 = vmatprep.subr.mxu0 0.0
        %625 = vmatpush2.msra.mxu0 0.0
        %626 = vmatprep.subr.mxu0 0.0
        %627 = vmatpush2.msra.mxu0 0.0
        %628 = vmatprep.subr.mxu0 0.0
        %629 = vmatpush2.msra.mxu0 0.0
        %630 = vmatprep.subr.mxu0 0.0
        %631 = vmatpush2.msra.mxu0 0.0
        %632 = vmatprep.subr.mxu0 0.0
        %633 = vmatpush2.msra.mxu0 0.0
        %634 = vmatprep.mubr.f32.mxu0 0.0
        %635 = vmatmul.mubr.f32.gmra.mxu0 %v568
        %v636 = vpop.f32.mrf.mxu0
        %v637 = vadd.f32 %v564, %v636
        %v638 = vpop.f32.mrf.mxu0
        %639 = vdwg.mxu0
        %v640 = vmax.f32 %v637, 0.0
        %v641 = vld [vmem:[%s5] sm:$0xff]
        %v642 = vld [vmem:[%s5 + $0x8] sm:$0xff]
        %v643 = vld [vmem:[%s5 + $0x10] sm:$0xff]
        %v644 = vld [vmem:[%s5 + $0x18] sm:$0xff]
        %v645 = vld [vmem:[%s5 + $0x20] sm:$0xff]
        %v646 = vld [vmem:[%s5 + $0x28] sm:$0xff]
        %v647 = vld [vmem:[%s5 + $0x30] sm:$0xff]
        %v648 = vld [vmem:[%s5 + $0x38] sm:$0xff]
        %v649 = vld [vmem:[%s5 + $0x40] sm:$0xff]
        %v650 = vld [vmem:[%s5 + $0x48] sm:$0xff]
        %v651 = vld [vmem:[%s5 + $0x50] sm:$0xff]
        %v652 = vld [vmem:[%s5 + $0x58] sm:$0xff]
        %v653 = vld [vmem:[%s5 + $0x60] sm:$0xff]
        %v654 = vld [vmem:[%s5 + $0x68] sm:$0xff]
        %v655 = vld [vmem:[%s5 + $0x70] sm:$0xff]
        %v656 = vld [vmem:[%s5 + $0x78] sm:$0xff]
        %v657 = vld [vmem:[%s7] sm:$0x3]
        %v659 = vlaneseq
        %v660 = vshrl.u32 %v659, 7
        %v661 = vsub.s32 0, %v660
        %v662 = vrot.slane %v657, %v661
        %v663 = vlaneseq
        %v664 = vshrl.u32 %v663, 7
        %v665 = vsub.s32 1, %v664
        %v666 = vrot.slane %v657, %v665
        %v670 = vsel %vm566, %v640, 0
        %672 = vmatprep.subr.mxu0 0.0
        %673 = vmatpush1.msra.mxu0 0.0
        %674 = vmatprep.subr.mxu0 0.0
        %675 = vmatpush1.msra.mxu0 0.0
        %676 = vmatprep.subr.mxu0 0.0
        %677 = vmatpush1.msra.mxu0 0.0
        %678 = vmatprep.subr.mxu0 0.0
        %679 = vmatpush1.msra.mxu0 0.0
        %680 = vmatprep.subr.mxu0 0.0
        %681 = vmatpush1.msra.mxu0 0.0
        %682 = vmatprep.subr.mxu0 0.0
        %683 = vmatpush1.msra.mxu0 0.0
        %684 = vmatprep.subr.mxu0 0.0
        %685 = vmatpush1.msra.mxu0 0.0
        %686 = vmatprep.subr.mxu0 0.0
        %687 = vmatpush1.msra.mxu0 0.0
        %688 = vmatprep.subr.mxu0 %v656
        %689 = vmatpush1.msra.mxu0 %v655
        %690 = vmatprep.subr.mxu0 %v654
        %691 = vmatpush1.msra.mxu0 %v653
        %692 = vmatprep.subr.mxu0 %v652
        %693 = vmatpush1.msra.mxu0 %v651
        %694 = vmatprep.subr.mxu0 %v650
        %695 = vmatpush1.msra.mxu0 %v649
        %696 = vmatprep.subr.mxu0 %v648
        %697 = vmatpush1.msra.mxu0 %v647
        %698 = vmatprep.subr.mxu0 %v646
        %699 = vmatpush1.msra.mxu0 %v645
        %700 = vmatprep.subr.mxu0 %v644
        %701 = vmatpush1.msra.mxu0 %v643
        %702 = vmatprep.subr.mxu0 %v642
        %703 = vmatpush1.msra.mxu0 %v641
        %704 = vmatprep.subr.mxu0 0.0
        %705 = vmatpush2.msra.mxu0 0.0
        %706 = vmatprep.subr.mxu0 0.0
        %707 = vmatpush2.msra.mxu0 0.0
        %708 = vmatprep.subr.mxu0 0.0
        %709 = vmatpush2.msra.mxu0 0.0
        %710 = vmatprep.subr.mxu0 0.0
        %711 = vmatpush2.msra.mxu0 0.0
        %712 = vmatprep.subr.mxu0 0.0
        %713 = vmatpush2.msra.mxu0 0.0
        %714 = vmatprep.subr.mxu0 0.0
        %715 = vmatpush2.msra.mxu0 0.0
        %716 = vmatprep.subr.mxu0 0.0
        %717 = vmatpush2.msra.mxu0 0.0
        %718 = vmatprep.subr.mxu0 0.0
        %719 = vmatpush2.msra.mxu0 0.0
        %720 = vmatprep.subr.mxu0 0.0
        %721 = vmatpush2.msra.mxu0 0.0
        %722 = vmatprep.subr.mxu0 0.0
        %723 = vmatpush2.msra.mxu0 0.0
        %724 = vmatprep.subr.mxu0 0.0
        %725 = vmatpush2.msra.mxu0 0.0
        %726 = vmatprep.subr.mxu0 0.0
        %727 = vmatpush2.msra.mxu0 0.0
        %728 = vmatprep.subr.mxu0 0.0
        %729 = vmatpush2.msra.mxu0 0.0
        %730 = vmatprep.subr.mxu0 0.0
        %731 = vmatpush2.msra.mxu0 0.0
        %732 = vmatprep.subr.mxu0 0.0
        %733 = vmatpush2.msra.mxu0 0.0
        %734 = vmatprep.subr.mxu0 0.0
        %735 = vmatpush2.msra.mxu0 0.0
        %736 = vmatprep.mubr.f32.mxu0 0.0
        %737 = vmatmul.mubr.f32.gmra.mxu0 %v670
        %v738 = vpop.f32.mrf.mxu0
        %v739 = vadd.f32 %v662, %v738
        %v740 = vpop.f32.mrf.mxu0
        %v741 = vadd.f32 %v666, %v740
        %742 = vdwg.mxu0
        %743 = vst [vmem:[#allocation2] sm:$0xff] %v739
        %744 = vst [vmem:[#allocation2 + $0x8] sm:$0xff] %v741
        %v745 = vld [vmem:[#allocation2] sm:$0xff]
        %v746 = vld [vmem:[#allocation2 + $0x8] sm:$0xff]
        %v747 = vld [vmem:[%s6] sm:$0xff]
        %v748 = vld [vmem:[%s6 + $0x8] sm:$0xff]
        %v749 = vld [vmem:[%s6 + $0x10] sm:$0xff]
        %v750 = vld [vmem:[%s6 + $0x18] sm:$0xff]
        %v751 = vld [vmem:[%s6 + $0x20] sm:$0xff]
        %v752 = vld [vmem:[%s6 + $0x28] sm:$0xff]
        %v753 = vld [vmem:[%s6 + $0x30] sm:$0xff]
        %v754 = vld [vmem:[%s6 + $0x38] sm:$0xff]
        %v755 = vld [vmem:[%s6 + $0x40] sm:$0xff]
        %v756 = vld [vmem:[%s6 + $0x48] sm:$0xff]
        %v757 = vld [vmem:[%s6 + $0x50] sm:$0xff]
        %v758 = vld [vmem:[%s6 + $0x58] sm:$0xff]
        %v759 = vld [vmem:[%s6 + $0x60] sm:$0xff]
        %v760 = vld [vmem:[%s6 + $0x68] sm:$0xff]
        %v761 = vld [vmem:[%s6 + $0x70] sm:$0xff]
        %v762 = vld [vmem:[%s6 + $0x78] sm:$0xff]
        %v764 = vsel %vm566, 0.0, 0
        %766 = vmatprep.subr.mxu0 0.0
        %767 = vmatpush1.msra.mxu0 0.0
        %768 = vmatprep.subr.mxu0 0.0
        %769 = vmatpush1.msra.mxu0 0.0
        %770 = vmatprep.subr.mxu0 0.0
        %771 = vmatpush1.msra.mxu0 0.0
        %772 = vmatprep.subr.mxu0 0.0
        %773 = vmatpush1.msra.mxu0 0.0
        %774 = vmatprep.subr.mxu0 0.0
        %775 = vmatpush1.msra.mxu0 0.0
        %776 = vmatprep.subr.mxu0 0.0
        %777 = vmatpush1.msra.mxu0 0.0
        %778 = vmatprep.subr.mxu0 0.0
        %779 = vmatpush1.msra.mxu0 0.0
        %780 = vmatprep.subr.mxu0 0.0
        %781 = vmatpush1.msra.mxu0 0.0
        %782 = vmatprep.subr.mxu0 %v762
        %783 = vmatpush1.msra.mxu0 %v761
        %784 = vmatprep.subr.mxu0 %v760
        %785 = vmatpush1.msra.mxu0 %v759
        %786 = vmatprep.subr.mxu0 %v758
        %787 = vmatpush1.msra.mxu0 %v757
        %788 = vmatprep.subr.mxu0 %v756
        %789 = vmatpush1.msra.mxu0 %v755
        %790 = vmatprep.subr.mxu0 %v754
        %791 = vmatpush1.msra.mxu0 %v753
        %792 = vmatprep.subr.mxu0 %v752
        %793 = vmatpush1.msra.mxu0 %v751
        %794 = vmatprep.subr.mxu0 %v750
        %795 = vmatpush1.msra.mxu0 %v749
        %796 = vmatprep.subr.mxu0 %v748
        %797 = vmatpush1.msra.mxu0 %v747
        %798 = vmatprep.subr.mxu0 0.0
        %799 = vmatpush2.msra.mxu0 0.0
        %800 = vmatprep.subr.mxu0 0.0
        %801 = vmatpush2.msra.mxu0 0.0
        %802 = vmatprep.subr.mxu0 0.0
        %803 = vmatpush2.msra.mxu0 0.0
        %804 = vmatprep.subr.mxu0 0.0
        %805 = vmatpush2.msra.mxu0 0.0
        %806 = vmatprep.subr.mxu0 0.0
        %807 = vmatpush2.msra.mxu0 0.0
        %808 = vmatprep.subr.mxu0 0.0
        %809 = vmatpush2.msra.mxu0 0.0
        %810 = vmatprep.subr.mxu0 0.0
        %811 = vmatpush2.msra.mxu0 0.0
        %812 = vmatprep.subr.mxu0 0.0
        %813 = vmatpush2.msra.mxu0 0.0
        %814 = vmatprep.subr.mxu0 0.0
        %815 = vmatpush2.msra.mxu0 0.0
        %816 = vmatprep.subr.mxu0 0.0
        %817 = vmatpush2.msra.mxu0 0.0
        %818 = vmatprep.subr.mxu0 0.0
        %819 = vmatpush2.msra.mxu0 0.0
        %820 = vmatprep.subr.mxu0 0.0
        %821 = vmatpush2.msra.mxu0 0.0
        %822 = vmatprep.subr.mxu0 0.0
        %823 = vmatpush2.msra.mxu0 0.0
        %824 = vmatprep.subr.mxu0 0.0
        %825 = vmatpush2.msra.mxu0 0.0
        %826 = vmatprep.subr.mxu0 0.0
        %827 = vmatpush2.msra.mxu0 0.0
        %828 = vmatprep.subr.mxu0 0.0
        %829 = vmatpush2.msra.mxu0 0.0
        %830 = vmatprep.mubr.f32.mxu0 0.0
        %831 = vmatmul.mubr.f32.gmra.mxu0 %v764
        %v832 = vpop.f32.mrf.mxu0
        %v833 = vadd.f32 0.0, %v832
        %v834 = vpop.f32.mrf.mxu0
        %v835 = vadd.f32 0.0, %v834
        %836 = vdwg.mxu0
        %v837 = vadd.f32 %v745, %v833
        %v838 = vadd.f32 %v746, %v835
        %v839 = vxor.u32 %v837, 2147483648
        %v840 = vxor.u32 %v838, 2147483648
        %v841 = vmul.f32 %v839, 1.442695
        %v842 = vpow.pop %v841
        %v843 = vmul.f32 %v840, 1.442695
        %v844 = vpow.pop %v843
        %v845 = vadd.f32 %v842, 1.0
        %v846 = vadd.f32 %v844, 1.0
        %v847 = vrcp.pop %v845
        %v848 = vmul.f32 1.0, %v847
        %v849 = vrcp.pop %v846
        %v850 = vmul.f32 1.0, %v849
        %v851 = vtanh.pop %v838
        %v852 = vmul.f32 %v848, 0.0
        %854 = vrot.lane.b32.xlu0 %v851, 64
        %v855 = vpop.permute.xlu0 %854
        %v857 = vmul.f32 %v848, %v855
        %859 = vrot.lane.b32.xlu0 %v857, 64
        %v860 = vpop.permute.xlu0 %859
        %v862 = vadd.f32 %v852, %v860
        %v863 = vtanh.pop %v862
        %865 = vrot.lane.b32.xlu0 %v863, 64
        %v866 = vpop.permute.xlu0 %865
        %v868 = vmul.f32 %v850, %v866
        %v869 = vsel %vm566, %v868, 0.0
        %v870 = vld [vmem:[%s8] sm:$0xff]
        %v871 = vld [vmem:[%s8 + $0x8] sm:$0xff]
        %v872 = vld [vmem:[%s8 + $0x10] sm:$0xff]
        %v873 = vld [vmem:[%s8 + $0x18] sm:$0xff]
        %v874 = vld [vmem:[%s8 + $0x20] sm:$0xff]
        %v875 = vld [vmem:[%s8 + $0x28] sm:$0xff]
        %v876 = vld [vmem:[%s8 + $0x30] sm:$0xff]
        %v877 = vld [vmem:[%s8 + $0x38] sm:$0xff]
        %v878 = vld [vmem:[%s8 + $0x40] sm:$0xff]
        %v879 = vld [vmem:[%s8 + $0x48] sm:$0xff]
        %v880 = vld [vmem:[%s8 + $0x50] sm:$0xff]
        %v881 = vld [vmem:[%s8 + $0x58] sm:$0xff]
        %v882 = vld [vmem:[%s8 + $0x60] sm:$0xff]
        %v883 = vld [vmem:[%s8 + $0x68] sm:$0xff]
        %v884 = vld [vmem:[%s8 + $0x70] sm:$0xff]
        %v885 = vld [vmem:[%s8 + $0x78] sm:$0xff]
        %v886 = vld [vmem:[%s8 + $0x80] sm:$0xff]
        %v887 = vld [vmem:[%s8 + $0x88] sm:$0xff]
        %v888 = vld [vmem:[%s8 + $0x90] sm:$0xff]
        %v889 = vld [vmem:[%s8 + $0x98] sm:$0xff]
        %v890 = vld [vmem:[%s8 + $0xa0] sm:$0xff]
        %v891 = vld [vmem:[%s8 + $0xa8] sm:$0xff]
        %v892 = vld [vmem:[%s8 + $0xb0] sm:$0xff]
        %v893 = vld [vmem:[%s8 + $0xb8] sm:$0xff]
        %v894 = vld [vmem:[%s8 + $0xc0] sm:$0xff]
        %v895 = vld [vmem:[%s8 + $0xc8] sm:$0xff]
        %v896 = vld [vmem:[%s8 + $0xd0] sm:$0xff]
        %v897 = vld [vmem:[%s8 + $0xd8] sm:$0xff]
        %v898 = vld [vmem:[%s8 + $0xe0] sm:$0xff]
        %v899 = vld [vmem:[%s8 + $0xe8] sm:$0xff]
        %v900 = vld [vmem:[%s8 + $0xf0] sm:$0xff]
        %v901 = vld [vmem:[%s8 + $0xf8] sm:$0xff]
        %v902 = vld [vmem:[%s9] sm:$0x3]
        %v904 = vlaneseq
        %v905 = vshrl.u32 %v904, 7
        %v906 = vsub.s32 0, %v905
        %v907 = vrot.slane %v902, %v906
        %v908 = vlaneseq
        %v909 = vshrl.u32 %v908, 7
        %v910 = vsub.s32 1, %v909
        %v911 = vrot.slane %v902, %v910
        %914 = vmatprep.subr.mxu0 %v901
        %915 = vmatpush1.msra.mxu0 %v900
        %916 = vmatprep.subr.mxu0 %v899
        %917 = vmatpush1.msra.mxu0 %v898
        %918 = vmatprep.subr.mxu0 %v897
        %919 = vmatpush1.msra.mxu0 %v896
        %920 = vmatprep.subr.mxu0 %v895
        %921 = vmatpush1.msra.mxu0 %v894
        %922 = vmatprep.subr.mxu0 %v893
        %923 = vmatpush1.msra.mxu0 %v892
        %924 = vmatprep.subr.mxu0 %v891
        %925 = vmatpush1.msra.mxu0 %v890
        %926 = vmatprep.subr.mxu0 %v889
        %927 = vmatpush1.msra.mxu0 %v888
        %928 = vmatprep.subr.mxu0 %v887
        %929 = vmatpush1.msra.mxu0 %v886
        %930 = vmatprep.subr.mxu0 %v885
        %931 = vmatpush1.msra.mxu0 %v884
        %932 = vmatprep.subr.mxu0 %v883
        %933 = vmatpush1.msra.mxu0 %v882
        %934 = vmatprep.subr.mxu0 %v881
        %935 = vmatpush1.msra.mxu0 %v880
        %936 = vmatprep.subr.mxu0 %v879
        %937 = vmatpush1.msra.mxu0 %v878
        %938 = vmatprep.subr.mxu0 %v877
        %939 = vmatpush1.msra.mxu0 %v876
        %940 = vmatprep.subr.mxu0 %v875
        %941 = vmatpush1.msra.mxu0 %v874
        %942 = vmatprep.subr.mxu0 %v873
        %943 = vmatpush1.msra.mxu0 %v872
        %944 = vmatprep.subr.mxu0 %v871
        %945 = vmatpush1.msra.mxu0 %v870
        %946 = vmatprep.subr.mxu0 0.0
        %947 = vmatpush2.msra.mxu0 0.0
        %948 = vmatprep.subr.mxu0 0.0
        %949 = vmatpush2.msra.mxu0 0.0
        %950 = vmatprep.subr.mxu0 0.0
        %951 = vmatpush2.msra.mxu0 0.0
        %952 = vmatprep.subr.mxu0 0.0
        %953 = vmatpush2.msra.mxu0 0.0
        %954 = vmatprep.subr.mxu0 0.0
        %955 = vmatpush2.msra.mxu0 0.0
        %956 = vmatprep.subr.mxu0 0.0
        %957 = vmatpush2.msra.mxu0 0.0
        %958 = vmatprep.subr.mxu0 0.0
        %959 = vmatpush2.msra.mxu0 0.0
        %960 = vmatprep.subr.mxu0 0.0
        %961 = vmatpush2.msra.mxu0 0.0
        %962 = vmatprep.subr.mxu0 0.0
        %963 = vmatpush2.msra.mxu0 0.0
        %964 = vmatprep.subr.mxu0 0.0
        %965 = vmatpush2.msra.mxu0 0.0
        %966 = vmatprep.subr.mxu0 0.0
        %967 = vmatpush2.msra.mxu0 0.0
        %968 = vmatprep.subr.mxu0 0.0
        %969 = vmatpush2.msra.mxu0 0.0
        %970 = vmatprep.subr.mxu0 0.0
        %971 = vmatpush2.msra.mxu0 0.0
        %972 = vmatprep.subr.mxu0 0.0
        %973 = vmatpush2.msra.mxu0 0.0
        %974 = vmatprep.subr.mxu0 0.0
        %975 = vmatpush2.msra.mxu0 0.0
        %976 = vmatprep.subr.mxu0 0.0
        %977 = vmatpush2.msra.mxu0 0.0
        %978 = vmatprep.mubr.f32.mxu0 0.0
        %979 = vmatmul.mubr.f32.gmra.mxu0 %v869
        %v980 = vpop.f32.mrf.mxu0
        %v981 = vadd.f32 %v907, %v980
        %v982 = vpop.f32.mrf.mxu0
        %v983 = vadd.f32 %v911, %v982
        %984 = vdwg.mxu0
        %v985 = vxor.u32 %v981, 2147483648
        %v986 = vxor.u32 %v983, 2147483648
        %v987 = vmul.f32 %v985, 1.442695
        %v988 = vpow.pop %v987
        %v989 = vmul.f32 %v986, 1.442695
        %v990 = vpow.pop %v989
        %v991 = vadd.f32 %v988, 1.0
        %v992 = vadd.f32 %v990, 1.0
        %v993 = vrcp.pop %v991
        %v994 = vmul.f32 1.0, %v993
        %v995 = vrcp.pop %v992
        %v996 = vmul.f32 1.0, %v995
        %v997 = vtanh.pop %v983
        %v998 = vmul.f32 %v994, 0.0
        %1000 = vrot.lane.b32.xlu0 %v997, 64
        %v1001 = vpop.permute.xlu0 %1000
        %v1003 = vmul.f32 %v994, %v1001
        %1005 = vrot.lane.b32.xlu0 %v1003, 64
        %v1006 = vpop.permute.xlu0 %1005
        %v1008 = vadd.f32 %v998, %v1006
        %v1009 = vtanh.pop %v1008
        %1011 = vrot.lane.b32.xlu0 %v1009, 64
        %v1012 = vpop.permute.xlu0 %1011
        %v1014 = vmul.f32 %v996, %v1012
        %1015 = vst.msk [vmem:[#allocation3] sm:$0xff] %vm566, %v1014
        %v1016 = vld [vmem:[#allocation2] sm:$0xff]
        %v1017 = vld [vmem:[#allocation2 + $0x8] sm:$0xff]
        %v1018 = vld [vmem:[%s6] sm:$0xff]
        %v1019 = vld [vmem:[%s6 + $0x8] sm:$0xff]
        %v1020 = vld [vmem:[%s6 + $0x10] sm:$0xff]
        %v1021 = vld [vmem:[%s6 + $0x18] sm:$0xff]
        %v1022 = vld [vmem:[%s6 + $0x20] sm:$0xff]
        %v1023 = vld [vmem:[%s6 + $0x28] sm:$0xff]
        %v1024 = vld [vmem:[%s6 + $0x30] sm:$0xff]
        %v1025 = vld [vmem:[%s6 + $0x38] sm:$0xff]
        %v1026 = vld [vmem:[%s6 + $0x40] sm:$0xff]
        %v1027 = vld [vmem:[%s6 + $0x48] sm:$0xff]
        %v1028 = vld [vmem:[%s6 + $0x50] sm:$0xff]
        %v1029 = vld [vmem:[%s6 + $0x58] sm:$0xff]
        %v1030 = vld [vmem:[%s6 + $0x60] sm:$0xff]
        %v1031 = vld [vmem:[%s6 + $0x68] sm:$0xff]
        %v1032 = vld [vmem:[%s6 + $0x70] sm:$0xff]
        %v1033 = vld [vmem:[%s6 + $0x78] sm:$0xff]
        %v1035 = vsel %vm566, %v868, 0
        %1037 = vmatprep.subr.mxu0 0.0
        %1038 = vmatpush1.msra.mxu0 0.0
        %1039 = vmatprep.subr.mxu0 0.0
        %1040 = vmatpush1.msra.mxu0 0.0
        %1041 = vmatprep.subr.mxu0 0.0
        %1042 = vmatpush1.msra.mxu0 0.0
        %1043 = vmatprep.subr.mxu0 0.0
        %1044 = vmatpush1.msra.mxu0 0.0
        %1045 = vmatprep.subr.mxu0 0.0
        %1046 = vmatpush1.msra.mxu0 0.0
        %1047 = vmatprep.subr.mxu0 0.0
        %1048 = vmatpush1.msra.mxu0 0.0
        %1049 = vmatprep.subr.mxu0 0.0
        %1050 = vmatpush1.msra.mxu0 0.0
        %1051 = vmatprep.subr.mxu0 0.0
        %1052 = vmatpush1.msra.mxu0 0.0
        %1053 = vmatprep.subr.mxu0 %v1033
        %1054 = vmatpush1.msra.mxu0 %v1032
        %1055 = vmatprep.subr.mxu0 %v1031
        %1056 = vmatpush1.msra.mxu0 %v1030
        %1057 = vmatprep.subr.mxu0 %v1029
        %1058 = vmatpush1.msra.mxu0 %v1028
        %1059 = vmatprep.subr.mxu0 %v1027
        %1060 = vmatpush1.msra.mxu0 %v1026
        %1061 = vmatprep.subr.mxu0 %v1025
        %1062 = vmatpush1.msra.mxu0 %v1024
        %1063 = vmatprep.subr.mxu0 %v1023
        %1064 = vmatpush1.msra.mxu0 %v1022
        %1065 = vmatprep.subr.mxu0 %v1021
        %1066 = vmatpush1.msra.mxu0 %v1020
        %1067 = vmatprep.subr.mxu0 %v1019
        %1068 = vmatpush1.msra.mxu0 %v1018
        %1069 = vmatprep.subr.mxu0 0.0
        %1070 = vmatpush2.msra.mxu0 0.0
        %1071 = vmatprep.subr.mxu0 0.0
        %1072 = vmatpush2.msra.mxu0 0.0
        %1073 = vmatprep.subr.mxu0 0.0
        %1074 = vmatpush2.msra.mxu0 0.0
        %1075 = vmatprep.subr.mxu0 0.0
        %1076 = vmatpush2.msra.mxu0 0.0
        %1077 = vmatprep.subr.mxu0 0.0
        %1078 = vmatpush2.msra.mxu0 0.0
        %1079 = vmatprep.subr.mxu0 0.0
        %1080 = vmatpush2.msra.mxu0 0.0
        %1081 = vmatprep.subr.mxu0 0.0
        %1082 = vmatpush2.msra.mxu0 0.0
        %1083 = vmatprep.subr.mxu0 0.0
        %1084 = vmatpush2.msra.mxu0 0.0
        %1085 = vmatprep.subr.mxu0 0.0
        %1086 = vmatpush2.msra.mxu0 0.0
        %1087 = vmatprep.subr.mxu0 0.0
        %1088 = vmatpush2.msra.mxu0 0.0
        %1089 = vmatprep.subr.mxu0 0.0
        %1090 = vmatpush2.msra.mxu0 0.0
        %1091 = vmatprep.subr.mxu0 0.0
        %1092 = vmatpush2.msra.mxu0 0.0
        %1093 = vmatprep.subr.mxu0 0.0
        %1094 = vmatpush2.msra.mxu0 0.0
        %1095 = vmatprep.subr.mxu0 0.0
        %1096 = vmatpush2.msra.mxu0 0.0
        %1097 = vmatprep.subr.mxu0 0.0
        %1098 = vmatpush2.msra.mxu0 0.0
        %1099 = vmatprep.subr.mxu0 0.0
        %1100 = vmatpush2.msra.mxu0 0.0
        %1101 = vmatprep.mubr.f32.mxu0 0.0
        %1102 = vmatmul.mubr.f32.gmra.mxu0 %v1035
        %v1103 = vpop.f32.mrf.mxu0
        %v1104 = vadd.f32 0.0, %v1103
        %v1105 = vpop.f32.mrf.mxu0
        %v1106 = vadd.f32 0.0, %v1105
        %1107 = vdwg.mxu0
        %v1108 = vadd.f32 %v1016, %v1104
        %v1109 = vadd.f32 %v1017, %v1106
        %v1110 = vxor.u32 %v1108, 2147483648
        %v1111 = vxor.u32 %v1109, 2147483648
        %v1112 = vmul.f32 %v1110, 1.442695
        %v1113 = vpow.pop %v1112
        %v1114 = vmul.f32 %v1111, 1.442695
        %v1115 = vpow.pop %v1114
        %v1116 = vadd.f32 %v1113, 1.0
        %v1117 = vadd.f32 %v1115, 1.0
        %v1118 = vrcp.pop %v1116
        %v1119 = vmul.f32 1.0, %v1118
        %v1120 = vrcp.pop %v1117
        %v1121 = vmul.f32 1.0, %v1120
        %v1122 = vtanh.pop %v1109
        %v1123 = vmul.f32 %v1119, %v862
        %1125 = vrot.lane.b32.xlu0 %v1122, 64
        %v1126 = vpop.permute.xlu0 %1125
        %v1128 = vmul.f32 %v1119, %v1126
        %1130 = vrot.lane.b32.xlu0 %v1128, 64
        %v1131 = vpop.permute.xlu0 %1130
        %v1133 = vadd.f32 %v1123, %v1131
        %v1134 = vtanh.pop %v1133
        %1136 = vrot.lane.b32.xlu0 %v1134, 64
        %v1137 = vpop.permute.xlu0 %1136
        %v1139 = vmul.f32 %v1121, %v1137
        %1141 = vrot.lane.b32.xlu0 %v1014, 64
        %v1142 = vpop.permute.xlu0 %1141
        %v1144 = vsel %vm566, %v1139, %v1142
        %v1145 = vld [vmem:[%s8] sm:$0xff]
        %v1146 = vld [vmem:[%s8 + $0x8] sm:$0xff]
        %v1147 = vld [vmem:[%s8 + $0x10] sm:$0xff]
        %v1148 = vld [vmem:[%s8 + $0x18] sm:$0xff]
        %v1149 = vld [vmem:[%s8 + $0x20] sm:$0xff]
        %v1150 = vld [vmem:[%s8 + $0x28] sm:$0xff]
        %v1151 = vld [vmem:[%s8 + $0x30] sm:$0xff]
        %v1152 = vld [vmem:[%s8 + $0x38] sm:$0xff]
        %v1153 = vld [vmem:[%s8 + $0x40] sm:$0xff]
        %v1154 = vld [vmem:[%s8 + $0x48] sm:$0xff]
        %v1155 = vld [vmem:[%s8 + $0x50] sm:$0xff]
        %v1156 = vld [vmem:[%s8 + $0x58] sm:$0xff]
        %v1157 = vld [vmem:[%s8 + $0x60] sm:$0xff]
        %v1158 = vld [vmem:[%s8 + $0x68] sm:$0xff]
        %v1159 = vld [vmem:[%s8 + $0x70] sm:$0xff]
        %v1160 = vld [vmem:[%s8 + $0x78] sm:$0xff]
        %v1161 = vld [vmem:[%s8 + $0x80] sm:$0xff]
        %v1162 = vld [vmem:[%s8 + $0x88] sm:$0xff]
        %v1163 = vld [vmem:[%s8 + $0x90] sm:$0xff]
        %v1164 = vld [vmem:[%s8 + $0x98] sm:$0xff]
        %v1165 = vld [vmem:[%s8 + $0xa0] sm:$0xff]
        %v1166 = vld [vmem:[%s8 + $0xa8] sm:$0xff]
        %v1167 = vld [vmem:[%s8 + $0xb0] sm:$0xff]
        %v1168 = vld [vmem:[%s8 + $0xb8] sm:$0xff]
        %v1169 = vld [vmem:[%s8 + $0xc0] sm:$0xff]
        %v1170 = vld [vmem:[%s8 + $0xc8] sm:$0xff]
        %v1171 = vld [vmem:[%s8 + $0xd0] sm:$0xff]
        %v1172 = vld [vmem:[%s8 + $0xd8] sm:$0xff]
        %v1173 = vld [vmem:[%s8 + $0xe0] sm:$0xff]
        %v1174 = vld [vmem:[%s8 + $0xe8] sm:$0xff]
        %v1175 = vld [vmem:[%s8 + $0xf0] sm:$0xff]
        %v1176 = vld [vmem:[%s8 + $0xf8] sm:$0xff]
        %v1177 = vld [vmem:[%s9] sm:$0x3]
        %v1179 = vlaneseq
        %v1180 = vshrl.u32 %v1179, 7
        %v1181 = vsub.s32 0, %v1180
        %v1182 = vrot.slane %v1177, %v1181
        %v1183 = vlaneseq
        %v1184 = vshrl.u32 %v1183, 7
        %v1185 = vsub.s32 1, %v1184
        %v1186 = vrot.slane %v1177, %v1185
        %1189 = vmatprep.subr.mxu0 %v1176
        %1190 = vmatpush1.msra.mxu0 %v1175
        %1191 = vmatprep.subr.mxu0 %v1174
        %1192 = vmatpush1.msra.mxu0 %v1173
        %1193 = vmatprep.subr.mxu0 %v1172
        %1194 = vmatpush1.msra.mxu0 %v1171
        %1195 = vmatprep.subr.mxu0 %v1170
        %1196 = vmatpush1.msra.mxu0 %v1169
        %1197 = vmatprep.subr.mxu0 %v1168
        %1198 = vmatpush1.msra.mxu0 %v1167
        %1199 = vmatprep.subr.mxu0 %v1166
        %1200 = vmatpush1.msra.mxu0 %v1165
        %1201 = vmatprep.subr.mxu0 %v1164
        %1202 = vmatpush1.msra.mxu0 %v1163
        %1203 = vmatprep.subr.mxu0 %v1162
        %1204 = vmatpush1.msra.mxu0 %v1161
        %1205 = vmatprep.subr.mxu0 %v1160
        %1206 = vmatpush1.msra.mxu0 %v1159
        %1207 = vmatprep.subr.mxu0 %v1158
        %1208 = vmatpush1.msra.mxu0 %v1157
        %1209 = vmatprep.subr.mxu0 %v1156
        %1210 = vmatpush1.msra.mxu0 %v1155
        %1211 = vmatprep.subr.mxu0 %v1154
        %1212 = vmatpush1.msra.mxu0 %v1153
        %1213 = vmatprep.subr.mxu0 %v1152
        %1214 = vmatpush1.msra.mxu0 %v1151
        %1215 = vmatprep.subr.mxu0 %v1150
        %1216 = vmatpush1.msra.mxu0 %v1149
        %1217 = vmatprep.subr.mxu0 %v1148
        %1218 = vmatpush1.msra.mxu0 %v1147
        %1219 = vmatprep.subr.mxu0 %v1146
        %1220 = vmatpush1.msra.mxu0 %v1145
        %1221 = vmatprep.subr.mxu0 0.0
        %1222 = vmatpush2.msra.mxu0 0.0
        %1223 = vmatprep.subr.mxu0 0.0
        %1224 = vmatpush2.msra.mxu0 0.0
        %1225 = vmatprep.subr.mxu0 0.0
        %1226 = vmatpush2.msra.mxu0 0.0
        %1227 = vmatprep.subr.mxu0 0.0
        %1228 = vmatpush2.msra.mxu0 0.0
        %1229 = vmatprep.subr.mxu0 0.0
        %1230 = vmatpush2.msra.mxu0 0.0
        %1231 = vmatprep.subr.mxu0 0.0
        %1232 = vmatpush2.msra.mxu0 0.0
        %1233 = vmatprep.subr.mxu0 0.0
        %1234 = vmatpush2.msra.mxu0 0.0
        %1235 = vmatprep.subr.mxu0 0.0
        %1236 = vmatpush2.msra.mxu0 0.0
        %1237 = vmatprep.subr.mxu0 0.0
        %1238 = vmatpush2.msra.mxu0 0.0
        %1239 = vmatprep.subr.mxu0 0.0
        %1240 = vmatpush2.msra.mxu0 0.0
        %1241 = vmatprep.subr.mxu0 0.0
        %1242 = vmatpush2.msra.mxu0 0.0
        %1243 = vmatprep.subr.mxu0 0.0
        %1244 = vmatpush2.msra.mxu0 0.0
        %1245 = vmatprep.subr.mxu0 0.0
        %1246 = vmatpush2.msra.mxu0 0.0
        %1247 = vmatprep.subr.mxu0 0.0
        %1248 = vmatpush2.msra.mxu0 0.0
        %1249 = vmatprep.subr.mxu0 0.0
        %1250 = vmatpush2.msra.mxu0 0.0
        %1251 = vmatprep.subr.mxu0 0.0
        %1252 = vmatpush2.msra.mxu0 0.0
        %1253 = vmatprep.mubr.f32.mxu0 0.0
        %1254 = vmatmul.mubr.f32.gmra.mxu0 %v1144
        %v1255 = vpop.f32.mrf.mxu0
        %v1256 = vadd.f32 %v1182, %v1255
        %v1257 = vpop.f32.mrf.mxu0
        %v1258 = vadd.f32 %v1186, %v1257
        %1259 = vdwg.mxu0
        %v1260 = vxor.u32 %v1256, 2147483648
        %v1261 = vxor.u32 %v1258, 2147483648
        %v1262 = vmul.f32 %v1260, 1.442695
        %v1263 = vpow.pop %v1262
        %v1264 = vmul.f32 %v1261, 1.442695
        %v1265 = vpow.pop %v1264
        %v1266 = vadd.f32 %v1263, 1.0
        %v1267 = vadd.f32 %v1265, 1.0
        %v1268 = vrcp.pop %v1266
        %v1269 = vmul.f32 1.0, %v1268
        %v1270 = vrcp.pop %v1267
        %v1271 = vmul.f32 1.0, %v1270
        %v1272 = vtanh.pop %v1258
        %v1273 = vmul.f32 %v1269, %v1008
        %1275 = vrot.lane.b32.xlu0 %v1272, 64
        %v1276 = vpop.permute.xlu0 %1275
        %v1278 = vmul.f32 %v1269, %v1276
        %1280 = vrot.lane.b32.xlu0 %v1278, 64
        %v1281 = vpop.permute.xlu0 %1280
        %v1283 = vadd.f32 %v1273, %v1281
        %v1284 = vtanh.pop %v1283
        %1286 = vrot.lane.b32.xlu0 %v1284, 64
        %v1287 = vpop.permute.xlu0 %1286
        %v1289 = vmul.f32 %v1271, %v1287
        %s1290 = scalar_lea.vmem [#allocation3], 8
        %1291 = vst.msk [vmem:[%s1290] sm:$0xff] %vm566, %v1289
        %v1292 = vld [vmem:[#allocation2] sm:$0xff]
        %v1293 = vld [vmem:[#allocation2 + $0x8] sm:$0xff]
        %v1294 = vld [vmem:[%s6] sm:$0xff]
        %v1295 = vld [vmem:[%s6 + $0x8] sm:$0xff]
        %v1296 = vld [vmem:[%s6 + $0x10] sm:$0xff]
        %v1297 = vld [vmem:[%s6 + $0x18] sm:$0xff]
        %v1298 = vld [vmem:[%s6 + $0x20] sm:$0xff]
        %v1299 = vld [vmem:[%s6 + $0x28] sm:$0xff]
        %v1300 = vld [vmem:[%s6 + $0x30] sm:$0xff]
        %v1301 = vld [vmem:[%s6 + $0x38] sm:$0xff]
        %v1302 = vld [vmem:[%s6 + $0x40] sm:$0xff]
        %v1303 = vld [vmem:[%s6 + $0x48] sm:$0xff]
        %v1304 = vld [vmem:[%s6 + $0x50] sm:$0xff]
        %v1305 = vld [vmem:[%s6 + $0x58] sm:$0xff]
        %v1306 = vld [vmem:[%s6 + $0x60] sm:$0xff]
        %v1307 = vld [vmem:[%s6 + $0x68] sm:$0xff]
        %v1308 = vld [vmem:[%s6 + $0x70] sm:$0xff]
        %v1309 = vld [vmem:[%s6 + $0x78] sm:$0xff]
        %v1311 = vsel %vm566, %v1139, 0
        %1313 = vmatprep.subr.mxu0 0.0
        %1314 = vmatpush1.msra.mxu0 0.0
        %1315 = vmatprep.subr.mxu0 0.0
        %1316 = vmatpush1.msra.mxu0 0.0
        %1317 = vmatprep.subr.mxu0 0.0
        %1318 = vmatpush1.msra.mxu0 0.0
        %1319 = vmatprep.subr.mxu0 0.0
        %1320 = vmatpush1.msra.mxu0 0.0
        %1321 = vmatprep.subr.mxu0 0.0
        %1322 = vmatpush1.msra.mxu0 0.0
        %1323 = vmatprep.subr.mxu0 0.0
        %1324 = vmatpush1.msra.mxu0 0.0
        %1325 = vmatprep.subr.mxu0 0.0
        %1326 = vmatpush1.msra.mxu0 0.0
        %1327 = vmatprep.subr.mxu0 0.0
        %1328 = vmatpush1.msra.mxu0 0.0
        %1329 = vmatprep.subr.mxu0 %v1309
        %1330 = vmatpush1.msra.mxu0 %v1308
        %1331 = vmatprep.subr.mxu0 %v1307
        %1332 = vmatpush1.msra.mxu0 %v1306
        %1333 = vmatprep.subr.mxu0 %v1305
        %1334 = vmatpush1.msra.mxu0 %v1304
        %1335 = vmatprep.subr.mxu0 %v1303
        %1336 = vmatpush1.msra.mxu0 %v1302
        %1337 = vmatprep.subr.mxu0 %v1301
        %1338 = vmatpush1.msra.mxu0 %v1300
        %1339 = vmatprep.subr.mxu0 %v1299
        %1340 = vmatpush1.msra.mxu0 %v1298
        %1341 = vmatprep.subr.mxu0 %v1297
        %1342 = vmatpush1.msra.mxu0 %v1296
        %1343 = vmatprep.subr.mxu0 %v1295
        %1344 = vmatpush1.msra.mxu0 %v1294
        %1345 = vmatprep.subr.mxu0 0.0
        %1346 = vmatpush2.msra.mxu0 0.0
        %1347 = vmatprep.subr.mxu0 0.0
        %1348 = vmatpush2.msra.mxu0 0.0
        %1349 = vmatprep.subr.mxu0 0.0
        %1350 = vmatpush2.msra.mxu0 0.0
        %1351 = vmatprep.subr.mxu0 0.0
        %1352 = vmatpush2.msra.mxu0 0.0
        %1353 = vmatprep.subr.mxu0 0.0
        %1354 = vmatpush2.msra.mxu0 0.0
        %1355 = vmatprep.subr.mxu0 0.0
        %1356 = vmatpush2.msra.mxu0 0.0
        %1357 = vmatprep.subr.mxu0 0.0
        %1358 = vmatpush2.msra.mxu0 0.0
        %1359 = vmatprep.subr.mxu0 0.0
        %1360 = vmatpush2.msra.mxu0 0.0
        %1361 = vmatprep.subr.mxu0 0.0
        %1362 = vmatpush2.msra.mxu0 0.0
        %1363 = vmatprep.subr.mxu0 0.0
        %1364 = vmatpush2.msra.mxu0 0.0
        %1365 = vmatprep.subr.mxu0 0.0
        %1366 = vmatpush2.msra.mxu0 0.0
        %1367 = vmatprep.subr.mxu0 0.0
        %1368 = vmatpush2.msra.mxu0 0.0
        %1369 = vmatprep.subr.mxu0 0.0
        %1370 = vmatpush2.msra.mxu0 0.0
        %1371 = vmatprep.subr.mxu0 0.0
        %1372 = vmatpush2.msra.mxu0 0.0
        %1373 = vmatprep.subr.mxu0 0.0
        %1374 = vmatpush2.msra.mxu0 0.0
        %1375 = vmatprep.subr.mxu0 0.0
        %1376 = vmatpush2.msra.mxu0 0.0
        %1377 = vmatprep.mubr.f32.mxu0 0.0
        %1378 = vmatmul.mubr.f32.gmra.mxu0 %v1311
        %v1379 = vpop.f32.mrf.mxu0
        %v1380 = vadd.f32 0.0, %v1379
        %v1381 = vpop.f32.mrf.mxu0
        %v1382 = vadd.f32 0.0, %v1381
        %1383 = vdwg.mxu0
        %v1384 = vadd.f32 %v1292, %v1380
        %v1385 = vadd.f32 %v1293, %v1382
        %v1386 = vxor.u32 %v1384, 2147483648
        %v1387 = vxor.u32 %v1385, 2147483648
        %v1388 = vmul.f32 %v1386, 1.442695
        %v1389 = vpow.pop %v1388
        %v1390 = vmul.f32 %v1387, 1.442695
        %v1391 = vpow.pop %v1390
        %v1392 = vadd.f32 %v1389, 1.0
        %v1393 = vadd.f32 %v1391, 1.0
        %v1394 = vrcp.pop %v1392
        %v1395 = vmul.f32 1.0, %v1394
        %v1396 = vrcp.pop %v1393
        %v1397 = vmul.f32 1.0, %v1396
        %v1398 = vtanh.pop %v1385
        %v1399 = vmul.f32 %v1395, %v1133
        %1401 = vrot.lane.b32.xlu0 %v1398, 64
        %v1402 = vpop.permute.xlu0 %1401
        %v1404 = vmul.f32 %v1395, %v1402
        %1406 = vrot.lane.b32.xlu0 %v1404, 64
        %v1407 = vpop.permute.xlu0 %1406
        %v1409 = vadd.f32 %v1399, %v1407
        %v1410 = vtanh.pop %v1409
        %1412 = vrot.lane.b32.xlu0 %v1410, 64
        %v1413 = vpop.permute.xlu0 %1412
        %v1415 = vmul.f32 %v1397, %v1413
        %1417 = vrot.lane.b32.xlu0 %v1289, 64
        %v1418 = vpop.permute.xlu0 %1417
        %v1420 = vsel %vm566, %v1415, %v1418
        %v1421 = vld [vmem:[%s8] sm:$0xff]
        %v1422 = vld [vmem:[%s8 + $0x8] sm:$0xff]
        %v1423 = vld [vmem:[%s8 + $0x10] sm:$0xff]
        %v1424 = vld [vmem:[%s8 + $0x18] sm:$0xff]
        %v1425 = vld [vmem:[%s8 + $0x20] sm:$0xff]
        %v1426 = vld [vmem:[%s8 + $0x28] sm:$0xff]
        %v1427 = vld [vmem:[%s8 + $0x30] sm:$0xff]
        %v1428 = vld [vmem:[%s8 + $0x38] sm:$0xff]
        %v1429 = vld [vmem:[%s8 + $0x40] sm:$0xff]
        %v1430 = vld [vmem:[%s8 + $0x48] sm:$0xff]
        %v1431 = vld [vmem:[%s8 + $0x50] sm:$0xff]
        %v1432 = vld [vmem:[%s8 + $0x58] sm:$0xff]
        %v1433 = vld [vmem:[%s8 + $0x60] sm:$0xff]
        %v1434 = vld [vmem:[%s8 + $0x68] sm:$0xff]
        %v1435 = vld [vmem:[%s8 + $0x70] sm:$0xff]
        %v1436 = vld [vmem:[%s8 + $0x78] sm:$0xff]
        %v1437 = vld [vmem:[%s8 + $0x80] sm:$0xff]
        %v1438 = vld [vmem:[%s8 + $0x88] sm:$0xff]
        %v1439 = vld [vmem:[%s8 + $0x90] sm:$0xff]
        %v1440 = vld [vmem:[%s8 + $0x98] sm:$0xff]
        %v1441 = vld [vmem:[%s8 + $0xa0] sm:$0xff]
        %v1442 = vld [vmem:[%s8 + $0xa8] sm:$0xff]
        %v1443 = vld [vmem:[%s8 + $0xb0] sm:$0xff]
        %v1444 = vld [vmem:[%s8 + $0xb8] sm:$0xff]
        %v1445 = vld [vmem:[%s8 + $0xc0] sm:$0xff]
        %v1446 = vld [vmem:[%s8 + $0xc8] sm:$0xff]
        %v1447 = vld [vmem:[%s8 + $0xd0] sm:$0xff]
        %v1448 = vld [vmem:[%s8 + $0xd8] sm:$0xff]
        %v1449 = vld [vmem:[%s8 + $0xe0] sm:$0xff]
        %v1450 = vld [vmem:[%s8 + $0xe8] sm:$0xff]
        %v1451 = vld [vmem:[%s8 + $0xf0] sm:$0xff]
        %v1452 = vld [vmem:[%s8 + $0xf8] sm:$0xff]
        %v1453 = vld [vmem:[%s9] sm:$0x3]
        %v1455 = vlaneseq
        %v1456 = vshrl.u32 %v1455, 7
        %v1457 = vsub.s32 0, %v1456
        %v1458 = vrot.slane %v1453, %v1457
        %v1459 = vlaneseq
        %v1460 = vshrl.u32 %v1459, 7
        %v1461 = vsub.s32 1, %v1460
        %v1462 = vrot.slane %v1453, %v1461
        %1465 = vmatprep.subr.mxu0 %v1452
        %1466 = vmatpush1.msra.mxu0 %v1451
        %1467 = vmatprep.subr.mxu0 %v1450
        %1468 = vmatpush1.msra.mxu0 %v1449
        %1469 = vmatprep.subr.mxu0 %v1448
        %1470 = vmatpush1.msra.mxu0 %v1447
        %1471 = vmatprep.subr.mxu0 %v1446
        %1472 = vmatpush1.msra.mxu0 %v1445
        %1473 = vmatprep.subr.mxu0 %v1444
        %1474 = vmatpush1.msra.mxu0 %v1443
        %1475 = vmatprep.subr.mxu0 %v1442
        %1476 = vmatpush1.msra.mxu0 %v1441
        %1477 = vmatprep.subr.mxu0 %v1440
        %1478 = vmatpush1.msra.mxu0 %v1439
        %1479 = vmatprep.subr.mxu0 %v1438
        %1480 = vmatpush1.msra.mxu0 %v1437
        %1481 = vmatprep.subr.mxu0 %v1436
        %1482 = vmatpush1.msra.mxu0 %v1435
        %1483 = vmatprep.subr.mxu0 %v1434
        %1484 = vmatpush1.msra.mxu0 %v1433
        %1485 = vmatprep.subr.mxu0 %v1432
        %1486 = vmatpush1.msra.mxu0 %v1431
        %1487 = vmatprep.subr.mxu0 %v1430
        %1488 = vmatpush1.msra.mxu0 %v1429
        %1489 = vmatprep.subr.mxu0 %v1428
        %1490 = vmatpush1.msra.mxu0 %v1427
        %1491 = vmatprep.subr.mxu0 %v1426
        %1492 = vmatpush1.msra.mxu0 %v1425
        %1493 = vmatprep.subr.mxu0 %v1424
        %1494 = vmatpush1.msra.mxu0 %v1423
        %1495 = vmatprep.subr.mxu0 %v1422
        %1496 = vmatpush1.msra.mxu0 %v1421
        %1497 = vmatprep.subr.mxu0 0.0
        %1498 = vmatpush2.msra.mxu0 0.0
        %1499 = vmatprep.subr.mxu0 0.0
        %1500 = vmatpush2.msra.mxu0 0.0
        %1501 = vmatprep.subr.mxu0 0.0
        %1502 = vmatpush2.msra.mxu0 0.0
        %1503 = vmatprep.subr.mxu0 0.0
        %1504 = vmatpush2.msra.mxu0 0.0
        %1505 = vmatprep.subr.mxu0 0.0
        %1506 = vmatpush2.msra.mxu0 0.0
        %1507 = vmatprep.subr.mxu0 0.0
        %1508 = vmatpush2.msra.mxu0 0.0
        %1509 = vmatprep.subr.mxu0 0.0
        %1510 = vmatpush2.msra.mxu0 0.0
        %1511 = vmatprep.subr.mxu0 0.0
        %1512 = vmatpush2.msra.mxu0 0.0
        %1513 = vmatprep.subr.mxu0 0.0
        %1514 = vmatpush2.msra.mxu0 0.0
        %1515 = vmatprep.subr.mxu0 0.0
        %1516 = vmatpush2.msra.mxu0 0.0
        %1517 = vmatprep.subr.mxu0 0.0
        %1518 = vmatpush2.msra.mxu0 0.0
        %1519 = vmatprep.subr.mxu0 0.0
        %1520 = vmatpush2.msra.mxu0 0.0
        %1521 = vmatprep.subr.mxu0 0.0
        %1522 = vmatpush2.msra.mxu0 0.0
        %1523 = vmatprep.subr.mxu0 0.0
        %1524 = vmatpush2.msra.mxu0 0.0
        %1525 = vmatprep.subr.mxu0 0.0
        %1526 = vmatpush2.msra.mxu0 0.0
        %1527 = vmatprep.subr.mxu0 0.0
        %1528 = vmatpush2.msra.mxu0 0.0
        %1529 = vmatprep.mubr.f32.mxu0 0.0
        %1530 = vmatmul.mubr.f32.gmra.mxu0 %v1420
        %v1531 = vpop.f32.mrf.mxu0
        %v1532 = vadd.f32 %v1458, %v1531
        %v1533 = vpop.f32.mrf.mxu0
        %v1534 = vadd.f32 %v1462, %v1533
        %1535 = vdwg.mxu0
        %v1536 = vxor.u32 %v1532, 2147483648
        %v1537 = vxor.u32 %v1534, 2147483648
        %v1538 = vmul.f32 %v1536, 1.442695
        %v1539 = vpow.pop %v1538
        %v1540 = vmul.f32 %v1537, 1.442695
        %v1541 = vpow.pop %v1540
        %v1542 = vadd.f32 %v1539, 1.0
        %v1543 = vadd.f32 %v1541, 1.0
        %v1544 = vrcp.pop %v1542
        %v1545 = vmul.f32 1.0, %v1544
        %v1546 = vrcp.pop %v1543
        %v1547 = vmul.f32 1.0, %v1546
        %v1548 = vtanh.pop %v1534
        %v1549 = vmul.f32 %v1545, %v1283
        %1551 = vrot.lane.b32.xlu0 %v1548, 64
        %v1552 = vpop.permute.xlu0 %1551
        %v1554 = vmul.f32 %v1545, %v1552
        %1556 = vrot.lane.b32.xlu0 %v1554, 64
        %v1557 = vpop.permute.xlu0 %1556
        %v1559 = vadd.f32 %v1549, %v1557
        %v1560 = vtanh.pop %v1559
        %1562 = vrot.lane.b32.xlu0 %v1560, 64
        %v1563 = vpop.permute.xlu0 %1562
        %v1565 = vmul.f32 %v1547, %v1563
        %s1566 = scalar_lea.vmem [#allocation3], 16
        %1567 = vst.msk [vmem:[%s1566] sm:$0xff] %vm566, %v1565
        %v1568 = vld [vmem:[#allocation2] sm:$0xff]
        %v1569 = vld [vmem:[#allocation2 + $0x8] sm:$0xff]
        %v1570 = vld [vmem:[%s6] sm:$0xff]
        %v1571 = vld [vmem:[%s6 + $0x8] sm:$0xff]
        %v1572 = vld [vmem:[%s6 + $0x10] sm:$0xff]
        %v1573 = vld [vmem:[%s6 + $0x18] sm:$0xff]
        %v1574 = vld [vmem:[%s6 + $0x20] sm:$0xff]
        %v1575 = vld [vmem:[%s6 + $0x28] sm:$0xff]
        %v1576 = vld [vmem:[%s6 + $0x30] sm:$0xff]
        %v1577 = vld [vmem:[%s6 + $0x38] sm:$0xff]
        %v1578 = vld [vmem:[%s6 + $0x40] sm:$0xff]
        %v1579 = vld [vmem:[%s6 + $0x48] sm:$0xff]
        %v1580 = vld [vmem:[%s6 + $0x50] sm:$0xff]
        %v1581 = vld [vmem:[%s6 + $0x58] sm:$0xff]
        %v1582 = vld [vmem:[%s6 + $0x60] sm:$0xff]
        %v1583 = vld [vmem:[%s6 + $0x68] sm:$0xff]
        %v1584 = vld [vmem:[%s6 + $0x70] sm:$0xff]
        %v1585 = vld [vmem:[%s6 + $0x78] sm:$0xff]
        %v1587 = vsel %vm566, %v1415, 0
        %1589 = vmatprep.subr.mxu0 0.0
        %1590 = vmatpush1.msra.mxu0 0.0
        %1591 = vmatprep.subr.mxu0 0.0
        %1592 = vmatpush1.msra.mxu0 0.0
        %1593 = vmatprep.subr.mxu0 0.0
        %1594 = vmatpush1.msra.mxu0 0.0
        %1595 = vmatprep.subr.mxu0 0.0
        %1596 = vmatpush1.msra.mxu0 0.0
        %1597 = vmatprep.subr.mxu0 0.0
        %1598 = vmatpush1.msra.mxu0 0.0
        %1599 = vmatprep.subr.mxu0 0.0
        %1600 = vmatpush1.msra.mxu0 0.0
        %1601 = vmatprep.subr.mxu0 0.0
        %1602 = vmatpush1.msra.mxu0 0.0
        %1603 = vmatprep.subr.mxu0 0.0
        %1604 = vmatpush1.msra.mxu0 0.0
        %1605 = vmatprep.subr.mxu0 %v1585
        %1606 = vmatpush1.msra.mxu0 %v1584
        %1607 = vmatprep.subr.mxu0 %v1583
        %1608 = vmatpush1.msra.mxu0 %v1582
        %1609 = vmatprep.subr.mxu0 %v1581
        %1610 = vmatpush1.msra.mxu0 %v1580
        %1611 = vmatprep.subr.mxu0 %v1579
        %1612 = vmatpush1.msra.mxu0 %v1578
        %1613 = vmatprep.subr.mxu0 %v1577
        %1614 = vmatpush1.msra.mxu0 %v1576
        %1615 = vmatprep.subr.mxu0 %v1575
        %1616 = vmatpush1.msra.mxu0 %v1574
        %1617 = vmatprep.subr.mxu0 %v1573
        %1618 = vmatpush1.msra.mxu0 %v1572
        %1619 = vmatprep.subr.mxu0 %v1571
        %1620 = vmatpush1.msra.mxu0 %v1570
        %1621 = vmatprep.subr.mxu0 0.0
        %1622 = vmatpush2.msra.mxu0 0.0
        %1623 = vmatprep.subr.mxu0 0.0
        %1624 = vmatpush2.msra.mxu0 0.0
        %1625 = vmatprep.subr.mxu0 0.0
        %1626 = vmatpush2.msra.mxu0 0.0
        %1627 = vmatprep.subr.mxu0 0.0
        %1628 = vmatpush2.msra.mxu0 0.0
        %1629 = vmatprep.subr.mxu0 0.0
        %1630 = vmatpush2.msra.mxu0 0.0
        %1631 = vmatprep.subr.mxu0 0.0
        %1632 = vmatpush2.msra.mxu0 0.0
        %1633 = vmatprep.subr.mxu0 0.0
        %1634 = vmatpush2.msra.mxu0 0.0
        %1635 = vmatprep.subr.mxu0 0.0
        %1636 = vmatpush2.msra.mxu0 0.0
        %1637 = vmatprep.subr.mxu0 0.0
        %1638 = vmatpush2.msra.mxu0 0.0
        %1639 = vmatprep.subr.mxu0 0.0
        %1640 = vmatpush2.msra.mxu0 0.0
        %1641 = vmatprep.subr.mxu0 0.0
        %1642 = vmatpush2.msra.mxu0 0.0
        %1643 = vmatprep.subr.mxu0 0.0
        %1644 = vmatpush2.msra.mxu0 0.0
        %1645 = vmatprep.subr.mxu0 0.0
        %1646 = vmatpush2.msra.mxu0 0.0
        %1647 = vmatprep.subr.mxu0 0.0
        %1648 = vmatpush2.msra.mxu0 0.0
        %1649 = vmatprep.subr.mxu0 0.0
        %1650 = vmatpush2.msra.mxu0 0.0
        %1651 = vmatprep.subr.mxu0 0.0
        %1652 = vmatpush2.msra.mxu0 0.0
        %1653 = vmatprep.mubr.f32.mxu0 0.0
        %1654 = vmatmul.mubr.f32.gmra.mxu0 %v1587
        %v1655 = vpop.f32.mrf.mxu0
        %v1656 = vadd.f32 0.0, %v1655
        %v1657 = vpop.f32.mrf.mxu0
        %v1658 = vadd.f32 0.0, %v1657
        %1659 = vdwg.mxu0
        %v1660 = vadd.f32 %v1568, %v1656
        %v1661 = vadd.f32 %v1569, %v1658
        %v1662 = vxor.u32 %v1660, 2147483648
        %v1663 = vxor.u32 %v1661, 2147483648
        %v1664 = vmul.f32 %v1662, 1.442695
        %v1665 = vpow.pop %v1664
        %v1666 = vmul.f32 %v1663, 1.442695
        %v1667 = vpow.pop %v1666
        %v1668 = vadd.f32 %v1665, 1.0
        %v1669 = vadd.f32 %v1667, 1.0
        %v1670 = vrcp.pop %v1668
        %v1671 = vmul.f32 1.0, %v1670
        %v1672 = vrcp.pop %v1669
        %v1673 = vmul.f32 1.0, %v1672
        %v1674 = vtanh.pop %v1661
        %v1675 = vmul.f32 %v1671, %v1409
        %1677 = vrot.lane.b32.xlu0 %v1674, 64
        %v1678 = vpop.permute.xlu0 %1677
        %v1680 = vmul.f32 %v1671, %v1678
        %1682 = vrot.lane.b32.xlu0 %v1680, 64
        %v1683 = vpop.permute.xlu0 %1682
        %v1685 = vadd.f32 %v1675, %v1683
        %v1686 = vtanh.pop %v1685
        %1688 = vrot.lane.b32.xlu0 %v1686, 64
        %v1689 = vpop.permute.xlu0 %1688
        %v1691 = vmul.f32 %v1673, %v1689
        %1693 = vrot.lane.b32.xlu0 %v1565, 64
        %v1694 = vpop.permute.xlu0 %1693
        %v1696 = vsel %vm566, %v1691, %v1694
        %v1697 = vld [vmem:[%s8] sm:$0xff]
        %v1698 = vld [vmem:[%s8 + $0x8] sm:$0xff]
        %v1699 = vld [vmem:[%s8 + $0x10] sm:$0xff]
        %v1700 = vld [vmem:[%s8 + $0x18] sm:$0xff]
        %v1701 = vld [vmem:[%s8 + $0x20] sm:$0xff]
        %v1702 = vld [vmem:[%s8 + $0x28] sm:$0xff]
        %v1703 = vld [vmem:[%s8 + $0x30] sm:$0xff]
        %v1704 = vld [vmem:[%s8 + $0x38] sm:$0xff]
        %v1705 = vld [vmem:[%s8 + $0x40] sm:$0xff]
        %v1706 = vld [vmem:[%s8 + $0x48] sm:$0xff]
        %v1707 = vld [vmem:[%s8 + $0x50] sm:$0xff]
        %v1708 = vld [vmem:[%s8 + $0x58] sm:$0xff]
        %v1709 = vld [vmem:[%s8 + $0x60] sm:$0xff]
        %v1710 = vld [vmem:[%s8 + $0x68] sm:$0xff]
        %v1711 = vld [vmem:[%s8 + $0x70] sm:$0xff]
        %v1712 = vld [vmem:[%s8 + $0x78] sm:$0xff]
        %v1713 = vld [vmem:[%s8 + $0x80] sm:$0xff]
        %v1714 = vld [vmem:[%s8 + $0x88] sm:$0xff]
        %v1715 = vld [vmem:[%s8 + $0x90] sm:$0xff]
        %v1716 = vld [vmem:[%s8 + $0x98] sm:$0xff]
        %v1717 = vld [vmem:[%s8 + $0xa0] sm:$0xff]
        %v1718 = vld [vmem:[%s8 + $0xa8] sm:$0xff]
        %v1719 = vld [vmem:[%s8 + $0xb0] sm:$0xff]
        %v1720 = vld [vmem:[%s8 + $0xb8] sm:$0xff]
        %v1721 = vld [vmem:[%s8 + $0xc0] sm:$0xff]
        %v1722 = vld [vmem:[%s8 + $0xc8] sm:$0xff]
        %v1723 = vld [vmem:[%s8 + $0xd0] sm:$0xff]
        %v1724 = vld [vmem:[%s8 + $0xd8] sm:$0xff]
        %v1725 = vld [vmem:[%s8 + $0xe0] sm:$0xff]
        %v1726 = vld [vmem:[%s8 + $0xe8] sm:$0xff]
        %v1727 = vld [vmem:[%s8 + $0xf0] sm:$0xff]
        %v1728 = vld [vmem:[%s8 + $0xf8] sm:$0xff]
        %v1729 = vld [vmem:[%s9] sm:$0x3]
        %v1731 = vlaneseq
        %v1732 = vshrl.u32 %v1731, 7
        %v1733 = vsub.s32 0, %v1732
        %v1734 = vrot.slane %v1729, %v1733
        %v1735 = vlaneseq
        %v1736 = vshrl.u32 %v1735, 7
        %v1737 = vsub.s32 1, %v1736
        %v1738 = vrot.slane %v1729, %v1737
        %1741 = vmatprep.subr.mxu0 %v1728
        %1742 = vmatpush1.msra.mxu0 %v1727
        %1743 = vmatprep.subr.mxu0 %v1726
        %1744 = vmatpush1.msra.mxu0 %v1725
        %1745 = vmatprep.subr.mxu0 %v1724
        %1746 = vmatpush1.msra.mxu0 %v1723
        %1747 = vmatprep.subr.mxu0 %v1722
        %1748 = vmatpush1.msra.mxu0 %v1721
        %1749 = vmatprep.subr.mxu0 %v1720
        %1750 = vmatpush1.msra.mxu0 %v1719
        %1751 = vmatprep.subr.mxu0 %v1718
        %1752 = vmatpush1.msra.mxu0 %v1717
        %1753 = vmatprep.subr.mxu0 %v1716
        %1754 = vmatpush1.msra.mxu0 %v1715
        %1755 = vmatprep.subr.mxu0 %v1714
        %1756 = vmatpush1.msra.mxu0 %v1713
        %1757 = vmatprep.subr.mxu0 %v1712
        %1758 = vmatpush1.msra.mxu0 %v1711
        %1759 = vmatprep.subr.mxu0 %v1710
        %1760 = vmatpush1.msra.mxu0 %v1709
        %1761 = vmatprep.subr.mxu0 %v1708
        %1762 = vmatpush1.msra.mxu0 %v1707
        %1763 = vmatprep.subr.mxu0 %v1706
        %1764 = vmatpush1.msra.mxu0 %v1705
        %1765 = vmatprep.subr.mxu0 %v1704
        %1766 = vmatpush1.msra.mxu0 %v1703
        %1767 = vmatprep.subr.mxu0 %v1702
        %1768 = vmatpush1.msra.mxu0 %v1701
        %1769 = vmatprep.subr.mxu0 %v1700
        %1770 = vmatpush1.msra.mxu0 %v1699
        %1771 = vmatprep.subr.mxu0 %v1698
        %1772 = vmatpush1.msra.mxu0 %v1697
        %1773 = vmatprep.subr.mxu0 0.0
        %1774 = vmatpush2.msra.mxu0 0.0
        %1775 = vmatprep.subr.mxu0 0.0
        %1776 = vmatpush2.msra.mxu0 0.0
        %1777 = vmatprep.subr.mxu0 0.0
        %1778 = vmatpush2.msra.mxu0 0.0
        %1779 = vmatprep.subr.mxu0 0.0
        %1780 = vmatpush2.msra.mxu0 0.0
        %1781 = vmatprep.subr.mxu0 0.0
        %1782 = vmatpush2.msra.mxu0 0.0
        %1783 = vmatprep.subr.mxu0 0.0
        %1784 = vmatpush2.msra.mxu0 0.0
        %1785 = vmatprep.subr.mxu0 0.0
        %1786 = vmatpush2.msra.mxu0 0.0
        %1787 = vmatprep.subr.mxu0 0.0
        %1788 = vmatpush2.msra.mxu0 0.0
        %1789 = vmatprep.subr.mxu0 0.0
        %1790 = vmatpush2.msra.mxu0 0.0
        %1791 = vmatprep.subr.mxu0 0.0
        %1792 = vmatpush2.msra.mxu0 0.0
        %1793 = vmatprep.subr.mxu0 0.0
        %1794 = vmatpush2.msra.mxu0 0.0
        %1795 = vmatprep.subr.mxu0 0.0
        %1796 = vmatpush2.msra.mxu0 0.0
        %1797 = vmatprep.subr.mxu0 0.0
        %1798 = vmatpush2.msra.mxu0 0.0
        %1799 = vmatprep.subr.mxu0 0.0
        %1800 = vmatpush2.msra.mxu0 0.0
        %1801 = vmatprep.subr.mxu0 0.0
        %1802 = vmatpush2.msra.mxu0 0.0
        %1803 = vmatprep.subr.mxu0 0.0
        %1804 = vmatpush2.msra.mxu0 0.0
        %1805 = vmatprep.mubr.f32.mxu0 0.0
        %1806 = vmatmul.mubr.f32.gmra.mxu0 %v1696
        %v1807 = vpop.f32.mrf.mxu0
        %v1808 = vadd.f32 %v1734, %v1807
        %v1809 = vpop.f32.mrf.mxu0
        %v1810 = vadd.f32 %v1738, %v1809
        %1811 = vdwg.mxu0
        %v1812 = vxor.u32 %v1808, 2147483648
        %v1813 = vxor.u32 %v1810, 2147483648
        %v1814 = vmul.f32 %v1812, 1.442695
        %v1815 = vpow.pop %v1814
        %v1816 = vmul.f32 %v1813, 1.442695
        %v1817 = vpow.pop %v1816
        %v1818 = vadd.f32 %v1815, 1.0
        %v1819 = vadd.f32 %v1817, 1.0
        %v1820 = vrcp.pop %v1818
        %v1821 = vmul.f32 1.0, %v1820
        %v1822 = vrcp.pop %v1819
        %v1823 = vmul.f32 1.0, %v1822
        %v1824 = vtanh.pop %v1810
        %v1825 = vmul.f32 %v1821, %v1559
        %1827 = vrot.lane.b32.xlu0 %v1824, 64
        %v1828 = vpop.permute.xlu0 %1827
        %v1830 = vmul.f32 %v1821, %v1828
        %1832 = vrot.lane.b32.xlu0 %v1830, 64
        %v1833 = vpop.permute.xlu0 %1832
        %v1835 = vadd.f32 %v1825, %v1833
        %v1836 = vtanh.pop %v1835
        %1838 = vrot.lane.b32.xlu0 %v1836, 64
        %v1839 = vpop.permute.xlu0 %1838
        %v1841 = vmul.f32 %v1823, %v1839
        %s1842 = scalar_lea.vmem [#allocation3], 24
        %1843 = vst.msk [vmem:[%s1842] sm:$0xff] %vm566, %v1841
        %v1844 = vld [vmem:[#allocation2] sm:$0xff]
        %v1845 = vld [vmem:[#allocation2 + $0x8] sm:$0xff]
        %v1846 = vld [vmem:[%s6] sm:$0xff]
        %v1847 = vld [vmem:[%s6 + $0x8] sm:$0xff]
        %v1848 = vld [vmem:[%s6 + $0x10] sm:$0xff]
        %v1849 = vld [vmem:[%s6 + $0x18] sm:$0xff]
        %v1850 = vld [vmem:[%s6 + $0x20] sm:$0xff]
        %v1851 = vld [vmem:[%s6 + $0x28] sm:$0xff]
        %v1852 = vld [vmem:[%s6 + $0x30] sm:$0xff]
        %v1853 = vld [vmem:[%s6 + $0x38] sm:$0xff]
        %v1854 = vld [vmem:[%s6 + $0x40] sm:$0xff]
        %v1855 = vld [vmem:[%s6 + $0x48] sm:$0xff]
        %v1856 = vld [vmem:[%s6 + $0x50] sm:$0xff]
        %v1857 = vld [vmem:[%s6 + $0x58] sm:$0xff]
        %v1858 = vld [vmem:[%s6 + $0x60] sm:$0xff]
        %v1859 = vld [vmem:[%s6 + $0x68] sm:$0xff]
        %v1860 = vld [vmem:[%s6 + $0x70] sm:$0xff]
        %v1861 = vld [vmem:[%s6 + $0x78] sm:$0xff]
        %v1863 = vsel %vm566, %v1691, 0
        %1865 = vmatprep.subr.mxu0 0.0
        %1866 = vmatpush1.msra.mxu0 0.0
        %1867 = vmatprep.subr.mxu0 0.0
        %1868 = vmatpush1.msra.mxu0 0.0
        %1869 = vmatprep.subr.mxu0 0.0
        %1870 = vmatpush1.msra.mxu0 0.0
        %1871 = vmatprep.subr.mxu0 0.0
        %1872 = vmatpush1.msra.mxu0 0.0
        %1873 = vmatprep.subr.mxu0 0.0
        %1874 = vmatpush1.msra.mxu0 0.0
        %1875 = vmatprep.subr.mxu0 0.0
        %1876 = vmatpush1.msra.mxu0 0.0
        %1877 = vmatprep.subr.mxu0 0.0
        %1878 = vmatpush1.msra.mxu0 0.0
        %1879 = vmatprep.subr.mxu0 0.0
        %1880 = vmatpush1.msra.mxu0 0.0
        %1881 = vmatprep.subr.mxu0 %v1861
        %1882 = vmatpush1.msra.mxu0 %v1860
        %1883 = vmatprep.subr.mxu0 %v1859
        %1884 = vmatpush1.msra.mxu0 %v1858
        %1885 = vmatprep.subr.mxu0 %v1857
        %1886 = vmatpush1.msra.mxu0 %v1856
        %1887 = vmatprep.subr.mxu0 %v1855
        %1888 = vmatpush1.msra.mxu0 %v1854
        %1889 = vmatprep.subr.mxu0 %v1853
        %1890 = vmatpush1.msra.mxu0 %v1852
        %1891 = vmatprep.subr.mxu0 %v1851
        %1892 = vmatpush1.msra.mxu0 %v1850
        %1893 = vmatprep.subr.mxu0 %v1849
        %1894 = vmatpush1.msra.mxu0 %v1848
        %1895 = vmatprep.subr.mxu0 %v1847
        %1896 = vmatpush1.msra.mxu0 %v1846
        %1897 = vmatprep.subr.mxu0 0.0
        %1898 = vmatpush2.msra.mxu0 0.0
        %1899 = vmatprep.subr.mxu0 0.0
        %1900 = vmatpush2.msra.mxu0 0.0
        %1901 = vmatprep.subr.mxu0 0.0
        %1902 = vmatpush2.msra.mxu0 0.0
        %1903 = vmatprep.subr.mxu0 0.0
        %1904 = vmatpush2.msra.mxu0 0.0
        %1905 = vmatprep.subr.mxu0 0.0
        %1906 = vmatpush2.msra.mxu0 0.0
        %1907 = vmatprep.subr.mxu0 0.0
        %1908 = vmatpush2.msra.mxu0 0.0
        %1909 = vmatprep.subr.mxu0 0.0
        %1910 = vmatpush2.msra.mxu0 0.0
        %1911 = vmatprep.subr.mxu0 0.0
        %1912 = vmatpush2.msra.mxu0 0.0
        %1913 = vmatprep.subr.mxu0 0.0
        %1914 = vmatpush2.msra.mxu0 0.0
        %1915 = vmatprep.subr.mxu0 0.0
        %1916 = vmatpush2.msra.mxu0 0.0
        %1917 = vmatprep.subr.mxu0 0.0
        %1918 = vmatpush2.msra.mxu0 0.0
        %1919 = vmatprep.subr.mxu0 0.0
        %1920 = vmatpush2.msra.mxu0 0.0
        %1921 = vmatprep.subr.mxu0 0.0
        %1922 = vmatpush2.msra.mxu0 0.0
        %1923 = vmatprep.subr.mxu0 0.0
        %1924 = vmatpush2.msra.mxu0 0.0
        %1925 = vmatprep.subr.mxu0 0.0
        %1926 = vmatpush2.msra.mxu0 0.0
        %1927 = vmatprep.subr.mxu0 0.0
        %1928 = vmatpush2.msra.mxu0 0.0
        %1929 = vmatprep.mubr.f32.mxu0 0.0
        %1930 = vmatmul.mubr.f32.gmra.mxu0 %v1863
        %v1931 = vpop.f32.mrf.mxu0
        %v1932 = vadd.f32 0.0, %v1931
        %v1933 = vpop.f32.mrf.mxu0
        %v1934 = vadd.f32 0.0, %v1933
        %1935 = vdwg.mxu0
        %v1936 = vadd.f32 %v1844, %v1932
        %v1937 = vadd.f32 %v1845, %v1934
        %v1938 = vxor.u32 %v1936, 2147483648
        %v1939 = vxor.u32 %v1937, 2147483648
        %v1940 = vmul.f32 %v1938, 1.442695
        %v1941 = vpow.pop %v1940
        %v1942 = vmul.f32 %v1939, 1.442695
        %v1943 = vpow.pop %v1942
        %v1944 = vadd.f32 %v1941, 1.0
        %v1945 = vadd.f32 %v1943, 1.0
        %v1946 = vrcp.pop %v1944
        %v1947 = vmul.f32 1.0, %v1946
        %v1948 = vrcp.pop %v1945
        %v1949 = vmul.f32 1.0, %v1948
        %v1950 = vtanh.pop %v1937
        %v1951 = vmul.f32 %v1947, %v1685
        %1953 = vrot.lane.b32.xlu0 %v1950, 64
        %v1954 = vpop.permute.xlu0 %1953
        %v1956 = vmul.f32 %v1947, %v1954
        %1958 = vrot.lane.b32.xlu0 %v1956, 64
        %v1959 = vpop.permute.xlu0 %1958
        %v1961 = vadd.f32 %v1951, %v1959
        %v1962 = vtanh.pop %v1961
        %1964 = vrot.lane.b32.xlu0 %v1962, 64
        %v1965 = vpop.permute.xlu0 %1964
        %v1967 = vmul.f32 %v1949, %v1965
        %1969 = vrot.lane.b32.xlu0 %v1841, 64
        %v1970 = vpop.permute.xlu0 %1969
        %v1972 = vsel %vm566, %v1967, %v1970
        %v1973 = vld [vmem:[%s8] sm:$0xff]
        %v1974 = vld [vmem:[%s8 + $0x8] sm:$0xff]
        %v1975 = vld [vmem:[%s8 + $0x10] sm:$0xff]
        %v1976 = vld [vmem:[%s8 + $0x18] sm:$0xff]
        %v1977 = vld [vmem:[%s8 + $0x20] sm:$0xff]
        %v1978 = vld [vmem:[%s8 + $0x28] sm:$0xff]
        %v1979 = vld [vmem:[%s8 + $0x30] sm:$0xff]
        %v1980 = vld [vmem:[%s8 + $0x38] sm:$0xff]
        %v1981 = vld [vmem:[%s8 + $0x40] sm:$0xff]
        %v1982 = vld [vmem:[%s8 + $0x48] sm:$0xff]
        %v1983 = vld [vmem:[%s8 + $0x50] sm:$0xff]
        %v1984 = vld [vmem:[%s8 + $0x58] sm:$0xff]
        %v1985 = vld [vmem:[%s8 + $0x60] sm:$0xff]
        %v1986 = vld [vmem:[%s8 + $0x68] sm:$0xff]
        %v1987 = vld [vmem:[%s8 + $0x70] sm:$0xff]
        %v1988 = vld [vmem:[%s8 + $0x78] sm:$0xff]
        %v1989 = vld [vmem:[%s8 + $0x80] sm:$0xff]
        %v1990 = vld [vmem:[%s8 + $0x88] sm:$0xff]
        %v1991 = vld [vmem:[%s8 + $0x90] sm:$0xff]
        %v1992 = vld [vmem:[%s8 + $0x98] sm:$0xff]
        %v1993 = vld [vmem:[%s8 + $0xa0] sm:$0xff]
        %v1994 = vld [vmem:[%s8 + $0xa8] sm:$0xff]
        %v1995 = vld [vmem:[%s8 + $0xb0] sm:$0xff]
        %v1996 = vld [vmem:[%s8 + $0xb8] sm:$0xff]
        %v1997 = vld [vmem:[%s8 + $0xc0] sm:$0xff]
        %v1998 = vld [vmem:[%s8 + $0xc8] sm:$0xff]
        %v1999 = vld [vmem:[%s8 + $0xd0] sm:$0xff]
        %v2000 = vld [vmem:[%s8 + $0xd8] sm:$0xff]
        %v2001 = vld [vmem:[%s8 + $0xe0] sm:$0xff]
        %v2002 = vld [vmem:[%s8 + $0xe8] sm:$0xff]
        %v2003 = vld [vmem:[%s8 + $0xf0] sm:$0xff]
        %v2004 = vld [vmem:[%s8 + $0xf8] sm:$0xff]
        %v2005 = vld [vmem:[%s9] sm:$0x3]
        %v2007 = vlaneseq
        %v2008 = vshrl.u32 %v2007, 7
        %v2009 = vsub.s32 0, %v2008
        %v2010 = vrot.slane %v2005, %v2009
        %v2011 = vlaneseq
        %v2012 = vshrl.u32 %v2011, 7
        %v2013 = vsub.s32 1, %v2012
        %v2014 = vrot.slane %v2005, %v2013
        %2017 = vmatprep.subr.mxu0 %v2004
        %2018 = vmatpush1.msra.mxu0 %v2003
        %2019 = vmatprep.subr.mxu0 %v2002
        %2020 = vmatpush1.msra.mxu0 %v2001
        %2021 = vmatprep.subr.mxu0 %v2000
        %2022 = vmatpush1.msra.mxu0 %v1999
        %2023 = vmatprep.subr.mxu0 %v1998
        %2024 = vmatpush1.msra.mxu0 %v1997
        %2025 = vmatprep.subr.mxu0 %v1996
        %2026 = vmatpush1.msra.mxu0 %v1995
        %2027 = vmatprep.subr.mxu0 %v1994
        %2028 = vmatpush1.msra.mxu0 %v1993
        %2029 = vmatprep.subr.mxu0 %v1992
        %2030 = vmatpush1.msra.mxu0 %v1991
        %2031 = vmatprep.subr.mxu0 %v1990
        %2032 = vmatpush1.msra.mxu0 %v1989
        %2033 = vmatprep.subr.mxu0 %v1988
        %2034 = vmatpush1.msra.mxu0 %v1987
        %2035 = vmatprep.subr.mxu0 %v1986
        %2036 = vmatpush1.msra.mxu0 %v1985
        %2037 = vmatprep.subr.mxu0 %v1984
        %2038 = vmatpush1.msra.mxu0 %v1983
        %2039 = vmatprep.subr.mxu0 %v1982
        %2040 = vmatpush1.msra.mxu0 %v1981
        %2041 = vmatprep.subr.mxu0 %v1980
        %2042 = vmatpush1.msra.mxu0 %v1979
        %2043 = vmatprep.subr.mxu0 %v1978
        %2044 = vmatpush1.msra.mxu0 %v1977
        %2045 = vmatprep.subr.mxu0 %v1976
        %2046 = vmatpush1.msra.mxu0 %v1975
        %2047 = vmatprep.subr.mxu0 %v1974
        %2048 = vmatpush1.msra.mxu0 %v1973
        %2049 = vmatprep.subr.mxu0 0.0
        %2050 = vmatpush2.msra.mxu0 0.0
        %2051 = vmatprep.subr.mxu0 0.0
        %2052 = vmatpush2.msra.mxu0 0.0
        %2053 = vmatprep.subr.mxu0 0.0
        %2054 = vmatpush2.msra.mxu0 0.0
        %2055 = vmatprep.subr.mxu0 0.0
        %2056 = vmatpush2.msra.mxu0 0.0
        %2057 = vmatprep.subr.mxu0 0.0
        %2058 = vmatpush2.msra.mxu0 0.0
        %2059 = vmatprep.subr.mxu0 0.0
        %2060 = vmatpush2.msra.mxu0 0.0
        %2061 = vmatprep.subr.mxu0 0.0
        %2062 = vmatpush2.msra.mxu0 0.0
        %2063 = vmatprep.subr.mxu0 0.0
        %2064 = vmatpush2.msra.mxu0 0.0
        %2065 = vmatprep.subr.mxu0 0.0
        %2066 = vmatpush2.msra.mxu0 0.0
        %2067 = vmatprep.subr.mxu0 0.0
        %2068 = vmatpush2.msra.mxu0 0.0
        %2069 = vmatprep.subr.mxu0 0.0
        %2070 = vmatpush2.msra.mxu0 0.0
        %2071 = vmatprep.subr.mxu0 0.0
        %2072 = vmatpush2.msra.mxu0 0.0
        %2073 = vmatprep.subr.mxu0 0.0
        %2074 = vmatpush2.msra.mxu0 0.0
        %2075 = vmatprep.subr.mxu0 0.0
        %2076 = vmatpush2.msra.mxu0 0.0
        %2077 = vmatprep.subr.mxu0 0.0
        %2078 = vmatpush2.msra.mxu0 0.0
        %2079 = vmatprep.subr.mxu0 0.0
        %2080 = vmatpush2.msra.mxu0 0.0
        %2081 = vmatprep.mubr.f32.mxu0 0.0
        %2082 = vmatmul.mubr.f32.gmra.mxu0 %v1972
        %v2083 = vpop.f32.mrf.mxu0
        %v2084 = vadd.f32 %v2010, %v2083
        %v2085 = vpop.f32.mrf.mxu0
        %v2086 = vadd.f32 %v2014, %v2085
        %2087 = vdwg.mxu0
        %v2088 = vxor.u32 %v2084, 2147483648
        %v2089 = vxor.u32 %v2086, 2147483648
        %v2090 = vmul.f32 %v2088, 1.442695
        %v2091 = vpow.pop %v2090
        %v2092 = vmul.f32 %v2089, 1.442695
        %v2093 = vpow.pop %v2092
        %v2094 = vadd.f32 %v2091, 1.0
        %v2095 = vadd.f32 %v2093, 1.0
        %v2096 = vrcp.pop %v2094
        %v2097 = vmul.f32 1.0, %v2096
        %v2098 = vrcp.pop %v2095
        %v2099 = vmul.f32 1.0, %v2098
        %v2100 = vtanh.pop %v2086
        %v2101 = vmul.f32 %v2097, %v1835
        %2103 = vrot.lane.b32.xlu0 %v2100, 64
        %v2104 = vpop.permute.xlu0 %2103
        %v2106 = vmul.f32 %v2097, %v2104
        %2108 = vrot.lane.b32.xlu0 %v2106, 64
        %v2109 = vpop.permute.xlu0 %2108
        %v2111 = vadd.f32 %v2101, %v2109
        %v2112 = vtanh.pop %v2111
        %2114 = vrot.lane.b32.xlu0 %v2112, 64
        %v2115 = vpop.permute.xlu0 %2114
        %v2117 = vmul.f32 %v2099, %v2115
        %s2118 = scalar_lea.vmem [#allocation3], 32
        %2119 = vst.msk [vmem:[%s2118] sm:$0xff] %vm566, %v2117
        %v2120 = vld [vmem:[#allocation2] sm:$0xff]
        %v2121 = vld [vmem:[#allocation2 + $0x8] sm:$0xff]
        %v2122 = vld [vmem:[%s6] sm:$0xff]
        %v2123 = vld [vmem:[%s6 + $0x8] sm:$0xff]
        %v2124 = vld [vmem:[%s6 + $0x10] sm:$0xff]
        %v2125 = vld [vmem:[%s6 + $0x18] sm:$0xff]
        %v2126 = vld [vmem:[%s6 + $0x20] sm:$0xff]
        %v2127 = vld [vmem:[%s6 + $0x28] sm:$0xff]
        %v2128 = vld [vmem:[%s6 + $0x30] sm:$0xff]
        %v2129 = vld [vmem:[%s6 + $0x38] sm:$0xff]
        %v2130 = vld [vmem:[%s6 + $0x40] sm:$0xff]
        %v2131 = vld [vmem:[%s6 + $0x48] sm:$0xff]
        %v2132 = vld [vmem:[%s6 + $0x50] sm:$0xff]
        %v2133 = vld [vmem:[%s6 + $0x58] sm:$0xff]
        %v2134 = vld [vmem:[%s6 + $0x60] sm:$0xff]
        %v2135 = vld [vmem:[%s6 + $0x68] sm:$0xff]
        %v2136 = vld [vmem:[%s6 + $0x70] sm:$0xff]
        %v2137 = vld [vmem:[%s6 + $0x78] sm:$0xff]
        %v2139 = vsel %vm566, %v1967, 0
        %2141 = vmatprep.subr.mxu0 0.0
        %2142 = vmatpush1.msra.mxu0 0.0
        %2143 = vmatprep.subr.mxu0 0.0
        %2144 = vmatpush1.msra.mxu0 0.0
        %2145 = vmatprep.subr.mxu0 0.0
        %2146 = vmatpush1.msra.mxu0 0.0
        %2147 = vmatprep.subr.mxu0 0.0
        %2148 = vmatpush1.msra.mxu0 0.0
        %2149 = vmatprep.subr.mxu0 0.0
        %2150 = vmatpush1.msra.mxu0 0.0
        %2151 = vmatprep.subr.mxu0 0.0
        %2152 = vmatpush1.msra.mxu0 0.0
        %2153 = vmatprep.subr.mxu0 0.0
        %2154 = vmatpush1.msra.mxu0 0.0
        %2155 = vmatprep.subr.mxu0 0.0
        %2156 = vmatpush1.msra.mxu0 0.0
        %2157 = vmatprep.subr.mxu0 %v2137
        %2158 = vmatpush1.msra.mxu0 %v2136
        %2159 = vmatprep.subr.mxu0 %v2135
        %2160 = vmatpush1.msra.mxu0 %v2134
        %2161 = vmatprep.subr.mxu0 %v2133
        %2162 = vmatpush1.msra.mxu0 %v2132
        %2163 = vmatprep.subr.mxu0 %v2131
        %2164 = vmatpush1.msra.mxu0 %v2130
        %2165 = vmatprep.subr.mxu0 %v2129
        %2166 = vmatpush1.msra.mxu0 %v2128
        %2167 = vmatprep.subr.mxu0 %v2127
        %2168 = vmatpush1.msra.mxu0 %v2126
        %2169 = vmatprep.subr.mxu0 %v2125
        %2170 = vmatpush1.msra.mxu0 %v2124
        %2171 = vmatprep.subr.mxu0 %v2123
        %2172 = vmatpush1.msra.mxu0 %v2122
        %2173 = vmatprep.subr.mxu0 0.0
        %2174 = vmatpush2.msra.mxu0 0.0
        %2175 = vmatprep.subr.mxu0 0.0
        %2176 = vmatpush2.msra.mxu0 0.0
        %2177 = vmatprep.subr.mxu0 0.0
        %2178 = vmatpush2.msra.mxu0 0.0
        %2179 = vmatprep.subr.mxu0 0.0
        %2180 = vmatpush2.msra.mxu0 0.0
        %2181 = vmatprep.subr.mxu0 0.0
        %2182 = vmatpush2.msra.mxu0 0.0
        %2183 = vmatprep.subr.mxu0 0.0
        %2184 = vmatpush2.msra.mxu0 0.0
        %2185 = vmatprep.subr.mxu0 0.0
        %2186 = vmatpush2.msra.mxu0 0.0
        %2187 = vmatprep.subr.mxu0 0.0
        %2188 = vmatpush2.msra.mxu0 0.0
        %2189 = vmatprep.subr.mxu0 0.0
        %2190 = vmatpush2.msra.mxu0 0.0
        %2191 = vmatprep.subr.mxu0 0.0
        %2192 = vmatpush2.msra.mxu0 0.0
        %2193 = vmatprep.subr.mxu0 0.0
        %2194 = vmatpush2.msra.mxu0 0.0
        %2195 = vmatprep.subr.mxu0 0.0
        %2196 = vmatpush2.msra.mxu0 0.0
        %2197 = vmatprep.subr.mxu0 0.0
        %2198 = vmatpush2.msra.mxu0 0.0
        %2199 = vmatprep.subr.mxu0 0.0
        %2200 = vmatpush2.msra.mxu0 0.0
        %2201 = vmatprep.subr.mxu0 0.0
        %2202 = vmatpush2.msra.mxu0 0.0
        %2203 = vmatprep.subr.mxu0 0.0
        %2204 = vmatpush2.msra.mxu0 0.0
        %2205 = vmatprep.mubr.f32.mxu0 0.0
        %2206 = vmatmul.mubr.f32.gmra.mxu0 %v2139
        %v2207 = vpop.f32.mrf.mxu0
        %v2208 = vadd.f32 0.0, %v2207
        %v2209 = vpop.f32.mrf.mxu0
        %v2210 = vadd.f32 0.0, %v2209
        %2211 = vdwg.mxu0
        %v2212 = vadd.f32 %v2120, %v2208
        %v2213 = vadd.f32 %v2121, %v2210
        %v2214 = vxor.u32 %v2212, 2147483648
        %v2215 = vxor.u32 %v2213, 2147483648
        %v2216 = vmul.f32 %v2214, 1.442695
        %v2217 = vpow.pop %v2216
        %v2218 = vmul.f32 %v2215, 1.442695
        %v2219 = vpow.pop %v2218
        %v2220 = vadd.f32 %v2217, 1.0
        %v2221 = vadd.f32 %v2219, 1.0
        %v2222 = vrcp.pop %v2220
        %v2223 = vmul.f32 1.0, %v2222
        %v2224 = vrcp.pop %v2221
        %v2225 = vmul.f32 1.0, %v2224
        %v2226 = vtanh.pop %v2213
        %v2227 = vmul.f32 %v2223, %v1961
        %2229 = vrot.lane.b32.xlu0 %v2226, 64
        %v2230 = vpop.permute.xlu0 %2229
        %v2232 = vmul.f32 %v2223, %v2230
        %2234 = vrot.lane.b32.xlu0 %v2232, 64
        %v2235 = vpop.permute.xlu0 %2234
        %v2237 = vadd.f32 %v2227, %v2235
        %v2238 = vtanh.pop %v2237
        %2240 = vrot.lane.b32.xlu0 %v2238, 64
        %v2241 = vpop.permute.xlu0 %2240
        %v2243 = vmul.f32 %v2225, %v2241
        %2245 = vrot.lane.b32.xlu0 %v2117, 64
        %v2246 = vpop.permute.xlu0 %2245
        %v2248 = vsel %vm566, %v2243, %v2246
        %v2249 = vld [vmem:[%s8] sm:$0xff]
        %v2250 = vld [vmem:[%s8 + $0x8] sm:$0xff]
        %v2251 = vld [vmem:[%s8 + $0x10] sm:$0xff]
        %v2252 = vld [vmem:[%s8 + $0x18] sm:$0xff]
        %v2253 = vld [vmem:[%s8 + $0x20] sm:$0xff]
        %v2254 = vld [vmem:[%s8 + $0x28] sm:$0xff]
        %v2255 = vld [vmem:[%s8 + $0x30] sm:$0xff]
        %v2256 = vld [vmem:[%s8 + $0x38] sm:$0xff]
        %v2257 = vld [vmem:[%s8 + $0x40] sm:$0xff]
        %v2258 = vld [vmem:[%s8 + $0x48] sm:$0xff]
        %v2259 = vld [vmem:[%s8 + $0x50] sm:$0xff]
        %v2260 = vld [vmem:[%s8 + $0x58] sm:$0xff]
        %v2261 = vld [vmem:[%s8 + $0x60] sm:$0xff]
        %v2262 = vld [vmem:[%s8 + $0x68] sm:$0xff]
        %v2263 = vld [vmem:[%s8 + $0x70] sm:$0xff]
        %v2264 = vld [vmem:[%s8 + $0x78] sm:$0xff]
        %v2265 = vld [vmem:[%s8 + $0x80] sm:$0xff]
        %v2266 = vld [vmem:[%s8 + $0x88] sm:$0xff]
        %v2267 = vld [vmem:[%s8 + $0x90] sm:$0xff]
        %v2268 = vld [vmem:[%s8 + $0x98] sm:$0xff]
        %v2269 = vld [vmem:[%s8 + $0xa0] sm:$0xff]
        %v2270 = vld [vmem:[%s8 + $0xa8] sm:$0xff]
        %v2271 = vld [vmem:[%s8 + $0xb0] sm:$0xff]
        %v2272 = vld [vmem:[%s8 + $0xb8] sm:$0xff]
        %v2273 = vld [vmem:[%s8 + $0xc0] sm:$0xff]
        %v2274 = vld [vmem:[%s8 + $0xc8] sm:$0xff]
        %v2275 = vld [vmem:[%s8 + $0xd0] sm:$0xff]
        %v2276 = vld [vmem:[%s8 + $0xd8] sm:$0xff]
        %v2277 = vld [vmem:[%s8 + $0xe0] sm:$0xff]
        %v2278 = vld [vmem:[%s8 + $0xe8] sm:$0xff]
        %v2279 = vld [vmem:[%s8 + $0xf0] sm:$0xff]
        %v2280 = vld [vmem:[%s8 + $0xf8] sm:$0xff]
        %v2281 = vld [vmem:[%s9] sm:$0x3]
        %v2283 = vlaneseq
        %v2284 = vshrl.u32 %v2283, 7
        %v2285 = vsub.s32 0, %v2284
        %v2286 = vrot.slane %v2281, %v2285
        %v2287 = vlaneseq
        %v2288 = vshrl.u32 %v2287, 7
        %v2289 = vsub.s32 1, %v2288
        %v2290 = vrot.slane %v2281, %v2289
        %2293 = vmatprep.subr.mxu0 %v2280
        %2294 = vmatpush1.msra.mxu0 %v2279
        %2295 = vmatprep.subr.mxu0 %v2278
        %2296 = vmatpush1.msra.mxu0 %v2277
        %2297 = vmatprep.subr.mxu0 %v2276
        %2298 = vmatpush1.msra.mxu0 %v2275
        %2299 = vmatprep.subr.mxu0 %v2274
        %2300 = vmatpush1.msra.mxu0 %v2273
        %2301 = vmatprep.subr.mxu0 %v2272
        %2302 = vmatpush1.msra.mxu0 %v2271
        %2303 = vmatprep.subr.mxu0 %v2270
        %2304 = vmatpush1.msra.mxu0 %v2269
        %2305 = vmatprep.subr.mxu0 %v2268
        %2306 = vmatpush1.msra.mxu0 %v2267
        %2307 = vmatprep.subr.mxu0 %v2266
        %2308 = vmatpush1.msra.mxu0 %v2265
        %2309 = vmatprep.subr.mxu0 %v2264
        %2310 = vmatpush1.msra.mxu0 %v2263
        %2311 = vmatprep.subr.mxu0 %v2262
        %2312 = vmatpush1.msra.mxu0 %v2261
        %2313 = vmatprep.subr.mxu0 %v2260
        %2314 = vmatpush1.msra.mxu0 %v2259
        %2315 = vmatprep.subr.mxu0 %v2258
        %2316 = vmatpush1.msra.mxu0 %v2257
        %2317 = vmatprep.subr.mxu0 %v2256
        %2318 = vmatpush1.msra.mxu0 %v2255
        %2319 = vmatprep.subr.mxu0 %v2254
        %2320 = vmatpush1.msra.mxu0 %v2253
        %2321 = vmatprep.subr.mxu0 %v2252
        %2322 = vmatpush1.msra.mxu0 %v2251
        %2323 = vmatprep.subr.mxu0 %v2250
        %2324 = vmatpush1.msra.mxu0 %v2249
        %2325 = vmatprep.subr.mxu0 0.0
        %2326 = vmatpush2.msra.mxu0 0.0
        %2327 = vmatprep.subr.mxu0 0.0
        %2328 = vmatpush2.msra.mxu0 0.0
        %2329 = vmatprep.subr.mxu0 0.0
        %2330 = vmatpush2.msra.mxu0 0.0
        %2331 = vmatprep.subr.mxu0 0.0
        %2332 = vmatpush2.msra.mxu0 0.0
        %2333 = vmatprep.subr.mxu0 0.0
        %2334 = vmatpush2.msra.mxu0 0.0
        %2335 = vmatprep.subr.mxu0 0.0
        %2336 = vmatpush2.msra.mxu0 0.0
        %2337 = vmatprep.subr.mxu0 0.0
        %2338 = vmatpush2.msra.mxu0 0.0
        %2339 = vmatprep.subr.mxu0 0.0
        %2340 = vmatpush2.msra.mxu0 0.0
        %2341 = vmatprep.subr.mxu0 0.0
        %2342 = vmatpush2.msra.mxu0 0.0
        %2343 = vmatprep.subr.mxu0 0.0
        %2344 = vmatpush2.msra.mxu0 0.0
        %2345 = vmatprep.subr.mxu0 0.0
        %2346 = vmatpush2.msra.mxu0 0.0
        %2347 = vmatprep.subr.mxu0 0.0
        %2348 = vmatpush2.msra.mxu0 0.0
        %2349 = vmatprep.subr.mxu0 0.0
        %2350 = vmatpush2.msra.mxu0 0.0
        %2351 = vmatprep.subr.mxu0 0.0
        %2352 = vmatpush2.msra.mxu0 0.0
        %2353 = vmatprep.subr.mxu0 0.0
        %2354 = vmatpush2.msra.mxu0 0.0
        %2355 = vmatprep.subr.mxu0 0.0
        %2356 = vmatpush2.msra.mxu0 0.0
        %2357 = vmatprep.mubr.f32.mxu0 0.0
        %2358 = vmatmul.mubr.f32.gmra.mxu0 %v2248
        %v2359 = vpop.f32.mrf.mxu0
        %v2360 = vadd.f32 %v2286, %v2359
        %v2361 = vpop.f32.mrf.mxu0
        %v2362 = vadd.f32 %v2290, %v2361
        %2363 = vdwg.mxu0
        %v2364 = vxor.u32 %v2360, 2147483648
        %v2365 = vxor.u32 %v2362, 2147483648
        %v2366 = vmul.f32 %v2364, 1.442695
        %v2367 = vpow.pop %v2366
        %v2368 = vmul.f32 %v2365, 1.442695
        %v2369 = vpow.pop %v2368
        %v2370 = vadd.f32 %v2367, 1.0
        %v2371 = vadd.f32 %v2369, 1.0
        %v2372 = vrcp.pop %v2370
        %v2373 = vmul.f32 1.0, %v2372
        %v2374 = vrcp.pop %v2371
        %v2375 = vmul.f32 1.0, %v2374
        %v2376 = vtanh.pop %v2362
        %v2377 = vmul.f32 %v2373, %v2111
        %2379 = vrot.lane.b32.xlu0 %v2376, 64
        %v2380 = vpop.permute.xlu0 %2379
        %v2382 = vmul.f32 %v2373, %v2380
        %2384 = vrot.lane.b32.xlu0 %v2382, 64
        %v2385 = vpop.permute.xlu0 %2384
        %v2387 = vadd.f32 %v2377, %v2385
        %v2388 = vtanh.pop %v2387
        %2390 = vrot.lane.b32.xlu0 %v2388, 64
        %v2391 = vpop.permute.xlu0 %2390
        %v2393 = vmul.f32 %v2375, %v2391
        %s2394 = scalar_lea.vmem [#allocation3], 40
        %2395 = vst.msk [vmem:[%s2394] sm:$0xff] %vm566, %v2393
        %v2396 = vld [vmem:[#allocation2] sm:$0xff]
        %v2397 = vld [vmem:[#allocation2 + $0x8] sm:$0xff]
        %v2398 = vld [vmem:[%s6] sm:$0xff]
        %v2399 = vld [vmem:[%s6 + $0x8] sm:$0xff]
        %v2400 = vld [vmem:[%s6 + $0x10] sm:$0xff]
        %v2401 = vld [vmem:[%s6 + $0x18] sm:$0xff]
        %v2402 = vld [vmem:[%s6 + $0x20] sm:$0xff]
        %v2403 = vld [vmem:[%s6 + $0x28] sm:$0xff]
        %v2404 = vld [vmem:[%s6 + $0x30] sm:$0xff]
        %v2405 = vld [vmem:[%s6 + $0x38] sm:$0xff]
        %v2406 = vld [vmem:[%s6 + $0x40] sm:$0xff]
        %v2407 = vld [vmem:[%s6 + $0x48] sm:$0xff]
        %v2408 = vld [vmem:[%s6 + $0x50] sm:$0xff]
        %v2409 = vld [vmem:[%s6 + $0x58] sm:$0xff]
        %v2410 = vld [vmem:[%s6 + $0x60] sm:$0xff]
        %v2411 = vld [vmem:[%s6 + $0x68] sm:$0xff]
        %v2412 = vld [vmem:[%s6 + $0x70] sm:$0xff]
        %v2413 = vld [vmem:[%s6 + $0x78] sm:$0xff]
        %v2415 = vsel %vm566, %v2243, 0
        %2417 = vmatprep.subr.mxu0 0.0
        %2418 = vmatpush1.msra.mxu0 0.0
        %2419 = vmatprep.subr.mxu0 0.0
        %2420 = vmatpush1.msra.mxu0 0.0
        %2421 = vmatprep.subr.mxu0 0.0
        %2422 = vmatpush1.msra.mxu0 0.0
        %2423 = vmatprep.subr.mxu0 0.0
        %2424 = vmatpush1.msra.mxu0 0.0
        %2425 = vmatprep.subr.mxu0 0.0
        %2426 = vmatpush1.msra.mxu0 0.0
        %2427 = vmatprep.subr.mxu0 0.0
        %2428 = vmatpush1.msra.mxu0 0.0
        %2429 = vmatprep.subr.mxu0 0.0
        %2430 = vmatpush1.msra.mxu0 0.0
        %2431 = vmatprep.subr.mxu0 0.0
        %2432 = vmatpush1.msra.mxu0 0.0
        %2433 = vmatprep.subr.mxu0 %v2413
        %2434 = vmatpush1.msra.mxu0 %v2412
        %2435 = vmatprep.subr.mxu0 %v2411
        %2436 = vmatpush1.msra.mxu0 %v2410
        %2437 = vmatprep.subr.mxu0 %v2409
        %2438 = vmatpush1.msra.mxu0 %v2408
        %2439 = vmatprep.subr.mxu0 %v2407
        %2440 = vmatpush1.msra.mxu0 %v2406
        %2441 = vmatprep.subr.mxu0 %v2405
        %2442 = vmatpush1.msra.mxu0 %v2404
        %2443 = vmatprep.subr.mxu0 %v2403
        %2444 = vmatpush1.msra.mxu0 %v2402
        %2445 = vmatprep.subr.mxu0 %v2401
        %2446 = vmatpush1.msra.mxu0 %v2400
        %2447 = vmatprep.subr.mxu0 %v2399
        %2448 = vmatpush1.msra.mxu0 %v2398
        %2449 = vmatprep.subr.mxu0 0.0
        %2450 = vmatpush2.msra.mxu0 0.0
        %2451 = vmatprep.subr.mxu0 0.0
        %2452 = vmatpush2.msra.mxu0 0.0
        %2453 = vmatprep.subr.mxu0 0.0
        %2454 = vmatpush2.msra.mxu0 0.0
        %2455 = vmatprep.subr.mxu0 0.0
        %2456 = vmatpush2.msra.mxu0 0.0
        %2457 = vmatprep.subr.mxu0 0.0
        %2458 = vmatpush2.msra.mxu0 0.0
        %2459 = vmatprep.subr.mxu0 0.0
        %2460 = vmatpush2.msra.mxu0 0.0
        %2461 = vmatprep.subr.mxu0 0.0
        %2462 = vmatpush2.msra.mxu0 0.0
        %2463 = vmatprep.subr.mxu0 0.0
        %2464 = vmatpush2.msra.mxu0 0.0
        %2465 = vmatprep.subr.mxu0 0.0
        %2466 = vmatpush2.msra.mxu0 0.0
        %2467 = vmatprep.subr.mxu0 0.0
        %2468 = vmatpush2.msra.mxu0 0.0
        %2469 = vmatprep.subr.mxu0 0.0
        %2470 = vmatpush2.msra.mxu0 0.0
        %2471 = vmatprep.subr.mxu0 0.0
        %2472 = vmatpush2.msra.mxu0 0.0
        %2473 = vmatprep.subr.mxu0 0.0
        %2474 = vmatpush2.msra.mxu0 0.0
        %2475 = vmatprep.subr.mxu0 0.0
        %2476 = vmatpush2.msra.mxu0 0.0
        %2477 = vmatprep.subr.mxu0 0.0
        %2478 = vmatpush2.msra.mxu0 0.0
        %2479 = vmatprep.subr.mxu0 0.0
        %2480 = vmatpush2.msra.mxu0 0.0
        %2481 = vmatprep.mubr.f32.mxu0 0.0
        %2482 = vmatmul.mubr.f32.gmra.mxu0 %v2415
        %v2483 = vpop.f32.mrf.mxu0
        %v2484 = vadd.f32 0.0, %v2483
        %v2485 = vpop.f32.mrf.mxu0
        %v2486 = vadd.f32 0.0, %v2485
        %2487 = vdwg.mxu0
        %v2488 = vadd.f32 %v2396, %v2484
        %v2489 = vadd.f32 %v2397, %v2486
        %v2490 = vxor.u32 %v2488, 2147483648
        %v2491 = vxor.u32 %v2489, 2147483648
        %v2492 = vmul.f32 %v2490, 1.442695
        %v2493 = vpow.pop %v2492
        %v2494 = vmul.f32 %v2491, 1.442695
        %v2495 = vpow.pop %v2494
        %v2496 = vadd.f32 %v2493, 1.0
        %v2497 = vadd.f32 %v2495, 1.0
        %v2498 = vrcp.pop %v2496
        %v2499 = vmul.f32 1.0, %v2498
        %v2500 = vrcp.pop %v2497
        %v2501 = vmul.f32 1.0, %v2500
        %v2502 = vtanh.pop %v2489
        %v2503 = vmul.f32 %v2499, %v2237
        %2505 = vrot.lane.b32.xlu0 %v2502, 64
        %v2506 = vpop.permute.xlu0 %2505
        %v2508 = vmul.f32 %v2499, %v2506
        %2510 = vrot.lane.b32.xlu0 %v2508, 64
        %v2511 = vpop.permute.xlu0 %2510
        %v2513 = vadd.f32 %v2503, %v2511
        %v2514 = vtanh.pop %v2513
        %2516 = vrot.lane.b32.xlu0 %v2514, 64
        %v2517 = vpop.permute.xlu0 %2516
        %v2519 = vmul.f32 %v2501, %v2517
        %2521 = vrot.lane.b32.xlu0 %v2393, 64
        %v2522 = vpop.permute.xlu0 %2521
        %v2524 = vsel %vm566, %v2519, %v2522
        %v2525 = vld [vmem:[%s8] sm:$0xff]
        %v2526 = vld [vmem:[%s8 + $0x8] sm:$0xff]
        %v2527 = vld [vmem:[%s8 + $0x10] sm:$0xff]
        %v2528 = vld [vmem:[%s8 + $0x18] sm:$0xff]
        %v2529 = vld [vmem:[%s8 + $0x20] sm:$0xff]
        %v2530 = vld [vmem:[%s8 + $0x28] sm:$0xff]
        %v2531 = vld [vmem:[%s8 + $0x30] sm:$0xff]
        %v2532 = vld [vmem:[%s8 + $0x38] sm:$0xff]
        %v2533 = vld [vmem:[%s8 + $0x40] sm:$0xff]
        %v2534 = vld [vmem:[%s8 + $0x48] sm:$0xff]
        %v2535 = vld [vmem:[%s8 + $0x50] sm:$0xff]
        %v2536 = vld [vmem:[%s8 + $0x58] sm:$0xff]
        %v2537 = vld [vmem:[%s8 + $0x60] sm:$0xff]
        %v2538 = vld [vmem:[%s8 + $0x68] sm:$0xff]
        %v2539 = vld [vmem:[%s8 + $0x70] sm:$0xff]
        %v2540 = vld [vmem:[%s8 + $0x78] sm:$0xff]
        %v2541 = vld [vmem:[%s8 + $0x80] sm:$0xff]
        %v2542 = vld [vmem:[%s8 + $0x88] sm:$0xff]
        %v2543 = vld [vmem:[%s8 + $0x90] sm:$0xff]
        %v2544 = vld [vmem:[%s8 + $0x98] sm:$0xff]
        %v2545 = vld [vmem:[%s8 + $0xa0] sm:$0xff]
        %v2546 = vld [vmem:[%s8 + $0xa8] sm:$0xff]
        %v2547 = vld [vmem:[%s8 + $0xb0] sm:$0xff]
        %v2548 = vld [vmem:[%s8 + $0xb8] sm:$0xff]
        %v2549 = vld [vmem:[%s8 + $0xc0] sm:$0xff]
        %v2550 = vld [vmem:[%s8 + $0xc8] sm:$0xff]
        %v2551 = vld [vmem:[%s8 + $0xd0] sm:$0xff]
        %v2552 = vld [vmem:[%s8 + $0xd8] sm:$0xff]
        %v2553 = vld [vmem:[%s8 + $0xe0] sm:$0xff]
        %v2554 = vld [vmem:[%s8 + $0xe8] sm:$0xff]
        %v2555 = vld [vmem:[%s8 + $0xf0] sm:$0xff]
        %v2556 = vld [vmem:[%s8 + $0xf8] sm:$0xff]
        %v2557 = vld [vmem:[%s9] sm:$0x3]
        %v2559 = vlaneseq
        %v2560 = vshrl.u32 %v2559, 7
        %v2561 = vsub.s32 0, %v2560
        %v2562 = vrot.slane %v2557, %v2561
        %v2563 = vlaneseq
        %v2564 = vshrl.u32 %v2563, 7
        %v2565 = vsub.s32 1, %v2564
        %v2566 = vrot.slane %v2557, %v2565
        %2569 = vmatprep.subr.mxu0 %v2556
        %2570 = vmatpush1.msra.mxu0 %v2555
        %2571 = vmatprep.subr.mxu0 %v2554
        %2572 = vmatpush1.msra.mxu0 %v2553
        %2573 = vmatprep.subr.mxu0 %v2552
        %2574 = vmatpush1.msra.mxu0 %v2551
        %2575 = vmatprep.subr.mxu0 %v2550
        %2576 = vmatpush1.msra.mxu0 %v2549
        %2577 = vmatprep.subr.mxu0 %v2548
        %2578 = vmatpush1.msra.mxu0 %v2547
        %2579 = vmatprep.subr.mxu0 %v2546
        %2580 = vmatpush1.msra.mxu0 %v2545
        %2581 = vmatprep.subr.mxu0 %v2544
        %2582 = vmatpush1.msra.mxu0 %v2543
        %2583 = vmatprep.subr.mxu0 %v2542
        %2584 = vmatpush1.msra.mxu0 %v2541
        %2585 = vmatprep.subr.mxu0 %v2540
        %2586 = vmatpush1.msra.mxu0 %v2539
        %2587 = vmatprep.subr.mxu0 %v2538
        %2588 = vmatpush1.msra.mxu0 %v2537
        %2589 = vmatprep.subr.mxu0 %v2536
        %2590 = vmatpush1.msra.mxu0 %v2535
        %2591 = vmatprep.subr.mxu0 %v2534
        %2592 = vmatpush1.msra.mxu0 %v2533
        %2593 = vmatprep.subr.mxu0 %v2532
        %2594 = vmatpush1.msra.mxu0 %v2531
        %2595 = vmatprep.subr.mxu0 %v2530
        %2596 = vmatpush1.msra.mxu0 %v2529
        %2597 = vmatprep.subr.mxu0 %v2528
        %2598 = vmatpush1.msra.mxu0 %v2527
        %2599 = vmatprep.subr.mxu0 %v2526
        %2600 = vmatpush1.msra.mxu0 %v2525
        %2601 = vmatprep.subr.mxu0 0.0
        %2602 = vmatpush2.msra.mxu0 0.0
        %2603 = vmatprep.subr.mxu0 0.0
        %2604 = vmatpush2.msra.mxu0 0.0
        %2605 = vmatprep.subr.mxu0 0.0
        %2606 = vmatpush2.msra.mxu0 0.0
        %2607 = vmatprep.subr.mxu0 0.0
        %2608 = vmatpush2.msra.mxu0 0.0
        %2609 = vmatprep.subr.mxu0 0.0
        %2610 = vmatpush2.msra.mxu0 0.0
        %2611 = vmatprep.subr.mxu0 0.0
        %2612 = vmatpush2.msra.mxu0 0.0
        %2613 = vmatprep.subr.mxu0 0.0
        %2614 = vmatpush2.msra.mxu0 0.0
        %2615 = vmatprep.subr.mxu0 0.0
        %2616 = vmatpush2.msra.mxu0 0.0
        %2617 = vmatprep.subr.mxu0 0.0
        %2618 = vmatpush2.msra.mxu0 0.0
        %2619 = vmatprep.subr.mxu0 0.0
        %2620 = vmatpush2.msra.mxu0 0.0
        %2621 = vmatprep.subr.mxu0 0.0
        %2622 = vmatpush2.msra.mxu0 0.0
        %2623 = vmatprep.subr.mxu0 0.0
        %2624 = vmatpush2.msra.mxu0 0.0
        %2625 = vmatprep.subr.mxu0 0.0
        %2626 = vmatpush2.msra.mxu0 0.0
        %2627 = vmatprep.subr.mxu0 0.0
        %2628 = vmatpush2.msra.mxu0 0.0
        %2629 = vmatprep.subr.mxu0 0.0
        %2630 = vmatpush2.msra.mxu0 0.0
        %2631 = vmatprep.subr.mxu0 0.0
        %2632 = vmatpush2.msra.mxu0 0.0
        %2633 = vmatprep.mubr.f32.mxu0 0.0
        %2634 = vmatmul.mubr.f32.gmra.mxu0 %v2524
        %v2635 = vpop.f32.mrf.mxu0
        %v2636 = vadd.f32 %v2562, %v2635
        %v2637 = vpop.f32.mrf.mxu0
        %v2638 = vadd.f32 %v2566, %v2637
        %2639 = vdwg.mxu0
        %v2640 = vxor.u32 %v2636, 2147483648
        %v2641 = vxor.u32 %v2638, 2147483648
        %v2642 = vmul.f32 %v2640, 1.442695
        %v2643 = vpow.pop %v2642
        %v2644 = vmul.f32 %v2641, 1.442695
        %v2645 = vpow.pop %v2644
        %v2646 = vadd.f32 %v2643, 1.0
        %v2647 = vadd.f32 %v2645, 1.0
        %v2648 = vrcp.pop %v2646
        %v2649 = vmul.f32 1.0, %v2648
        %v2650 = vrcp.pop %v2647
        %v2651 = vmul.f32 1.0, %v2650
        %v2652 = vtanh.pop %v2638
        %v2653 = vmul.f32 %v2649, %v2387
        %2655 = vrot.lane.b32.xlu0 %v2652, 64
        %v2656 = vpop.permute.xlu0 %2655
        %v2658 = vmul.f32 %v2649, %v2656
        %2660 = vrot.lane.b32.xlu0 %v2658, 64
        %v2661 = vpop.permute.xlu0 %2660
        %v2663 = vadd.f32 %v2653, %v2661
        %v2664 = vtanh.pop %v2663
        %2666 = vrot.lane.b32.xlu0 %v2664, 64
        %v2667 = vpop.permute.xlu0 %2666
        %v2669 = vmul.f32 %v2651, %v2667
        %s2670 = scalar_lea.vmem [#allocation3], 48
        %2671 = vst.msk [vmem:[%s2670] sm:$0xff] %vm566, %v2669
        %v2672 = vld [vmem:[#allocation2] sm:$0xff]
        %v2673 = vld [vmem:[#allocation2 + $0x8] sm:$0xff]
        %v2674 = vld [vmem:[%s6] sm:$0xff]
        %v2675 = vld [vmem:[%s6 + $0x8] sm:$0xff]
        %v2676 = vld [vmem:[%s6 + $0x10] sm:$0xff]
        %v2677 = vld [vmem:[%s6 + $0x18] sm:$0xff]
        %v2678 = vld [vmem:[%s6 + $0x20] sm:$0xff]
        %v2679 = vld [vmem:[%s6 + $0x28] sm:$0xff]
        %v2680 = vld [vmem:[%s6 + $0x30] sm:$0xff]
        %v2681 = vld [vmem:[%s6 + $0x38] sm:$0xff]
        %v2682 = vld [vmem:[%s6 + $0x40] sm:$0xff]
        %v2683 = vld [vmem:[%s6 + $0x48] sm:$0xff]
        %v2684 = vld [vmem:[%s6 + $0x50] sm:$0xff]
        %v2685 = vld [vmem:[%s6 + $0x58] sm:$0xff]
        %v2686 = vld [vmem:[%s6 + $0x60] sm:$0xff]
        %v2687 = vld [vmem:[%s6 + $0x68] sm:$0xff]
        %v2688 = vld [vmem:[%s6 + $0x70] sm:$0xff]
        %v2689 = vld [vmem:[%s6 + $0x78] sm:$0xff]
        %v2691 = vsel %vm566, %v2519, 0
        %2693 = vmatprep.subr.mxu0 0.0
        %2694 = vmatpush1.msra.mxu0 0.0
        %2695 = vmatprep.subr.mxu0 0.0
        %2696 = vmatpush1.msra.mxu0 0.0
        %2697 = vmatprep.subr.mxu0 0.0
        %2698 = vmatpush1.msra.mxu0 0.0
        %2699 = vmatprep.subr.mxu0 0.0
        %2700 = vmatpush1.msra.mxu0 0.0
        %2701 = vmatprep.subr.mxu0 0.0
        %2702 = vmatpush1.msra.mxu0 0.0
        %2703 = vmatprep.subr.mxu0 0.0
        %2704 = vmatpush1.msra.mxu0 0.0
        %2705 = vmatprep.subr.mxu0 0.0
        %2706 = vmatpush1.msra.mxu0 0.0
        %2707 = vmatprep.subr.mxu0 0.0
        %2708 = vmatpush1.msra.mxu0 0.0
        %2709 = vmatprep.subr.mxu0 %v2689
        %2710 = vmatpush1.msra.mxu0 %v2688
        %2711 = vmatprep.subr.mxu0 %v2687
        %2712 = vmatpush1.msra.mxu0 %v2686
        %2713 = vmatprep.subr.mxu0 %v2685
        %2714 = vmatpush1.msra.mxu0 %v2684
        %2715 = vmatprep.subr.mxu0 %v2683
        %2716 = vmatpush1.msra.mxu0 %v2682
        %2717 = vmatprep.subr.mxu0 %v2681
        %2718 = vmatpush1.msra.mxu0 %v2680
        %2719 = vmatprep.subr.mxu0 %v2679
        %2720 = vmatpush1.msra.mxu0 %v2678
        %2721 = vmatprep.subr.mxu0 %v2677
        %2722 = vmatpush1.msra.mxu0 %v2676
        %2723 = vmatprep.subr.mxu0 %v2675
        %2724 = vmatpush1.msra.mxu0 %v2674
        %2725 = vmatprep.subr.mxu0 0.0
        %2726 = vmatpush2.msra.mxu0 0.0
        %2727 = vmatprep.subr.mxu0 0.0
        %2728 = vmatpush2.msra.mxu0 0.0
        %2729 = vmatprep.subr.mxu0 0.0
        %2730 = vmatpush2.msra.mxu0 0.0
        %2731 = vmatprep.subr.mxu0 0.0
        %2732 = vmatpush2.msra.mxu0 0.0
        %2733 = vmatprep.subr.mxu0 0.0
        %2734 = vmatpush2.msra.mxu0 0.0
        %2735 = vmatprep.subr.mxu0 0.0
        %2736 = vmatpush2.msra.mxu0 0.0
        %2737 = vmatprep.subr.mxu0 0.0
        %2738 = vmatpush2.msra.mxu0 0.0
        %2739 = vmatprep.subr.mxu0 0.0
        %2740 = vmatpush2.msra.mxu0 0.0
        %2741 = vmatprep.subr.mxu0 0.0
        %2742 = vmatpush2.msra.mxu0 0.0
        %2743 = vmatprep.subr.mxu0 0.0
        %2744 = vmatpush2.msra.mxu0 0.0
        %2745 = vmatprep.subr.mxu0 0.0
        %2746 = vmatpush2.msra.mxu0 0.0
        %2747 = vmatprep.subr.mxu0 0.0
        %2748 = vmatpush2.msra.mxu0 0.0
        %2749 = vmatprep.subr.mxu0 0.0
        %2750 = vmatpush2.msra.mxu0 0.0
        %2751 = vmatprep.subr.mxu0 0.0
        %2752 = vmatpush2.msra.mxu0 0.0
        %2753 = vmatprep.subr.mxu0 0.0
        %2754 = vmatpush2.msra.mxu0 0.0
        %2755 = vmatprep.subr.mxu0 0.0
        %2756 = vmatpush2.msra.mxu0 0.0
        %2757 = vmatprep.mubr.f32.mxu0 0.0
        %2758 = vmatmul.mubr.f32.gmra.mxu0 %v2691
        %v2759 = vpop.f32.mrf.mxu0
        %v2760 = vadd.f32 0.0, %v2759
        %v2761 = vpop.f32.mrf.mxu0
        %v2762 = vadd.f32 0.0, %v2761
        %2763 = vdwg.mxu0
        %v2764 = vadd.f32 %v2672, %v2760
        %v2765 = vadd.f32 %v2673, %v2762
        %v2766 = vxor.u32 %v2764, 2147483648
        %v2767 = vxor.u32 %v2765, 2147483648
        %v2768 = vmul.f32 %v2766, 1.442695
        %v2769 = vpow.pop %v2768
        %v2770 = vmul.f32 %v2767, 1.442695
        %v2771 = vpow.pop %v2770
        %v2772 = vadd.f32 %v2769, 1.0
        %v2773 = vadd.f32 %v2771, 1.0
        %v2774 = vrcp.pop %v2772
        %v2775 = vmul.f32 1.0, %v2774
        %v2776 = vrcp.pop %v2773
        %v2777 = vmul.f32 1.0, %v2776
        %v2778 = vtanh.pop %v2765
        %v2779 = vmul.f32 %v2775, %v2513
        %2781 = vrot.lane.b32.xlu0 %v2778, 64
        %v2782 = vpop.permute.xlu0 %2781
        %v2784 = vmul.f32 %v2775, %v2782
        %2786 = vrot.lane.b32.xlu0 %v2784, 64
        %v2787 = vpop.permute.xlu0 %2786
        %v2789 = vadd.f32 %v2779, %v2787
        %v2790 = vtanh.pop %v2789
        %2792 = vrot.lane.b32.xlu0 %v2790, 64
        %v2793 = vpop.permute.xlu0 %2792
        %v2795 = vmul.f32 %v2777, %v2793
        %2797 = vrot.lane.b32.xlu0 %v2669, 64
        %v2798 = vpop.permute.xlu0 %2797
        %v2800 = vsel %vm566, %v2795, %v2798
        %v2801 = vld [vmem:[%s8] sm:$0xff]
        %v2802 = vld [vmem:[%s8 + $0x8] sm:$0xff]
        %v2803 = vld [vmem:[%s8 + $0x10] sm:$0xff]
        %v2804 = vld [vmem:[%s8 + $0x18] sm:$0xff]
        %v2805 = vld [vmem:[%s8 + $0x20] sm:$0xff]
        %v2806 = vld [vmem:[%s8 + $0x28] sm:$0xff]
        %v2807 = vld [vmem:[%s8 + $0x30] sm:$0xff]
        %v2808 = vld [vmem:[%s8 + $0x38] sm:$0xff]
        %v2809 = vld [vmem:[%s8 + $0x40] sm:$0xff]
        %v2810 = vld [vmem:[%s8 + $0x48] sm:$0xff]
        %v2811 = vld [vmem:[%s8 + $0x50] sm:$0xff]
        %v2812 = vld [vmem:[%s8 + $0x58] sm:$0xff]
        %v2813 = vld [vmem:[%s8 + $0x60] sm:$0xff]
        %v2814 = vld [vmem:[%s8 + $0x68] sm:$0xff]
        %v2815 = vld [vmem:[%s8 + $0x70] sm:$0xff]
        %v2816 = vld [vmem:[%s8 + $0x78] sm:$0xff]
        %v2817 = vld [vmem:[%s8 + $0x80] sm:$0xff]
        %v2818 = vld [vmem:[%s8 + $0x88] sm:$0xff]
        %v2819 = vld [vmem:[%s8 + $0x90] sm:$0xff]
        %v2820 = vld [vmem:[%s8 + $0x98] sm:$0xff]
        %v2821 = vld [vmem:[%s8 + $0xa0] sm:$0xff]
        %v2822 = vld [vmem:[%s8 + $0xa8] sm:$0xff]
        %v2823 = vld [vmem:[%s8 + $0xb0] sm:$0xff]
        %v2824 = vld [vmem:[%s8 + $0xb8] sm:$0xff]
        %v2825 = vld [vmem:[%s8 + $0xc0] sm:$0xff]
        %v2826 = vld [vmem:[%s8 + $0xc8] sm:$0xff]
        %v2827 = vld [vmem:[%s8 + $0xd0] sm:$0xff]
        %v2828 = vld [vmem:[%s8 + $0xd8] sm:$0xff]
        %v2829 = vld [vmem:[%s8 + $0xe0] sm:$0xff]
        %v2830 = vld [vmem:[%s8 + $0xe8] sm:$0xff]
        %v2831 = vld [vmem:[%s8 + $0xf0] sm:$0xff]
        %v2832 = vld [vmem:[%s8 + $0xf8] sm:$0xff]
        %v2833 = vld [vmem:[%s9] sm:$0x3]
        %v2835 = vlaneseq
        %v2836 = vshrl.u32 %v2835, 7
        %v2837 = vsub.s32 0, %v2836
        %v2838 = vrot.slane %v2833, %v2837
        %v2839 = vlaneseq
        %v2840 = vshrl.u32 %v2839, 7
        %v2841 = vsub.s32 1, %v2840
        %v2842 = vrot.slane %v2833, %v2841
        %2845 = vmatprep.subr.mxu0 %v2832
        %2846 = vmatpush1.msra.mxu0 %v2831
        %2847 = vmatprep.subr.mxu0 %v2830
        %2848 = vmatpush1.msra.mxu0 %v2829
        %2849 = vmatprep.subr.mxu0 %v2828
        %2850 = vmatpush1.msra.mxu0 %v2827
        %2851 = vmatprep.subr.mxu0 %v2826
        %2852 = vmatpush1.msra.mxu0 %v2825
        %2853 = vmatprep.subr.mxu0 %v2824
        %2854 = vmatpush1.msra.mxu0 %v2823
        %2855 = vmatprep.subr.mxu0 %v2822
        %2856 = vmatpush1.msra.mxu0 %v2821
        %2857 = vmatprep.subr.mxu0 %v2820
        %2858 = vmatpush1.msra.mxu0 %v2819
        %2859 = vmatprep.subr.mxu0 %v2818
        %2860 = vmatpush1.msra.mxu0 %v2817
        %2861 = vmatprep.subr.mxu0 %v2816
        %2862 = vmatpush1.msra.mxu0 %v2815
        %2863 = vmatprep.subr.mxu0 %v2814
        %2864 = vmatpush1.msra.mxu0 %v2813
        %2865 = vmatprep.subr.mxu0 %v2812
        %2866 = vmatpush1.msra.mxu0 %v2811
        %2867 = vmatprep.subr.mxu0 %v2810
        %2868 = vmatpush1.msra.mxu0 %v2809
        %2869 = vmatprep.subr.mxu0 %v2808
        %2870 = vmatpush1.msra.mxu0 %v2807
        %2871 = vmatprep.subr.mxu0 %v2806
        %2872 = vmatpush1.msra.mxu0 %v2805
        %2873 = vmatprep.subr.mxu0 %v2804
        %2874 = vmatpush1.msra.mxu0 %v2803
        %2875 = vmatprep.subr.mxu0 %v2802
        %2876 = vmatpush1.msra.mxu0 %v2801
        %2877 = vmatprep.subr.mxu0 0.0
        %2878 = vmatpush2.msra.mxu0 0.0
        %2879 = vmatprep.subr.mxu0 0.0
        %2880 = vmatpush2.msra.mxu0 0.0
        %2881 = vmatprep.subr.mxu0 0.0
        %2882 = vmatpush2.msra.mxu0 0.0
        %2883 = vmatprep.subr.mxu0 0.0
        %2884 = vmatpush2.msra.mxu0 0.0
        %2885 = vmatprep.subr.mxu0 0.0
        %2886 = vmatpush2.msra.mxu0 0.0
        %2887 = vmatprep.subr.mxu0 0.0
        %2888 = vmatpush2.msra.mxu0 0.0
        %2889 = vmatprep.subr.mxu0 0.0
        %2890 = vmatpush2.msra.mxu0 0.0
        %2891 = vmatprep.subr.mxu0 0.0
        %2892 = vmatpush2.msra.mxu0 0.0
        %2893 = vmatprep.subr.mxu0 0.0
        %2894 = vmatpush2.msra.mxu0 0.0
        %2895 = vmatprep.subr.mxu0 0.0
        %2896 = vmatpush2.msra.mxu0 0.0
        %2897 = vmatprep.subr.mxu0 0.0
        %2898 = vmatpush2.msra.mxu0 0.0
        %2899 = vmatprep.subr.mxu0 0.0
        %2900 = vmatpush2.msra.mxu0 0.0
        %2901 = vmatprep.subr.mxu0 0.0
        %2902 = vmatpush2.msra.mxu0 0.0
        %2903 = vmatprep.subr.mxu0 0.0
        %2904 = vmatpush2.msra.mxu0 0.0
        %2905 = vmatprep.subr.mxu0 0.0
        %2906 = vmatpush2.msra.mxu0 0.0
        %2907 = vmatprep.subr.mxu0 0.0
        %2908 = vmatpush2.msra.mxu0 0.0
        %2909 = vmatprep.mubr.f32.mxu0 0.0
        %2910 = vmatmul.mubr.f32.gmra.mxu0 %v2800
        %v2911 = vpop.f32.mrf.mxu0
        %v2912 = vadd.f32 %v2838, %v2911
        %v2913 = vpop.f32.mrf.mxu0
        %v2914 = vadd.f32 %v2842, %v2913
        %2915 = vdwg.mxu0
        %v2916 = vxor.u32 %v2912, 2147483648
        %v2917 = vxor.u32 %v2914, 2147483648
        %v2918 = vmul.f32 %v2916, 1.442695
        %v2919 = vpow.pop %v2918
        %v2920 = vmul.f32 %v2917, 1.442695
        %v2921 = vpow.pop %v2920
        %v2922 = vadd.f32 %v2919, 1.0
        %v2923 = vadd.f32 %v2921, 1.0
        %v2924 = vrcp.pop %v2922
        %v2925 = vmul.f32 1.0, %v2924
        %v2926 = vrcp.pop %v2923
        %v2927 = vmul.f32 1.0, %v2926
        %v2928 = vtanh.pop %v2914
        %v2929 = vmul.f32 %v2925, %v2663
        %2931 = vrot.lane.b32.xlu0 %v2928, 64
        %v2932 = vpop.permute.xlu0 %2931
        %v2934 = vmul.f32 %v2925, %v2932
        %2936 = vrot.lane.b32.xlu0 %v2934, 64
        %v2937 = vpop.permute.xlu0 %2936
        %v2939 = vadd.f32 %v2929, %v2937
        %v2940 = vtanh.pop %v2939
        %2942 = vrot.lane.b32.xlu0 %v2940, 64
        %v2943 = vpop.permute.xlu0 %2942
        %v2945 = vmul.f32 %v2927, %v2943
        %s2946 = scalar_lea.vmem [#allocation3], 56
        %2947 = vst.msk [vmem:[%s2946] sm:$0xff] %vm566, %v2945
        %v2948 = vld [vmem:[#allocation2] sm:$0xff]
        %v2949 = vld [vmem:[#allocation2 + $0x8] sm:$0xff]
        %v2950 = vld [vmem:[%s6] sm:$0xff]
        %v2951 = vld [vmem:[%s6 + $0x8] sm:$0xff]
        %v2952 = vld [vmem:[%s6 + $0x10] sm:$0xff]
        %v2953 = vld [vmem:[%s6 + $0x18] sm:$0xff]
        %v2954 = vld [vmem:[%s6 + $0x20] sm:$0xff]
        %v2955 = vld [vmem:[%s6 + $0x28] sm:$0xff]
        %v2956 = vld [vmem:[%s6 + $0x30] sm:$0xff]
        %v2957 = vld [vmem:[%s6 + $0x38] sm:$0xff]
        %v2958 = vld [vmem:[%s6 + $0x40] sm:$0xff]
        %v2959 = vld [vmem:[%s6 + $0x48] sm:$0xff]
        %v2960 = vld [vmem:[%s6 + $0x50] sm:$0xff]
        %v2961 = vld [vmem:[%s6 + $0x58] sm:$0xff]
        %v2962 = vld [vmem:[%s6 + $0x60] sm:$0xff]
        %v2963 = vld [vmem:[%s6 + $0x68] sm:$0xff]
        %v2964 = vld [vmem:[%s6 + $0x70] sm:$0xff]
        %v2965 = vld [vmem:[%s6 + $0x78] sm:$0xff]
        %v2967 = vsel %vm566, %v2795, 0
        %2969 = vmatprep.subr.mxu0 0.0
        %2970 = vmatpush1.msra.mxu0 0.0
        %2971 = vmatprep.subr.mxu0 0.0
        %2972 = vmatpush1.msra.mxu0 0.0
        %2973 = vmatprep.subr.mxu0 0.0
        %2974 = vmatpush1.msra.mxu0 0.0
        %2975 = vmatprep.subr.mxu0 0.0
        %2976 = vmatpush1.msra.mxu0 0.0
        %2977 = vmatprep.subr.mxu0 0.0
        %2978 = vmatpush1.msra.mxu0 0.0
        %2979 = vmatprep.subr.mxu0 0.0
        %2980 = vmatpush1.msra.mxu0 0.0
        %2981 = vmatprep.subr.mxu0 0.0
        %2982 = vmatpush1.msra.mxu0 0.0
        %2983 = vmatprep.subr.mxu0 0.0
        %2984 = vmatpush1.msra.mxu0 0.0
        %2985 = vmatprep.subr.mxu0 %v2965
        %2986 = vmatpush1.msra.mxu0 %v2964
        %2987 = vmatprep.subr.mxu0 %v2963
        %2988 = vmatpush1.msra.mxu0 %v2962
        %2989 = vmatprep.subr.mxu0 %v2961
        %2990 = vmatpush1.msra.mxu0 %v2960
        %2991 = vmatprep.subr.mxu0 %v2959
        %2992 = vmatpush1.msra.mxu0 %v2958
        %2993 = vmatprep.subr.mxu0 %v2957
        %2994 = vmatpush1.msra.mxu0 %v2956
        %2995 = vmatprep.subr.mxu0 %v2955
        %2996 = vmatpush1.msra.mxu0 %v2954
        %2997 = vmatprep.subr.mxu0 %v2953
        %2998 = vmatpush1.msra.mxu0 %v2952
        %2999 = vmatprep.subr.mxu0 %v2951
        %3000 = vmatpush1.msra.mxu0 %v2950
        %3001 = vmatprep.subr.mxu0 0.0
        %3002 = vmatpush2.msra.mxu0 0.0
        %3003 = vmatprep.subr.mxu0 0.0
        %3004 = vmatpush2.msra.mxu0 0.0
        %3005 = vmatprep.subr.mxu0 0.0
        %3006 = vmatpush2.msra.mxu0 0.0
        %3007 = vmatprep.subr.mxu0 0.0
        %3008 = vmatpush2.msra.mxu0 0.0
        %3009 = vmatprep.subr.mxu0 0.0
        %3010 = vmatpush2.msra.mxu0 0.0
        %3011 = vmatprep.subr.mxu0 0.0
        %3012 = vmatpush2.msra.mxu0 0.0
        %3013 = vmatprep.subr.mxu0 0.0
        %3014 = vmatpush2.msra.mxu0 0.0
        %3015 = vmatprep.subr.mxu0 0.0
        %3016 = vmatpush2.msra.mxu0 0.0
        %3017 = vmatprep.subr.mxu0 0.0
        %3018 = vmatpush2.msra.mxu0 0.0
        %3019 = vmatprep.subr.mxu0 0.0
        %3020 = vmatpush2.msra.mxu0 0.0
        %3021 = vmatprep.subr.mxu0 0.0
        %3022 = vmatpush2.msra.mxu0 0.0
        %3023 = vmatprep.subr.mxu0 0.0
        %3024 = vmatpush2.msra.mxu0 0.0
        %3025 = vmatprep.subr.mxu0 0.0
        %3026 = vmatpush2.msra.mxu0 0.0
        %3027 = vmatprep.subr.mxu0 0.0
        %3028 = vmatpush2.msra.mxu0 0.0
        %3029 = vmatprep.subr.mxu0 0.0
        %3030 = vmatpush2.msra.mxu0 0.0
        %3031 = vmatprep.subr.mxu0 0.0
        %3032 = vmatpush2.msra.mxu0 0.0
        %3033 = vmatprep.mubr.f32.mxu0 0.0
        %3034 = vmatmul.mubr.f32.gmra.mxu0 %v2967
        %v3035 = vpop.f32.mrf.mxu0
        %v3036 = vadd.f32 0.0, %v3035
        %v3037 = vpop.f32.mrf.mxu0
        %v3038 = vadd.f32 0.0, %v3037
        %3039 = vdwg.mxu0
        %v3040 = vadd.f32 %v2948, %v3036
        %v3041 = vadd.f32 %v2949, %v3038
        %v3042 = vxor.u32 %v3040, 2147483648
        %v3043 = vxor.u32 %v3041, 2147483648
        %v3044 = vmul.f32 %v3042, 1.442695
        %v3045 = vpow.pop %v3044
        %v3046 = vmul.f32 %v3043, 1.442695
        %v3047 = vpow.pop %v3046
        %v3048 = vadd.f32 %v3045, 1.0
        %v3049 = vadd.f32 %v3047, 1.0
        %v3050 = vrcp.pop %v3048
        %v3051 = vmul.f32 1.0, %v3050
        %v3052 = vrcp.pop %v3049
        %v3053 = vmul.f32 1.0, %v3052
        %v3054 = vtanh.pop %v3041
        %v3055 = vmul.f32 %v3051, %v2789
        %3057 = vrot.lane.b32.xlu0 %v3054, 64
        %v3058 = vpop.permute.xlu0 %3057
        %v3060 = vmul.f32 %v3051, %v3058
        %3062 = vrot.lane.b32.xlu0 %v3060, 64
        %v3063 = vpop.permute.xlu0 %3062
        %v3065 = vadd.f32 %v3055, %v3063
        %v3066 = vtanh.pop %v3065
        %3068 = vrot.lane.b32.xlu0 %v3066, 64
        %v3069 = vpop.permute.xlu0 %3068
        %v3071 = vmul.f32 %v3053, %v3069
        %3073 = vrot.lane.b32.xlu0 %v2945, 64
        %v3074 = vpop.permute.xlu0 %3073
        %v3076 = vsel %vm566, %v3071, %v3074
        %v3077 = vld [vmem:[%s8] sm:$0xff]
        %v3078 = vld [vmem:[%s8 + $0x8] sm:$0xff]
        %v3079 = vld [vmem:[%s8 + $0x10] sm:$0xff]
        %v3080 = vld [vmem:[%s8 + $0x18] sm:$0xff]
        %v3081 = vld [vmem:[%s8 + $0x20] sm:$0xff]
        %v3082 = vld [vmem:[%s8 + $0x28] sm:$0xff]
        %v3083 = vld [vmem:[%s8 + $0x30] sm:$0xff]
        %v3084 = vld [vmem:[%s8 + $0x38] sm:$0xff]
        %v3085 = vld [vmem:[%s8 + $0x40] sm:$0xff]
        %v3086 = vld [vmem:[%s8 + $0x48] sm:$0xff]
        %v3087 = vld [vmem:[%s8 + $0x50] sm:$0xff]
        %v3088 = vld [vmem:[%s8 + $0x58] sm:$0xff]
        %v3089 = vld [vmem:[%s8 + $0x60] sm:$0xff]
        %v3090 = vld [vmem:[%s8 + $0x68] sm:$0xff]
        %v3091 = vld [vmem:[%s8 + $0x70] sm:$0xff]
        %v3092 = vld [vmem:[%s8 + $0x78] sm:$0xff]
        %v3093 = vld [vmem:[%s8 + $0x80] sm:$0xff]
        %v3094 = vld [vmem:[%s8 + $0x88] sm:$0xff]
        %v3095 = vld [vmem:[%s8 + $0x90] sm:$0xff]
        %v3096 = vld [vmem:[%s8 + $0x98] sm:$0xff]
        %v3097 = vld [vmem:[%s8 + $0xa0] sm:$0xff]
        %v3098 = vld [vmem:[%s8 + $0xa8] sm:$0xff]
        %v3099 = vld [vmem:[%s8 + $0xb0] sm:$0xff]
        %v3100 = vld [vmem:[%s8 + $0xb8] sm:$0xff]
        %v3101 = vld [vmem:[%s8 + $0xc0] sm:$0xff]
        %v3102 = vld [vmem:[%s8 + $0xc8] sm:$0xff]
        %v3103 = vld [vmem:[%s8 + $0xd0] sm:$0xff]
        %v3104 = vld [vmem:[%s8 + $0xd8] sm:$0xff]
        %v3105 = vld [vmem:[%s8 + $0xe0] sm:$0xff]
        %v3106 = vld [vmem:[%s8 + $0xe8] sm:$0xff]
        %v3107 = vld [vmem:[%s8 + $0xf0] sm:$0xff]
        %v3108 = vld [vmem:[%s8 + $0xf8] sm:$0xff]
        %v3109 = vld [vmem:[%s9] sm:$0x3]
        %v3111 = vlaneseq
        %v3112 = vshrl.u32 %v3111, 7
        %v3113 = vsub.s32 0, %v3112
        %v3114 = vrot.slane %v3109, %v3113
        %v3115 = vlaneseq
        %v3116 = vshrl.u32 %v3115, 7
        %v3117 = vsub.s32 1, %v3116
        %v3118 = vrot.slane %v3109, %v3117
        %3121 = vmatprep.subr.mxu0 %v3108
        %3122 = vmatpush1.msra.mxu0 %v3107
        %3123 = vmatprep.subr.mxu0 %v3106
        %3124 = vmatpush1.msra.mxu0 %v3105
        %3125 = vmatprep.subr.mxu0 %v3104
        %3126 = vmatpush1.msra.mxu0 %v3103
        %3127 = vmatprep.subr.mxu0 %v3102
        %3128 = vmatpush1.msra.mxu0 %v3101
        %3129 = vmatprep.subr.mxu0 %v3100
        %3130 = vmatpush1.msra.mxu0 %v3099
        %3131 = vmatprep.subr.mxu0 %v3098
        %3132 = vmatpush1.msra.mxu0 %v3097
        %3133 = vmatprep.subr.mxu0 %v3096
        %3134 = vmatpush1.msra.mxu0 %v3095
        %3135 = vmatprep.subr.mxu0 %v3094
        %3136 = vmatpush1.msra.mxu0 %v3093
        %3137 = vmatprep.subr.mxu0 %v3092
        %3138 = vmatpush1.msra.mxu0 %v3091
        %3139 = vmatprep.subr.mxu0 %v3090
        %3140 = vmatpush1.msra.mxu0 %v3089
        %3141 = vmatprep.subr.mxu0 %v3088
        %3142 = vmatpush1.msra.mxu0 %v3087
        %3143 = vmatprep.subr.mxu0 %v3086
        %3144 = vmatpush1.msra.mxu0 %v3085
        %3145 = vmatprep.subr.mxu0 %v3084
        %3146 = vmatpush1.msra.mxu0 %v3083
        %3147 = vmatprep.subr.mxu0 %v3082
        %3148 = vmatpush1.msra.mxu0 %v3081
        %3149 = vmatprep.subr.mxu0 %v3080
        %3150 = vmatpush1.msra.mxu0 %v3079
        %3151 = vmatprep.subr.mxu0 %v3078
        %3152 = vmatpush1.msra.mxu0 %v3077
        %3153 = vmatprep.subr.mxu0 0.0
        %3154 = vmatpush2.msra.mxu0 0.0
        %3155 = vmatprep.subr.mxu0 0.0
        %3156 = vmatpush2.msra.mxu0 0.0
        %3157 = vmatprep.subr.mxu0 0.0
        %3158 = vmatpush2.msra.mxu0 0.0
        %3159 = vmatprep.subr.mxu0 0.0
        %3160 = vmatpush2.msra.mxu0 0.0
        %3161 = vmatprep.subr.mxu0 0.0
        %3162 = vmatpush2.msra.mxu0 0.0
        %3163 = vmatprep.subr.mxu0 0.0
        %3164 = vmatpush2.msra.mxu0 0.0
        %3165 = vmatprep.subr.mxu0 0.0
        %3166 = vmatpush2.msra.mxu0 0.0
        %3167 = vmatprep.subr.mxu0 0.0
        %3168 = vmatpush2.msra.mxu0 0.0
        %3169 = vmatprep.subr.mxu0 0.0
        %3170 = vmatpush2.msra.mxu0 0.0
        %3171 = vmatprep.subr.mxu0 0.0
        %3172 = vmatpush2.msra.mxu0 0.0
        %3173 = vmatprep.subr.mxu0 0.0
        %3174 = vmatpush2.msra.mxu0 0.0
        %3175 = vmatprep.subr.mxu0 0.0
        %3176 = vmatpush2.msra.mxu0 0.0
        %3177 = vmatprep.subr.mxu0 0.0
        %3178 = vmatpush2.msra.mxu0 0.0
        %3179 = vmatprep.subr.mxu0 0.0
        %3180 = vmatpush2.msra.mxu0 0.0
        %3181 = vmatprep.subr.mxu0 0.0
        %3182 = vmatpush2.msra.mxu0 0.0
        %3183 = vmatprep.subr.mxu0 0.0
        %3184 = vmatpush2.msra.mxu0 0.0
        %3185 = vmatprep.mubr.f32.mxu0 0.0
        %3186 = vmatmul.mubr.f32.gmra.mxu0 %v3076
        %v3187 = vpop.f32.mrf.mxu0
        %v3188 = vadd.f32 %v3114, %v3187
        %v3189 = vpop.f32.mrf.mxu0
        %v3190 = vadd.f32 %v3118, %v3189
        %3191 = vdwg.mxu0
        %v3192 = vxor.u32 %v3188, 2147483648
        %v3193 = vxor.u32 %v3190, 2147483648
        %v3194 = vmul.f32 %v3192, 1.442695
        %v3195 = vpow.pop %v3194
        %v3196 = vmul.f32 %v3193, 1.442695
        %v3197 = vpow.pop %v3196
        %v3198 = vadd.f32 %v3195, 1.0
        %v3199 = vadd.f32 %v3197, 1.0
        %v3200 = vrcp.pop %v3198
        %v3201 = vmul.f32 1.0, %v3200
        %v3202 = vrcp.pop %v3199
        %v3203 = vmul.f32 1.0, %v3202
        %v3204 = vtanh.pop %v3190
        %v3205 = vmul.f32 %v3201, %v2939
        %3207 = vrot.lane.b32.xlu0 %v3204, 64
        %v3208 = vpop.permute.xlu0 %3207
        %v3210 = vmul.f32 %v3201, %v3208
        %3212 = vrot.lane.b32.xlu0 %v3210, 64
        %v3213 = vpop.permute.xlu0 %3212
        %v3215 = vadd.f32 %v3205, %v3213
        %v3216 = vtanh.pop %v3215
        %3218 = vrot.lane.b32.xlu0 %v3216, 64
        %v3219 = vpop.permute.xlu0 %3218
        %v3221 = vmul.f32 %v3203, %v3219
        %s3222 = scalar_lea.vmem [#allocation3], 64
        %3223 = vst.msk [vmem:[%s3222] sm:$0xff] %vm566, %v3221
        %v3224 = vld [vmem:[#allocation2] sm:$0xff]
        %v3225 = vld [vmem:[#allocation2 + $0x8] sm:$0xff]
        %v3226 = vld [vmem:[%s6] sm:$0xff]
        %v3227 = vld [vmem:[%s6 + $0x8] sm:$0xff]
        %v3228 = vld [vmem:[%s6 + $0x10] sm:$0xff]
        %v3229 = vld [vmem:[%s6 + $0x18] sm:$0xff]
        %v3230 = vld [vmem:[%s6 + $0x20] sm:$0xff]
        %v3231 = vld [vmem:[%s6 + $0x28] sm:$0xff]
        %v3232 = vld [vmem:[%s6 + $0x30] sm:$0xff]
        %v3233 = vld [vmem:[%s6 + $0x38] sm:$0xff]
        %v3234 = vld [vmem:[%s6 + $0x40] sm:$0xff]
        %v3235 = vld [vmem:[%s6 + $0x48] sm:$0xff]
        %v3236 = vld [vmem:[%s6 + $0x50] sm:$0xff]
        %v3237 = vld [vmem:[%s6 + $0x58] sm:$0xff]
        %v3238 = vld [vmem:[%s6 + $0x60] sm:$0xff]
        %v3239 = vld [vmem:[%s6 + $0x68] sm:$0xff]
        %v3240 = vld [vmem:[%s6 + $0x70] sm:$0xff]
        %v3241 = vld [vmem:[%s6 + $0x78] sm:$0xff]
        %v3243 = vsel %vm566, %v3071, 0
        %3245 = vmatprep.subr.mxu0 0.0
        %3246 = vmatpush1.msra.mxu0 0.0
        %3247 = vmatprep.subr.mxu0 0.0
        %3248 = vmatpush1.msra.mxu0 0.0
        %3249 = vmatprep.subr.mxu0 0.0
        %3250 = vmatpush1.msra.mxu0 0.0
        %3251 = vmatprep.subr.mxu0 0.0
        %3252 = vmatpush1.msra.mxu0 0.0
        %3253 = vmatprep.subr.mxu0 0.0
        %3254 = vmatpush1.msra.mxu0 0.0
        %3255 = vmatprep.subr.mxu0 0.0
        %3256 = vmatpush1.msra.mxu0 0.0
        %3257 = vmatprep.subr.mxu0 0.0
        %3258 = vmatpush1.msra.mxu0 0.0
        %3259 = vmatprep.subr.mxu0 0.0
        %3260 = vmatpush1.msra.mxu0 0.0
        %3261 = vmatprep.subr.mxu0 %v3241
        %3262 = vmatpush1.msra.mxu0 %v3240
        %3263 = vmatprep.subr.mxu0 %v3239
        %3264 = vmatpush1.msra.mxu0 %v3238
        %3265 = vmatprep.subr.mxu0 %v3237
        %3266 = vmatpush1.msra.mxu0 %v3236
        %3267 = vmatprep.subr.mxu0 %v3235
        %3268 = vmatpush1.msra.mxu0 %v3234
        %3269 = vmatprep.subr.mxu0 %v3233
        %3270 = vmatpush1.msra.mxu0 %v3232
        %3271 = vmatprep.subr.mxu0 %v3231
        %3272 = vmatpush1.msra.mxu0 %v3230
        %3273 = vmatprep.subr.mxu0 %v3229
        %3274 = vmatpush1.msra.mxu0 %v3228
        %3275 = vmatprep.subr.mxu0 %v3227
        %3276 = vmatpush1.msra.mxu0 %v3226
        %3277 = vmatprep.subr.mxu0 0.0
        %3278 = vmatpush2.msra.mxu0 0.0
        %3279 = vmatprep.subr.mxu0 0.0
        %3280 = vmatpush2.msra.mxu0 0.0
        %3281 = vmatprep.subr.mxu0 0.0
        %3282 = vmatpush2.msra.mxu0 0.0
        %3283 = vmatprep.subr.mxu0 0.0
        %3284 = vmatpush2.msra.mxu0 0.0
        %3285 = vmatprep.subr.mxu0 0.0
        %3286 = vmatpush2.msra.mxu0 0.0
        %3287 = vmatprep.subr.mxu0 0.0
        %3288 = vmatpush2.msra.mxu0 0.0
        %3289 = vmatprep.subr.mxu0 0.0
        %3290 = vmatpush2.msra.mxu0 0.0
        %3291 = vmatprep.subr.mxu0 0.0
        %3292 = vmatpush2.msra.mxu0 0.0
        %3293 = vmatprep.subr.mxu0 0.0
        %3294 = vmatpush2.msra.mxu0 0.0
        %3295 = vmatprep.subr.mxu0 0.0
        %3296 = vmatpush2.msra.mxu0 0.0
        %3297 = vmatprep.subr.mxu0 0.0
        %3298 = vmatpush2.msra.mxu0 0.0
        %3299 = vmatprep.subr.mxu0 0.0
        %3300 = vmatpush2.msra.mxu0 0.0
        %3301 = vmatprep.subr.mxu0 0.0
        %3302 = vmatpush2.msra.mxu0 0.0
        %3303 = vmatprep.subr.mxu0 0.0
        %3304 = vmatpush2.msra.mxu0 0.0
        %3305 = vmatprep.subr.mxu0 0.0
        %3306 = vmatpush2.msra.mxu0 0.0
        %3307 = vmatprep.subr.mxu0 0.0
        %3308 = vmatpush2.msra.mxu0 0.0
        %3309 = vmatprep.mubr.f32.mxu0 0.0
        %3310 = vmatmul.mubr.f32.gmra.mxu0 %v3243
        %v3311 = vpop.f32.mrf.mxu0
        %v3312 = vadd.f32 0.0, %v3311
        %v3313 = vpop.f32.mrf.mxu0
        %v3314 = vadd.f32 0.0, %v3313
        %3315 = vdwg.mxu0
        %v3316 = vadd.f32 %v3224, %v3312
        %v3317 = vadd.f32 %v3225, %v3314
        %v3318 = vxor.u32 %v3316, 2147483648
        %v3319 = vxor.u32 %v3317, 2147483648
        %v3320 = vmul.f32 %v3318, 1.442695
        %v3321 = vpow.pop %v3320
        %v3322 = vmul.f32 %v3319, 1.442695
        %v3323 = vpow.pop %v3322
        %v3324 = vadd.f32 %v3321, 1.0
        %v3325 = vadd.f32 %v3323, 1.0
        %v3326 = vrcp.pop %v3324
        %v3327 = vmul.f32 1.0, %v3326
        %v3328 = vrcp.pop %v3325
        %v3329 = vmul.f32 1.0, %v3328
        %v3330 = vtanh.pop %v3317
        %v3331 = vmul.f32 %v3327, %v3065
        %3333 = vrot.lane.b32.xlu0 %v3330, 64
        %v3334 = vpop.permute.xlu0 %3333
        %v3336 = vmul.f32 %v3327, %v3334
        %3338 = vrot.lane.b32.xlu0 %v3336, 64
        %v3339 = vpop.permute.xlu0 %3338
        %v3341 = vadd.f32 %v3331, %v3339
        %v3342 = vtanh.pop %v3341
        %3344 = vrot.lane.b32.xlu0 %v3342, 64
        %v3345 = vpop.permute.xlu0 %3344
        %v3347 = vmul.f32 %v3329, %v3345
        %3349 = vrot.lane.b32.xlu0 %v3221, 64
        %v3350 = vpop.permute.xlu0 %3349
        %v3352 = vsel %vm566, %v3347, %v3350
        %v3353 = vld [vmem:[%s8] sm:$0xff]
        %v3354 = vld [vmem:[%s8 + $0x8] sm:$0xff]
        %v3355 = vld [vmem:[%s8 + $0x10] sm:$0xff]
        %v3356 = vld [vmem:[%s8 + $0x18] sm:$0xff]
        %v3357 = vld [vmem:[%s8 + $0x20] sm:$0xff]
        %v3358 = vld [vmem:[%s8 + $0x28] sm:$0xff]
        %v3359 = vld [vmem:[%s8 + $0x30] sm:$0xff]
        %v3360 = vld [vmem:[%s8 + $0x38] sm:$0xff]
        %v3361 = vld [vmem:[%s8 + $0x40] sm:$0xff]
        %v3362 = vld [vmem:[%s8 + $0x48] sm:$0xff]
        %v3363 = vld [vmem:[%s8 + $0x50] sm:$0xff]
        %v3364 = vld [vmem:[%s8 + $0x58] sm:$0xff]
        %v3365 = vld [vmem:[%s8 + $0x60] sm:$0xff]
        %v3366 = vld [vmem:[%s8 + $0x68] sm:$0xff]
        %v3367 = vld [vmem:[%s8 + $0x70] sm:$0xff]
        %v3368 = vld [vmem:[%s8 + $0x78] sm:$0xff]
        %v3369 = vld [vmem:[%s8 + $0x80] sm:$0xff]
        %v3370 = vld [vmem:[%s8 + $0x88] sm:$0xff]
        %v3371 = vld [vmem:[%s8 + $0x90] sm:$0xff]
        %v3372 = vld [vmem:[%s8 + $0x98] sm:$0xff]
        %v3373 = vld [vmem:[%s8 + $0xa0] sm:$0xff]
        %v3374 = vld [vmem:[%s8 + $0xa8] sm:$0xff]
        %v3375 = vld [vmem:[%s8 + $0xb0] sm:$0xff]
        %v3376 = vld [vmem:[%s8 + $0xb8] sm:$0xff]
        %v3377 = vld [vmem:[%s8 + $0xc0] sm:$0xff]
        %v3378 = vld [vmem:[%s8 + $0xc8] sm:$0xff]
        %v3379 = vld [vmem:[%s8 + $0xd0] sm:$0xff]
        %v3380 = vld [vmem:[%s8 + $0xd8] sm:$0xff]
        %v3381 = vld [vmem:[%s8 + $0xe0] sm:$0xff]
        %v3382 = vld [vmem:[%s8 + $0xe8] sm:$0xff]
        %v3383 = vld [vmem:[%s8 + $0xf0] sm:$0xff]
        %v3384 = vld [vmem:[%s8 + $0xf8] sm:$0xff]
        %v3385 = vld [vmem:[%s9] sm:$0x3]
        %v3387 = vlaneseq
        %v3388 = vshrl.u32 %v3387, 7
        %v3389 = vsub.s32 0, %v3388
        %v3390 = vrot.slane %v3385, %v3389
        %v3391 = vlaneseq
        %v3392 = vshrl.u32 %v3391, 7
        %v3393 = vsub.s32 1, %v3392
        %v3394 = vrot.slane %v3385, %v3393
        %3397 = vmatprep.subr.mxu0 %v3384
        %3398 = vmatpush1.msra.mxu0 %v3383
        %3399 = vmatprep.subr.mxu0 %v3382
        %3400 = vmatpush1.msra.mxu0 %v3381
        %3401 = vmatprep.subr.mxu0 %v3380
        %3402 = vmatpush1.msra.mxu0 %v3379
        %3403 = vmatprep.subr.mxu0 %v3378
        %3404 = vmatpush1.msra.mxu0 %v3377
        %3405 = vmatprep.subr.mxu0 %v3376
        %3406 = vmatpush1.msra.mxu0 %v3375
        %3407 = vmatprep.subr.mxu0 %v3374
        %3408 = vmatpush1.msra.mxu0 %v3373
        %3409 = vmatprep.subr.mxu0 %v3372
        %3410 = vmatpush1.msra.mxu0 %v3371
        %3411 = vmatprep.subr.mxu0 %v3370
        %3412 = vmatpush1.msra.mxu0 %v3369
        %3413 = vmatprep.subr.mxu0 %v3368
        %3414 = vmatpush1.msra.mxu0 %v3367
        %3415 = vmatprep.subr.mxu0 %v3366
        %3416 = vmatpush1.msra.mxu0 %v3365
        %3417 = vmatprep.subr.mxu0 %v3364
        %3418 = vmatpush1.msra.mxu0 %v3363
        %3419 = vmatprep.subr.mxu0 %v3362
        %3420 = vmatpush1.msra.mxu0 %v3361
        %3421 = vmatprep.subr.mxu0 %v3360
        %3422 = vmatpush1.msra.mxu0 %v3359
        %3423 = vmatprep.subr.mxu0 %v3358
        %3424 = vmatpush1.msra.mxu0 %v3357
        %3425 = vmatprep.subr.mxu0 %v3356
        %3426 = vmatpush1.msra.mxu0 %v3355
        %3427 = vmatprep.subr.mxu0 %v3354
        %3428 = vmatpush1.msra.mxu0 %v3353
        %3429 = vmatprep.subr.mxu0 0.0
        %3430 = vmatpush2.msra.mxu0 0.0
        %3431 = vmatprep.subr.mxu0 0.0
        %3432 = vmatpush2.msra.mxu0 0.0
        %3433 = vmatprep.subr.mxu0 0.0
        %3434 = vmatpush2.msra.mxu0 0.0
        %3435 = vmatprep.subr.mxu0 0.0
        %3436 = vmatpush2.msra.mxu0 0.0
        %3437 = vmatprep.subr.mxu0 0.0
        %3438 = vmatpush2.msra.mxu0 0.0
        %3439 = vmatprep.subr.mxu0 0.0
        %3440 = vmatpush2.msra.mxu0 0.0
        %3441 = vmatprep.subr.mxu0 0.0
        %3442 = vmatpush2.msra.mxu0 0.0
        %3443 = vmatprep.subr.mxu0 0.0
        %3444 = vmatpush2.msra.mxu0 0.0
        %3445 = vmatprep.subr.mxu0 0.0
        %3446 = vmatpush2.msra.mxu0 0.0
        %3447 = vmatprep.subr.mxu0 0.0
        %3448 = vmatpush2.msra.mxu0 0.0
        %3449 = vmatprep.subr.mxu0 0.0
        %3450 = vmatpush2.msra.mxu0 0.0
        %3451 = vmatprep.subr.mxu0 0.0
        %3452 = vmatpush2.msra.mxu0 0.0
        %3453 = vmatprep.subr.mxu0 0.0
        %3454 = vmatpush2.msra.mxu0 0.0
        %3455 = vmatprep.subr.mxu0 0.0
        %3456 = vmatpush2.msra.mxu0 0.0
        %3457 = vmatprep.subr.mxu0 0.0
        %3458 = vmatpush2.msra.mxu0 0.0
        %3459 = vmatprep.subr.mxu0 0.0
        %3460 = vmatpush2.msra.mxu0 0.0
        %3461 = vmatprep.mubr.f32.mxu0 0.0
        %3462 = vmatmul.mubr.f32.gmra.mxu0 %v3352
        %v3463 = vpop.f32.mrf.mxu0
        %v3464 = vadd.f32 %v3390, %v3463
        %v3465 = vpop.f32.mrf.mxu0
        %v3466 = vadd.f32 %v3394, %v3465
        %3467 = vdwg.mxu0
        %v3468 = vxor.u32 %v3464, 2147483648
        %v3469 = vxor.u32 %v3466, 2147483648
        %v3470 = vmul.f32 %v3468, 1.442695
        %v3471 = vpow.pop %v3470
        %v3472 = vmul.f32 %v3469, 1.442695
        %v3473 = vpow.pop %v3472
        %v3474 = vadd.f32 %v3471, 1.0
        %v3475 = vadd.f32 %v3473, 1.0
        %v3476 = vrcp.pop %v3474
        %v3477 = vmul.f32 1.0, %v3476
        %v3478 = vrcp.pop %v3475
        %v3479 = vmul.f32 1.0, %v3478
        %v3480 = vtanh.pop %v3466
        %v3481 = vmul.f32 %v3477, %v3215
        %3483 = vrot.lane.b32.xlu0 %v3480, 64
        %v3484 = vpop.permute.xlu0 %3483
        %v3486 = vmul.f32 %v3477, %v3484
        %3488 = vrot.lane.b32.xlu0 %v3486, 64
        %v3489 = vpop.permute.xlu0 %3488
        %v3491 = vadd.f32 %v3481, %v3489
        %v3492 = vtanh.pop %v3491
        %3494 = vrot.lane.b32.xlu0 %v3492, 64
        %v3495 = vpop.permute.xlu0 %3494
        %v3497 = vmul.f32 %v3479, %v3495
        %s3498 = scalar_lea.vmem [#allocation3], 72
        %3499 = vst.msk [vmem:[%s3498] sm:$0xff] %vm566, %v3497
        %v3500 = vld [vmem:[#allocation3] sm:$0xff]
        %v3501 = vld [vmem:[%s10] sm:$0xff]
        %v3502 = vld [vmem:[%s10 + $0x8] sm:$0xff]
        %v3503 = vld [vmem:[%s10 + $0x10] sm:$0xff]
        %v3504 = vld [vmem:[%s10 + $0x18] sm:$0xff]
        %v3505 = vld [vmem:[%s10 + $0x20] sm:$0xff]
        %v3506 = vld [vmem:[%s10 + $0x28] sm:$0xff]
        %v3507 = vld [vmem:[%s10 + $0x30] sm:$0xff]
        %v3508 = vld [vmem:[%s10 + $0x38] sm:$0xff]
        %v3509 = vld [vmem:[%s11] sm:$0x1]
        %v3511 = vlaneseq
        %v3512 = vshrl.u32 %v3511, 7
        %v3513 = vsub.s32 0, %v3512
        %v3514 = vrot.slane %v3509, %v3513
        %v3517 = vsel %vm566, %v3500, 0
        %3519 = vmatprep.subr.mxu0 0.0
        %3520 = vmatpush1.msra.mxu0 0.0
        %3521 = vmatprep.subr.mxu0 0.0
        %3522 = vmatpush1.msra.mxu0 0.0
        %3523 = vmatprep.subr.mxu0 0.0
        %3524 = vmatpush1.msra.mxu0 0.0
        %3525 = vmatprep.subr.mxu0 0.0
        %3526 = vmatpush1.msra.mxu0 0.0
        %3527 = vmatprep.subr.mxu0 0.0
        %3528 = vmatpush1.msra.mxu0 0.0
        %3529 = vmatprep.subr.mxu0 0.0
        %3530 = vmatpush1.msra.mxu0 0.0
        %3531 = vmatprep.subr.mxu0 0.0
        %3532 = vmatpush1.msra.mxu0 0.0
        %3533 = vmatprep.subr.mxu0 0.0
        %3534 = vmatpush1.msra.mxu0 0.0
        %3535 = vmatprep.subr.mxu0 0.0
        %3536 = vmatpush1.msra.mxu0 %v3508
        %3537 = vmatprep.subr.mxu0 0.0
        %3538 = vmatpush1.msra.mxu0 %v3507
        %3539 = vmatprep.subr.mxu0 0.0
        %3540 = vmatpush1.msra.mxu0 %v3506
        %3541 = vmatprep.subr.mxu0 0.0
        %3542 = vmatpush1.msra.mxu0 %v3505
        %3543 = vmatprep.subr.mxu0 0.0
        %3544 = vmatpush1.msra.mxu0 %v3504
        %3545 = vmatprep.subr.mxu0 0.0
        %3546 = vmatpush1.msra.mxu0 %v3503
        %3547 = vmatprep.subr.mxu0 0.0
        %3548 = vmatpush1.msra.mxu0 %v3502
        %3549 = vmatprep.subr.mxu0 0.0
        %3550 = vmatpush1.msra.mxu0 %v3501
        %3551 = vmatprep.subr.mxu0 0.0
        %3552 = vmatpush2.msra.mxu0 0.0
        %3553 = vmatprep.subr.mxu0 0.0
        %3554 = vmatpush2.msra.mxu0 0.0
        %3555 = vmatprep.subr.mxu0 0.0
        %3556 = vmatpush2.msra.mxu0 0.0
        %3557 = vmatprep.subr.mxu0 0.0
        %3558 = vmatpush2.msra.mxu0 0.0
        %3559 = vmatprep.subr.mxu0 0.0
        %3560 = vmatpush2.msra.mxu0 0.0
        %3561 = vmatprep.subr.mxu0 0.0
        %3562 = vmatpush2.msra.mxu0 0.0
        %3563 = vmatprep.subr.mxu0 0.0
        %3564 = vmatpush2.msra.mxu0 0.0
        %3565 = vmatprep.subr.mxu0 0.0
        %3566 = vmatpush2.msra.mxu0 0.0
        %3567 = vmatprep.subr.mxu0 0.0
        %3568 = vmatpush2.msra.mxu0 0.0
        %3569 = vmatprep.subr.mxu0 0.0
        %3570 = vmatpush2.msra.mxu0 0.0
        %3571 = vmatprep.subr.mxu0 0.0
        %3572 = vmatpush2.msra.mxu0 0.0
        %3573 = vmatprep.subr.mxu0 0.0
        %3574 = vmatpush2.msra.mxu0 0.0
        %3575 = vmatprep.subr.mxu0 0.0
        %3576 = vmatpush2.msra.mxu0 0.0
        %3577 = vmatprep.subr.mxu0 0.0
        %3578 = vmatpush2.msra.mxu0 0.0
        %3579 = vmatprep.subr.mxu0 0.0
        %3580 = vmatpush2.msra.mxu0 0.0
        %3581 = vmatprep.subr.mxu0 0.0
        %3582 = vmatpush2.msra.mxu0 0.0
        %3583 = vmatprep.mubr.f32.mxu0 0.0
        %3584 = vmatmul.mubr.f32.gmra.mxu0 %v3517
        %v3585 = vpop.f32.mrf.mxu0
        %v3586 = vadd.f32 %v3514, %v3585
        %v3587 = vpop.f32.mrf.mxu0
        %3588 = vdwg.mxu0
        %v3589 = vmax.f32 %v3586, 0.0
        %v3590 = vld [vmem:[%s12] sm:$0xff]
        %v3591 = vld [vmem:[%s12 + $0x8] sm:$0xff]
        %v3592 = vld [vmem:[%s12 + $0x10] sm:$0xff]
        %v3593 = vld [vmem:[%s12 + $0x18] sm:$0xff]
        %v3594 = vld [vmem:[%s12 + $0x20] sm:$0xff]
        %v3595 = vld [vmem:[%s12 + $0x28] sm:$0xff]
        %v3596 = vld [vmem:[%s12 + $0x30] sm:$0xff]
        %v3597 = vld [vmem:[%s12 + $0x38] sm:$0xff]
        %v3598 = vld [vmem:[%s1290] sm:$0xff]
        %v3600 = vsel %vm566, %v3598, 0
        %3602 = vmatprep.subr.mxu0 0.0
        %3603 = vmatpush1.msra.mxu0 0.0
        %3604 = vmatprep.subr.mxu0 0.0
        %3605 = vmatpush1.msra.mxu0 0.0
        %3606 = vmatprep.subr.mxu0 0.0
        %3607 = vmatpush1.msra.mxu0 0.0
        %3608 = vmatprep.subr.mxu0 0.0
        %3609 = vmatpush1.msra.mxu0 0.0
        %3610 = vmatprep.subr.mxu0 0.0
        %3611 = vmatpush1.msra.mxu0 0.0
        %3612 = vmatprep.subr.mxu0 0.0
        %3613 = vmatpush1.msra.mxu0 0.0
        %3614 = vmatprep.subr.mxu0 0.0
        %3615 = vmatpush1.msra.mxu0 0.0
        %3616 = vmatprep.subr.mxu0 0.0
        %3617 = vmatpush1.msra.mxu0 0.0
        %3618 = vmatprep.subr.mxu0 0.0
        %3619 = vmatpush1.msra.mxu0 %v3508
        %3620 = vmatprep.subr.mxu0 0.0
        %3621 = vmatpush1.msra.mxu0 %v3507
        %3622 = vmatprep.subr.mxu0 0.0
        %3623 = vmatpush1.msra.mxu0 %v3506
        %3624 = vmatprep.subr.mxu0 0.0
        %3625 = vmatpush1.msra.mxu0 %v3505
        %3626 = vmatprep.subr.mxu0 0.0
        %3627 = vmatpush1.msra.mxu0 %v3504
        %3628 = vmatprep.subr.mxu0 0.0
        %3629 = vmatpush1.msra.mxu0 %v3503
        %3630 = vmatprep.subr.mxu0 0.0
        %3631 = vmatpush1.msra.mxu0 %v3502
        %3632 = vmatprep.subr.mxu0 0.0
        %3633 = vmatpush1.msra.mxu0 %v3501
        %3634 = vmatprep.subr.mxu0 0.0
        %3635 = vmatpush2.msra.mxu0 0.0
        %3636 = vmatprep.subr.mxu0 0.0
        %3637 = vmatpush2.msra.mxu0 0.0
        %3638 = vmatprep.subr.mxu0 0.0
        %3639 = vmatpush2.msra.mxu0 0.0
        %3640 = vmatprep.subr.mxu0 0.0
        %3641 = vmatpush2.msra.mxu0 0.0
        %3642 = vmatprep.subr.mxu0 0.0
        %3643 = vmatpush2.msra.mxu0 0.0
        %3644 = vmatprep.subr.mxu0 0.0
        %3645 = vmatpush2.msra.mxu0 0.0
        %3646 = vmatprep.subr.mxu0 0.0
        %3647 = vmatpush2.msra.mxu0 0.0
        %3648 = vmatprep.subr.mxu0 0.0
        %3649 = vmatpush2.msra.mxu0 0.0
        %3650 = vmatprep.subr.mxu0 0.0
        %3651 = vmatpush2.msra.mxu0 0.0
        %3652 = vmatprep.subr.mxu0 0.0
        %3653 = vmatpush2.msra.mxu0 0.0
        %3654 = vmatprep.subr.mxu0 0.0
        %3655 = vmatpush2.msra.mxu0 0.0
        %3656 = vmatprep.subr.mxu0 0.0
        %3657 = vmatpush2.msra.mxu0 0.0
        %3658 = vmatprep.subr.mxu0 0.0
        %3659 = vmatpush2.msra.mxu0 0.0
        %3660 = vmatprep.subr.mxu0 0.0
        %3661 = vmatpush2.msra.mxu0 0.0
        %3662 = vmatprep.subr.mxu0 0.0
        %3663 = vmatpush2.msra.mxu0 0.0
        %3664 = vmatprep.subr.mxu0 0.0
        %3665 = vmatpush2.msra.mxu0 0.0
        %3666 = vmatprep.mubr.f32.mxu0 0.0
        %3667 = vmatmul.mubr.f32.gmra.mxu0 %v3600
        %v3668 = vpop.f32.mrf.mxu0
        %v3669 = vadd.f32 %v3514, %v3668
        %v3670 = vpop.f32.mrf.mxu0
        %3671 = vdwg.mxu0
        %v3672 = vmax.f32 %v3669, 0.0
        %v3673 = vld [vmem:[%s12 + $0x40] sm:$0xff]
        %v3674 = vld [vmem:[%s12 + $0x48] sm:$0xff]
        %v3675 = vld [vmem:[%s12 + $0x50] sm:$0xff]
        %v3676 = vld [vmem:[%s12 + $0x58] sm:$0xff]
        %v3677 = vld [vmem:[%s12 + $0x60] sm:$0xff]
        %v3678 = vld [vmem:[%s12 + $0x68] sm:$0xff]
        %v3679 = vld [vmem:[%s12 + $0x70] sm:$0xff]
        %v3680 = vld [vmem:[%s12 + $0x78] sm:$0xff]
        %v3682 = vsel %vm566, %v3672, 0
        %3684 = vmatprep.subr.mxu0 0.0
        %3685 = vmatpush1.msra.mxu0 0.0
        %3686 = vmatprep.subr.mxu0 0.0
        %3687 = vmatpush1.msra.mxu0 0.0
        %3688 = vmatprep.subr.mxu0 0.0
        %3689 = vmatpush1.msra.mxu0 0.0
        %3690 = vmatprep.subr.mxu0 0.0
        %3691 = vmatpush1.msra.mxu0 0.0
        %3692 = vmatprep.subr.mxu0 0.0
        %3693 = vmatpush1.msra.mxu0 0.0
        %3694 = vmatprep.subr.mxu0 0.0
        %3695 = vmatpush1.msra.mxu0 0.0
        %3696 = vmatprep.subr.mxu0 0.0
        %3697 = vmatpush1.msra.mxu0 0.0
        %3698 = vmatprep.subr.mxu0 0.0
        %3699 = vmatpush1.msra.mxu0 0.0
        %3700 = vmatprep.subr.mxu0 0.0
        %3701 = vmatpush1.msra.mxu0 %v3680
        %3702 = vmatprep.subr.mxu0 0.0
        %3703 = vmatpush1.msra.mxu0 %v3679
        %3704 = vmatprep.subr.mxu0 0.0
        %3705 = vmatpush1.msra.mxu0 %v3678
        %3706 = vmatprep.subr.mxu0 0.0
        %3707 = vmatpush1.msra.mxu0 %v3677
        %3708 = vmatprep.subr.mxu0 0.0
        %3709 = vmatpush1.msra.mxu0 %v3676
        %3710 = vmatprep.subr.mxu0 0.0
        %3711 = vmatpush1.msra.mxu0 %v3675
        %3712 = vmatprep.subr.mxu0 0.0
        %3713 = vmatpush1.msra.mxu0 %v3674
        %3714 = vmatprep.subr.mxu0 0.0
        %3715 = vmatpush1.msra.mxu0 %v3673
        %3716 = vmatprep.subr.mxu0 0.0
        %3717 = vmatpush2.msra.mxu0 0.0
        %3718 = vmatprep.subr.mxu0 0.0
        %3719 = vmatpush2.msra.mxu0 0.0
        %3720 = vmatprep.subr.mxu0 0.0
        %3721 = vmatpush2.msra.mxu0 0.0
        %3722 = vmatprep.subr.mxu0 0.0
        %3723 = vmatpush2.msra.mxu0 0.0
        %3724 = vmatprep.subr.mxu0 0.0
        %3725 = vmatpush2.msra.mxu0 0.0
        %3726 = vmatprep.subr.mxu0 0.0
        %3727 = vmatpush2.msra.mxu0 0.0
        %3728 = vmatprep.subr.mxu0 0.0
        %3729 = vmatpush2.msra.mxu0 0.0
        %3730 = vmatprep.subr.mxu0 0.0
        %3731 = vmatpush2.msra.mxu0 0.0
        %3732 = vmatprep.subr.mxu0 0.0
        %3733 = vmatpush2.msra.mxu0 0.0
        %3734 = vmatprep.subr.mxu0 0.0
        %3735 = vmatpush2.msra.mxu0 0.0
        %3736 = vmatprep.subr.mxu0 0.0
        %3737 = vmatpush2.msra.mxu0 0.0
        %3738 = vmatprep.subr.mxu0 0.0
        %3739 = vmatpush2.msra.mxu0 0.0
        %3740 = vmatprep.subr.mxu0 0.0
        %3741 = vmatpush2.msra.mxu0 0.0
        %3742 = vmatprep.subr.mxu0 0.0
        %3743 = vmatpush2.msra.mxu0 0.0
        %3744 = vmatprep.subr.mxu0 0.0
        %3745 = vmatpush2.msra.mxu0 0.0
        %3746 = vmatprep.subr.mxu0 0.0
        %3747 = vmatpush2.msra.mxu0 0.0
        %3748 = vmatprep.mubr.f32.mxu0 0.0
        %3749 = vmatmul.mubr.f32.gmra.mxu0 %v3682
        %v3750 = vpop.f32.mrf.mxu0
        %v3751 = vadd.f32 0.0, %v3750
        %v3752 = vpop.f32.mrf.mxu0
        %3753 = vdwg.mxu0
        %v3755 = vsel %vm566, %v3589, 0
        %3757 = vmatprep.subr.mxu0 0.0
        %3758 = vmatpush1.msra.mxu0 0.0
        %3759 = vmatprep.subr.mxu0 0.0
        %3760 = vmatpush1.msra.mxu0 0.0
        %3761 = vmatprep.subr.mxu0 0.0
        %3762 = vmatpush1.msra.mxu0 0.0
        %3763 = vmatprep.subr.mxu0 0.0
        %3764 = vmatpush1.msra.mxu0 0.0
        %3765 = vmatprep.subr.mxu0 0.0
        %3766 = vmatpush1.msra.mxu0 0.0
        %3767 = vmatprep.subr.mxu0 0.0
        %3768 = vmatpush1.msra.mxu0 0.0
        %3769 = vmatprep.subr.mxu0 0.0
        %3770 = vmatpush1.msra.mxu0 0.0
        %3771 = vmatprep.subr.mxu0 0.0
        %3772 = vmatpush1.msra.mxu0 0.0
        %3773 = vmatprep.subr.mxu0 0.0
        %3774 = vmatpush1.msra.mxu0 %v3597
        %3775 = vmatprep.subr.mxu0 0.0
        %3776 = vmatpush1.msra.mxu0 %v3596
        %3777 = vmatprep.subr.mxu0 0.0
        %3778 = vmatpush1.msra.mxu0 %v3595
        %3779 = vmatprep.subr.mxu0 0.0
        %3780 = vmatpush1.msra.mxu0 %v3594
        %3781 = vmatprep.subr.mxu0 0.0
        %3782 = vmatpush1.msra.mxu0 %v3593
        %3783 = vmatprep.subr.mxu0 0.0
        %3784 = vmatpush1.msra.mxu0 %v3592
        %3785 = vmatprep.subr.mxu0 0.0
        %3786 = vmatpush1.msra.mxu0 %v3591
        %3787 = vmatprep.subr.mxu0 0.0
        %3788 = vmatpush1.msra.mxu0 %v3590
        %3789 = vmatprep.subr.mxu0 0.0
        %3790 = vmatpush2.msra.mxu0 0.0
        %3791 = vmatprep.subr.mxu0 0.0
        %3792 = vmatpush2.msra.mxu0 0.0
        %3793 = vmatprep.subr.mxu0 0.0
        %3794 = vmatpush2.msra.mxu0 0.0
        %3795 = vmatprep.subr.mxu0 0.0
        %3796 = vmatpush2.msra.mxu0 0.0
        %3797 = vmatprep.subr.mxu0 0.0
        %3798 = vmatpush2.msra.mxu0 0.0
        %3799 = vmatprep.subr.mxu0 0.0
        %3800 = vmatpush2.msra.mxu0 0.0
        %3801 = vmatprep.subr.mxu0 0.0
        %3802 = vmatpush2.msra.mxu0 0.0
        %3803 = vmatprep.subr.mxu0 0.0
        %3804 = vmatpush2.msra.mxu0 0.0
        %3805 = vmatprep.subr.mxu0 0.0
        %3806 = vmatpush2.msra.mxu0 0.0
        %3807 = vmatprep.subr.mxu0 0.0
        %3808 = vmatpush2.msra.mxu0 0.0
        %3809 = vmatprep.subr.mxu0 0.0
        %3810 = vmatpush2.msra.mxu0 0.0
        %3811 = vmatprep.subr.mxu0 0.0
        %3812 = vmatpush2.msra.mxu0 0.0
        %3813 = vmatprep.subr.mxu0 0.0
        %3814 = vmatpush2.msra.mxu0 0.0
        %3815 = vmatprep.subr.mxu0 0.0
        %3816 = vmatpush2.msra.mxu0 0.0
        %3817 = vmatprep.subr.mxu0 0.0
        %3818 = vmatpush2.msra.mxu0 0.0
        %3819 = vmatprep.subr.mxu0 0.0
        %3820 = vmatpush2.msra.mxu0 0.0
        %3821 = vmatprep.mubr.f32.mxu0 0.0
        %3822 = vmatmul.mubr.f32.gmra.mxu0 %v3755
        %v3823 = vpop.f32.mrf.mxu0
        %v3824 = vadd.f32 %v3751, %v3823
        %v3825 = vpop.f32.mrf.mxu0
        %3826 = vdwg.mxu0
        %v3827 = vld [vmem:[%s1566] sm:$0xff]
        %v3829 = vsel %vm566, %v3827, 0
        %3831 = vmatprep.subr.mxu0 0.0
        %3832 = vmatpush1.msra.mxu0 0.0
        %3833 = vmatprep.subr.mxu0 0.0
        %3834 = vmatpush1.msra.mxu0 0.0
        %3835 = vmatprep.subr.mxu0 0.0
        %3836 = vmatpush1.msra.mxu0 0.0
        %3837 = vmatprep.subr.mxu0 0.0
        %3838 = vmatpush1.msra.mxu0 0.0
        %3839 = vmatprep.subr.mxu0 0.0
        %3840 = vmatpush1.msra.mxu0 0.0
        %3841 = vmatprep.subr.mxu0 0.0
        %3842 = vmatpush1.msra.mxu0 0.0
        %3843 = vmatprep.subr.mxu0 0.0
        %3844 = vmatpush1.msra.mxu0 0.0
        %3845 = vmatprep.subr.mxu0 0.0
        %3846 = vmatpush1.msra.mxu0 0.0
        %3847 = vmatprep.subr.mxu0 0.0
        %3848 = vmatpush1.msra.mxu0 %v3508
        %3849 = vmatprep.subr.mxu0 0.0
        %3850 = vmatpush1.msra.mxu0 %v3507
        %3851 = vmatprep.subr.mxu0 0.0
        %3852 = vmatpush1.msra.mxu0 %v3506
        %3853 = vmatprep.subr.mxu0 0.0
        %3854 = vmatpush1.msra.mxu0 %v3505
        %3855 = vmatprep.subr.mxu0 0.0
        %3856 = vmatpush1.msra.mxu0 %v3504
        %3857 = vmatprep.subr.mxu0 0.0
        %3858 = vmatpush1.msra.mxu0 %v3503
        %3859 = vmatprep.subr.mxu0 0.0
        %3860 = vmatpush1.msra.mxu0 %v3502
        %3861 = vmatprep.subr.mxu0 0.0
        %3862 = vmatpush1.msra.mxu0 %v3501
        %3863 = vmatprep.subr.mxu0 0.0
        %3864 = vmatpush2.msra.mxu0 0.0
        %3865 = vmatprep.subr.mxu0 0.0
        %3866 = vmatpush2.msra.mxu0 0.0
        %3867 = vmatprep.subr.mxu0 0.0
        %3868 = vmatpush2.msra.mxu0 0.0
        %3869 = vmatprep.subr.mxu0 0.0
        %3870 = vmatpush2.msra.mxu0 0.0
        %3871 = vmatprep.subr.mxu0 0.0
        %3872 = vmatpush2.msra.mxu0 0.0
        %3873 = vmatprep.subr.mxu0 0.0
        %3874 = vmatpush2.msra.mxu0 0.0
        %3875 = vmatprep.subr.mxu0 0.0
        %3876 = vmatpush2.msra.mxu0 0.0
        %3877 = vmatprep.subr.mxu0 0.0
        %3878 = vmatpush2.msra.mxu0 0.0
        %3879 = vmatprep.subr.mxu0 0.0
        %3880 = vmatpush2.msra.mxu0 0.0
        %3881 = vmatprep.subr.mxu0 0.0
        %3882 = vmatpush2.msra.mxu0 0.0
        %3883 = vmatprep.subr.mxu0 0.0
        %3884 = vmatpush2.msra.mxu0 0.0
        %3885 = vmatprep.subr.mxu0 0.0
        %3886 = vmatpush2.msra.mxu0 0.0
        %3887 = vmatprep.subr.mxu0 0.0
        %3888 = vmatpush2.msra.mxu0 0.0
        %3889 = vmatprep.subr.mxu0 0.0
        %3890 = vmatpush2.msra.mxu0 0.0
        %3891 = vmatprep.subr.mxu0 0.0
        %3892 = vmatpush2.msra.mxu0 0.0
        %3893 = vmatprep.subr.mxu0 0.0
        %3894 = vmatpush2.msra.mxu0 0.0
        %3895 = vmatprep.mubr.f32.mxu0 0.0
        %3896 = vmatmul.mubr.f32.gmra.mxu0 %v3829
        %v3897 = vpop.f32.mrf.mxu0
        %v3898 = vadd.f32 %v3514, %v3897
        %v3899 = vpop.f32.mrf.mxu0
        %3900 = vdwg.mxu0
        %v3901 = vmax.f32 %v3898, 0.0
        %v3902 = vld [vmem:[%s12 + $0x80] sm:$0xff]
        %v3903 = vld [vmem:[%s12 + $0x88] sm:$0xff]
        %v3904 = vld [vmem:[%s12 + $0x90] sm:$0xff]
        %v3905 = vld [vmem:[%s12 + $0x98] sm:$0xff]
        %v3906 = vld [vmem:[%s12 + $0xa0] sm:$0xff]
        %v3907 = vld [vmem:[%s12 + $0xa8] sm:$0xff]
        %v3908 = vld [vmem:[%s12 + $0xb0] sm:$0xff]
        %v3909 = vld [vmem:[%s12 + $0xb8] sm:$0xff]
        %v3911 = vsel %vm566, %v3901, 0
        %3913 = vmatprep.subr.mxu0 0.0
        %3914 = vmatpush1.msra.mxu0 0.0
        %3915 = vmatprep.subr.mxu0 0.0
        %3916 = vmatpush1.msra.mxu0 0.0
        %3917 = vmatprep.subr.mxu0 0.0
        %3918 = vmatpush1.msra.mxu0 0.0
        %3919 = vmatprep.subr.mxu0 0.0
        %3920 = vmatpush1.msra.mxu0 0.0
        %3921 = vmatprep.subr.mxu0 0.0
        %3922 = vmatpush1.msra.mxu0 0.0
        %3923 = vmatprep.subr.mxu0 0.0
        %3924 = vmatpush1.msra.mxu0 0.0
        %3925 = vmatprep.subr.mxu0 0.0
        %3926 = vmatpush1.msra.mxu0 0.0
        %3927 = vmatprep.subr.mxu0 0.0
        %3928 = vmatpush1.msra.mxu0 0.0
        %3929 = vmatprep.subr.mxu0 0.0
        %3930 = vmatpush1.msra.mxu0 %v3909
        %3931 = vmatprep.subr.mxu0 0.0
        %3932 = vmatpush1.msra.mxu0 %v3908
        %3933 = vmatprep.subr.mxu0 0.0
        %3934 = vmatpush1.msra.mxu0 %v3907
        %3935 = vmatprep.subr.mxu0 0.0
        %3936 = vmatpush1.msra.mxu0 %v3906
        %3937 = vmatprep.subr.mxu0 0.0
        %3938 = vmatpush1.msra.mxu0 %v3905
        %3939 = vmatprep.subr.mxu0 0.0
        %3940 = vmatpush1.msra.mxu0 %v3904
        %3941 = vmatprep.subr.mxu0 0.0
        %3942 = vmatpush1.msra.mxu0 %v3903
        %3943 = vmatprep.subr.mxu0 0.0
        %3944 = vmatpush1.msra.mxu0 %v3902
        %3945 = vmatprep.subr.mxu0 0.0
        %3946 = vmatpush2.msra.mxu0 0.0
        %3947 = vmatprep.subr.mxu0 0.0
        %3948 = vmatpush2.msra.mxu0 0.0
        %3949 = vmatprep.subr.mxu0 0.0
        %3950 = vmatpush2.msra.mxu0 0.0
        %3951 = vmatprep.subr.mxu0 0.0
        %3952 = vmatpush2.msra.mxu0 0.0
        %3953 = vmatprep.subr.mxu0 0.0
        %3954 = vmatpush2.msra.mxu0 0.0
        %3955 = vmatprep.subr.mxu0 0.0
        %3956 = vmatpush2.msra.mxu0 0.0
        %3957 = vmatprep.subr.mxu0 0.0
        %3958 = vmatpush2.msra.mxu0 0.0
        %3959 = vmatprep.subr.mxu0 0.0
        %3960 = vmatpush2.msra.mxu0 0.0
        %3961 = vmatprep.subr.mxu0 0.0
        %3962 = vmatpush2.msra.mxu0 0.0
        %3963 = vmatprep.subr.mxu0 0.0
        %3964 = vmatpush2.msra.mxu0 0.0
        %3965 = vmatprep.subr.mxu0 0.0
        %3966 = vmatpush2.msra.mxu0 0.0
        %3967 = vmatprep.subr.mxu0 0.0
        %3968 = vmatpush2.msra.mxu0 0.0
        %3969 = vmatprep.subr.mxu0 0.0
        %3970 = vmatpush2.msra.mxu0 0.0
        %3971 = vmatprep.subr.mxu0 0.0
        %3972 = vmatpush2.msra.mxu0 0.0
        %3973 = vmatprep.subr.mxu0 0.0
        %3974 = vmatpush2.msra.mxu0 0.0
        %3975 = vmatprep.subr.mxu0 0.0
        %3976 = vmatpush2.msra.mxu0 0.0
        %3977 = vmatprep.mubr.f32.mxu0 0.0
        %3978 = vmatmul.mubr.f32.gmra.mxu0 %v3911
        %v3979 = vpop.f32.mrf.mxu0
        %v3980 = vadd.f32 0.0, %v3979
        %v3981 = vpop.f32.mrf.mxu0
        %3982 = vdwg.mxu0
        %v3983 = vadd.f32 %v3824, %v3980
        %v3984 = vld [vmem:[%s1842] sm:$0xff]
        %v3986 = vsel %vm566, %v3984, 0
        %3988 = vmatprep.subr.mxu0 0.0
        %3989 = vmatpush1.msra.mxu0 0.0
        %3990 = vmatprep.subr.mxu0 0.0
        %3991 = vmatpush1.msra.mxu0 0.0
        %3992 = vmatprep.subr.mxu0 0.0
        %3993 = vmatpush1.msra.mxu0 0.0
        %3994 = vmatprep.subr.mxu0 0.0
        %3995 = vmatpush1.msra.mxu0 0.0
        %3996 = vmatprep.subr.mxu0 0.0
        %3997 = vmatpush1.msra.mxu0 0.0
        %3998 = vmatprep.subr.mxu0 0.0
        %3999 = vmatpush1.msra.mxu0 0.0
        %4000 = vmatprep.subr.mxu0 0.0
        %4001 = vmatpush1.msra.mxu0 0.0
        %4002 = vmatprep.subr.mxu0 0.0
        %4003 = vmatpush1.msra.mxu0 0.0
        %4004 = vmatprep.subr.mxu0 0.0
        %4005 = vmatpush1.msra.mxu0 %v3508
        %4006 = vmatprep.subr.mxu0 0.0
        %4007 = vmatpush1.msra.mxu0 %v3507
        %4008 = vmatprep.subr.mxu0 0.0
        %4009 = vmatpush1.msra.mxu0 %v3506
        %4010 = vmatprep.subr.mxu0 0.0
        %4011 = vmatpush1.msra.mxu0 %v3505
        %4012 = vmatprep.subr.mxu0 0.0
        %4013 = vmatpush1.msra.mxu0 %v3504
        %4014 = vmatprep.subr.mxu0 0.0
        %4015 = vmatpush1.msra.mxu0 %v3503
        %4016 = vmatprep.subr.mxu0 0.0
        %4017 = vmatpush1.msra.mxu0 %v3502
        %4018 = vmatprep.subr.mxu0 0.0
        %4019 = vmatpush1.msra.mxu0 %v3501
        %4020 = vmatprep.subr.mxu0 0.0
        %4021 = vmatpush2.msra.mxu0 0.0
        %4022 = vmatprep.subr.mxu0 0.0
        %4023 = vmatpush2.msra.mxu0 0.0
        %4024 = vmatprep.subr.mxu0 0.0
        %4025 = vmatpush2.msra.mxu0 0.0
        %4026 = vmatprep.subr.mxu0 0.0
        %4027 = vmatpush2.msra.mxu0 0.0
        %4028 = vmatprep.subr.mxu0 0.0
        %4029 = vmatpush2.msra.mxu0 0.0
        %4030 = vmatprep.subr.mxu0 0.0
        %4031 = vmatpush2.msra.mxu0 0.0
        %4032 = vmatprep.subr.mxu0 0.0
        %4033 = vmatpush2.msra.mxu0 0.0
        %4034 = vmatprep.subr.mxu0 0.0
        %4035 = vmatpush2.msra.mxu0 0.0
        %4036 = vmatprep.subr.mxu0 0.0
        %4037 = vmatpush2.msra.mxu0 0.0
        %4038 = vmatprep.subr.mxu0 0.0
        %4039 = vmatpush2.msra.mxu0 0.0
        %4040 = vmatprep.subr.mxu0 0.0
        %4041 = vmatpush2.msra.mxu0 0.0
        %4042 = vmatprep.subr.mxu0 0.0
        %4043 = vmatpush2.msra.mxu0 0.0
        %4044 = vmatprep.subr.mxu0 0.0
        %4045 = vmatpush2.msra.mxu0 0.0
        %4046 = vmatprep.subr.mxu0 0.0
        %4047 = vmatpush2.msra.mxu0 0.0
        %4048 = vmatprep.subr.mxu0 0.0
        %4049 = vmatpush2.msra.mxu0 0.0
        %4050 = vmatprep.subr.mxu0 0.0
        %4051 = vmatpush2.msra.mxu0 0.0
        %4052 = vmatprep.mubr.f32.mxu0 0.0
        %4053 = vmatmul.mubr.f32.gmra.mxu0 %v3986
        %v4054 = vpop.f32.mrf.mxu0
        %v4055 = vadd.f32 %v3514, %v4054
        %v4056 = vpop.f32.mrf.mxu0
        %4057 = vdwg.mxu0
        %v4058 = vmax.f32 %v4055, 0.0
        %v4059 = vld [vmem:[%s12 + $0xc0] sm:$0xff]
        %v4060 = vld [vmem:[%s12 + $0xc8] sm:$0xff]
        %v4061 = vld [vmem:[%s12 + $0xd0] sm:$0xff]
        %v4062 = vld [vmem:[%s12 + $0xd8] sm:$0xff]
        %v4063 = vld [vmem:[%s12 + $0xe0] sm:$0xff]
        %v4064 = vld [vmem:[%s12 + $0xe8] sm:$0xff]
        %v4065 = vld [vmem:[%s12 + $0xf0] sm:$0xff]
        %v4066 = vld [vmem:[%s12 + $0xf8] sm:$0xff]
        %v4068 = vsel %vm566, %v4058, 0
        %4070 = vmatprep.subr.mxu0 0.0
        %4071 = vmatpush1.msra.mxu0 0.0
        %4072 = vmatprep.subr.mxu0 0.0
        %4073 = vmatpush1.msra.mxu0 0.0
        %4074 = vmatprep.subr.mxu0 0.0
        %4075 = vmatpush1.msra.mxu0 0.0
        %4076 = vmatprep.subr.mxu0 0.0
        %4077 = vmatpush1.msra.mxu0 0.0
        %4078 = vmatprep.subr.mxu0 0.0
        %4079 = vmatpush1.msra.mxu0 0.0
        %4080 = vmatprep.subr.mxu0 0.0
        %4081 = vmatpush1.msra.mxu0 0.0
        %4082 = vmatprep.subr.mxu0 0.0
        %4083 = vmatpush1.msra.mxu0 0.0
        %4084 = vmatprep.subr.mxu0 0.0
        %4085 = vmatpush1.msra.mxu0 0.0
        %4086 = vmatprep.subr.mxu0 0.0
        %4087 = vmatpush1.msra.mxu0 %v4066
        %4088 = vmatprep.subr.mxu0 0.0
        %4089 = vmatpush1.msra.mxu0 %v4065
        %4090 = vmatprep.subr.mxu0 0.0
        %4091 = vmatpush1.msra.mxu0 %v4064
        %4092 = vmatprep.subr.mxu0 0.0
        %4093 = vmatpush1.msra.mxu0 %v4063
        %4094 = vmatprep.subr.mxu0 0.0
        %4095 = vmatpush1.msra.mxu0 %v4062
        %4096 = vmatprep.subr.mxu0 0.0
        %4097 = vmatpush1.msra.mxu0 %v4061
        %4098 = vmatprep.subr.mxu0 0.0
        %4099 = vmatpush1.msra.mxu0 %v4060
        %4100 = vmatprep.subr.mxu0 0.0
        %4101 = vmatpush1.msra.mxu0 %v4059
        %4102 = vmatprep.subr.mxu0 0.0
        %4103 = vmatpush2.msra.mxu0 0.0
        %4104 = vmatprep.subr.mxu0 0.0
        %4105 = vmatpush2.msra.mxu0 0.0
        %4106 = vmatprep.subr.mxu0 0.0
        %4107 = vmatpush2.msra.mxu0 0.0
        %4108 = vmatprep.subr.mxu0 0.0
        %4109 = vmatpush2.msra.mxu0 0.0
        %4110 = vmatprep.subr.mxu0 0.0
        %4111 = vmatpush2.msra.mxu0 0.0
        %4112 = vmatprep.subr.mxu0 0.0
        %4113 = vmatpush2.msra.mxu0 0.0
        %4114 = vmatprep.subr.mxu0 0.0
        %4115 = vmatpush2.msra.mxu0 0.0
        %4116 = vmatprep.subr.mxu0 0.0
        %4117 = vmatpush2.msra.mxu0 0.0
        %4118 = vmatprep.subr.mxu0 0.0
        %4119 = vmatpush2.msra.mxu0 0.0
        %4120 = vmatprep.subr.mxu0 0.0
        %4121 = vmatpush2.msra.mxu0 0.0
        %4122 = vmatprep.subr.mxu0 0.0
        %4123 = vmatpush2.msra.mxu0 0.0
        %4124 = vmatprep.subr.mxu0 0.0
        %4125 = vmatpush2.msra.mxu0 0.0
        %4126 = vmatprep.subr.mxu0 0.0
        %4127 = vmatpush2.msra.mxu0 0.0
        %4128 = vmatprep.subr.mxu0 0.0
        %4129 = vmatpush2.msra.mxu0 0.0
        %4130 = vmatprep.subr.mxu0 0.0
        %4131 = vmatpush2.msra.mxu0 0.0
        %4132 = vmatprep.subr.mxu0 0.0
        %4133 = vmatpush2.msra.mxu0 0.0
        %4134 = vmatprep.mubr.f32.mxu0 0.0
        %4135 = vmatmul.mubr.f32.gmra.mxu0 %v4068
        %v4136 = vpop.f32.mrf.mxu0
        %v4137 = vadd.f32 0.0, %v4136
        %v4138 = vpop.f32.mrf.mxu0
        %4139 = vdwg.mxu0
        %v4140 = vadd.f32 %v3983, %v4137
        %v4141 = vld [vmem:[%s2118] sm:$0xff]
        %v4143 = vsel %vm566, %v4141, 0
        %4145 = vmatprep.subr.mxu0 0.0
        %4146 = vmatpush1.msra.mxu0 0.0
        %4147 = vmatprep.subr.mxu0 0.0
        %4148 = vmatpush1.msra.mxu0 0.0
        %4149 = vmatprep.subr.mxu0 0.0
        %4150 = vmatpush1.msra.mxu0 0.0
        %4151 = vmatprep.subr.mxu0 0.0
        %4152 = vmatpush1.msra.mxu0 0.0
        %4153 = vmatprep.subr.mxu0 0.0
        %4154 = vmatpush1.msra.mxu0 0.0
        %4155 = vmatprep.subr.mxu0 0.0
        %4156 = vmatpush1.msra.mxu0 0.0
        %4157 = vmatprep.subr.mxu0 0.0
        %4158 = vmatpush1.msra.mxu0 0.0
        %4159 = vmatprep.subr.mxu0 0.0
        %4160 = vmatpush1.msra.mxu0 0.0
        %4161 = vmatprep.subr.mxu0 0.0
        %4162 = vmatpush1.msra.mxu0 %v3508
        %4163 = vmatprep.subr.mxu0 0.0
        %4164 = vmatpush1.msra.mxu0 %v3507
        %4165 = vmatprep.subr.mxu0 0.0
        %4166 = vmatpush1.msra.mxu0 %v3506
        %4167 = vmatprep.subr.mxu0 0.0
        %4168 = vmatpush1.msra.mxu0 %v3505
        %4169 = vmatprep.subr.mxu0 0.0
        %4170 = vmatpush1.msra.mxu0 %v3504
        %4171 = vmatprep.subr.mxu0 0.0
        %4172 = vmatpush1.msra.mxu0 %v3503
        %4173 = vmatprep.subr.mxu0 0.0
        %4174 = vmatpush1.msra.mxu0 %v3502
        %4175 = vmatprep.subr.mxu0 0.0
        %4176 = vmatpush1.msra.mxu0 %v3501
        %4177 = vmatprep.subr.mxu0 0.0
        %4178 = vmatpush2.msra.mxu0 0.0
        %4179 = vmatprep.subr.mxu0 0.0
        %4180 = vmatpush2.msra.mxu0 0.0
        %4181 = vmatprep.subr.mxu0 0.0
        %4182 = vmatpush2.msra.mxu0 0.0
        %4183 = vmatprep.subr.mxu0 0.0
        %4184 = vmatpush2.msra.mxu0 0.0
        %4185 = vmatprep.subr.mxu0 0.0
        %4186 = vmatpush2.msra.mxu0 0.0
        %4187 = vmatprep.subr.mxu0 0.0
        %4188 = vmatpush2.msra.mxu0 0.0
        %4189 = vmatprep.subr.mxu0 0.0
        %4190 = vmatpush2.msra.mxu0 0.0
        %4191 = vmatprep.subr.mxu0 0.0
        %4192 = vmatpush2.msra.mxu0 0.0
        %4193 = vmatprep.subr.mxu0 0.0
        %4194 = vmatpush2.msra.mxu0 0.0
        %4195 = vmatprep.subr.mxu0 0.0
        %4196 = vmatpush2.msra.mxu0 0.0
        %4197 = vmatprep.subr.mxu0 0.0
        %4198 = vmatpush2.msra.mxu0 0.0
        %4199 = vmatprep.subr.mxu0 0.0
        %4200 = vmatpush2.msra.mxu0 0.0
        %4201 = vmatprep.subr.mxu0 0.0
        %4202 = vmatpush2.msra.mxu0 0.0
        %4203 = vmatprep.subr.mxu0 0.0
        %4204 = vmatpush2.msra.mxu0 0.0
        %4205 = vmatprep.subr.mxu0 0.0
        %4206 = vmatpush2.msra.mxu0 0.0
        %4207 = vmatprep.subr.mxu0 0.0
        %4208 = vmatpush2.msra.mxu0 0.0
        %4209 = vmatprep.mubr.f32.mxu0 0.0
        %4210 = vmatmul.mubr.f32.gmra.mxu0 %v4143
        %v4211 = vpop.f32.mrf.mxu0
        %v4212 = vadd.f32 %v3514, %v4211
        %v4213 = vpop.f32.mrf.mxu0
        %4214 = vdwg.mxu0
        %v4215 = vmax.f32 %v4212, 0.0
        %v4216 = vld [vmem:[%s12 + $0x100] sm:$0xff]
        %v4217 = vld [vmem:[%s12 + $0x108] sm:$0xff]
        %v4218 = vld [vmem:[%s12 + $0x110] sm:$0xff]
        %v4219 = vld [vmem:[%s12 + $0x118] sm:$0xff]
        %v4220 = vld [vmem:[%s12 + $0x120] sm:$0xff]
        %v4221 = vld [vmem:[%s12 + $0x128] sm:$0xff]
        %v4222 = vld [vmem:[%s12 + $0x130] sm:$0xff]
        %v4223 = vld [vmem:[%s12 + $0x138] sm:$0xff]
        %v4225 = vsel %vm566, %v4215, 0
        %4227 = vmatprep.subr.mxu0 0.0
        %4228 = vmatpush1.msra.mxu0 0.0
        %4229 = vmatprep.subr.mxu0 0.0
        %4230 = vmatpush1.msra.mxu0 0.0
        %4231 = vmatprep.subr.mxu0 0.0
        %4232 = vmatpush1.msra.mxu0 0.0
        %4233 = vmatprep.subr.mxu0 0.0
        %4234 = vmatpush1.msra.mxu0 0.0
        %4235 = vmatprep.subr.mxu0 0.0
        %4236 = vmatpush1.msra.mxu0 0.0
        %4237 = vmatprep.subr.mxu0 0.0
        %4238 = vmatpush1.msra.mxu0 0.0
        %4239 = vmatprep.subr.mxu0 0.0
        %4240 = vmatpush1.msra.mxu0 0.0
        %4241 = vmatprep.subr.mxu0 0.0
        %4242 = vmatpush1.msra.mxu0 0.0
        %4243 = vmatprep.subr.mxu0 0.0
        %4244 = vmatpush1.msra.mxu0 %v4223
        %4245 = vmatprep.subr.mxu0 0.0
        %4246 = vmatpush1.msra.mxu0 %v4222
        %4247 = vmatprep.subr.mxu0 0.0
        %4248 = vmatpush1.msra.mxu0 %v4221
        %4249 = vmatprep.subr.mxu0 0.0
        %4250 = vmatpush1.msra.mxu0 %v4220
        %4251 = vmatprep.subr.mxu0 0.0
        %4252 = vmatpush1.msra.mxu0 %v4219
        %4253 = vmatprep.subr.mxu0 0.0
        %4254 = vmatpush1.msra.mxu0 %v4218
        %4255 = vmatprep.subr.mxu0 0.0
        %4256 = vmatpush1.msra.mxu0 %v4217
        %4257 = vmatprep.subr.mxu0 0.0
        %4258 = vmatpush1.msra.mxu0 %v4216
        %4259 = vmatprep.subr.mxu0 0.0
        %4260 = vmatpush2.msra.mxu0 0.0
        %4261 = vmatprep.subr.mxu0 0.0
        %4262 = vmatpush2.msra.mxu0 0.0
        %4263 = vmatprep.subr.mxu0 0.0
        %4264 = vmatpush2.msra.mxu0 0.0
        %4265 = vmatprep.subr.mxu0 0.0
        %4266 = vmatpush2.msra.mxu0 0.0
        %4267 = vmatprep.subr.mxu0 0.0
        %4268 = vmatpush2.msra.mxu0 0.0
        %4269 = vmatprep.subr.mxu0 0.0
        %4270 = vmatpush2.msra.mxu0 0.0
        %4271 = vmatprep.subr.mxu0 0.0
        %4272 = vmatpush2.msra.mxu0 0.0
        %4273 = vmatprep.subr.mxu0 0.0
        %4274 = vmatpush2.msra.mxu0 0.0
        %4275 = vmatprep.subr.mxu0 0.0
        %4276 = vmatpush2.msra.mxu0 0.0
        %4277 = vmatprep.subr.mxu0 0.0
        %4278 = vmatpush2.msra.mxu0 0.0
        %4279 = vmatprep.subr.mxu0 0.0
        %4280 = vmatpush2.msra.mxu0 0.0
        %4281 = vmatprep.subr.mxu0 0.0
        %4282 = vmatpush2.msra.mxu0 0.0
        %4283 = vmatprep.subr.mxu0 0.0
        %4284 = vmatpush2.msra.mxu0 0.0
        %4285 = vmatprep.subr.mxu0 0.0
        %4286 = vmatpush2.msra.mxu0 0.0
        %4287 = vmatprep.subr.mxu0 0.0
        %4288 = vmatpush2.msra.mxu0 0.0
        %4289 = vmatprep.subr.mxu0 0.0
        %4290 = vmatpush2.msra.mxu0 0.0
        %4291 = vmatprep.mubr.f32.mxu0 0.0
        %4292 = vmatmul.mubr.f32.gmra.mxu0 %v4225
        %v4293 = vpop.f32.mrf.mxu0
        %v4294 = vadd.f32 0.0, %v4293
        %v4295 = vpop.f32.mrf.mxu0
        %4296 = vdwg.mxu0
        %v4297 = vadd.f32 %v4140, %v4294
        %v4298 = vld [vmem:[%s2394] sm:$0xff]
        %v4300 = vsel %vm566, %v4298, 0
        %4302 = vmatprep.subr.mxu0 0.0
        %4303 = vmatpush1.msra.mxu0 0.0
        %4304 = vmatprep.subr.mxu0 0.0
        %4305 = vmatpush1.msra.mxu0 0.0
        %4306 = vmatprep.subr.mxu0 0.0
        %4307 = vmatpush1.msra.mxu0 0.0
        %4308 = vmatprep.subr.mxu0 0.0
        %4309 = vmatpush1.msra.mxu0 0.0
        %4310 = vmatprep.subr.mxu0 0.0
        %4311 = vmatpush1.msra.mxu0 0.0
        %4312 = vmatprep.subr.mxu0 0.0
        %4313 = vmatpush1.msra.mxu0 0.0
        %4314 = vmatprep.subr.mxu0 0.0
        %4315 = vmatpush1.msra.mxu0 0.0
        %4316 = vmatprep.subr.mxu0 0.0
        %4317 = vmatpush1.msra.mxu0 0.0
        %4318 = vmatprep.subr.mxu0 0.0
        %4319 = vmatpush1.msra.mxu0 %v3508
        %4320 = vmatprep.subr.mxu0 0.0
        %4321 = vmatpush1.msra.mxu0 %v3507
        %4322 = vmatprep.subr.mxu0 0.0
        %4323 = vmatpush1.msra.mxu0 %v3506
        %4324 = vmatprep.subr.mxu0 0.0
        %4325 = vmatpush1.msra.mxu0 %v3505
        %4326 = vmatprep.subr.mxu0 0.0
        %4327 = vmatpush1.msra.mxu0 %v3504
        %4328 = vmatprep.subr.mxu0 0.0
        %4329 = vmatpush1.msra.mxu0 %v3503
        %4330 = vmatprep.subr.mxu0 0.0
        %4331 = vmatpush1.msra.mxu0 %v3502
        %4332 = vmatprep.subr.mxu0 0.0
        %4333 = vmatpush1.msra.mxu0 %v3501
        %4334 = vmatprep.subr.mxu0 0.0
        %4335 = vmatpush2.msra.mxu0 0.0
        %4336 = vmatprep.subr.mxu0 0.0
        %4337 = vmatpush2.msra.mxu0 0.0
        %4338 = vmatprep.subr.mxu0 0.0
        %4339 = vmatpush2.msra.mxu0 0.0
        %4340 = vmatprep.subr.mxu0 0.0
        %4341 = vmatpush2.msra.mxu0 0.0
        %4342 = vmatprep.subr.mxu0 0.0
        %4343 = vmatpush2.msra.mxu0 0.0
        %4344 = vmatprep.subr.mxu0 0.0
        %4345 = vmatpush2.msra.mxu0 0.0
        %4346 = vmatprep.subr.mxu0 0.0
        %4347 = vmatpush2.msra.mxu0 0.0
        %4348 = vmatprep.subr.mxu0 0.0
        %4349 = vmatpush2.msra.mxu0 0.0
        %4350 = vmatprep.subr.mxu0 0.0
        %4351 = vmatpush2.msra.mxu0 0.0
        %4352 = vmatprep.subr.mxu0 0.0
        %4353 = vmatpush2.msra.mxu0 0.0
        %4354 = vmatprep.subr.mxu0 0.0
        %4355 = vmatpush2.msra.mxu0 0.0
        %4356 = vmatprep.subr.mxu0 0.0
        %4357 = vmatpush2.msra.mxu0 0.0
        %4358 = vmatprep.subr.mxu0 0.0
        %4359 = vmatpush2.msra.mxu0 0.0
        %4360 = vmatprep.subr.mxu0 0.0
        %4361 = vmatpush2.msra.mxu0 0.0
        %4362 = vmatprep.subr.mxu0 0.0
        %4363 = vmatpush2.msra.mxu0 0.0
        %4364 = vmatprep.subr.mxu0 0.0
        %4365 = vmatpush2.msra.mxu0 0.0
        %4366 = vmatprep.mubr.f32.mxu0 0.0
        %4367 = vmatmul.mubr.f32.gmra.mxu0 %v4300
        %v4368 = vpop.f32.mrf.mxu0
        %v4369 = vadd.f32 %v3514, %v4368
        %v4370 = vpop.f32.mrf.mxu0
        %4371 = vdwg.mxu0
        %v4372 = vmax.f32 %v4369, 0.0
        %v4373 = vld [vmem:[%s12 + $0x140] sm:$0xff]
        %v4374 = vld [vmem:[%s12 + $0x148] sm:$0xff]
        %v4375 = vld [vmem:[%s12 + $0x150] sm:$0xff]
        %v4376 = vld [vmem:[%s12 + $0x158] sm:$0xff]
        %v4377 = vld [vmem:[%s12 + $0x160] sm:$0xff]
        %v4378 = vld [vmem:[%s12 + $0x168] sm:$0xff]
        %v4379 = vld [vmem:[%s12 + $0x170] sm:$0xff]
        %v4380 = vld [vmem:[%s12 + $0x178] sm:$0xff]
        %v4382 = vsel %vm566, %v4372, 0
        %4384 = vmatprep.subr.mxu0 0.0
        %4385 = vmatpush1.msra.mxu0 0.0
        %4386 = vmatprep.subr.mxu0 0.0
        %4387 = vmatpush1.msra.mxu0 0.0
        %4388 = vmatprep.subr.mxu0 0.0
        %4389 = vmatpush1.msra.mxu0 0.0
        %4390 = vmatprep.subr.mxu0 0.0
        %4391 = vmatpush1.msra.mxu0 0.0
        %4392 = vmatprep.subr.mxu0 0.0
        %4393 = vmatpush1.msra.mxu0 0.0
        %4394 = vmatprep.subr.mxu0 0.0
        %4395 = vmatpush1.msra.mxu0 0.0
        %4396 = vmatprep.subr.mxu0 0.0
        %4397 = vmatpush1.msra.mxu0 0.0
        %4398 = vmatprep.subr.mxu0 0.0
        %4399 = vmatpush1.msra.mxu0 0.0
        %4400 = vmatprep.subr.mxu0 0.0
        %4401 = vmatpush1.msra.mxu0 %v4380
        %4402 = vmatprep.subr.mxu0 0.0
        %4403 = vmatpush1.msra.mxu0 %v4379
        %4404 = vmatprep.subr.mxu0 0.0
        %4405 = vmatpush1.msra.mxu0 %v4378
        %4406 = vmatprep.subr.mxu0 0.0
        %4407 = vmatpush1.msra.mxu0 %v4377
        %4408 = vmatprep.subr.mxu0 0.0
        %4409 = vmatpush1.msra.mxu0 %v4376
        %4410 = vmatprep.subr.mxu0 0.0
        %4411 = vmatpush1.msra.mxu0 %v4375
        %4412 = vmatprep.subr.mxu0 0.0
        %4413 = vmatpush1.msra.mxu0 %v4374
        %4414 = vmatprep.subr.mxu0 0.0
        %4415 = vmatpush1.msra.mxu0 %v4373
        %4416 = vmatprep.subr.mxu0 0.0
        %4417 = vmatpush2.msra.mxu0 0.0
        %4418 = vmatprep.subr.mxu0 0.0
        %4419 = vmatpush2.msra.mxu0 0.0
        %4420 = vmatprep.subr.mxu0 0.0
        %4421 = vmatpush2.msra.mxu0 0.0
        %4422 = vmatprep.subr.mxu0 0.0
        %4423 = vmatpush2.msra.mxu0 0.0
        %4424 = vmatprep.subr.mxu0 0.0
        %4425 = vmatpush2.msra.mxu0 0.0
        %4426 = vmatprep.subr.mxu0 0.0
        %4427 = vmatpush2.msra.mxu0 0.0
        %4428 = vmatprep.subr.mxu0 0.0
        %4429 = vmatpush2.msra.mxu0 0.0
        %4430 = vmatprep.subr.mxu0 0.0
        %4431 = vmatpush2.msra.mxu0 0.0
        %4432 = vmatprep.subr.mxu0 0.0
        %4433 = vmatpush2.msra.mxu0 0.0
        %4434 = vmatprep.subr.mxu0 0.0
        %4435 = vmatpush2.msra.mxu0 0.0
        %4436 = vmatprep.subr.mxu0 0.0
        %4437 = vmatpush2.msra.mxu0 0.0
        %4438 = vmatprep.subr.mxu0 0.0
        %4439 = vmatpush2.msra.mxu0 0.0
        %4440 = vmatprep.subr.mxu0 0.0
        %4441 = vmatpush2.msra.mxu0 0.0
        %4442 = vmatprep.subr.mxu0 0.0
        %4443 = vmatpush2.msra.mxu0 0.0
        %4444 = vmatprep.subr.mxu0 0.0
        %4445 = vmatpush2.msra.mxu0 0.0
        %4446 = vmatprep.subr.mxu0 0.0
        %4447 = vmatpush2.msra.mxu0 0.0
        %4448 = vmatprep.mubr.f32.mxu0 0.0
        %4449 = vmatmul.mubr.f32.gmra.mxu0 %v4382
        %v4450 = vpop.f32.mrf.mxu0
        %v4451 = vadd.f32 0.0, %v4450
        %v4452 = vpop.f32.mrf.mxu0
        %4453 = vdwg.mxu0
        %v4454 = vadd.f32 %v4297, %v4451
        %v4455 = vld [vmem:[%s2670] sm:$0xff]
        %v4457 = vsel %vm566, %v4455, 0
        %4459 = vmatprep.subr.mxu0 0.0
        %4460 = vmatpush1.msra.mxu0 0.0
        %4461 = vmatprep.subr.mxu0 0.0
        %4462 = vmatpush1.msra.mxu0 0.0
        %4463 = vmatprep.subr.mxu0 0.0
        %4464 = vmatpush1.msra.mxu0 0.0
        %4465 = vmatprep.subr.mxu0 0.0
        %4466 = vmatpush1.msra.mxu0 0.0
        %4467 = vmatprep.subr.mxu0 0.0
        %4468 = vmatpush1.msra.mxu0 0.0
        %4469 = vmatprep.subr.mxu0 0.0
        %4470 = vmatpush1.msra.mxu0 0.0
        %4471 = vmatprep.subr.mxu0 0.0
        %4472 = vmatpush1.msra.mxu0 0.0
        %4473 = vmatprep.subr.mxu0 0.0
        %4474 = vmatpush1.msra.mxu0 0.0
        %4475 = vmatprep.subr.mxu0 0.0
        %4476 = vmatpush1.msra.mxu0 %v3508
        %4477 = vmatprep.subr.mxu0 0.0
        %4478 = vmatpush1.msra.mxu0 %v3507
        %4479 = vmatprep.subr.mxu0 0.0
        %4480 = vmatpush1.msra.mxu0 %v3506
        %4481 = vmatprep.subr.mxu0 0.0
        %4482 = vmatpush1.msra.mxu0 %v3505
        %4483 = vmatprep.subr.mxu0 0.0
        %4484 = vmatpush1.msra.mxu0 %v3504
        %4485 = vmatprep.subr.mxu0 0.0
        %4486 = vmatpush1.msra.mxu0 %v3503
        %4487 = vmatprep.subr.mxu0 0.0
        %4488 = vmatpush1.msra.mxu0 %v3502
        %4489 = vmatprep.subr.mxu0 0.0
        %4490 = vmatpush1.msra.mxu0 %v3501
        %4491 = vmatprep.subr.mxu0 0.0
        %4492 = vmatpush2.msra.mxu0 0.0
        %4493 = vmatprep.subr.mxu0 0.0
        %4494 = vmatpush2.msra.mxu0 0.0
        %4495 = vmatprep.subr.mxu0 0.0
        %4496 = vmatpush2.msra.mxu0 0.0
        %4497 = vmatprep.subr.mxu0 0.0
        %4498 = vmatpush2.msra.mxu0 0.0
        %4499 = vmatprep.subr.mxu0 0.0
        %4500 = vmatpush2.msra.mxu0 0.0
        %4501 = vmatprep.subr.mxu0 0.0
        %4502 = vmatpush2.msra.mxu0 0.0
        %4503 = vmatprep.subr.mxu0 0.0
        %4504 = vmatpush2.msra.mxu0 0.0
        %4505 = vmatprep.subr.mxu0 0.0
        %4506 = vmatpush2.msra.mxu0 0.0
        %4507 = vmatprep.subr.mxu0 0.0
        %4508 = vmatpush2.msra.mxu0 0.0
        %4509 = vmatprep.subr.mxu0 0.0
        %4510 = vmatpush2.msra.mxu0 0.0
        %4511 = vmatprep.subr.mxu0 0.0
        %4512 = vmatpush2.msra.mxu0 0.0
        %4513 = vmatprep.subr.mxu0 0.0
        %4514 = vmatpush2.msra.mxu0 0.0
        %4515 = vmatprep.subr.mxu0 0.0
        %4516 = vmatpush2.msra.mxu0 0.0
        %4517 = vmatprep.subr.mxu0 0.0
        %4518 = vmatpush2.msra.mxu0 0.0
        %4519 = vmatprep.subr.mxu0 0.0
        %4520 = vmatpush2.msra.mxu0 0.0
        %4521 = vmatprep.subr.mxu0 0.0
        %4522 = vmatpush2.msra.mxu0 0.0
        %4523 = vmatprep.mubr.f32.mxu0 0.0
        %4524 = vmatmul.mubr.f32.gmra.mxu0 %v4457
        %v4525 = vpop.f32.mrf.mxu0
        %v4526 = vadd.f32 %v3514, %v4525
        %v4527 = vpop.f32.mrf.mxu0
        %4528 = vdwg.mxu0
        %v4529 = vmax.f32 %v4526, 0.0
        %v4530 = vld [vmem:[%s12 + $0x180] sm:$0xff]
        %v4531 = vld [vmem:[%s12 + $0x188] sm:$0xff]
        %v4532 = vld [vmem:[%s12 + $0x190] sm:$0xff]
        %v4533 = vld [vmem:[%s12 + $0x198] sm:$0xff]
        %v4534 = vld [vmem:[%s12 + $0x1a0] sm:$0xff]
        %v4535 = vld [vmem:[%s12 + $0x1a8] sm:$0xff]
        %v4536 = vld [vmem:[%s12 + $0x1b0] sm:$0xff]
        %v4537 = vld [vmem:[%s12 + $0x1b8] sm:$0xff]
        %v4539 = vsel %vm566, %v4529, 0
        %4541 = vmatprep.subr.mxu0 0.0
        %4542 = vmatpush1.msra.mxu0 0.0
        %4543 = vmatprep.subr.mxu0 0.0
        %4544 = vmatpush1.msra.mxu0 0.0
        %4545 = vmatprep.subr.mxu0 0.0
        %4546 = vmatpush1.msra.mxu0 0.0
        %4547 = vmatprep.subr.mxu0 0.0
        %4548 = vmatpush1.msra.mxu0 0.0
        %4549 = vmatprep.subr.mxu0 0.0
        %4550 = vmatpush1.msra.mxu0 0.0
        %4551 = vmatprep.subr.mxu0 0.0
        %4552 = vmatpush1.msra.mxu0 0.0
        %4553 = vmatprep.subr.mxu0 0.0
        %4554 = vmatpush1.msra.mxu0 0.0
        %4555 = vmatprep.subr.mxu0 0.0
        %4556 = vmatpush1.msra.mxu0 0.0
        %4557 = vmatprep.subr.mxu0 0.0
        %4558 = vmatpush1.msra.mxu0 %v4537
        %4559 = vmatprep.subr.mxu0 0.0
        %4560 = vmatpush1.msra.mxu0 %v4536
        %4561 = vmatprep.subr.mxu0 0.0
        %4562 = vmatpush1.msra.mxu0 %v4535
        %4563 = vmatprep.subr.mxu0 0.0
        %4564 = vmatpush1.msra.mxu0 %v4534
        %4565 = vmatprep.subr.mxu0 0.0
        %4566 = vmatpush1.msra.mxu0 %v4533
        %4567 = vmatprep.subr.mxu0 0.0
        %4568 = vmatpush1.msra.mxu0 %v4532
        %4569 = vmatprep.subr.mxu0 0.0
        %4570 = vmatpush1.msra.mxu0 %v4531
        %4571 = vmatprep.subr.mxu0 0.0
        %4572 = vmatpush1.msra.mxu0 %v4530
        %4573 = vmatprep.subr.mxu0 0.0
        %4574 = vmatpush2.msra.mxu0 0.0
        %4575 = vmatprep.subr.mxu0 0.0
        %4576 = vmatpush2.msra.mxu0 0.0
        %4577 = vmatprep.subr.mxu0 0.0
        %4578 = vmatpush2.msra.mxu0 0.0
        %4579 = vmatprep.subr.mxu0 0.0
        %4580 = vmatpush2.msra.mxu0 0.0
        %4581 = vmatprep.subr.mxu0 0.0
        %4582 = vmatpush2.msra.mxu0 0.0
        %4583 = vmatprep.subr.mxu0 0.0
        %4584 = vmatpush2.msra.mxu0 0.0
        %4585 = vmatprep.subr.mxu0 0.0
        %4586 = vmatpush2.msra.mxu0 0.0
        %4587 = vmatprep.subr.mxu0 0.0
        %4588 = vmatpush2.msra.mxu0 0.0
        %4589 = vmatprep.subr.mxu0 0.0
        %4590 = vmatpush2.msra.mxu0 0.0
        %4591 = vmatprep.subr.mxu0 0.0
        %4592 = vmatpush2.msra.mxu0 0.0
        %4593 = vmatprep.subr.mxu0 0.0
        %4594 = vmatpush2.msra.mxu0 0.0
        %4595 = vmatprep.subr.mxu0 0.0
        %4596 = vmatpush2.msra.mxu0 0.0
        %4597 = vmatprep.subr.mxu0 0.0
        %4598 = vmatpush2.msra.mxu0 0.0
        %4599 = vmatprep.subr.mxu0 0.0
        %4600 = vmatpush2.msra.mxu0 0.0
        %4601 = vmatprep.subr.mxu0 0.0
        %4602 = vmatpush2.msra.mxu0 0.0
        %4603 = vmatprep.subr.mxu0 0.0
        %4604 = vmatpush2.msra.mxu0 0.0
        %4605 = vmatprep.mubr.f32.mxu0 0.0
        %4606 = vmatmul.mubr.f32.gmra.mxu0 %v4539
        %v4607 = vpop.f32.mrf.mxu0
        %v4608 = vadd.f32 0.0, %v4607
        %v4609 = vpop.f32.mrf.mxu0
        %4610 = vdwg.mxu0
        %v4611 = vadd.f32 %v4454, %v4608
        %v4612 = vld [vmem:[%s2946] sm:$0xff]
        %v4614 = vsel %vm566, %v4612, 0
        %4616 = vmatprep.subr.mxu0 0.0
        %4617 = vmatpush1.msra.mxu0 0.0
        %4618 = vmatprep.subr.mxu0 0.0
        %4619 = vmatpush1.msra.mxu0 0.0
        %4620 = vmatprep.subr.mxu0 0.0
        %4621 = vmatpush1.msra.mxu0 0.0
        %4622 = vmatprep.subr.mxu0 0.0
        %4623 = vmatpush1.msra.mxu0 0.0
        %4624 = vmatprep.subr.mxu0 0.0
        %4625 = vmatpush1.msra.mxu0 0.0
        %4626 = vmatprep.subr.mxu0 0.0
        %4627 = vmatpush1.msra.mxu0 0.0
        %4628 = vmatprep.subr.mxu0 0.0
        %4629 = vmatpush1.msra.mxu0 0.0
        %4630 = vmatprep.subr.mxu0 0.0
        %4631 = vmatpush1.msra.mxu0 0.0
        %4632 = vmatprep.subr.mxu0 0.0
        %4633 = vmatpush1.msra.mxu0 %v3508
        %4634 = vmatprep.subr.mxu0 0.0
        %4635 = vmatpush1.msra.mxu0 %v3507
        %4636 = vmatprep.subr.mxu0 0.0
        %4637 = vmatpush1.msra.mxu0 %v3506
        %4638 = vmatprep.subr.mxu0 0.0
        %4639 = vmatpush1.msra.mxu0 %v3505
        %4640 = vmatprep.subr.mxu0 0.0
        %4641 = vmatpush1.msra.mxu0 %v3504
        %4642 = vmatprep.subr.mxu0 0.0
        %4643 = vmatpush1.msra.mxu0 %v3503
        %4644 = vmatprep.subr.mxu0 0.0
        %4645 = vmatpush1.msra.mxu0 %v3502
        %4646 = vmatprep.subr.mxu0 0.0
        %4647 = vmatpush1.msra.mxu0 %v3501
        %4648 = vmatprep.subr.mxu0 0.0
        %4649 = vmatpush2.msra.mxu0 0.0
        %4650 = vmatprep.subr.mxu0 0.0
        %4651 = vmatpush2.msra.mxu0 0.0
        %4652 = vmatprep.subr.mxu0 0.0
        %4653 = vmatpush2.msra.mxu0 0.0
        %4654 = vmatprep.subr.mxu0 0.0
        %4655 = vmatpush2.msra.mxu0 0.0
        %4656 = vmatprep.subr.mxu0 0.0
        %4657 = vmatpush2.msra.mxu0 0.0
        %4658 = vmatprep.subr.mxu0 0.0
        %4659 = vmatpush2.msra.mxu0 0.0
        %4660 = vmatprep.subr.mxu0 0.0
        %4661 = vmatpush2.msra.mxu0 0.0
        %4662 = vmatprep.subr.mxu0 0.0
        %4663 = vmatpush2.msra.mxu0 0.0
        %4664 = vmatprep.subr.mxu0 0.0
        %4665 = vmatpush2.msra.mxu0 0.0
        %4666 = vmatprep.subr.mxu0 0.0
        %4667 = vmatpush2.msra.mxu0 0.0
        %4668 = vmatprep.subr.mxu0 0.0
        %4669 = vmatpush2.msra.mxu0 0.0
        %4670 = vmatprep.subr.mxu0 0.0
        %4671 = vmatpush2.msra.mxu0 0.0
        %4672 = vmatprep.subr.mxu0 0.0
        %4673 = vmatpush2.msra.mxu0 0.0
        %4674 = vmatprep.subr.mxu0 0.0
        %4675 = vmatpush2.msra.mxu0 0.0
        %4676 = vmatprep.subr.mxu0 0.0
        %4677 = vmatpush2.msra.mxu0 0.0
        %4678 = vmatprep.subr.mxu0 0.0
        %4679 = vmatpush2.msra.mxu0 0.0
        %4680 = vmatprep.mubr.f32.mxu0 0.0
        %4681 = vmatmul.mubr.f32.gmra.mxu0 %v4614
        %v4682 = vpop.f32.mrf.mxu0
        %v4683 = vadd.f32 %v3514, %v4682
        %v4684 = vpop.f32.mrf.mxu0
        %4685 = vdwg.mxu0
        %v4686 = vmax.f32 %v4683, 0.0
        %v4687 = vld [vmem:[%s12 + $0x1c0] sm:$0xff]
        %v4688 = vld [vmem:[%s12 + $0x1c8] sm:$0xff]
        %v4689 = vld [vmem:[%s12 + $0x1d0] sm:$0xff]
        %v4690 = vld [vmem:[%s12 + $0x1d8] sm:$0xff]
        %v4691 = vld [vmem:[%s12 + $0x1e0] sm:$0xff]
        %v4692 = vld [vmem:[%s12 + $0x1e8] sm:$0xff]
        %v4693 = vld [vmem:[%s12 + $0x1f0] sm:$0xff]
        %v4694 = vld [vmem:[%s12 + $0x1f8] sm:$0xff]
        %v4696 = vsel %vm566, %v4686, 0
        %4698 = vmatprep.subr.mxu0 0.0
        %4699 = vmatpush1.msra.mxu0 0.0
        %4700 = vmatprep.subr.mxu0 0.0
        %4701 = vmatpush1.msra.mxu0 0.0
        %4702 = vmatprep.subr.mxu0 0.0
        %4703 = vmatpush1.msra.mxu0 0.0
        %4704 = vmatprep.subr.mxu0 0.0
        %4705 = vmatpush1.msra.mxu0 0.0
        %4706 = vmatprep.subr.mxu0 0.0
        %4707 = vmatpush1.msra.mxu0 0.0
        %4708 = vmatprep.subr.mxu0 0.0
        %4709 = vmatpush1.msra.mxu0 0.0
        %4710 = vmatprep.subr.mxu0 0.0
        %4711 = vmatpush1.msra.mxu0 0.0
        %4712 = vmatprep.subr.mxu0 0.0
        %4713 = vmatpush1.msra.mxu0 0.0
        %4714 = vmatprep.subr.mxu0 0.0
        %4715 = vmatpush1.msra.mxu0 %v4694
        %4716 = vmatprep.subr.mxu0 0.0
        %4717 = vmatpush1.msra.mxu0 %v4693
        %4718 = vmatprep.subr.mxu0 0.0
        %4719 = vmatpush1.msra.mxu0 %v4692
        %4720 = vmatprep.subr.mxu0 0.0
        %4721 = vmatpush1.msra.mxu0 %v4691
        %4722 = vmatprep.subr.mxu0 0.0
        %4723 = vmatpush1.msra.mxu0 %v4690
        %4724 = vmatprep.subr.mxu0 0.0
        %4725 = vmatpush1.msra.mxu0 %v4689
        %4726 = vmatprep.subr.mxu0 0.0
        %4727 = vmatpush1.msra.mxu0 %v4688
        %4728 = vmatprep.subr.mxu0 0.0
        %4729 = vmatpush1.msra.mxu0 %v4687
        %4730 = vmatprep.subr.mxu0 0.0
        %4731 = vmatpush2.msra.mxu0 0.0
        %4732 = vmatprep.subr.mxu0 0.0
        %4733 = vmatpush2.msra.mxu0 0.0
        %4734 = vmatprep.subr.mxu0 0.0
        %4735 = vmatpush2.msra.mxu0 0.0
        %4736 = vmatprep.subr.mxu0 0.0
        %4737 = vmatpush2.msra.mxu0 0.0
        %4738 = vmatprep.subr.mxu0 0.0
        %4739 = vmatpush2.msra.mxu0 0.0
        %4740 = vmatprep.subr.mxu0 0.0
        %4741 = vmatpush2.msra.mxu0 0.0
        %4742 = vmatprep.subr.mxu0 0.0
        %4743 = vmatpush2.msra.mxu0 0.0
        %4744 = vmatprep.subr.mxu0 0.0
        %4745 = vmatpush2.msra.mxu0 0.0
        %4746 = vmatprep.subr.mxu0 0.0
        %4747 = vmatpush2.msra.mxu0 0.0
        %4748 = vmatprep.subr.mxu0 0.0
        %4749 = vmatpush2.msra.mxu0 0.0
        %4750 = vmatprep.subr.mxu0 0.0
        %4751 = vmatpush2.msra.mxu0 0.0
        %4752 = vmatprep.subr.mxu0 0.0
        %4753 = vmatpush2.msra.mxu0 0.0
        %4754 = vmatprep.subr.mxu0 0.0
        %4755 = vmatpush2.msra.mxu0 0.0
        %4756 = vmatprep.subr.mxu0 0.0
        %4757 = vmatpush2.msra.mxu0 0.0
        %4758 = vmatprep.subr.mxu0 0.0
        %4759 = vmatpush2.msra.mxu0 0.0
        %4760 = vmatprep.subr.mxu0 0.0
        %4761 = vmatpush2.msra.mxu0 0.0
        %4762 = vmatprep.mubr.f32.mxu0 0.0
        %4763 = vmatmul.mubr.f32.gmra.mxu0 %v4696
        %v4764 = vpop.f32.mrf.mxu0
        %v4765 = vadd.f32 0.0, %v4764
        %v4766 = vpop.f32.mrf.mxu0
        %4767 = vdwg.mxu0
        %v4768 = vadd.f32 %v4611, %v4765
        %v4769 = vld [vmem:[%s3222] sm:$0xff]
        %v4771 = vsel %vm566, %v4769, 0
        %4773 = vmatprep.subr.mxu0 0.0
        %4774 = vmatpush1.msra.mxu0 0.0
        %4775 = vmatprep.subr.mxu0 0.0
        %4776 = vmatpush1.msra.mxu0 0.0
        %4777 = vmatprep.subr.mxu0 0.0
        %4778 = vmatpush1.msra.mxu0 0.0
        %4779 = vmatprep.subr.mxu0 0.0
        %4780 = vmatpush1.msra.mxu0 0.0
        %4781 = vmatprep.subr.mxu0 0.0
        %4782 = vmatpush1.msra.mxu0 0.0
        %4783 = vmatprep.subr.mxu0 0.0
        %4784 = vmatpush1.msra.mxu0 0.0
        %4785 = vmatprep.subr.mxu0 0.0
        %4786 = vmatpush1.msra.mxu0 0.0
        %4787 = vmatprep.subr.mxu0 0.0
        %4788 = vmatpush1.msra.mxu0 0.0
        %4789 = vmatprep.subr.mxu0 0.0
        %4790 = vmatpush1.msra.mxu0 %v3508
        %4791 = vmatprep.subr.mxu0 0.0
        %4792 = vmatpush1.msra.mxu0 %v3507
        %4793 = vmatprep.subr.mxu0 0.0
        %4794 = vmatpush1.msra.mxu0 %v3506
        %4795 = vmatprep.subr.mxu0 0.0
        %4796 = vmatpush1.msra.mxu0 %v3505
        %4797 = vmatprep.subr.mxu0 0.0
        %4798 = vmatpush1.msra.mxu0 %v3504
        %4799 = vmatprep.subr.mxu0 0.0
        %4800 = vmatpush1.msra.mxu0 %v3503
        %4801 = vmatprep.subr.mxu0 0.0
        %4802 = vmatpush1.msra.mxu0 %v3502
        %4803 = vmatprep.subr.mxu0 0.0
        %4804 = vmatpush1.msra.mxu0 %v3501
        %4805 = vmatprep.subr.mxu0 0.0
        %4806 = vmatpush2.msra.mxu0 0.0
        %4807 = vmatprep.subr.mxu0 0.0
        %4808 = vmatpush2.msra.mxu0 0.0
        %4809 = vmatprep.subr.mxu0 0.0
        %4810 = vmatpush2.msra.mxu0 0.0
        %4811 = vmatprep.subr.mxu0 0.0
        %4812 = vmatpush2.msra.mxu0 0.0
        %4813 = vmatprep.subr.mxu0 0.0
        %4814 = vmatpush2.msra.mxu0 0.0
        %4815 = vmatprep.subr.mxu0 0.0
        %4816 = vmatpush2.msra.mxu0 0.0
        %4817 = vmatprep.subr.mxu0 0.0
        %4818 = vmatpush2.msra.mxu0 0.0
        %4819 = vmatprep.subr.mxu0 0.0
        %4820 = vmatpush2.msra.mxu0 0.0
        %4821 = vmatprep.subr.mxu0 0.0
        %4822 = vmatpush2.msra.mxu0 0.0
        %4823 = vmatprep.subr.mxu0 0.0
        %4824 = vmatpush2.msra.mxu0 0.0
        %4825 = vmatprep.subr.mxu0 0.0
        %4826 = vmatpush2.msra.mxu0 0.0
        %4827 = vmatprep.subr.mxu0 0.0
        %4828 = vmatpush2.msra.mxu0 0.0
        %4829 = vmatprep.subr.mxu0 0.0
        %4830 = vmatpush2.msra.mxu0 0.0
        %4831 = vmatprep.subr.mxu0 0.0
        %4832 = vmatpush2.msra.mxu0 0.0
        %4833 = vmatprep.subr.mxu0 0.0
        %4834 = vmatpush2.msra.mxu0 0.0
        %4835 = vmatprep.subr.mxu0 0.0
        %4836 = vmatpush2.msra.mxu0 0.0
        %4837 = vmatprep.mubr.f32.mxu0 0.0
        %4838 = vmatmul.mubr.f32.gmra.mxu0 %v4771
        %v4839 = vpop.f32.mrf.mxu0
        %v4840 = vadd.f32 %v3514, %v4839
        %v4841 = vpop.f32.mrf.mxu0
        %4842 = vdwg.mxu0
        %v4843 = vmax.f32 %v4840, 0.0
        %v4844 = vld [vmem:[%s12 + $0x200] sm:$0xff]
        %v4845 = vld [vmem:[%s12 + $0x208] sm:$0xff]
        %v4846 = vld [vmem:[%s12 + $0x210] sm:$0xff]
        %v4847 = vld [vmem:[%s12 + $0x218] sm:$0xff]
        %v4848 = vld [vmem:[%s12 + $0x220] sm:$0xff]
        %v4849 = vld [vmem:[%s12 + $0x228] sm:$0xff]
        %v4850 = vld [vmem:[%s12 + $0x230] sm:$0xff]
        %v4851 = vld [vmem:[%s12 + $0x238] sm:$0xff]
        %v4853 = vsel %vm566, %v4843, 0
        %4855 = vmatprep.subr.mxu0 0.0
        %4856 = vmatpush1.msra.mxu0 0.0
        %4857 = vmatprep.subr.mxu0 0.0
        %4858 = vmatpush1.msra.mxu0 0.0
        %4859 = vmatprep.subr.mxu0 0.0
        %4860 = vmatpush1.msra.mxu0 0.0
        %4861 = vmatprep.subr.mxu0 0.0
        %4862 = vmatpush1.msra.mxu0 0.0
        %4863 = vmatprep.subr.mxu0 0.0
        %4864 = vmatpush1.msra.mxu0 0.0
        %4865 = vmatprep.subr.mxu0 0.0
        %4866 = vmatpush1.msra.mxu0 0.0
        %4867 = vmatprep.subr.mxu0 0.0
        %4868 = vmatpush1.msra.mxu0 0.0
        %4869 = vmatprep.subr.mxu0 0.0
        %4870 = vmatpush1.msra.mxu0 0.0
        %4871 = vmatprep.subr.mxu0 0.0
        %4872 = vmatpush1.msra.mxu0 %v4851
        %4873 = vmatprep.subr.mxu0 0.0
        %4874 = vmatpush1.msra.mxu0 %v4850
        %4875 = vmatprep.subr.mxu0 0.0
        %4876 = vmatpush1.msra.mxu0 %v4849
        %4877 = vmatprep.subr.mxu0 0.0
        %4878 = vmatpush1.msra.mxu0 %v4848
        %4879 = vmatprep.subr.mxu0 0.0
        %4880 = vmatpush1.msra.mxu0 %v4847
        %4881 = vmatprep.subr.mxu0 0.0
        %4882 = vmatpush1.msra.mxu0 %v4846
        %4883 = vmatprep.subr.mxu0 0.0
        %4884 = vmatpush1.msra.mxu0 %v4845
        %4885 = vmatprep.subr.mxu0 0.0
        %4886 = vmatpush1.msra.mxu0 %v4844
        %4887 = vmatprep.subr.mxu0 0.0
        %4888 = vmatpush2.msra.mxu0 0.0
        %4889 = vmatprep.subr.mxu0 0.0
        %4890 = vmatpush2.msra.mxu0 0.0
        %4891 = vmatprep.subr.mxu0 0.0
        %4892 = vmatpush2.msra.mxu0 0.0
        %4893 = vmatprep.subr.mxu0 0.0
        %4894 = vmatpush2.msra.mxu0 0.0
        %4895 = vmatprep.subr.mxu0 0.0
        %4896 = vmatpush2.msra.mxu0 0.0
        %4897 = vmatprep.subr.mxu0 0.0
        %4898 = vmatpush2.msra.mxu0 0.0
        %4899 = vmatprep.subr.mxu0 0.0
        %4900 = vmatpush2.msra.mxu0 0.0
        %4901 = vmatprep.subr.mxu0 0.0
        %4902 = vmatpush2.msra.mxu0 0.0
        %4903 = vmatprep.subr.mxu0 0.0
        %4904 = vmatpush2.msra.mxu0 0.0
        %4905 = vmatprep.subr.mxu0 0.0
        %4906 = vmatpush2.msra.mxu0 0.0
        %4907 = vmatprep.subr.mxu0 0.0
        %4908 = vmatpush2.msra.mxu0 0.0
        %4909 = vmatprep.subr.mxu0 0.0
        %4910 = vmatpush2.msra.mxu0 0.0
        %4911 = vmatprep.subr.mxu0 0.0
        %4912 = vmatpush2.msra.mxu0 0.0
        %4913 = vmatprep.subr.mxu0 0.0
        %4914 = vmatpush2.msra.mxu0 0.0
        %4915 = vmatprep.subr.mxu0 0.0
        %4916 = vmatpush2.msra.mxu0 0.0
        %4917 = vmatprep.subr.mxu0 0.0
        %4918 = vmatpush2.msra.mxu0 0.0
        %4919 = vmatprep.mubr.f32.mxu0 0.0
        %4920 = vmatmul.mubr.f32.gmra.mxu0 %v4853
        %v4921 = vpop.f32.mrf.mxu0
        %v4922 = vadd.f32 0.0, %v4921
        %v4923 = vpop.f32.mrf.mxu0
        %4924 = vdwg.mxu0
        %v4925 = vadd.f32 %v4768, %v4922
        %v4926 = vld [vmem:[%s3498] sm:$0xff]
        %v4928 = vsel %vm566, %v4926, 0
        %4930 = vmatprep.subr.mxu0 0.0
        %4931 = vmatpush1.msra.mxu0 0.0
        %4932 = vmatprep.subr.mxu0 0.0
        %4933 = vmatpush1.msra.mxu0 0.0
        %4934 = vmatprep.subr.mxu0 0.0
        %4935 = vmatpush1.msra.mxu0 0.0
        %4936 = vmatprep.subr.mxu0 0.0
        %4937 = vmatpush1.msra.mxu0 0.0
        %4938 = vmatprep.subr.mxu0 0.0
        %4939 = vmatpush1.msra.mxu0 0.0
        %4940 = vmatprep.subr.mxu0 0.0
        %4941 = vmatpush1.msra.mxu0 0.0
        %4942 = vmatprep.subr.mxu0 0.0
        %4943 = vmatpush1.msra.mxu0 0.0
        %4944 = vmatprep.subr.mxu0 0.0
        %4945 = vmatpush1.msra.mxu0 0.0
        %4946 = vmatprep.subr.mxu0 0.0
        %4947 = vmatpush1.msra.mxu0 %v3508
        %4948 = vmatprep.subr.mxu0 0.0
        %4949 = vmatpush1.msra.mxu0 %v3507
        %4950 = vmatprep.subr.mxu0 0.0
        %4951 = vmatpush1.msra.mxu0 %v3506
        %4952 = vmatprep.subr.mxu0 0.0
        %4953 = vmatpush1.msra.mxu0 %v3505
        %4954 = vmatprep.subr.mxu0 0.0
        %4955 = vmatpush1.msra.mxu0 %v3504
        %4956 = vmatprep.subr.mxu0 0.0
        %4957 = vmatpush1.msra.mxu0 %v3503
        %4958 = vmatprep.subr.mxu0 0.0
        %4959 = vmatpush1.msra.mxu0 %v3502
        %4960 = vmatprep.subr.mxu0 0.0
        %4961 = vmatpush1.msra.mxu0 %v3501
        %4962 = vmatprep.subr.mxu0 0.0
        %4963 = vmatpush2.msra.mxu0 0.0
        %4964 = vmatprep.subr.mxu0 0.0
        %4965 = vmatpush2.msra.mxu0 0.0
        %4966 = vmatprep.subr.mxu0 0.0
        %4967 = vmatpush2.msra.mxu0 0.0
        %4968 = vmatprep.subr.mxu0 0.0
        %4969 = vmatpush2.msra.mxu0 0.0
        %4970 = vmatprep.subr.mxu0 0.0
        %4971 = vmatpush2.msra.mxu0 0.0
        %4972 = vmatprep.subr.mxu0 0.0
        %4973 = vmatpush2.msra.mxu0 0.0
        %4974 = vmatprep.subr.mxu0 0.0
        %4975 = vmatpush2.msra.mxu0 0.0
        %4976 = vmatprep.subr.mxu0 0.0
        %4977 = vmatpush2.msra.mxu0 0.0
        %4978 = vmatprep.subr.mxu0 0.0
        %4979 = vmatpush2.msra.mxu0 0.0
        %4980 = vmatprep.subr.mxu0 0.0
        %4981 = vmatpush2.msra.mxu0 0.0
        %4982 = vmatprep.subr.mxu0 0.0
        %4983 = vmatpush2.msra.mxu0 0.0
        %4984 = vmatprep.subr.mxu0 0.0
        %4985 = vmatpush2.msra.mxu0 0.0
        %4986 = vmatprep.subr.mxu0 0.0
        %4987 = vmatpush2.msra.mxu0 0.0
        %4988 = vmatprep.subr.mxu0 0.0
        %4989 = vmatpush2.msra.mxu0 0.0
        %4990 = vmatprep.subr.mxu0 0.0
        %4991 = vmatpush2.msra.mxu0 0.0
        %4992 = vmatprep.subr.mxu0 0.0
        %4993 = vmatpush2.msra.mxu0 0.0
        %4994 = vmatprep.mubr.f32.mxu0 0.0
        %4995 = vmatmul.mubr.f32.gmra.mxu0 %v4928
        %v4996 = vpop.f32.mrf.mxu0
        %v4997 = vadd.f32 %v3514, %v4996
        %v4998 = vpop.f32.mrf.mxu0
        %4999 = vdwg.mxu0
        %v5000 = vmax.f32 %v4997, 0.0
        %v5001 = vld [vmem:[%s12 + $0x240] sm:$0xff]
        %v5002 = vld [vmem:[%s12 + $0x248] sm:$0xff]
        %v5003 = vld [vmem:[%s12 + $0x250] sm:$0xff]
        %v5004 = vld [vmem:[%s12 + $0x258] sm:$0xff]
        %v5005 = vld [vmem:[%s12 + $0x260] sm:$0xff]
        %v5006 = vld [vmem:[%s12 + $0x268] sm:$0xff]
        %v5007 = vld [vmem:[%s12 + $0x270] sm:$0xff]
        %v5008 = vld [vmem:[%s12 + $0x278] sm:$0xff]
        %v5010 = vsel %vm566, %v5000, 0
        %5012 = vmatprep.subr.mxu0 0.0
        %5013 = vmatpush1.msra.mxu0 0.0
        %5014 = vmatprep.subr.mxu0 0.0
        %5015 = vmatpush1.msra.mxu0 0.0
        %5016 = vmatprep.subr.mxu0 0.0
        %5017 = vmatpush1.msra.mxu0 0.0
        %5018 = vmatprep.subr.mxu0 0.0
        %5019 = vmatpush1.msra.mxu0 0.0
        %5020 = vmatprep.subr.mxu0 0.0
        %5021 = vmatpush1.msra.mxu0 0.0
        %5022 = vmatprep.subr.mxu0 0.0
        %5023 = vmatpush1.msra.mxu0 0.0
        %5024 = vmatprep.subr.mxu0 0.0
        %5025 = vmatpush1.msra.mxu0 0.0
        %5026 = vmatprep.subr.mxu0 0.0
        %5027 = vmatpush1.msra.mxu0 0.0
        %5028 = vmatprep.subr.mxu0 0.0
        %5029 = vmatpush1.msra.mxu0 %v5008
        %5030 = vmatprep.subr.mxu0 0.0
        %5031 = vmatpush1.msra.mxu0 %v5007
        %5032 = vmatprep.subr.mxu0 0.0
        %5033 = vmatpush1.msra.mxu0 %v5006
        %5034 = vmatprep.subr.mxu0 0.0
        %5035 = vmatpush1.msra.mxu0 %v5005
        %5036 = vmatprep.subr.mxu0 0.0
        %5037 = vmatpush1.msra.mxu0 %v5004
        %5038 = vmatprep.subr.mxu0 0.0
        %5039 = vmatpush1.msra.mxu0 %v5003
        %5040 = vmatprep.subr.mxu0 0.0
        %5041 = vmatpush1.msra.mxu0 %v5002
        %5042 = vmatprep.subr.mxu0 0.0
        %5043 = vmatpush1.msra.mxu0 %v5001
        %5044 = vmatprep.subr.mxu0 0.0
        %5045 = vmatpush2.msra.mxu0 0.0
        %5046 = vmatprep.subr.mxu0 0.0
        %5047 = vmatpush2.msra.mxu0 0.0
        %5048 = vmatprep.subr.mxu0 0.0
        %5049 = vmatpush2.msra.mxu0 0.0
        %5050 = vmatprep.subr.mxu0 0.0
        %5051 = vmatpush2.msra.mxu0 0.0
        %5052 = vmatprep.subr.mxu0 0.0
        %5053 = vmatpush2.msra.mxu0 0.0
        %5054 = vmatprep.subr.mxu0 0.0
        %5055 = vmatpush2.msra.mxu0 0.0
        %5056 = vmatprep.subr.mxu0 0.0
        %5057 = vmatpush2.msra.mxu0 0.0
        %5058 = vmatprep.subr.mxu0 0.0
        %5059 = vmatpush2.msra.mxu0 0.0
        %5060 = vmatprep.subr.mxu0 0.0
        %5061 = vmatpush2.msra.mxu0 0.0
        %5062 = vmatprep.subr.mxu0 0.0
        %5063 = vmatpush2.msra.mxu0 0.0
        %5064 = vmatprep.subr.mxu0 0.0
        %5065 = vmatpush2.msra.mxu0 0.0
        %5066 = vmatprep.subr.mxu0 0.0
        %5067 = vmatpush2.msra.mxu0 0.0
        %5068 = vmatprep.subr.mxu0 0.0
        %5069 = vmatpush2.msra.mxu0 0.0
        %5070 = vmatprep.subr.mxu0 0.0
        %5071 = vmatpush2.msra.mxu0 0.0
        %5072 = vmatprep.subr.mxu0 0.0
        %5073 = vmatpush2.msra.mxu0 0.0
        %5074 = vmatprep.subr.mxu0 0.0
        %5075 = vmatpush2.msra.mxu0 0.0
        %5076 = vmatprep.mubr.f32.mxu0 0.0
        %5077 = vmatmul.mubr.f32.gmra.mxu0 %v5010
        %v5078 = vpop.f32.mrf.mxu0
        %v5079 = vadd.f32 0.0, %v5078
        %v5080 = vpop.f32.mrf.mxu0
        %5081 = vdwg.mxu0
        %v5082 = vadd.f32 %v4925, %v5079
        %v5083 = vld [vmem:[%s13] sm:$0x1]
        %v5085 = vlaneseq
        %v5086 = vshrl.u32 %v5085, 7
        %v5087 = vsub.s32 0, %v5086
        %v5088 = vrot.slane %v5083, %v5087
        %v5090 = vadd.f32 %v5082, %v5088
        %vm5091 = vcmask 244736
        %5092 = vst.msk [vmem:[%s458] sm:$0xff] %vm5091, %v5090
        %s5093 = sand.u32 %s335, 1
        %s5094 = scalar_lea.sflag [#allocation5], %s5093
        %s5095 = sand.u32 %s335, 1
        %s5096 = smul.addr %s5095, 8
        %s5097 = scalar_lea.vmem [#allocation4], %s5096
        // Predicated region
        $region77: #{tpu_custom_call.1} parent=75 // pred_check
          %p5098 = pneg %p345
        $region78: #{tpu_custom_call.1} parent=75 // pred_check_branch
          %5100 = sbr.rel (%p5098) target = $region80
        $region79: #{tpu_custom_call.1} parent=75 // pred_region
          %s5102 = ssub.s32 128, 128
          %5103 = vsyncadd %s5094, %s5102
          %s5104 = smul.addr %s28, 128
          %s5105 = scalar_lea.hbm %s14, %s5104
          %s5107 = sshll.u32 %s5097, 4
          %s5108 = int_to_ptr.vmem [resolvable:$true] %s5107
          %5110 = dma.vmem_to_hbm [thread:$0]  %s5108, 128, %s5105, %s5094
        $region80: #{tpu_custom_call.1} parent=75 // pred_fallthru
          _
      $region76: #{tpu_custom_call.1} parent=5 // pred_fallthru
        _
      %p5111 = scmp.le.s32.totalorder 2, %s23
      // Predicated region
      $region81: #{tpu_custom_call.1} parent=5 // pred_check
        %p5112 = pneg %p5111
      $region82: #{tpu_custom_call.1} parent=5 // pred_check_branch
        %5114 = sbr.rel (%p5112) target = $region84
      $region83: #{tpu_custom_call.1} parent=5 // pred_region
        %s5115 = ssub.s32 %s23, 2
        // Predicated region
        $region85: #{tpu_custom_call.1} parent=83 // pred_check
          %p5116 = pneg %p351
        $region86: #{tpu_custom_call.1} parent=83 // pred_check_branch
          %5118 = sbr.rel (%p5116) target = $region88
        $region87: #{tpu_custom_call.1} parent=83 // pred_region
          %s5119 = sand.u32 %s336, 1
          %s5120 = scalar_lea.sflag [#allocation5], %s5119
          %s5121 = sand.u32 %s336, 1
          %s5122 = smul.addr %s5121, 8
          %s5123 = scalar_lea.vmem [#allocation4], %s5122
          %5124 = dma.done %s5120, 128
        $region88: #{tpu_custom_call.1} parent=83 // pred_fallthru
          _
      $region84: #{tpu_custom_call.1} parent=5 // pred_fallthru
        _
    $region6: #{tpu_custom_call.1} parent=1 // loop_footer
      %s27 = sadd.s32 1, %s23
    $region7: #{tpu_custom_call.1} parent=1 // loop_footer_branch
      %22 = sbr.rel target = $region3
    $region8: #{tpu_custom_call.1} parent=1 // loop_exit
      _
    %5125 = vsyncpa [#allocation5], 1
    %s5126 = scalar_lea.sflag [#allocation5], 1
    %5127 = vsyncpa %s5126, 1

</llo_original>
